<compile_context>
chip_gen: v5e
topology: v5e:2x2
jax: 0.10.0
libtpu: 0.0.40
codegen_flags: <defaults>
</compile_context>

<pallas_src>
import functools
import math

import jax
import jax.numpy as jnp
from jax.experimental import pallas as pl
from jax.experimental.pallas import tpu as pltpu


_LAYER_KEYS = ("in_proj_w", "in_proj_b", "out_proj_w", "out_proj_b",
               "ln1_g", "ln1_b", "ff1_w", "ff1_b",
               "ff2_w", "ff2_b", "ln2_g", "ln2_b")


# ----------------------------------------------------------------------------
# Fused whole-forward kernel (one grid step = one batch tile, end to end)
# ----------------------------------------------------------------------------

def _fused_forward_kernel(*refs, nhead, n_layers):
    (emb_ref, bin_ref, cont_ref, mask_ref, pos_ref,
     clg_ref, clb_ref, pwb_ref, pwc_ref, pb_ref) = refs[:10]
    lrefs = refs[10:10 + 12 * n_layers]
    pool_w_ref, pool_b_ref, reg_w_ref, reg_b_ref, out_ref = refs[10 + 12 * n_layers:]

    f32, bf16 = jnp.float32, jnp.bfloat16
    tb, S, D = emb_ref.shape
    nb = bin_ref.shape[-1]
    nc = cont_ref.shape[-1]
    N = tb * S
    dh = D // nhead
    scale = 1.0 / math.sqrt(dh)

    def ln(x, g, b, eps=1e-5):                 # f32 elementwise (v5e-safe)
        mu = jnp.mean(x, axis=-1, keepdims=True)
        var = jnp.mean((x - mu) ** 2, axis=-1, keepdims=True)
        return (x - mu) * jax.lax.rsqrt(var + eps) * g + b

    def softmax_last(s):                        # exp + EUP reciprocal
        m = jnp.max(s, axis=-1, keepdims=True)
        e = jnp.exp(s - m)
        return e * pl.reciprocal(jnp.sum(e, axis=-1, keepdims=True), approx=True)

    # ---- continuous-feature LayerNorm ----
    xc = ln(cont_ref[...].reshape(N, nc), clg_ref[...], clb_ref[...])

    # ---- feature projector (embedding slice was pre-folded into the gathered
    #      tables; only binary + continuous columns are multiplied here) ----
    h = emb_ref[...].reshape(N, D)
    h = h + jnp.dot(bin_ref[...].reshape(N, nb).astype(bf16), pwb_ref[...],
                    preferred_element_type=f32)
    h = h + jnp.dot(xc.astype(bf16), pwc_ref[...], preferred_element_type=f32)
    h = jnp.maximum(h + pb_ref[...], 0.0)                      # ReLU

    # ---- positional encoding ----
    h = (h.reshape(tb, S, D) + pos_ref[...][None, :, :]).reshape(N, D)

    valid = mask_ref[...][:, None, :] > 0.0                    # (tb, 1, S)

    # ---- transformer encoder layers (post-norm, relu FFN, dropout=identity) --
    for l in range(n_layers):
        (ipw, ipb, opw, opb, l1g, l1b,
         f1w, f1b, f2w, f2b, l2g, l2b) = lrefs[12 * l:12 * (l + 1)]

        qkv = jnp.dot(h.astype(bf16), ipw[...], preferred_element_type=f32) + ipb[...]
        q = (qkv[:, :D] * scale).reshape(tb, S, D)             # fold 1/sqrt(dh) into q
        k = qkv[:, D:2 * D].reshape(tb, S, D)
        v = qkv[:, 2 * D:].reshape(tb, S, D)

        opw_a = opw[...]                                        # (D, D) bf16, resident
        attn = jnp.zeros((N, D), f32)
        for hh in range(nhead):
            sl = slice(hh * dh, (hh + 1) * dh)
            s = jnp.einsum("bqd,bkd->bqk",
                           q[:, :, sl].astype(bf16), k[:, :, sl].astype(bf16),
                           preferred_element_type=f32)
            s = jnp.where(valid, s, -1e30)                      # key-padding mask
            p = softmax_last(s)
            o_h = jnp.einsum("bqk,bkd->bqd",
                             p.astype(bf16), v[:, :, sl].astype(bf16),
                             preferred_element_type=f32)
            # concat-of-heads folded into the out-projection (lane-dense (N, D)):
            #   concat_h(o_h) @ Wout == sum_h o_h @ Wout[h*dh:(h+1)*dh, :]
            attn = attn + jnp.dot(o_h.reshape(N, dh).astype(bf16), opw_a[sl, :],
                                  preferred_element_type=f32)
        attn = attn + opb[...]

        h = ln(h + attn, l1g[...], l1b[...])                    # residual + LN1
        ff = jnp.maximum(
            jnp.dot(h.astype(bf16), f1w[...], preferred_element_type=f32) + f1b[...],
            0.0)
        ff = jnp.dot(ff.astype(bf16), f2w[...], preferred_element_type=f32) + f2b[...]
        h = ln(h + ff, l2g[...], l2b[...])                      # residual + LN2

    # ---- masked attention pooling over the sequence ----
    h3 = h.reshape(tb, S, D)
    sc = jnp.sum(h3 * pool_w_ref[...][None, :, :], axis=-1) + pool_b_ref[...]  # (tb, S)
    sc = jnp.where(mask_ref[...] > 0.0, sc, -1e30)
    p = softmax_last(sc)
    pooled = jnp.sum(p[:, :, None] * h3, axis=1)                # (tb, D)

    # ---- regressor ----
    out_ref[...] = (jnp.dot(pooled, reg_w_ref[...], preferred_element_type=f32)
                    + reg_b_ref[...])


# ----------------------------------------------------------------------------
# Parameters (PyTorch-equivalent layout, with the embedding->projection fold)
# ----------------------------------------------------------------------------

def init_params(key, embedding_table_shapes, num_binary, num_continuous,
                dim_model, nhead, dim_ff, n_layers, max_len):
    keys = jax.random.split(key, 256)
    kit = iter(keys)
    bf16 = jnp.bfloat16

    def nrm(shape, scale=0.02, dtype=jnp.float32):
        return (jax.random.normal(next(kit), shape, jnp.float32) * scale).astype(dtype)

    params = {}
    emb_sizes = [e for _, e in embedding_table_shapes.values()]
    emb_total = sum(emb_sizes)
    total_in = emb_total + num_binary + num_continuous

    proj_w = jax.random.normal(next(kit), (total_in, dim_model), jnp.float32) * 0.02

    # EntityEmbeddingLayer tables (padding_idx=0 row zero), folded with the
    # embedding rows of the feature projector: gather yields projected vectors.
    emb_proj_tables = {}
    off = 0
    for name, (cat_size, emb_size) in embedding_table_shapes.items():
        t = jax.random.normal(next(kit), (cat_size, emb_size), jnp.float32)
        t = t.at[0].set(0.0)                                   # padding_idx=0
        emb_proj_tables[name] = t @ proj_w[off:off + emb_size]  # (cat_size, D)
        off += emb_size
    params["emb_proj_tables"] = emb_proj_tables

    params["proj_w_bin"] = proj_w[emb_total:emb_total + num_binary].astype(bf16)
    params["proj_w_cont"] = proj_w[emb_total + num_binary:].astype(bf16)
    params["proj_b"] = jnp.zeros((1, dim_model), jnp.float32)

    params["cont_ln_g"] = jnp.ones((1, num_continuous), jnp.float32)
    params["cont_ln_b"] = jnp.zeros((1, num_continuous), jnp.float32)

    params["pos_enc"] = jax.random.normal(next(kit), (max_len, dim_model), jnp.float32)

    layers = []
    for _ in range(n_layers):
        layers.append(dict(
            in_proj_w=nrm((dim_model, 3 * dim_model), dtype=bf16),
            in_proj_b=jnp.zeros((1, 3 * dim_model), jnp.float32),
            out_proj_w=nrm((dim_model, dim_model), dtype=bf16),
            out_proj_b=jnp.zeros((1, dim_model), jnp.float32),
            ln1_g=jnp.ones((1, dim_model), jnp.float32),
            ln1_b=jnp.zeros((1, dim_model), jnp.float32),
            ff1_w=nrm((dim_model, dim_ff), dtype=bf16),
            ff1_b=jnp.zeros((1, dim_ff), jnp.float32),
            ff2_w=nrm((dim_ff, dim_model), dtype=bf16),
            ff2_b=jnp.zeros((1, dim_model), jnp.float32),
            ln2_g=jnp.ones((1, dim_model), jnp.float32),
            ln2_b=jnp.zeros((1, dim_model), jnp.float32),
        ))
    params["layers"] = layers

    params["pool_w"] = nrm((1, dim_model))          # Linear(D, 1) weight (row form)
    params["pool_b"] = jnp.zeros((1, 1), jnp.float32)
    params["reg_w"] = nrm((dim_model, 1))
    params["reg_b"] = jnp.zeros((1, 1), jnp.float32)
    return params


# ----------------------------------------------------------------------------
# Forward wrapper: one pallas_call, grid over batch tiles
# ----------------------------------------------------------------------------

def forward(params, x_cat, x_bin, x_cont, mask, *, nhead, tb=8):
    B, S, n_cat = x_cat.shape
    names = list(params["emb_proj_tables"].keys())
    assert n_cat == len(names), "categorical feature / table count mismatch"
    assert B % tb == 0

    # EntityEmbeddingLayer gather (plain-JAX glue; padding rows are zero).
    # Tables already carry the projector fold, so concat+project == sum of gathers.
    emb_proj = params["emb_proj_tables"][names[0]][x_cat[:, :, 0]]
    for i in range(1, n_cat):
        emb_proj = emb_proj + params["emb_proj_tables"][names[i]][x_cat[:, :, i]]

    maskf = mask[..., 0].astype(jnp.float32)            # (B, S): 1.0 = valid token
    pos = params["pos_enc"][:S]                         # DynamicPositionalEncoding
    n_layers = len(params["layers"])

    flat_inputs = [emb_proj, x_bin, x_cont, maskf, pos,
                   params["cont_ln_g"], params["cont_ln_b"],
                   params["proj_w_bin"], params["proj_w_cont"], params["proj_b"]]
    for lp in params["layers"]:
        flat_inputs += [lp[k] for k in _LAYER_KEYS]
    flat_inputs += [params["pool_w"], params["pool_b"],
                    params["reg_w"], params["reg_b"]]

    def batch_spec(a):                                  # tiled over the batch axis
        z = (0,) * (a.ndim - 1)
        return pl.BlockSpec((tb,) + a.shape[1:], lambda i, z=z: (i,) + z)

    def resident_spec(a):                               # whole array, VMEM-resident
        z = (0,) * a.ndim
        return pl.BlockSpec(a.shape, lambda i, z=z: z)

    in_specs = ([batch_spec(a) for a in flat_inputs[:4]]
                + [resident_spec(a) for a in flat_inputs[4:]])

    out = pl.pallas_call(
        functools.partial(_fused_forward_kernel, nhead=nhead, n_layers=n_layers),
        grid=(B // tb,),
        in_specs=in_specs,
        out_specs=pl.BlockSpec((tb, 1), lambda i: (i, 0)),
        out_shape=jax.ShapeDtypeStruct((B, 1), jnp.float32),
        compiler_params=pltpu.CompilerParams(
            dimension_semantics=("parallel",),           # megacore split on v7x
            vmem_limit_bytes=32 * 1024 * 1024),          # explicit budget, fits all gens
    )(*flat_inputs)
    return out[:, 0]                                     # squeeze(-1)


# ----------------------------------------------------------------------------

if __name__ == "__main__":
    B, S = 16, 8
    embedding_table_shapes = {"cat_a": (11, 8), "cat_b": (13, 8)}
    num_binary, num_continuous = 4, 4
    dim_model, nhead, dim_ff, n_layers, max_len = 32, 4, 64, 2, 16
    # TODO(synk): D=32 / dh=8 / S=8 under-fill the 128-lane vreg and the MXU; a
    # production config should pick D, dim_ff as multiples of 128 and dh >= 64.

    key = jax.random.PRNGKey(0)
    k1, k2, k3, k4, kp = jax.random.split(key, 5)

    params = init_params(kp, embedding_table_shapes, num_binary, num_continuous,
                         dim_model, nhead, dim_ff, n_layers, max_len)

    x_cat = jnp.stack(
        [jax.random.randint(k1, (B, S), 0, 11),
         jax.random.randint(k2, (B, S), 0, 13)], axis=-1).astype(jnp.int32)
    x_bin = (jax.random.uniform(k3, (B, S, num_binary)) > 0.5).astype(jnp.float32)
    x_cont = jax.random.normal(k4, (B, S, num_continuous), jnp.float32)

    lengths = jnp.array([8, 5, 8, 3, 7, 6, 2, 8, 4, 8, 1, 8, 5, 8, 3, 6])
    mask = (jnp.arange(S)[None, :] < lengths[:, None])[..., None]   # (B, S, 1) bool

    out = forward(params, x_cat, x_bin, x_cont, mask, nhead=nhead, tb=8)
    out = jax.block_until_ready(out)

    assert out.shape == (B,), out.shape
    assert bool(jnp.all(jnp.isfinite(out)))
    print("KERNEL_OK")
</pallas_src>

<mosaic_0001>
module attributes {stable_mosaic.version = 11 : i64} {
  func.func @_fused_forward_kernel(%arg0: i32, %arg1: memref<8x8x32xf32, #tpu.memory_space<vmem>>, %arg2: memref<8x8x4xf32, #tpu.memory_space<vmem>>, %arg3: memref<8x8x4xf32, #tpu.memory_space<vmem>>, %arg4: memref<8x8xf32, #tpu.memory_space<vmem>>, %arg5: memref<8x32xf32, #tpu.memory_space<vmem>>, %arg6: memref<1x4xf32, #tpu.memory_space<vmem>>, %arg7: memref<1x4xf32, #tpu.memory_space<vmem>>, %arg8: memref<4x32xbf16, #tpu.memory_space<vmem>>, %arg9: memref<4x32xbf16, #tpu.memory_space<vmem>>, %arg10: memref<1x32xf32, #tpu.memory_space<vmem>>, %arg11: memref<32x96xbf16, #tpu.memory_space<vmem>>, %arg12: memref<1x96xf32, #tpu.memory_space<vmem>>, %arg13: memref<32x32xbf16, #tpu.memory_space<vmem>>, %arg14: memref<1x32xf32, #tpu.memory_space<vmem>>, %arg15: memref<1x32xf32, #tpu.memory_space<vmem>>, %arg16: memref<1x32xf32, #tpu.memory_space<vmem>>, %arg17: memref<32x64xbf16, #tpu.memory_space<vmem>>, %arg18: memref<1x64xf32, #tpu.memory_space<vmem>>, %arg19: memref<64x32xbf16, #tpu.memory_space<vmem>>, %arg20: memref<1x32xf32, #tpu.memory_space<vmem>>, %arg21: memref<1x32xf32, #tpu.memory_space<vmem>>, %arg22: memref<1x32xf32, #tpu.memory_space<vmem>>, %arg23: memref<32x96xbf16, #tpu.memory_space<vmem>>, %arg24: memref<1x96xf32, #tpu.memory_space<vmem>>, %arg25: memref<32x32xbf16, #tpu.memory_space<vmem>>, %arg26: memref<1x32xf32, #tpu.memory_space<vmem>>, %arg27: memref<1x32xf32, #tpu.memory_space<vmem>>, %arg28: memref<1x32xf32, #tpu.memory_space<vmem>>, %arg29: memref<32x64xbf16, #tpu.memory_space<vmem>>, %arg30: memref<1x64xf32, #tpu.memory_space<vmem>>, %arg31: memref<64x32xbf16, #tpu.memory_space<vmem>>, %arg32: memref<1x32xf32, #tpu.memory_space<vmem>>, %arg33: memref<1x32xf32, #tpu.memory_space<vmem>>, %arg34: memref<1x32xf32, #tpu.memory_space<vmem>>, %arg35: memref<1x32xf32, #tpu.memory_space<vmem>>, %arg36: memref<1x1xf32, #tpu.memory_space<vmem>>, %arg37: memref<32x1xf32, #tpu.memory_space<vmem>>, %arg38: memref<1x1xf32, #tpu.memory_space<vmem>>, %arg39: memref<8x1xf32, #tpu.memory_space<vmem>>) attributes {dimension_semantics = [#tpu.dimension_semantics<parallel>], iteration_bounds = array<i64: 2>, scalar_prefetch = 0 : i64, scratch_operands = 0 : i64, tpu.core_type = #tpu.core_type<tc>, window_params = [{transform_indices = @transform_0, window_bounds = array<i64: 8, 8, 32>}, {transform_indices = @transform_1, window_bounds = array<i64: 8, 8, 4>}, {transform_indices = @transform_2, window_bounds = array<i64: 8, 8, 4>}, {transform_indices = @transform_3, window_bounds = array<i64: 8, 8>}, {pipeline_mode = #tpu.pipeline_mode<synchronous>, transform_indices = @transform_4, window_bounds = array<i64: 8, 32>}, {pipeline_mode = #tpu.pipeline_mode<synchronous>, transform_indices = @transform_5, window_bounds = array<i64: 1, 4>}, {pipeline_mode = #tpu.pipeline_mode<synchronous>, transform_indices = @transform_6, window_bounds = array<i64: 1, 4>}, {pipeline_mode = #tpu.pipeline_mode<synchronous>, transform_indices = @transform_7, window_bounds = array<i64: 4, 32>}, {pipeline_mode = #tpu.pipeline_mode<synchronous>, transform_indices = @transform_8, window_bounds = array<i64: 4, 32>}, {pipeline_mode = #tpu.pipeline_mode<synchronous>, transform_indices = @transform_9, window_bounds = array<i64: 1, 32>}, {pipeline_mode = #tpu.pipeline_mode<synchronous>, transform_indices = @transform_10, window_bounds = array<i64: 32, 96>}, {pipeline_mode = #tpu.pipeline_mode<synchronous>, transform_indices = @transform_11, window_bounds = array<i64: 1, 96>}, {pipeline_mode = #tpu.pipeline_mode<synchronous>, transform_indices = @transform_12, window_bounds = array<i64: 32, 32>}, {pipeline_mode = #tpu.pipeline_mode<synchronous>, transform_indices = @transform_13, window_bounds = array<i64: 1, 32>}, {pipeline_mode = #tpu.pipeline_mode<synchronous>, transform_indices = @transform_14, window_bounds = array<i64: 1, 32>}, {pipeline_mode = #tpu.pipeline_mode<synchronous>, transform_indices = @transform_15, window_bounds = array<i64: 1, 32>}, {pipeline_mode = #tpu.pipeline_mode<synchronous>, transform_indices = @transform_16, window_bounds = array<i64: 32, 64>}, {pipeline_mode = #tpu.pipeline_mode<synchronous>, transform_indices = @transform_17, window_bounds = array<i64: 1, 64>}, {pipeline_mode = #tpu.pipeline_mode<synchronous>, transform_indices = @transform_18, window_bounds = array<i64: 64, 32>}, {pipeline_mode = #tpu.pipeline_mode<synchronous>, transform_indices = @transform_19, window_bounds = array<i64: 1, 32>}, {pipeline_mode = #tpu.pipeline_mode<synchronous>, transform_indices = @transform_20, window_bounds = array<i64: 1, 32>}, {pipeline_mode = #tpu.pipeline_mode<synchronous>, transform_indices = @transform_21, window_bounds = array<i64: 1, 32>}, {pipeline_mode = #tpu.pipeline_mode<synchronous>, transform_indices = @transform_22, window_bounds = array<i64: 32, 96>}, {pipeline_mode = #tpu.pipeline_mode<synchronous>, transform_indices = @transform_23, window_bounds = array<i64: 1, 96>}, {pipeline_mode = #tpu.pipeline_mode<synchronous>, transform_indices = @transform_24, window_bounds = array<i64: 32, 32>}, {pipeline_mode = #tpu.pipeline_mode<synchronous>, transform_indices = @transform_25, window_bounds = array<i64: 1, 32>}, {pipeline_mode = #tpu.pipeline_mode<synchronous>, transform_indices = @transform_26, window_bounds = array<i64: 1, 32>}, {pipeline_mode = #tpu.pipeline_mode<synchronous>, transform_indices = @transform_27, window_bounds = array<i64: 1, 32>}, {pipeline_mode = #tpu.pipeline_mode<synchronous>, transform_indices = @transform_28, window_bounds = array<i64: 32, 64>}, {pipeline_mode = #tpu.pipeline_mode<synchronous>, transform_indices = @transform_29, window_bounds = array<i64: 1, 64>}, {pipeline_mode = #tpu.pipeline_mode<synchronous>, transform_indices = @transform_30, window_bounds = array<i64: 64, 32>}, {pipeline_mode = #tpu.pipeline_mode<synchronous>, transform_indices = @transform_31, window_bounds = array<i64: 1, 32>}, {pipeline_mode = #tpu.pipeline_mode<synchronous>, transform_indices = @transform_32, window_bounds = array<i64: 1, 32>}, {pipeline_mode = #tpu.pipeline_mode<synchronous>, transform_indices = @transform_33, window_bounds = array<i64: 1, 32>}, {pipeline_mode = #tpu.pipeline_mode<synchronous>, transform_indices = @transform_34, window_bounds = array<i64: 1, 32>}, {pipeline_mode = #tpu.pipeline_mode<synchronous>, transform_indices = @transform_35, window_bounds = array<i64: 1, 1>}, {pipeline_mode = #tpu.pipeline_mode<synchronous>, transform_indices = @transform_36, window_bounds = array<i64: 32, 1>}, {pipeline_mode = #tpu.pipeline_mode<synchronous>, transform_indices = @transform_37, window_bounds = array<i64: 1, 1>}, {transform_indices = @transform_38, window_bounds = array<i64: 8, 1>}]} {
    %c0 = arith.constant 0 : index
    %c0_0 = arith.constant 0 : index
    %c0_1 = arith.constant 0 : index
    %0 = vector.load %arg3[%c0, %c0_0, %c0_1] : memref<8x8x4xf32, #tpu.memory_space<vmem>>, vector<8x8x4xf32>
    %1 = vector.shape_cast %0 : vector<8x8x4xf32> to vector<64x4xf32>
    %c0_2 = arith.constant 0 : index
    %c0_3 = arith.constant 0 : index
    %2 = vector.load %arg6[%c0_2, %c0_3] : memref<1x4xf32, #tpu.memory_space<vmem>>, vector<1x4xf32>
    %c0_4 = arith.constant 0 : index
    %c0_5 = arith.constant 0 : index
    %3 = vector.load %arg7[%c0_4, %c0_5] : memref<1x4xf32, #tpu.memory_space<vmem>>, vector<1x4xf32>
    %cst = arith.constant dense<0.000000e+00> : vector<64xf32>
    %4 = vector.multi_reduction <add>, %1, %cst [1] : vector<64x4xf32> to vector<64xf32>
    %5 = vector.shape_cast %4 : vector<64xf32> to vector<64x1xf32>
    %cst_6 = arith.constant 4.000000e+00 : f32
    %6 = vector.broadcast %cst_6 : f32 to vector<64x1xf32>
    %7 = arith.divf %5, %6 : vector<64x1xf32>
    %8 = vector.broadcast %7 : vector<64x1xf32> to vector<64x4xf32>
    %9 = arith.subf %1, %8 : vector<64x4xf32>
    %10 = arith.mulf %9, %9 : vector<64x4xf32>
    %cst_7 = arith.constant dense<0.000000e+00> : vector<64xf32>
    %11 = vector.multi_reduction <add>, %10, %cst_7 [1] : vector<64x4xf32> to vector<64xf32>
    %12 = vector.shape_cast %11 : vector<64xf32> to vector<64x1xf32>
    %cst_8 = arith.constant 4.000000e+00 : f32
    %13 = vector.broadcast %cst_8 : f32 to vector<64x1xf32>
    %14 = arith.divf %12, %13 : vector<64x1xf32>
    %15 = vector.broadcast %7 : vector<64x1xf32> to vector<64x4xf32>
    %16 = arith.subf %1, %15 : vector<64x4xf32>
    %cst_9 = arith.constant 9.99999974E-6 : f32
    %17 = vector.broadcast %cst_9 : f32 to vector<64x1xf32>
    %18 = arith.addf %14, %17 : vector<64x1xf32>
    %19 = math.rsqrt %18 : vector<64x1xf32>
    %20 = vector.broadcast %19 : vector<64x1xf32> to vector<64x4xf32>
    %21 = arith.mulf %16, %20 : vector<64x4xf32>
    %22 = vector.broadcast %2 : vector<1x4xf32> to vector<64x4xf32>
    %23 = arith.mulf %21, %22 : vector<64x4xf32>
    %24 = vector.broadcast %3 : vector<1x4xf32> to vector<64x4xf32>
    %25 = arith.addf %23, %24 : vector<64x4xf32>
    %c0_10 = arith.constant 0 : index
    %c0_11 = arith.constant 0 : index
    %c0_12 = arith.constant 0 : index
    %26 = vector.load %arg1[%c0_10, %c0_11, %c0_12] : memref<8x8x32xf32, #tpu.memory_space<vmem>>, vector<8x8x32xf32>
    %27 = vector.shape_cast %26 : vector<8x8x32xf32> to vector<64x32xf32>
    %c0_13 = arith.constant 0 : index
    %c0_14 = arith.constant 0 : index
    %c0_15 = arith.constant 0 : index
    %28 = vector.load %arg2[%c0_13, %c0_14, %c0_15] : memref<8x8x4xf32, #tpu.memory_space<vmem>>, vector<8x8x4xf32>
    %29 = vector.shape_cast %28 : vector<8x8x4xf32> to vector<64x4xf32>
    %30 = arith.truncf %29 : vector<64x4xf32> to vector<64x4xbf16>
    %c0_16 = arith.constant 0 : index
    %c0_17 = arith.constant 0 : index
    %31 = vector.load %arg8[%c0_16, %c0_17] : memref<4x32xbf16, #tpu.memory_space<vmem>>, vector<4x32xbf16>
    %cst_18 = arith.constant dense<0.000000e+00> : vector<64x32xf32>
    %32 = tpu.matmul %30, %31, %cst_18 {dimension_numbers = #tpu.dot_dimension_numbers<[1], [0], [0], [1], [0, 0, 1, 1], [], []>} : vector<64x4xbf16>, vector<4x32xbf16>, vector<64x32xf32> -> vector<64x32xf32>
    %33 = arith.addf %27, %32 : vector<64x32xf32>
    %34 = arith.truncf %25 : vector<64x4xf32> to vector<64x4xbf16>
    %c0_19 = arith.constant 0 : index
    %c0_20 = arith.constant 0 : index
    %35 = vector.load %arg9[%c0_19, %c0_20] : memref<4x32xbf16, #tpu.memory_space<vmem>>, vector<4x32xbf16>
    %cst_21 = arith.constant dense<0.000000e+00> : vector<64x32xf32>
    %36 = tpu.matmul %34, %35, %cst_21 {dimension_numbers = #tpu.dot_dimension_numbers<[1], [0], [0], [1], [0, 0, 1, 1], [], []>} : vector<64x4xbf16>, vector<4x32xbf16>, vector<64x32xf32> -> vector<64x32xf32>
    %37 = arith.addf %33, %36 : vector<64x32xf32>
    %c0_22 = arith.constant 0 : index
    %c0_23 = arith.constant 0 : index
    %38 = vector.load %arg10[%c0_22, %c0_23] : memref<1x32xf32, #tpu.memory_space<vmem>>, vector<1x32xf32>
    %39 = vector.broadcast %38 : vector<1x32xf32> to vector<64x32xf32>
    %40 = arith.addf %37, %39 : vector<64x32xf32>
    %cst_24 = arith.constant 0.000000e+00 : f32
    %41 = vector.broadcast %cst_24 : f32 to vector<64x32xf32>
    %42 = arith.maximumf %40, %41 : vector<64x32xf32>
    %43 = vector.shape_cast %42 : vector<64x32xf32> to vector<8x8x32xf32>
    %c0_25 = arith.constant 0 : index
    %c0_26 = arith.constant 0 : index
    %44 = vector.load %arg5[%c0_25, %c0_26] : memref<8x32xf32, #tpu.memory_space<vmem>>, vector<8x32xf32>
    %45 = vector.shape_cast %44 : vector<8x32xf32> to vector<1x8x32xf32>
    %46 = vector.broadcast %45 : vector<1x8x32xf32> to vector<8x8x32xf32>
    %47 = arith.addf %43, %46 : vector<8x8x32xf32>
    %48 = vector.shape_cast %47 : vector<8x8x32xf32> to vector<64x32xf32>
    %c0_27 = arith.constant 0 : index
    %c0_28 = arith.constant 0 : index
    %49 = vector.load %arg4[%c0_27, %c0_28] : memref<8x8xf32, #tpu.memory_space<vmem>>, vector<8x8xf32>
    %50 = vector.shape_cast %49 : vector<8x8xf32> to vector<8x1x8xf32>
    %cst_29 = arith.constant 0.000000e+00 : f32
    %51 = vector.broadcast %cst_29 : f32 to vector<8x1x8xf32>
    %52 = arith.cmpf ogt, %50, %51 : vector<8x1x8xf32>
    %53 = arith.truncf %48 : vector<64x32xf32> to vector<64x32xbf16>
    %c0_30 = arith.constant 0 : index
    %c0_31 = arith.constant 0 : index
    %54 = vector.load %arg11[%c0_30, %c0_31] : memref<32x96xbf16, #tpu.memory_space<vmem>>, vector<32x96xbf16>
    %cst_32 = arith.constant dense<0.000000e+00> : vector<64x96xf32>
    %55 = tpu.matmul %53, %54, %cst_32 {dimension_numbers = #tpu.dot_dimension_numbers<[1], [0], [0], [1], [0, 0, 1, 1], [], []>} : vector<64x32xbf16>, vector<32x96xbf16>, vector<64x96xf32> -> vector<64x96xf32>
    %c0_33 = arith.constant 0 : index
    %c0_34 = arith.constant 0 : index
    %56 = vector.load %arg12[%c0_33, %c0_34] : memref<1x96xf32, #tpu.memory_space<vmem>>, vector<1x96xf32>
    %57 = vector.broadcast %56 : vector<1x96xf32> to vector<64x96xf32>
    %58 = arith.addf %55, %57 : vector<64x96xf32>
    %59 = vector.extract_strided_slice %58 {offsets = [0, 0], sizes = [64, 32], strides = [1, 1]} : vector<64x96xf32> to vector<64x32xf32>
    %cst_35 = arith.constant 0.353553385 : f32
    %60 = vector.broadcast %cst_35 : f32 to vector<64x32xf32>
    %61 = arith.mulf %59, %60 : vector<64x32xf32>
    %62 = vector.shape_cast %61 : vector<64x32xf32> to vector<8x8x32xf32>
    %63 = vector.extract_strided_slice %58 {offsets = [0, 32], sizes = [64, 32], strides = [1, 1]} : vector<64x96xf32> to vector<64x32xf32>
    %64 = vector.shape_cast %63 : vector<64x32xf32> to vector<8x8x32xf32>
    %65 = vector.extract_strided_slice %58 {offsets = [0, 64], sizes = [64, 32], strides = [1, 1]} : vector<64x96xf32> to vector<64x32xf32>
    %66 = vector.shape_cast %65 : vector<64x32xf32> to vector<8x8x32xf32>
    %c0_36 = arith.constant 0 : index
    %c0_37 = arith.constant 0 : index
    %67 = vector.load %arg13[%c0_36, %c0_37] : memref<32x32xbf16, #tpu.memory_space<vmem>>, vector<32x32xbf16>
    %cst_38 = arith.constant 0.000000e+00 : f32
    %68 = vector.broadcast %cst_38 : f32 to vector<64x32xf32>
    %69 = vector.extract_strided_slice %62 {offsets = [0, 0, 0], sizes = [8, 8, 8], strides = [1, 1, 1]} : vector<8x8x32xf32> to vector<8x8x8xf32>
    %70 = arith.truncf %69 : vector<8x8x8xf32> to vector<8x8x8xbf16>
    %71 = vector.extract_strided_slice %64 {offsets = [0, 0, 0], sizes = [8, 8, 8], strides = [1, 1, 1]} : vector<8x8x32xf32> to vector<8x8x8xf32>
    %72 = arith.truncf %71 : vector<8x8x8xf32> to vector<8x8x8xbf16>
    "tpu.trace_start"() <{level = 10 : i32, message = "bqd,bkd->bqk"}> : () -> ()
    %cst_39 = arith.constant dense<0.000000e+00> : vector<8x8x8xf32>
    %73 = tpu.matmul %70, %72, %cst_39 {dimension_numbers = #tpu.dot_dimension_numbers<[2], [2], [1], [1], [0, 0, 0, 1, 1, 1], [0], [0]>} : vector<8x8x8xbf16>, vector<8x8x8xbf16>, vector<8x8x8xf32> -> vector<8x8x8xf32>
    %cst_40 = arith.constant -1.000000e+30 : f32
    "tpu.trace_stop"() : () -> ()
    %74 = vector.shape_cast %52 : vector<8x1x8xi1> to vector<8x1x8xi1>
    %75 = vector.broadcast %74 : vector<8x1x8xi1> to vector<8x8x8xi1>
    %76 = vector.broadcast %cst_40 : f32 to vector<8x8x8xf32>
    %77 = arith.select %75, %73, %76 : vector<8x8x8xi1>, vector<8x8x8xf32>
    %cst_41 = arith.constant dense<0xFF800000> : vector<8x8xf32>
    %78 = vector.multi_reduction <maximumf>, %77, %cst_41 [2] : vector<8x8x8xf32> to vector<8x8xf32>
    %79 = vector.shape_cast %78 : vector<8x8xf32> to vector<8x8x1xf32>
    %80 = vector.broadcast %79 : vector<8x8x1xf32> to vector<8x8x8xf32>
    %81 = arith.subf %77, %80 : vector<8x8x8xf32>
    %82 = math.exp %81 : vector<8x8x8xf32>
    %cst_42 = arith.constant dense<0.000000e+00> : vector<8x8xf32>
    %83 = vector.multi_reduction <add>, %82, %cst_42 [2] : vector<8x8x8xf32> to vector<8x8xf32>
    %84 = vector.shape_cast %83 : vector<8x8xf32> to vector<8x8x1xf32>
    %85 = tpu.reciprocal %84 {approx = true} : vector<8x8x1xf32> -> vector<8x8x1xf32>
    %86 = vector.broadcast %85 : vector<8x8x1xf32> to vector<8x8x8xf32>
    %87 = arith.mulf %82, %86 : vector<8x8x8xf32>
    %88 = arith.truncf %87 : vector<8x8x8xf32> to vector<8x8x8xbf16>
    %89 = vector.extract_strided_slice %66 {offsets = [0, 0, 0], sizes = [8, 8, 8], strides = [1, 1, 1]} : vector<8x8x32xf32> to vector<8x8x8xf32>
    %90 = arith.truncf %89 : vector<8x8x8xf32> to vector<8x8x8xbf16>
    "tpu.trace_start"() <{level = 10 : i32, message = "bqk,bkd->bqd"}> : () -> ()
    %cst_43 = arith.constant dense<0.000000e+00> : vector<8x8x8xf32>
    %91 = tpu.matmul %88, %90, %cst_43 {dimension_numbers = #tpu.dot_dimension_numbers<[2], [1], [1], [2], [0, 0, 0, 1, 1, 2], [0], [0]>} : vector<8x8x8xbf16>, vector<8x8x8xbf16>, vector<8x8x8xf32> -> vector<8x8x8xf32>
    "tpu.trace_stop"() : () -> ()
    %92 = vector.shape_cast %91 : vector<8x8x8xf32> to vector<64x8xf32>
    %93 = arith.truncf %92 : vector<64x8xf32> to vector<64x8xbf16>
    %94 = vector.extract_strided_slice %67 {offsets = [0, 0], sizes = [8, 32], strides = [1, 1]} : vector<32x32xbf16> to vector<8x32xbf16>
    %cst_44 = arith.constant dense<0.000000e+00> : vector<64x32xf32>
    %95 = tpu.matmul %93, %94, %cst_44 {dimension_numbers = #tpu.dot_dimension_numbers<[1], [0], [0], [1], [0, 0, 1, 1], [], []>} : vector<64x8xbf16>, vector<8x32xbf16>, vector<64x32xf32> -> vector<64x32xf32>
    %96 = arith.addf %68, %95 : vector<64x32xf32>
    %97 = vector.extract_strided_slice %62 {offsets = [0, 0, 8], sizes = [8, 8, 8], strides = [1, 1, 1]} : vector<8x8x32xf32> to vector<8x8x8xf32>
    %98 = arith.truncf %97 : vector<8x8x8xf32> to vector<8x8x8xbf16>
    %99 = vector.extract_strided_slice %64 {offsets = [0, 0, 8], sizes = [8, 8, 8], strides = [1, 1, 1]} : vector<8x8x32xf32> to vector<8x8x8xf32>
    %100 = arith.truncf %99 : vector<8x8x8xf32> to vector<8x8x8xbf16>
    "tpu.trace_start"() <{level = 10 : i32, message = "bqd,bkd->bqk"}> : () -> ()
    %cst_45 = arith.constant dense<0.000000e+00> : vector<8x8x8xf32>
    %101 = tpu.matmul %98, %100, %cst_45 {dimension_numbers = #tpu.dot_dimension_numbers<[2], [2], [1], [1], [0, 0, 0, 1, 1, 1], [0], [0]>} : vector<8x8x8xbf16>, vector<8x8x8xbf16>, vector<8x8x8xf32> -> vector<8x8x8xf32>
    %cst_46 = arith.constant -1.000000e+30 : f32
    "tpu.trace_stop"() : () -> ()
    %102 = vector.shape_cast %52 : vector<8x1x8xi1> to vector<8x1x8xi1>
    %103 = vector.broadcast %102 : vector<8x1x8xi1> to vector<8x8x8xi1>
    %104 = vector.broadcast %cst_46 : f32 to vector<8x8x8xf32>
    %105 = arith.select %103, %101, %104 : vector<8x8x8xi1>, vector<8x8x8xf32>
    %cst_47 = arith.constant dense<0xFF800000> : vector<8x8xf32>
    %106 = vector.multi_reduction <maximumf>, %105, %cst_47 [2] : vector<8x8x8xf32> to vector<8x8xf32>
    %107 = vector.shape_cast %106 : vector<8x8xf32> to vector<8x8x1xf32>
    %108 = vector.broadcast %107 : vector<8x8x1xf32> to vector<8x8x8xf32>
    %109 = arith.subf %105, %108 : vector<8x8x8xf32>
    %110 = math.exp %109 : vector<8x8x8xf32>
    %cst_48 = arith.constant dense<0.000000e+00> : vector<8x8xf32>
    %111 = vector.multi_reduction <add>, %110, %cst_48 [2] : vector<8x8x8xf32> to vector<8x8xf32>
    %112 = vector.shape_cast %111 : vector<8x8xf32> to vector<8x8x1xf32>
    %113 = tpu.reciprocal %112 {approx = true} : vector<8x8x1xf32> -> vector<8x8x1xf32>
    %114 = vector.broadcast %113 : vector<8x8x1xf32> to vector<8x8x8xf32>
    %115 = arith.mulf %110, %114 : vector<8x8x8xf32>
    %116 = arith.truncf %115 : vector<8x8x8xf32> to vector<8x8x8xbf16>
    %117 = vector.extract_strided_slice %66 {offsets = [0, 0, 8], sizes = [8, 8, 8], strides = [1, 1, 1]} : vector<8x8x32xf32> to vector<8x8x8xf32>
    %118 = arith.truncf %117 : vector<8x8x8xf32> to vector<8x8x8xbf16>
    "tpu.trace_start"() <{level = 10 : i32, message = "bqk,bkd->bqd"}> : () -> ()
    %cst_49 = arith.constant dense<0.000000e+00> : vector<8x8x8xf32>
    %119 = tpu.matmul %116, %118, %cst_49 {dimension_numbers = #tpu.dot_dimension_numbers<[2], [1], [1], [2], [0, 0, 0, 1, 1, 2], [0], [0]>} : vector<8x8x8xbf16>, vector<8x8x8xbf16>, vector<8x8x8xf32> -> vector<8x8x8xf32>
    "tpu.trace_stop"() : () -> ()
    %120 = vector.shape_cast %119 : vector<8x8x8xf32> to vector<64x8xf32>
    %121 = arith.truncf %120 : vector<64x8xf32> to vector<64x8xbf16>
    %122 = vector.extract_strided_slice %67 {offsets = [8, 0], sizes = [8, 32], strides = [1, 1]} : vector<32x32xbf16> to vector<8x32xbf16>
    %cst_50 = arith.constant dense<0.000000e+00> : vector<64x32xf32>
    %123 = tpu.matmul %121, %122, %cst_50 {dimension_numbers = #tpu.dot_dimension_numbers<[1], [0], [0], [1], [0, 0, 1, 1], [], []>} : vector<64x8xbf16>, vector<8x32xbf16>, vector<64x32xf32> -> vector<64x32xf32>
    %124 = arith.addf %96, %123 : vector<64x32xf32>
    %125 = vector.extract_strided_slice %62 {offsets = [0, 0, 16], sizes = [8, 8, 8], strides = [1, 1, 1]} : vector<8x8x32xf32> to vector<8x8x8xf32>
    %126 = arith.truncf %125 : vector<8x8x8xf32> to vector<8x8x8xbf16>
    %127 = vector.extract_strided_slice %64 {offsets = [0, 0, 16], sizes = [8, 8, 8], strides = [1, 1, 1]} : vector<8x8x32xf32> to vector<8x8x8xf32>
    %128 = arith.truncf %127 : vector<8x8x8xf32> to vector<8x8x8xbf16>
    "tpu.trace_start"() <{level = 10 : i32, message = "bqd,bkd->bqk"}> : () -> ()
    %cst_51 = arith.constant dense<0.000000e+00> : vector<8x8x8xf32>
    %129 = tpu.matmul %126, %128, %cst_51 {dimension_numbers = #tpu.dot_dimension_numbers<[2], [2], [1], [1], [0, 0, 0, 1, 1, 1], [0], [0]>} : vector<8x8x8xbf16>, vector<8x8x8xbf16>, vector<8x8x8xf32> -> vector<8x8x8xf32>
    %cst_52 = arith.constant -1.000000e+30 : f32
    "tpu.trace_stop"() : () -> ()
    %130 = vector.shape_cast %52 : vector<8x1x8xi1> to vector<8x1x8xi1>
    %131 = vector.broadcast %130 : vector<8x1x8xi1> to vector<8x8x8xi1>
    %132 = vector.broadcast %cst_52 : f32 to vector<8x8x8xf32>
    %133 = arith.select %131, %129, %132 : vector<8x8x8xi1>, vector<8x8x8xf32>
    %cst_53 = arith.constant dense<0xFF800000> : vector<8x8xf32>
    %134 = vector.multi_reduction <maximumf>, %133, %cst_53 [2] : vector<8x8x8xf32> to vector<8x8xf32>
    %135 = vector.shape_cast %134 : vector<8x8xf32> to vector<8x8x1xf32>
    %136 = vector.broadcast %135 : vector<8x8x1xf32> to vector<8x8x8xf32>
    %137 = arith.subf %133, %136 : vector<8x8x8xf32>
    %138 = math.exp %137 : vector<8x8x8xf32>
    %cst_54 = arith.constant dense<0.000000e+00> : vector<8x8xf32>
    %139 = vector.multi_reduction <add>, %138, %cst_54 [2] : vector<8x8x8xf32> to vector<8x8xf32>
    %140 = vector.shape_cast %139 : vector<8x8xf32> to vector<8x8x1xf32>
    %141 = tpu.reciprocal %140 {approx = true} : vector<8x8x1xf32> -> vector<8x8x1xf32>
    %142 = vector.broadcast %141 : vector<8x8x1xf32> to vector<8x8x8xf32>
    %143 = arith.mulf %138, %142 : vector<8x8x8xf32>
    %144 = arith.truncf %143 : vector<8x8x8xf32> to vector<8x8x8xbf16>
    %145 = vector.extract_strided_slice %66 {offsets = [0, 0, 16], sizes = [8, 8, 8], strides = [1, 1, 1]} : vector<8x8x32xf32> to vector<8x8x8xf32>
    %146 = arith.truncf %145 : vector<8x8x8xf32> to vector<8x8x8xbf16>
    "tpu.trace_start"() <{level = 10 : i32, message = "bqk,bkd->bqd"}> : () -> ()
    %cst_55 = arith.constant dense<0.000000e+00> : vector<8x8x8xf32>
    %147 = tpu.matmul %144, %146, %cst_55 {dimension_numbers = #tpu.dot_dimension_numbers<[2], [1], [1], [2], [0, 0, 0, 1, 1, 2], [0], [0]>} : vector<8x8x8xbf16>, vector<8x8x8xbf16>, vector<8x8x8xf32> -> vector<8x8x8xf32>
    "tpu.trace_stop"() : () -> ()
    %148 = vector.shape_cast %147 : vector<8x8x8xf32> to vector<64x8xf32>
    %149 = arith.truncf %148 : vector<64x8xf32> to vector<64x8xbf16>
    %150 = vector.extract_strided_slice %67 {offsets = [16, 0], sizes = [8, 32], strides = [1, 1]} : vector<32x32xbf16> to vector<8x32xbf16>
    %cst_56 = arith.constant dense<0.000000e+00> : vector<64x32xf32>
    %151 = tpu.matmul %149, %150, %cst_56 {dimension_numbers = #tpu.dot_dimension_numbers<[1], [0], [0], [1], [0, 0, 1, 1], [], []>} : vector<64x8xbf16>, vector<8x32xbf16>, vector<64x32xf32> -> vector<64x32xf32>
    %152 = arith.addf %124, %151 : vector<64x32xf32>
    %153 = vector.extract_strided_slice %62 {offsets = [0, 0, 24], sizes = [8, 8, 8], strides = [1, 1, 1]} : vector<8x8x32xf32> to vector<8x8x8xf32>
    %154 = arith.truncf %153 : vector<8x8x8xf32> to vector<8x8x8xbf16>
    %155 = vector.extract_strided_slice %64 {offsets = [0, 0, 24], sizes = [8, 8, 8], strides = [1, 1, 1]} : vector<8x8x32xf32> to vector<8x8x8xf32>
    %156 = arith.truncf %155 : vector<8x8x8xf32> to vector<8x8x8xbf16>
    "tpu.trace_start"() <{level = 10 : i32, message = "bqd,bkd->bqk"}> : () -> ()
    %cst_57 = arith.constant dense<0.000000e+00> : vector<8x8x8xf32>
    %157 = tpu.matmul %154, %156, %cst_57 {dimension_numbers = #tpu.dot_dimension_numbers<[2], [2], [1], [1], [0, 0, 0, 1, 1, 1], [0], [0]>} : vector<8x8x8xbf16>, vector<8x8x8xbf16>, vector<8x8x8xf32> -> vector<8x8x8xf32>
    %cst_58 = arith.constant -1.000000e+30 : f32
    "tpu.trace_stop"() : () -> ()
    %158 = vector.shape_cast %52 : vector<8x1x8xi1> to vector<8x1x8xi1>
    %159 = vector.broadcast %158 : vector<8x1x8xi1> to vector<8x8x8xi1>
    %160 = vector.broadcast %cst_58 : f32 to vector<8x8x8xf32>
    %161 = arith.select %159, %157, %160 : vector<8x8x8xi1>, vector<8x8x8xf32>
    %cst_59 = arith.constant dense<0xFF800000> : vector<8x8xf32>
    %162 = vector.multi_reduction <maximumf>, %161, %cst_59 [2] : vector<8x8x8xf32> to vector<8x8xf32>
    %163 = vector.shape_cast %162 : vector<8x8xf32> to vector<8x8x1xf32>
    %164 = vector.broadcast %163 : vector<8x8x1xf32> to vector<8x8x8xf32>
    %165 = arith.subf %161, %164 : vector<8x8x8xf32>
    %166 = math.exp %165 : vector<8x8x8xf32>
    %cst_60 = arith.constant dense<0.000000e+00> : vector<8x8xf32>
    %167 = vector.multi_reduction <add>, %166, %cst_60 [2] : vector<8x8x8xf32> to vector<8x8xf32>
    %168 = vector.shape_cast %167 : vector<8x8xf32> to vector<8x8x1xf32>
    %169 = tpu.reciprocal %168 {approx = true} : vector<8x8x1xf32> -> vector<8x8x1xf32>
    %170 = vector.broadcast %169 : vector<8x8x1xf32> to vector<8x8x8xf32>
    %171 = arith.mulf %166, %170 : vector<8x8x8xf32>
    %172 = arith.truncf %171 : vector<8x8x8xf32> to vector<8x8x8xbf16>
    %173 = vector.extract_strided_slice %66 {offsets = [0, 0, 24], sizes = [8, 8, 8], strides = [1, 1, 1]} : vector<8x8x32xf32> to vector<8x8x8xf32>
    %174 = arith.truncf %173 : vector<8x8x8xf32> to vector<8x8x8xbf16>
    "tpu.trace_start"() <{level = 10 : i32, message = "bqk,bkd->bqd"}> : () -> ()
    %cst_61 = arith.constant dense<0.000000e+00> : vector<8x8x8xf32>
    %175 = tpu.matmul %172, %174, %cst_61 {dimension_numbers = #tpu.dot_dimension_numbers<[2], [1], [1], [2], [0, 0, 0, 1, 1, 2], [0], [0]>} : vector<8x8x8xbf16>, vector<8x8x8xbf16>, vector<8x8x8xf32> -> vector<8x8x8xf32>
    "tpu.trace_stop"() : () -> ()
    %176 = vector.shape_cast %175 : vector<8x8x8xf32> to vector<64x8xf32>
    %177 = arith.truncf %176 : vector<64x8xf32> to vector<64x8xbf16>
    %178 = vector.extract_strided_slice %67 {offsets = [24, 0], sizes = [8, 32], strides = [1, 1]} : vector<32x32xbf16> to vector<8x32xbf16>
    %cst_62 = arith.constant dense<0.000000e+00> : vector<64x32xf32>
    %179 = tpu.matmul %177, %178, %cst_62 {dimension_numbers = #tpu.dot_dimension_numbers<[1], [0], [0], [1], [0, 0, 1, 1], [], []>} : vector<64x8xbf16>, vector<8x32xbf16>, vector<64x32xf32> -> vector<64x32xf32>
    %180 = arith.addf %152, %179 : vector<64x32xf32>
    %c0_63 = arith.constant 0 : index
    %c0_64 = arith.constant 0 : index
    %181 = vector.load %arg14[%c0_63, %c0_64] : memref<1x32xf32, #tpu.memory_space<vmem>>, vector<1x32xf32>
    %182 = vector.broadcast %181 : vector<1x32xf32> to vector<64x32xf32>
    %183 = arith.addf %180, %182 : vector<64x32xf32>
    %184 = arith.addf %48, %183 : vector<64x32xf32>
    %c0_65 = arith.constant 0 : index
    %c0_66 = arith.constant 0 : index
    %185 = vector.load %arg15[%c0_65, %c0_66] : memref<1x32xf32, #tpu.memory_space<vmem>>, vector<1x32xf32>
    %c0_67 = arith.constant 0 : index
    %c0_68 = arith.constant 0 : index
    %186 = vector.load %arg16[%c0_67, %c0_68] : memref<1x32xf32, #tpu.memory_space<vmem>>, vector<1x32xf32>
    %cst_69 = arith.constant dense<0.000000e+00> : vector<64xf32>
    %187 = vector.multi_reduction <add>, %184, %cst_69 [1] : vector<64x32xf32> to vector<64xf32>
    %188 = vector.shape_cast %187 : vector<64xf32> to vector<64x1xf32>
    %cst_70 = arith.constant 3.200000e+01 : f32
    %189 = vector.broadcast %cst_70 : f32 to vector<64x1xf32>
    %190 = arith.divf %188, %189 : vector<64x1xf32>
    %191 = vector.broadcast %190 : vector<64x1xf32> to vector<64x32xf32>
    %192 = arith.subf %184, %191 : vector<64x32xf32>
    %193 = arith.mulf %192, %192 : vector<64x32xf32>
    %cst_71 = arith.constant dense<0.000000e+00> : vector<64xf32>
    %194 = vector.multi_reduction <add>, %193, %cst_71 [1] : vector<64x32xf32> to vector<64xf32>
    %195 = vector.shape_cast %194 : vector<64xf32> to vector<64x1xf32>
    %cst_72 = arith.constant 3.200000e+01 : f32
    %196 = vector.broadcast %cst_72 : f32 to vector<64x1xf32>
    %197 = arith.divf %195, %196 : vector<64x1xf32>
    %198 = vector.broadcast %190 : vector<64x1xf32> to vector<64x32xf32>
    %199 = arith.subf %184, %198 : vector<64x32xf32>
    %cst_73 = arith.constant 9.99999974E-6 : f32
    %200 = vector.broadcast %cst_73 : f32 to vector<64x1xf32>
    %201 = arith.addf %197, %200 : vector<64x1xf32>
    %202 = math.rsqrt %201 : vector<64x1xf32>
    %203 = vector.broadcast %202 : vector<64x1xf32> to vector<64x32xf32>
    %204 = arith.mulf %199, %203 : vector<64x32xf32>
    %205 = vector.broadcast %185 : vector<1x32xf32> to vector<64x32xf32>
    %206 = arith.mulf %204, %205 : vector<64x32xf32>
    %207 = vector.broadcast %186 : vector<1x32xf32> to vector<64x32xf32>
    %208 = arith.addf %206, %207 : vector<64x32xf32>
    %209 = arith.truncf %208 : vector<64x32xf32> to vector<64x32xbf16>
    %c0_74 = arith.constant 0 : index
    %c0_75 = arith.constant 0 : index
    %210 = vector.load %arg17[%c0_74, %c0_75] : memref<32x64xbf16, #tpu.memory_space<vmem>>, vector<32x64xbf16>
    %cst_76 = arith.constant dense<0.000000e+00> : vector<64x64xf32>
    %211 = tpu.matmul %209, %210, %cst_76 {dimension_numbers = #tpu.dot_dimension_numbers<[1], [0], [0], [1], [0, 0, 1, 1], [], []>} : vector<64x32xbf16>, vector<32x64xbf16>, vector<64x64xf32> -> vector<64x64xf32>
    %c0_77 = arith.constant 0 : index
    %c0_78 = arith.constant 0 : index
    %212 = vector.load %arg18[%c0_77, %c0_78] : memref<1x64xf32, #tpu.memory_space<vmem>>, vector<1x64xf32>
    %213 = vector.broadcast %212 : vector<1x64xf32> to vector<64x64xf32>
    %214 = arith.addf %211, %213 : vector<64x64xf32>
    %cst_79 = arith.constant 0.000000e+00 : f32
    %215 = vector.broadcast %cst_79 : f32 to vector<64x64xf32>
    %216 = arith.maximumf %214, %215 : vector<64x64xf32>
    %217 = arith.truncf %216 : vector<64x64xf32> to vector<64x64xbf16>
    %c0_80 = arith.constant 0 : index
    %c0_81 = arith.constant 0 : index
    %218 = vector.load %arg19[%c0_80, %c0_81] : memref<64x32xbf16, #tpu.memory_space<vmem>>, vector<64x32xbf16>
    %cst_82 = arith.constant dense<0.000000e+00> : vector<64x32xf32>
    %219 = tpu.matmul %217, %218, %cst_82 {dimension_numbers = #tpu.dot_dimension_numbers<[1], [0], [0], [1], [0, 0, 1, 1], [], []>} : vector<64x64xbf16>, vector<64x32xbf16>, vector<64x32xf32> -> vector<64x32xf32>
    %c0_83 = arith.constant 0 : index
    %c0_84 = arith.constant 0 : index
    %220 = vector.load %arg20[%c0_83, %c0_84] : memref<1x32xf32, #tpu.memory_space<vmem>>, vector<1x32xf32>
    %221 = vector.broadcast %220 : vector<1x32xf32> to vector<64x32xf32>
    %222 = arith.addf %219, %221 : vector<64x32xf32>
    %223 = arith.addf %208, %222 : vector<64x32xf32>
    %c0_85 = arith.constant 0 : index
    %c0_86 = arith.constant 0 : index
    %224 = vector.load %arg21[%c0_85, %c0_86] : memref<1x32xf32, #tpu.memory_space<vmem>>, vector<1x32xf32>
    %c0_87 = arith.constant 0 : index
    %c0_88 = arith.constant 0 : index
    %225 = vector.load %arg22[%c0_87, %c0_88] : memref<1x32xf32, #tpu.memory_space<vmem>>, vector<1x32xf32>
    %cst_89 = arith.constant dense<0.000000e+00> : vector<64xf32>
    %226 = vector.multi_reduction <add>, %223, %cst_89 [1] : vector<64x32xf32> to vector<64xf32>
    %227 = vector.shape_cast %226 : vector<64xf32> to vector<64x1xf32>
    %cst_90 = arith.constant 3.200000e+01 : f32
    %228 = vector.broadcast %cst_90 : f32 to vector<64x1xf32>
    %229 = arith.divf %227, %228 : vector<64x1xf32>
    %230 = vector.broadcast %229 : vector<64x1xf32> to vector<64x32xf32>
    %231 = arith.subf %223, %230 : vector<64x32xf32>
    %232 = arith.mulf %231, %231 : vector<64x32xf32>
    %cst_91 = arith.constant dense<0.000000e+00> : vector<64xf32>
    %233 = vector.multi_reduction <add>, %232, %cst_91 [1] : vector<64x32xf32> to vector<64xf32>
    %234 = vector.shape_cast %233 : vector<64xf32> to vector<64x1xf32>
    %cst_92 = arith.constant 3.200000e+01 : f32
    %235 = vector.broadcast %cst_92 : f32 to vector<64x1xf32>
    %236 = arith.divf %234, %235 : vector<64x1xf32>
    %237 = vector.broadcast %229 : vector<64x1xf32> to vector<64x32xf32>
    %238 = arith.subf %223, %237 : vector<64x32xf32>
    %cst_93 = arith.constant 9.99999974E-6 : f32
    %239 = vector.broadcast %cst_93 : f32 to vector<64x1xf32>
    %240 = arith.addf %236, %239 : vector<64x1xf32>
    %241 = math.rsqrt %240 : vector<64x1xf32>
    %242 = vector.broadcast %241 : vector<64x1xf32> to vector<64x32xf32>
    %243 = arith.mulf %238, %242 : vector<64x32xf32>
    %244 = vector.broadcast %224 : vector<1x32xf32> to vector<64x32xf32>
    %245 = arith.mulf %243, %244 : vector<64x32xf32>
    %246 = vector.broadcast %225 : vector<1x32xf32> to vector<64x32xf32>
    %247 = arith.addf %245, %246 : vector<64x32xf32>
    %248 = arith.truncf %247 : vector<64x32xf32> to vector<64x32xbf16>
    %c0_94 = arith.constant 0 : index
    %c0_95 = arith.constant 0 : index
    %249 = vector.load %arg23[%c0_94, %c0_95] : memref<32x96xbf16, #tpu.memory_space<vmem>>, vector<32x96xbf16>
    %cst_96 = arith.constant dense<0.000000e+00> : vector<64x96xf32>
    %250 = tpu.matmul %248, %249, %cst_96 {dimension_numbers = #tpu.dot_dimension_numbers<[1], [0], [0], [1], [0, 0, 1, 1], [], []>} : vector<64x32xbf16>, vector<32x96xbf16>, vector<64x96xf32> -> vector<64x96xf32>
    %c0_97 = arith.constant 0 : index
    %c0_98 = arith.constant 0 : index
    %251 = vector.load %arg24[%c0_97, %c0_98] : memref<1x96xf32, #tpu.memory_space<vmem>>, vector<1x96xf32>
    %252 = vector.broadcast %251 : vector<1x96xf32> to vector<64x96xf32>
    %253 = arith.addf %250, %252 : vector<64x96xf32>
    %254 = vector.extract_strided_slice %253 {offsets = [0, 0], sizes = [64, 32], strides = [1, 1]} : vector<64x96xf32> to vector<64x32xf32>
    %cst_99 = arith.constant 0.353553385 : f32
    %255 = vector.broadcast %cst_99 : f32 to vector<64x32xf32>
    %256 = arith.mulf %254, %255 : vector<64x32xf32>
    %257 = vector.shape_cast %256 : vector<64x32xf32> to vector<8x8x32xf32>
    %258 = vector.extract_strided_slice %253 {offsets = [0, 32], sizes = [64, 32], strides = [1, 1]} : vector<64x96xf32> to vector<64x32xf32>
    %259 = vector.shape_cast %258 : vector<64x32xf32> to vector<8x8x32xf32>
    %260 = vector.extract_strided_slice %253 {offsets = [0, 64], sizes = [64, 32], strides = [1, 1]} : vector<64x96xf32> to vector<64x32xf32>
    %261 = vector.shape_cast %260 : vector<64x32xf32> to vector<8x8x32xf32>
    %c0_100 = arith.constant 0 : index
    %c0_101 = arith.constant 0 : index
    %262 = vector.load %arg25[%c0_100, %c0_101] : memref<32x32xbf16, #tpu.memory_space<vmem>>, vector<32x32xbf16>
    %cst_102 = arith.constant 0.000000e+00 : f32
    %263 = vector.broadcast %cst_102 : f32 to vector<64x32xf32>
    %264 = vector.extract_strided_slice %257 {offsets = [0, 0, 0], sizes = [8, 8, 8], strides = [1, 1, 1]} : vector<8x8x32xf32> to vector<8x8x8xf32>
    %265 = arith.truncf %264 : vector<8x8x8xf32> to vector<8x8x8xbf16>
    %266 = vector.extract_strided_slice %259 {offsets = [0, 0, 0], sizes = [8, 8, 8], strides = [1, 1, 1]} : vector<8x8x32xf32> to vector<8x8x8xf32>
    %267 = arith.truncf %266 : vector<8x8x8xf32> to vector<8x8x8xbf16>
    "tpu.trace_start"() <{level = 10 : i32, message = "bqd,bkd->bqk"}> : () -> ()
    %cst_103 = arith.constant dense<0.000000e+00> : vector<8x8x8xf32>
    %268 = tpu.matmul %265, %267, %cst_103 {dimension_numbers = #tpu.dot_dimension_numbers<[2], [2], [1], [1], [0, 0, 0, 1, 1, 1], [0], [0]>} : vector<8x8x8xbf16>, vector<8x8x8xbf16>, vector<8x8x8xf32> -> vector<8x8x8xf32>
    %cst_104 = arith.constant -1.000000e+30 : f32
    "tpu.trace_stop"() : () -> ()
    %269 = vector.shape_cast %52 : vector<8x1x8xi1> to vector<8x1x8xi1>
    %270 = vector.broadcast %269 : vector<8x1x8xi1> to vector<8x8x8xi1>
    %271 = vector.broadcast %cst_104 : f32 to vector<8x8x8xf32>
    %272 = arith.select %270, %268, %271 : vector<8x8x8xi1>, vector<8x8x8xf32>
    %cst_105 = arith.constant dense<0xFF800000> : vector<8x8xf32>
    %273 = vector.multi_reduction <maximumf>, %272, %cst_105 [2] : vector<8x8x8xf32> to vector<8x8xf32>
    %274 = vector.shape_cast %273 : vector<8x8xf32> to vector<8x8x1xf32>
    %275 = vector.broadcast %274 : vector<8x8x1xf32> to vector<8x8x8xf32>
    %276 = arith.subf %272, %275 : vector<8x8x8xf32>
    %277 = math.exp %276 : vector<8x8x8xf32>
    %cst_106 = arith.constant dense<0.000000e+00> : vector<8x8xf32>
    %278 = vector.multi_reduction <add>, %277, %cst_106 [2] : vector<8x8x8xf32> to vector<8x8xf32>
    %279 = vector.shape_cast %278 : vector<8x8xf32> to vector<8x8x1xf32>
    %280 = tpu.reciprocal %279 {approx = true} : vector<8x8x1xf32> -> vector<8x8x1xf32>
    %281 = vector.broadcast %280 : vector<8x8x1xf32> to vector<8x8x8xf32>
    %282 = arith.mulf %277, %281 : vector<8x8x8xf32>
    %283 = arith.truncf %282 : vector<8x8x8xf32> to vector<8x8x8xbf16>
    %284 = vector.extract_strided_slice %261 {offsets = [0, 0, 0], sizes = [8, 8, 8], strides = [1, 1, 1]} : vector<8x8x32xf32> to vector<8x8x8xf32>
    %285 = arith.truncf %284 : vector<8x8x8xf32> to vector<8x8x8xbf16>
    "tpu.trace_start"() <{level = 10 : i32, message = "bqk,bkd->bqd"}> : () -> ()
    %cst_107 = arith.constant dense<0.000000e+00> : vector<8x8x8xf32>
    %286 = tpu.matmul %283, %285, %cst_107 {dimension_numbers = #tpu.dot_dimension_numbers<[2], [1], [1], [2], [0, 0, 0, 1, 1, 2], [0], [0]>} : vector<8x8x8xbf16>, vector<8x8x8xbf16>, vector<8x8x8xf32> -> vector<8x8x8xf32>
    "tpu.trace_stop"() : () -> ()
    %287 = vector.shape_cast %286 : vector<8x8x8xf32> to vector<64x8xf32>
    %288 = arith.truncf %287 : vector<64x8xf32> to vector<64x8xbf16>
    %289 = vector.extract_strided_slice %262 {offsets = [0, 0], sizes = [8, 32], strides = [1, 1]} : vector<32x32xbf16> to vector<8x32xbf16>
    %cst_108 = arith.constant dense<0.000000e+00> : vector<64x32xf32>
    %290 = tpu.matmul %288, %289, %cst_108 {dimension_numbers = #tpu.dot_dimension_numbers<[1], [0], [0], [1], [0, 0, 1, 1], [], []>} : vector<64x8xbf16>, vector<8x32xbf16>, vector<64x32xf32> -> vector<64x32xf32>
    %291 = arith.addf %263, %290 : vector<64x32xf32>
    %292 = vector.extract_strided_slice %257 {offsets = [0, 0, 8], sizes = [8, 8, 8], strides = [1, 1, 1]} : vector<8x8x32xf32> to vector<8x8x8xf32>
    %293 = arith.truncf %292 : vector<8x8x8xf32> to vector<8x8x8xbf16>
    %294 = vector.extract_strided_slice %259 {offsets = [0, 0, 8], sizes = [8, 8, 8], strides = [1, 1, 1]} : vector<8x8x32xf32> to vector<8x8x8xf32>
    %295 = arith.truncf %294 : vector<8x8x8xf32> to vector<8x8x8xbf16>
    "tpu.trace_start"() <{level = 10 : i32, message = "bqd,bkd->bqk"}> : () -> ()
    %cst_109 = arith.constant dense<0.000000e+00> : vector<8x8x8xf32>
    %296 = tpu.matmul %293, %295, %cst_109 {dimension_numbers = #tpu.dot_dimension_numbers<[2], [2], [1], [1], [0, 0, 0, 1, 1, 1], [0], [0]>} : vector<8x8x8xbf16>, vector<8x8x8xbf16>, vector<8x8x8xf32> -> vector<8x8x8xf32>
    %cst_110 = arith.constant -1.000000e+30 : f32
    "tpu.trace_stop"() : () -> ()
    %297 = vector.shape_cast %52 : vector<8x1x8xi1> to vector<8x1x8xi1>
    %298 = vector.broadcast %297 : vector<8x1x8xi1> to vector<8x8x8xi1>
    %299 = vector.broadcast %cst_110 : f32 to vector<8x8x8xf32>
    %300 = arith.select %298, %296, %299 : vector<8x8x8xi1>, vector<8x8x8xf32>
    %cst_111 = arith.constant dense<0xFF800000> : vector<8x8xf32>
    %301 = vector.multi_reduction <maximumf>, %300, %cst_111 [2] : vector<8x8x8xf32> to vector<8x8xf32>
    %302 = vector.shape_cast %301 : vector<8x8xf32> to vector<8x8x1xf32>
    %303 = vector.broadcast %302 : vector<8x8x1xf32> to vector<8x8x8xf32>
    %304 = arith.subf %300, %303 : vector<8x8x8xf32>
    %305 = math.exp %304 : vector<8x8x8xf32>
    %cst_112 = arith.constant dense<0.000000e+00> : vector<8x8xf32>
    %306 = vector.multi_reduction <add>, %305, %cst_112 [2] : vector<8x8x8xf32> to vector<8x8xf32>
    %307 = vector.shape_cast %306 : vector<8x8xf32> to vector<8x8x1xf32>
    %308 = tpu.reciprocal %307 {approx = true} : vector<8x8x1xf32> -> vector<8x8x1xf32>
    %309 = vector.broadcast %308 : vector<8x8x1xf32> to vector<8x8x8xf32>
    %310 = arith.mulf %305, %309 : vector<8x8x8xf32>
    %311 = arith.truncf %310 : vector<8x8x8xf32> to vector<8x8x8xbf16>
    %312 = vector.extract_strided_slice %261 {offsets = [0, 0, 8], sizes = [8, 8, 8], strides = [1, 1, 1]} : vector<8x8x32xf32> to vector<8x8x8xf32>
    %313 = arith.truncf %312 : vector<8x8x8xf32> to vector<8x8x8xbf16>
    "tpu.trace_start"() <{level = 10 : i32, message = "bqk,bkd->bqd"}> : () -> ()
    %cst_113 = arith.constant dense<0.000000e+00> : vector<8x8x8xf32>
    %314 = tpu.matmul %311, %313, %cst_113 {dimension_numbers = #tpu.dot_dimension_numbers<[2], [1], [1], [2], [0, 0, 0, 1, 1, 2], [0], [0]>} : vector<8x8x8xbf16>, vector<8x8x8xbf16>, vector<8x8x8xf32> -> vector<8x8x8xf32>
    "tpu.trace_stop"() : () -> ()
    %315 = vector.shape_cast %314 : vector<8x8x8xf32> to vector<64x8xf32>
    %316 = arith.truncf %315 : vector<64x8xf32> to vector<64x8xbf16>
    %317 = vector.extract_strided_slice %262 {offsets = [8, 0], sizes = [8, 32], strides = [1, 1]} : vector<32x32xbf16> to vector<8x32xbf16>
    %cst_114 = arith.constant dense<0.000000e+00> : vector<64x32xf32>
    %318 = tpu.matmul %316, %317, %cst_114 {dimension_numbers = #tpu.dot_dimension_numbers<[1], [0], [0], [1], [0, 0, 1, 1], [], []>} : vector<64x8xbf16>, vector<8x32xbf16>, vector<64x32xf32> -> vector<64x32xf32>
    %319 = arith.addf %291, %318 : vector<64x32xf32>
    %320 = vector.extract_strided_slice %257 {offsets = [0, 0, 16], sizes = [8, 8, 8], strides = [1, 1, 1]} : vector<8x8x32xf32> to vector<8x8x8xf32>
    %321 = arith.truncf %320 : vector<8x8x8xf32> to vector<8x8x8xbf16>
    %322 = vector.extract_strided_slice %259 {offsets = [0, 0, 16], sizes = [8, 8, 8], strides = [1, 1, 1]} : vector<8x8x32xf32> to vector<8x8x8xf32>
    %323 = arith.truncf %322 : vector<8x8x8xf32> to vector<8x8x8xbf16>
    "tpu.trace_start"() <{level = 10 : i32, message = "bqd,bkd->bqk"}> : () -> ()
    %cst_115 = arith.constant dense<0.000000e+00> : vector<8x8x8xf32>
    %324 = tpu.matmul %321, %323, %cst_115 {dimension_numbers = #tpu.dot_dimension_numbers<[2], [2], [1], [1], [0, 0, 0, 1, 1, 1], [0], [0]>} : vector<8x8x8xbf16>, vector<8x8x8xbf16>, vector<8x8x8xf32> -> vector<8x8x8xf32>
    %cst_116 = arith.constant -1.000000e+30 : f32
    "tpu.trace_stop"() : () -> ()
    %325 = vector.shape_cast %52 : vector<8x1x8xi1> to vector<8x1x8xi1>
    %326 = vector.broadcast %325 : vector<8x1x8xi1> to vector<8x8x8xi1>
    %327 = vector.broadcast %cst_116 : f32 to vector<8x8x8xf32>
    %328 = arith.select %326, %324, %327 : vector<8x8x8xi1>, vector<8x8x8xf32>
    %cst_117 = arith.constant dense<0xFF800000> : vector<8x8xf32>
    %329 = vector.multi_reduction <maximumf>, %328, %cst_117 [2] : vector<8x8x8xf32> to vector<8x8xf32>
    %330 = vector.shape_cast %329 : vector<8x8xf32> to vector<8x8x1xf32>
    %331 = vector.broadcast %330 : vector<8x8x1xf32> to vector<8x8x8xf32>
    %332 = arith.subf %328, %331 : vector<8x8x8xf32>
    %333 = math.exp %332 : vector<8x8x8xf32>
    %cst_118 = arith.constant dense<0.000000e+00> : vector<8x8xf32>
    %334 = vector.multi_reduction <add>, %333, %cst_118 [2] : vector<8x8x8xf32> to vector<8x8xf32>
    %335 = vector.shape_cast %334 : vector<8x8xf32> to vector<8x8x1xf32>
    %336 = tpu.reciprocal %335 {approx = true} : vector<8x8x1xf32> -> vector<8x8x1xf32>
    %337 = vector.broadcast %336 : vector<8x8x1xf32> to vector<8x8x8xf32>
    %338 = arith.mulf %333, %337 : vector<8x8x8xf32>
    %339 = arith.truncf %338 : vector<8x8x8xf32> to vector<8x8x8xbf16>
    %340 = vector.extract_strided_slice %261 {offsets = [0, 0, 16], sizes = [8, 8, 8], strides = [1, 1, 1]} : vector<8x8x32xf32> to vector<8x8x8xf32>
    %341 = arith.truncf %340 : vector<8x8x8xf32> to vector<8x8x8xbf16>
    "tpu.trace_start"() <{level = 10 : i32, message = "bqk,bkd->bqd"}> : () -> ()
    %cst_119 = arith.constant dense<0.000000e+00> : vector<8x8x8xf32>
    %342 = tpu.matmul %339, %341, %cst_119 {dimension_numbers = #tpu.dot_dimension_numbers<[2], [1], [1], [2], [0, 0, 0, 1, 1, 2], [0], [0]>} : vector<8x8x8xbf16>, vector<8x8x8xbf16>, vector<8x8x8xf32> -> vector<8x8x8xf32>
    "tpu.trace_stop"() : () -> ()
    %343 = vector.shape_cast %342 : vector<8x8x8xf32> to vector<64x8xf32>
    %344 = arith.truncf %343 : vector<64x8xf32> to vector<64x8xbf16>
    %345 = vector.extract_strided_slice %262 {offsets = [16, 0], sizes = [8, 32], strides = [1, 1]} : vector<32x32xbf16> to vector<8x32xbf16>
    %cst_120 = arith.constant dense<0.000000e+00> : vector<64x32xf32>
    %346 = tpu.matmul %344, %345, %cst_120 {dimension_numbers = #tpu.dot_dimension_numbers<[1], [0], [0], [1], [0, 0, 1, 1], [], []>} : vector<64x8xbf16>, vector<8x32xbf16>, vector<64x32xf32> -> vector<64x32xf32>
    %347 = arith.addf %319, %346 : vector<64x32xf32>
    %348 = vector.extract_strided_slice %257 {offsets = [0, 0, 24], sizes = [8, 8, 8], strides = [1, 1, 1]} : vector<8x8x32xf32> to vector<8x8x8xf32>
    %349 = arith.truncf %348 : vector<8x8x8xf32> to vector<8x8x8xbf16>
    %350 = vector.extract_strided_slice %259 {offsets = [0, 0, 24], sizes = [8, 8, 8], strides = [1, 1, 1]} : vector<8x8x32xf32> to vector<8x8x8xf32>
    %351 = arith.truncf %350 : vector<8x8x8xf32> to vector<8x8x8xbf16>
    "tpu.trace_start"() <{level = 10 : i32, message = "bqd,bkd->bqk"}> : () -> ()
    %cst_121 = arith.constant dense<0.000000e+00> : vector<8x8x8xf32>
    %352 = tpu.matmul %349, %351, %cst_121 {dimension_numbers = #tpu.dot_dimension_numbers<[2], [2], [1], [1], [0, 0, 0, 1, 1, 1], [0], [0]>} : vector<8x8x8xbf16>, vector<8x8x8xbf16>, vector<8x8x8xf32> -> vector<8x8x8xf32>
    %cst_122 = arith.constant -1.000000e+30 : f32
    "tpu.trace_stop"() : () -> ()
    %353 = vector.shape_cast %52 : vector<8x1x8xi1> to vector<8x1x8xi1>
    %354 = vector.broadcast %353 : vector<8x1x8xi1> to vector<8x8x8xi1>
    %355 = vector.broadcast %cst_122 : f32 to vector<8x8x8xf32>
    %356 = arith.select %354, %352, %355 : vector<8x8x8xi1>, vector<8x8x8xf32>
    %cst_123 = arith.constant dense<0xFF800000> : vector<8x8xf32>
    %357 = vector.multi_reduction <maximumf>, %356, %cst_123 [2] : vector<8x8x8xf32> to vector<8x8xf32>
    %358 = vector.shape_cast %357 : vector<8x8xf32> to vector<8x8x1xf32>
    %359 = vector.broadcast %358 : vector<8x8x1xf32> to vector<8x8x8xf32>
    %360 = arith.subf %356, %359 : vector<8x8x8xf32>
    %361 = math.exp %360 : vector<8x8x8xf32>
    %cst_124 = arith.constant dense<0.000000e+00> : vector<8x8xf32>
    %362 = vector.multi_reduction <add>, %361, %cst_124 [2] : vector<8x8x8xf32> to vector<8x8xf32>
    %363 = vector.shape_cast %362 : vector<8x8xf32> to vector<8x8x1xf32>
    %364 = tpu.reciprocal %363 {approx = true} : vector<8x8x1xf32> -> vector<8x8x1xf32>
    %365 = vector.broadcast %364 : vector<8x8x1xf32> to vector<8x8x8xf32>
    %366 = arith.mulf %361, %365 : vector<8x8x8xf32>
    %367 = arith.truncf %366 : vector<8x8x8xf32> to vector<8x8x8xbf16>
    %368 = vector.extract_strided_slice %261 {offsets = [0, 0, 24], sizes = [8, 8, 8], strides = [1, 1, 1]} : vector<8x8x32xf32> to vector<8x8x8xf32>
    %369 = arith.truncf %368 : vector<8x8x8xf32> to vector<8x8x8xbf16>
    "tpu.trace_start"() <{level = 10 : i32, message = "bqk,bkd->bqd"}> : () -> ()
    %cst_125 = arith.constant dense<0.000000e+00> : vector<8x8x8xf32>
    %370 = tpu.matmul %367, %369, %cst_125 {dimension_numbers = #tpu.dot_dimension_numbers<[2], [1], [1], [2], [0, 0, 0, 1, 1, 2], [0], [0]>} : vector<8x8x8xbf16>, vector<8x8x8xbf16>, vector<8x8x8xf32> -> vector<8x8x8xf32>
    "tpu.trace_stop"() : () -> ()
    %371 = vector.shape_cast %370 : vector<8x8x8xf32> to vector<64x8xf32>
    %372 = arith.truncf %371 : vector<64x8xf32> to vector<64x8xbf16>
    %373 = vector.extract_strided_slice %262 {offsets = [24, 0], sizes = [8, 32], strides = [1, 1]} : vector<32x32xbf16> to vector<8x32xbf16>
    %cst_126 = arith.constant dense<0.000000e+00> : vector<64x32xf32>
    %374 = tpu.matmul %372, %373, %cst_126 {dimension_numbers = #tpu.dot_dimension_numbers<[1], [0], [0], [1], [0, 0, 1, 1], [], []>} : vector<64x8xbf16>, vector<8x32xbf16>, vector<64x32xf32> -> vector<64x32xf32>
    %375 = arith.addf %347, %374 : vector<64x32xf32>
    %c0_127 = arith.constant 0 : index
    %c0_128 = arith.constant 0 : index
    %376 = vector.load %arg26[%c0_127, %c0_128] : memref<1x32xf32, #tpu.memory_space<vmem>>, vector<1x32xf32>
    %377 = vector.broadcast %376 : vector<1x32xf32> to vector<64x32xf32>
    %378 = arith.addf %375, %377 : vector<64x32xf32>
    %379 = arith.addf %247, %378 : vector<64x32xf32>
    %c0_129 = arith.constant 0 : index
    %c0_130 = arith.constant 0 : index
    %380 = vector.load %arg27[%c0_129, %c0_130] : memref<1x32xf32, #tpu.memory_space<vmem>>, vector<1x32xf32>
    %c0_131 = arith.constant 0 : index
    %c0_132 = arith.constant 0 : index
    %381 = vector.load %arg28[%c0_131, %c0_132] : memref<1x32xf32, #tpu.memory_space<vmem>>, vector<1x32xf32>
    %cst_133 = arith.constant dense<0.000000e+00> : vector<64xf32>
    %382 = vector.multi_reduction <add>, %379, %cst_133 [1] : vector<64x32xf32> to vector<64xf32>
    %383 = vector.shape_cast %382 : vector<64xf32> to vector<64x1xf32>
    %cst_134 = arith.constant 3.200000e+01 : f32
    %384 = vector.broadcast %cst_134 : f32 to vector<64x1xf32>
    %385 = arith.divf %383, %384 : vector<64x1xf32>
    %386 = vector.broadcast %385 : vector<64x1xf32> to vector<64x32xf32>
    %387 = arith.subf %379, %386 : vector<64x32xf32>
    %388 = arith.mulf %387, %387 : vector<64x32xf32>
    %cst_135 = arith.constant dense<0.000000e+00> : vector<64xf32>
    %389 = vector.multi_reduction <add>, %388, %cst_135 [1] : vector<64x32xf32> to vector<64xf32>
    %390 = vector.shape_cast %389 : vector<64xf32> to vector<64x1xf32>
    %cst_136 = arith.constant 3.200000e+01 : f32
    %391 = vector.broadcast %cst_136 : f32 to vector<64x1xf32>
    %392 = arith.divf %390, %391 : vector<64x1xf32>
    %393 = vector.broadcast %385 : vector<64x1xf32> to vector<64x32xf32>
    %394 = arith.subf %379, %393 : vector<64x32xf32>
    %cst_137 = arith.constant 9.99999974E-6 : f32
    %395 = vector.broadcast %cst_137 : f32 to vector<64x1xf32>
    %396 = arith.addf %392, %395 : vector<64x1xf32>
    %397 = math.rsqrt %396 : vector<64x1xf32>
    %398 = vector.broadcast %397 : vector<64x1xf32> to vector<64x32xf32>
    %399 = arith.mulf %394, %398 : vector<64x32xf32>
    %400 = vector.broadcast %380 : vector<1x32xf32> to vector<64x32xf32>
    %401 = arith.mulf %399, %400 : vector<64x32xf32>
    %402 = vector.broadcast %381 : vector<1x32xf32> to vector<64x32xf32>
    %403 = arith.addf %401, %402 : vector<64x32xf32>
    %404 = arith.truncf %403 : vector<64x32xf32> to vector<64x32xbf16>
    %c0_138 = arith.constant 0 : index
    %c0_139 = arith.constant 0 : index
    %405 = vector.load %arg29[%c0_138, %c0_139] : memref<32x64xbf16, #tpu.memory_space<vmem>>, vector<32x64xbf16>
    %cst_140 = arith.constant dense<0.000000e+00> : vector<64x64xf32>
    %406 = tpu.matmul %404, %405, %cst_140 {dimension_numbers = #tpu.dot_dimension_numbers<[1], [0], [0], [1], [0, 0, 1, 1], [], []>} : vector<64x32xbf16>, vector<32x64xbf16>, vector<64x64xf32> -> vector<64x64xf32>
    %c0_141 = arith.constant 0 : index
    %c0_142 = arith.constant 0 : index
    %407 = vector.load %arg30[%c0_141, %c0_142] : memref<1x64xf32, #tpu.memory_space<vmem>>, vector<1x64xf32>
    %408 = vector.broadcast %407 : vector<1x64xf32> to vector<64x64xf32>
    %409 = arith.addf %406, %408 : vector<64x64xf32>
    %cst_143 = arith.constant 0.000000e+00 : f32
    %410 = vector.broadcast %cst_143 : f32 to vector<64x64xf32>
    %411 = arith.maximumf %409, %410 : vector<64x64xf32>
    %412 = arith.truncf %411 : vector<64x64xf32> to vector<64x64xbf16>
    %c0_144 = arith.constant 0 : index
    %c0_145 = arith.constant 0 : index
    %413 = vector.load %arg31[%c0_144, %c0_145] : memref<64x32xbf16, #tpu.memory_space<vmem>>, vector<64x32xbf16>
    %cst_146 = arith.constant dense<0.000000e+00> : vector<64x32xf32>
    %414 = tpu.matmul %412, %413, %cst_146 {dimension_numbers = #tpu.dot_dimension_numbers<[1], [0], [0], [1], [0, 0, 1, 1], [], []>} : vector<64x64xbf16>, vector<64x32xbf16>, vector<64x32xf32> -> vector<64x32xf32>
    %c0_147 = arith.constant 0 : index
    %c0_148 = arith.constant 0 : index
    %415 = vector.load %arg32[%c0_147, %c0_148] : memref<1x32xf32, #tpu.memory_space<vmem>>, vector<1x32xf32>
    %416 = vector.broadcast %415 : vector<1x32xf32> to vector<64x32xf32>
    %417 = arith.addf %414, %416 : vector<64x32xf32>
    %418 = arith.addf %403, %417 : vector<64x32xf32>
    %c0_149 = arith.constant 0 : index
    %c0_150 = arith.constant 0 : index
    %419 = vector.load %arg33[%c0_149, %c0_150] : memref<1x32xf32, #tpu.memory_space<vmem>>, vector<1x32xf32>
    %c0_151 = arith.constant 0 : index
    %c0_152 = arith.constant 0 : index
    %420 = vector.load %arg34[%c0_151, %c0_152] : memref<1x32xf32, #tpu.memory_space<vmem>>, vector<1x32xf32>
    %cst_153 = arith.constant dense<0.000000e+00> : vector<64xf32>
    %421 = vector.multi_reduction <add>, %418, %cst_153 [1] : vector<64x32xf32> to vector<64xf32>
    %422 = vector.shape_cast %421 : vector<64xf32> to vector<64x1xf32>
    %cst_154 = arith.constant 3.200000e+01 : f32
    %423 = vector.broadcast %cst_154 : f32 to vector<64x1xf32>
    %424 = arith.divf %422, %423 : vector<64x1xf32>
    %425 = vector.broadcast %424 : vector<64x1xf32> to vector<64x32xf32>
    %426 = arith.subf %418, %425 : vector<64x32xf32>
    %427 = arith.mulf %426, %426 : vector<64x32xf32>
    %cst_155 = arith.constant dense<0.000000e+00> : vector<64xf32>
    %428 = vector.multi_reduction <add>, %427, %cst_155 [1] : vector<64x32xf32> to vector<64xf32>
    %429 = vector.shape_cast %428 : vector<64xf32> to vector<64x1xf32>
    %cst_156 = arith.constant 3.200000e+01 : f32
    %430 = vector.broadcast %cst_156 : f32 to vector<64x1xf32>
    %431 = arith.divf %429, %430 : vector<64x1xf32>
    %432 = vector.broadcast %424 : vector<64x1xf32> to vector<64x32xf32>
    %433 = arith.subf %418, %432 : vector<64x32xf32>
    %cst_157 = arith.constant 9.99999974E-6 : f32
    %434 = vector.broadcast %cst_157 : f32 to vector<64x1xf32>
    %435 = arith.addf %431, %434 : vector<64x1xf32>
    %436 = math.rsqrt %435 : vector<64x1xf32>
    %437 = vector.broadcast %436 : vector<64x1xf32> to vector<64x32xf32>
    %438 = arith.mulf %433, %437 : vector<64x32xf32>
    %439 = vector.broadcast %419 : vector<1x32xf32> to vector<64x32xf32>
    %440 = arith.mulf %438, %439 : vector<64x32xf32>
    %441 = vector.broadcast %420 : vector<1x32xf32> to vector<64x32xf32>
    %442 = arith.addf %440, %441 : vector<64x32xf32>
    %443 = vector.shape_cast %442 : vector<64x32xf32> to vector<8x8x32xf32>
    %c0_158 = arith.constant 0 : index
    %c0_159 = arith.constant 0 : index
    %444 = vector.load %arg35[%c0_158, %c0_159] : memref<1x32xf32, #tpu.memory_space<vmem>>, vector<1x32xf32>
    %445 = vector.shape_cast %444 : vector<1x32xf32> to vector<1x1x32xf32>
    %446 = vector.broadcast %445 : vector<1x1x32xf32> to vector<8x8x32xf32>
    %447 = arith.mulf %443, %446 : vector<8x8x32xf32>
    %cst_160 = arith.constant dense<0.000000e+00> : vector<8x8xf32>
    %448 = vector.multi_reduction <add>, %447, %cst_160 [2] : vector<8x8x32xf32> to vector<8x8xf32>
    %c0_161 = arith.constant 0 : index
    %c0_162 = arith.constant 0 : index
    %449 = vector.load %arg36[%c0_161, %c0_162] : memref<1x1xf32, #tpu.memory_space<vmem>>, vector<1x1xf32>
    %450 = vector.broadcast %449 : vector<1x1xf32> to vector<8x8xf32>
    %451 = arith.addf %448, %450 : vector<8x8xf32>
    %c0_163 = arith.constant 0 : index
    %c0_164 = arith.constant 0 : index
    %452 = vector.load %arg4[%c0_163, %c0_164] : memref<8x8xf32, #tpu.memory_space<vmem>>, vector<8x8xf32>
    %cst_165 = arith.constant 0.000000e+00 : f32
    %453 = vector.broadcast %cst_165 : f32 to vector<8x8xf32>
    %454 = arith.cmpf ogt, %452, %453 : vector<8x8xf32>
    %cst_166 = arith.constant -1.000000e+30 : f32
    %455 = vector.broadcast %cst_166 : f32 to vector<8x8xf32>
    %456 = arith.select %454, %451, %455 : vector<8x8xi1>, vector<8x8xf32>
    %cst_167 = arith.constant dense<0xFF800000> : vector<8xf32>
    %457 = vector.multi_reduction <maximumf>, %456, %cst_167 [1] : vector<8x8xf32> to vector<8xf32>
    %458 = vector.shape_cast %457 : vector<8xf32> to vector<8x1xf32>
    %459 = vector.broadcast %458 : vector<8x1xf32> to vector<8x8xf32>
    %460 = arith.subf %456, %459 : vector<8x8xf32>
    %461 = math.exp %460 : vector<8x8xf32>
    %cst_168 = arith.constant dense<0.000000e+00> : vector<8xf32>
    %462 = vector.multi_reduction <add>, %461, %cst_168 [1] : vector<8x8xf32> to vector<8xf32>
    %463 = vector.shape_cast %462 : vector<8xf32> to vector<8x1xf32>
    %464 = tpu.reciprocal %463 {approx = true} : vector<8x1xf32> -> vector<8x1xf32>
    %465 = vector.broadcast %464 : vector<8x1xf32> to vector<8x8xf32>
    %466 = arith.mulf %461, %465 : vector<8x8xf32>
    %467 = vector.shape_cast %466 : vector<8x8xf32> to vector<8x8x1xf32>
    %468 = vector.broadcast %467 : vector<8x8x1xf32> to vector<8x8x32xf32>
    %469 = arith.mulf %468, %443 : vector<8x8x32xf32>
    %cst_169 = arith.constant dense<0.000000e+00> : vector<8x32xf32>
    %470 = vector.multi_reduction <add>, %469, %cst_169 [1] : vector<8x8x32xf32> to vector<8x32xf32>
    %c0_170 = arith.constant 0 : index
    %c0_171 = arith.constant 0 : index
    %471 = vector.load %arg37[%c0_170, %c0_171] : memref<32x1xf32, #tpu.memory_space<vmem>>, vector<32x1xf32>
    %cst_172 = arith.constant dense<0.000000e+00> : vector<8x1xf32>
    %472 = tpu.matmul %470, %471, %cst_172 {dimension_numbers = #tpu.dot_dimension_numbers<[1], [0], [0], [1], [0, 0, 1, 1], [], []>} : vector<8x32xf32>, vector<32x1xf32>, vector<8x1xf32> -> vector<8x1xf32>
    %c0_173 = arith.constant 0 : index
    %c0_174 = arith.constant 0 : index
    %473 = vector.load %arg38[%c0_173, %c0_174] : memref<1x1xf32, #tpu.memory_space<vmem>>, vector<1x1xf32>
    %474 = vector.broadcast %473 : vector<1x1xf32> to vector<8x1xf32>
    %475 = arith.addf %472, %474 : vector<8x1xf32>
    %c0_175 = arith.constant 0 : index
    %c0_176 = arith.constant 0 : index
    %476 = vector.load %arg39[%c0_175, %c0_176] : memref<8x1xf32, #tpu.memory_space<vmem>>, vector<8x1xf32>
    tpu.vector_store %arg39[%c0_175, %c0_176], %475 {strides = array<i32>} : memref<8x1xf32, #tpu.memory_space<vmem>>, vector<8x1xf32>,
    return
  }
  func.func @transform_0(%arg0: i32) -> (i32, i32, i32) {
    %c0_i32 = arith.constant 0 : i32
    %c0_i32_0 = arith.constant 0 : i32
    %c0_i32_1 = arith.constant 0 : i32
    return %arg0, %c0_i32, %c0_i32_0 : i32, i32, i32
  }
  func.func @transform_1(%arg0: i32) -> (i32, i32, i32) {
    %c0_i32 = arith.constant 0 : i32
    %c0_i32_0 = arith.constant 0 : i32
    %c0_i32_1 = arith.constant 0 : i32
    return %arg0, %c0_i32, %c0_i32_0 : i32, i32, i32
  }
  func.func @transform_2(%arg0: i32) -> (i32, i32, i32) {
    %c0_i32 = arith.constant 0 : i32
    %c0_i32_0 = arith.constant 0 : i32
    %c0_i32_1 = arith.constant 0 : i32
    return %arg0, %c0_i32, %c0_i32_0 : i32, i32, i32
  }
  func.func @transform_3(%arg0: i32) -> (i32, i32) {
    %c0_i32 = arith.constant 0 : i32
    %c0_i32_0 = arith.constant 0 : i32
    return %arg0, %c0_i32 : i32, i32
  }
  func.func @transform_4(%arg0: i32) -> (i32, i32) {
    %c0_i32 = arith.constant 0 : i32
    %c0_i32_0 = arith.constant 0 : i32
    %c0_i32_1 = arith.constant 0 : i32
    return %c0_i32, %c0_i32_0 : i32, i32
  }
  func.func @transform_5(%arg0: i32) -> (i32, i32) {
    %c0_i32 = arith.constant 0 : i32
    %c0_i32_0 = arith.constant 0 : i32
    %c0_i32_1 = arith.constant 0 : i32
    return %c0_i32, %c0_i32_0 : i32, i32
  }
  func.func @transform_6(%arg0: i32) -> (i32, i32) {
    %c0_i32 = arith.constant 0 : i32
    %c0_i32_0 = arith.constant 0 : i32
    %c0_i32_1 = arith.constant 0 : i32
    return %c0_i32, %c0_i32_0 : i32, i32
  }
  func.func @transform_7(%arg0: i32) -> (i32, i32) {
    %c0_i32 = arith.constant 0 : i32
    %c0_i32_0 = arith.constant 0 : i32
    %c0_i32_1 = arith.constant 0 : i32
    return %c0_i32, %c0_i32_0 : i32, i32
  }
  func.func @transform_8(%arg0: i32) -> (i32, i32) {
    %c0_i32 = arith.constant 0 : i32
    %c0_i32_0 = arith.constant 0 : i32
    %c0_i32_1 = arith.constant 0 : i32
    return %c0_i32, %c0_i32_0 : i32, i32
  }
  func.func @transform_9(%arg0: i32) -> (i32, i32) {
    %c0_i32 = arith.constant 0 : i32
    %c0_i32_0 = arith.constant 0 : i32
    %c0_i32_1 = arith.constant 0 : i32
    return %c0_i32, %c0_i32_0 : i32, i32
  }
  func.func @transform_10(%arg0: i32) -> (i32, i32) {
    %c0_i32 = arith.constant 0 : i32
    %c0_i32_0 = arith.constant 0 : i32
    %c0_i32_1 = arith.constant 0 : i32
    return %c0_i32, %c0_i32_0 : i32, i32
  }
  func.func @transform_11(%arg0: i32) -> (i32, i32) {
    %c0_i32 = arith.constant 0 : i32
    %c0_i32_0 = arith.constant 0 : i32
    %c0_i32_1 = arith.constant 0 : i32
    return %c0_i32, %c0_i32_0 : i32, i32
  }
  func.func @transform_12(%arg0: i32) -> (i32, i32) {
    %c0_i32 = arith.constant 0 : i32
    %c0_i32_0 = arith.constant 0 : i32
    %c0_i32_1 = arith.constant 0 : i32
    return %c0_i32, %c0_i32_0 : i32, i32
  }
  func.func @transform_13(%arg0: i32) -> (i32, i32) {
    %c0_i32 = arith.constant 0 : i32
    %c0_i32_0 = arith.constant 0 : i32
    %c0_i32_1 = arith.constant 0 : i32
    return %c0_i32, %c0_i32_0 : i32, i32
  }
  func.func @transform_14(%arg0: i32) -> (i32, i32) {
    %c0_i32 = arith.constant 0 : i32
    %c0_i32_0 = arith.constant 0 : i32
    %c0_i32_1 = arith.constant 0 : i32
    return %c0_i32, %c0_i32_0 : i32, i32
  }
  func.func @transform_15(%arg0: i32) -> (i32, i32) {
    %c0_i32 = arith.constant 0 : i32
    %c0_i32_0 = arith.constant 0 : i32
    %c0_i32_1 = arith.constant 0 : i32
    return %c0_i32, %c0_i32_0 : i32, i32
  }
  func.func @transform_16(%arg0: i32) -> (i32, i32) {
    %c0_i32 = arith.constant 0 : i32
    %c0_i32_0 = arith.constant 0 : i32
    %c0_i32_1 = arith.constant 0 : i32
    return %c0_i32, %c0_i32_0 : i32, i32
  }
  func.func @transform_17(%arg0: i32) -> (i32, i32) {
    %c0_i32 = arith.constant 0 : i32
    %c0_i32_0 = arith.constant 0 : i32
    %c0_i32_1 = arith.constant 0 : i32
    return %c0_i32, %c0_i32_0 : i32, i32
  }
  func.func @transform_18(%arg0: i32) -> (i32, i32) {
    %c0_i32 = arith.constant 0 : i32
    %c0_i32_0 = arith.constant 0 : i32
    %c0_i32_1 = arith.constant 0 : i32
    return %c0_i32, %c0_i32_0 : i32, i32
  }
  func.func @transform_19(%arg0: i32) -> (i32, i32) {
    %c0_i32 = arith.constant 0 : i32
    %c0_i32_0 = arith.constant 0 : i32
    %c0_i32_1 = arith.constant 0 : i32
    return %c0_i32, %c0_i32_0 : i32, i32
  }
  func.func @transform_20(%arg0: i32) -> (i32, i32) {
    %c0_i32 = arith.constant 0 : i32
    %c0_i32_0 = arith.constant 0 : i32
    %c0_i32_1 = arith.constant 0 : i32
    return %c0_i32, %c0_i32_0 : i32, i32
  }
  func.func @transform_21(%arg0: i32) -> (i32, i32) {
    %c0_i32 = arith.constant 0 : i32
    %c0_i32_0 = arith.constant 0 : i32
    %c0_i32_1 = arith.constant 0 : i32
    return %c0_i32, %c0_i32_0 : i32, i32
  }
  func.func @transform_22(%arg0: i32) -> (i32, i32) {
    %c0_i32 = arith.constant 0 : i32
    %c0_i32_0 = arith.constant 0 : i32
    %c0_i32_1 = arith.constant 0 : i32
    return %c0_i32, %c0_i32_0 : i32, i32
  }
  func.func @transform_23(%arg0: i32) -> (i32, i32) {
    %c0_i32 = arith.constant 0 : i32
    %c0_i32_0 = arith.constant 0 : i32
    %c0_i32_1 = arith.constant 0 : i32
    return %c0_i32, %c0_i32_0 : i32, i32
  }
  func.func @transform_24(%arg0: i32) -> (i32, i32) {
    %c0_i32 = arith.constant 0 : i32
    %c0_i32_0 = arith.constant 0 : i32
    %c0_i32_1 = arith.constant 0 : i32
    return %c0_i32, %c0_i32_0 : i32, i32
  }
  func.func @transform_25(%arg0: i32) -> (i32, i32) {
    %c0_i32 = arith.constant 0 : i32
    %c0_i32_0 = arith.constant 0 : i32
    %c0_i32_1 = arith.constant 0 : i32
    return %c0_i32, %c0_i32_0 : i32, i32
  }
  func.func @transform_26(%arg0: i32) -> (i32, i32) {
    %c0_i32 = arith.constant 0 : i32
    %c0_i32_0 = arith.constant 0 : i32
    %c0_i32_1 = arith.constant 0 : i32
    return %c0_i32, %c0_i32_0 : i32, i32
  }
  func.func @transform_27(%arg0: i32) -> (i32, i32) {
    %c0_i32 = arith.constant 0 : i32
    %c0_i32_0 = arith.constant 0 : i32
    %c0_i32_1 = arith.constant 0 : i32
    return %c0_i32, %c0_i32_0 : i32, i32
  }
  func.func @transform_28(%arg0: i32) -> (i32, i32) {
    %c0_i32 = arith.constant 0 : i32
    %c0_i32_0 = arith.constant 0 : i32
    %c0_i32_1 = arith.constant 0 : i32
    return %c0_i32, %c0_i32_0 : i32, i32
  }
  func.func @transform_29(%arg0: i32) -> (i32, i32) {
    %c0_i32 = arith.constant 0 : i32
    %c0_i32_0 = arith.constant 0 : i32
    %c0_i32_1 = arith.constant 0 : i32
    return %c0_i32, %c0_i32_0 : i32, i32
  }
  func.func @transform_30(%arg0: i32) -> (i32, i32) {
    %c0_i32 = arith.constant 0 : i32
    %c0_i32_0 = arith.constant 0 : i32
    %c0_i32_1 = arith.constant 0 : i32
    return %c0_i32, %c0_i32_0 : i32, i32
  }
  func.func @transform_31(%arg0: i32) -> (i32, i32) {
    %c0_i32 = arith.constant 0 : i32
    %c0_i32_0 = arith.constant 0 : i32
    %c0_i32_1 = arith.constant 0 : i32
    return %c0_i32, %c0_i32_0 : i32, i32
  }
  func.func @transform_32(%arg0: i32) -> (i32, i32) {
    %c0_i32 = arith.constant 0 : i32
    %c0_i32_0 = arith.constant 0 : i32
    %c0_i32_1 = arith.constant 0 : i32
    return %c0_i32, %c0_i32_0 : i32, i32
  }
  func.func @transform_33(%arg0: i32) -> (i32, i32) {
    %c0_i32 = arith.constant 0 : i32
    %c0_i32_0 = arith.constant 0 : i32
    %c0_i32_1 = arith.constant 0 : i32
    return %c0_i32, %c0_i32_0 : i32, i32
  }
  func.func @transform_34(%arg0: i32) -> (i32, i32) {
    %c0_i32 = arith.constant 0 : i32
    %c0_i32_0 = arith.constant 0 : i32
    %c0_i32_1 = arith.constant 0 : i32
    return %c0_i32, %c0_i32_0 : i32, i32
  }
  func.func @transform_35(%arg0: i32) -> (i32, i32) {
    %c0_i32 = arith.constant 0 : i32
    %c0_i32_0 = arith.constant 0 : i32
    %c0_i32_1 = arith.constant 0 : i32
    return %c0_i32, %c0_i32_0 : i32, i32
  }
  func.func @transform_36(%arg0: i32) -> (i32, i32) {
    %c0_i32 = arith.constant 0 : i32
    %c0_i32_0 = arith.constant 0 : i32
    %c0_i32_1 = arith.constant 0 : i32
    return %c0_i32, %c0_i32_0 : i32, i32
  }
  func.func @transform_37(%arg0: i32) -> (i32, i32) {
    %c0_i32 = arith.constant 0 : i32
    %c0_i32_0 = arith.constant 0 : i32
    %c0_i32_1 = arith.constant 0 : i32
    return %c0_i32, %c0_i32_0 : i32, i32
  }
  func.func @transform_38(%arg0: i32) -> (i32, i32) {
    %c0_i32 = arith.constant 0 : i32
    %c0_i32_0 = arith.constant 0 : i32
    return %arg0, %c0_i32 : i32, i32
  }
}

</mosaic_0001>

<llo_original>
// kernel: tpu_custom_call.1
$region0: #{tpu_custom_call.1}
  #allocation0 [shape = 'u32[]', space=smem, size = 0x4, offset = 0x4, fixed_abs, tag = 'smem constant byte address 0x4 - core index']
  #allocation1 [shape = 'u32[72,128]{1,0:T(1,128)}', space=vmem, size = 0x9000, scoped, tag = 'internal scratch']
  #allocation2 [shape = 'f32[1,1]{1,0:T(1,128)S(1)}', space=vmem, size = 0x200, scoped, tag = 'scoped memory for tpu_custom_call.1']
  #allocation3 [shape = 'f32[1,1]{1,0:T(1,128)S(1)}', space=vmem, size = 0x200, scoped, tag = 'scoped memory for tpu_custom_call.1']
  %s0 = inlined_call_operand.smem [shape: u32[39], index: -1, kind: input, shape index: {}]
  %s1 = sld [smem:[%s0]]
  %s2 = scalar_lea.smem %s0, 1
  %s3 = sld [smem:[%s2]]
  %s4 = scalar_lea.smem %s0, 2
  %s5 = sld [smem:[%s4]]
  %s6 = scalar_lea.smem %s0, 3
  %s7 = sld [smem:[%s6]]
  %s8 = scalar_lea.smem %s0, 4
  %s9 = sld [smem:[%s8]]
  %s10 = scalar_lea.smem %s0, 5
  %s11 = sld [smem:[%s10]]
  %s12 = scalar_lea.smem %s0, 6
  %s13 = sld [smem:[%s12]]
  %s14 = scalar_lea.smem %s0, 7
  %s15 = sld [smem:[%s14]]
  %s16 = scalar_lea.smem %s0, 8
  %s17 = sld [smem:[%s16]]
  %s18 = scalar_lea.smem %s0, 9
  %s19 = sld [smem:[%s18]]
  %s20 = scalar_lea.smem %s0, 10
  %s21 = sld [smem:[%s20]]
  %s22 = scalar_lea.smem %s0, 11
  %s23 = sld [smem:[%s22]]
  %s24 = scalar_lea.smem %s0, 12
  %s25 = sld [smem:[%s24]]
  %s26 = scalar_lea.smem %s0, 13
  %s27 = sld [smem:[%s26]]
  %s28 = scalar_lea.smem %s0, 14
  %s29 = sld [smem:[%s28]]
  %s30 = scalar_lea.smem %s0, 15
  %s31 = sld [smem:[%s30]]
  %s32 = scalar_lea.smem %s0, 16
  %s33 = sld [smem:[%s32]]
  %s34 = scalar_lea.smem %s0, 17
  %s35 = sld [smem:[%s34]]
  %s36 = scalar_lea.smem %s0, 18
  %s37 = sld [smem:[%s36]]
  %s38 = scalar_lea.smem %s0, 19
  %s39 = sld [smem:[%s38]]
  %s40 = scalar_lea.smem %s0, 20
  %s41 = sld [smem:[%s40]]
  %s42 = scalar_lea.smem %s0, 21
  %s43 = sld [smem:[%s42]]
  %s44 = scalar_lea.smem %s0, 22
  %s45 = sld [smem:[%s44]]
  %s46 = scalar_lea.smem %s0, 23
  %s47 = sld [smem:[%s46]]
  %s48 = scalar_lea.smem %s0, 24
  %s49 = sld [smem:[%s48]]
  %s50 = scalar_lea.smem %s0, 25
  %s51 = sld [smem:[%s50]]
  %s52 = scalar_lea.smem %s0, 26
  %s53 = sld [smem:[%s52]]
  %s54 = scalar_lea.smem %s0, 27
  %s55 = sld [smem:[%s54]]
  %s56 = scalar_lea.smem %s0, 28
  %s57 = sld [smem:[%s56]]
  %s58 = scalar_lea.smem %s0, 29
  %s59 = sld [smem:[%s58]]
  %s60 = scalar_lea.smem %s0, 30
  %s61 = sld [smem:[%s60]]
  %s62 = scalar_lea.smem %s0, 31
  %s63 = sld [smem:[%s62]]
  %s64 = scalar_lea.smem %s0, 32
  %s65 = sld [smem:[%s64]]
  %s66 = scalar_lea.smem %s0, 33
  %s67 = sld [smem:[%s66]]
  %s68 = scalar_lea.smem %s0, 34
  %s69 = sld [smem:[%s68]]
  %s70 = scalar_lea.smem %s0, 35
  %s71 = sld [smem:[%s70]]
  %s72 = scalar_lea.smem %s0, 36
  %s73 = sld [smem:[%s72]]
  %s74 = scalar_lea.smem %s0, 37
  %s75 = sld [smem:[%s74]]
  %s76 = scalar_lea.smem %s0, 38
  %s77 = sld [smem:[%s76]]
  %s78 = sld [smem:[#allocation0]]
  $region185: #{tpu_custom_call.1} parent=0
    _
  %s80 = ssub.s32 1, %s78
  %s81 = scalar_select 0, %s80, %s78
  %v82 = vstv %s71
  %83 = vst [vmem:[#allocation2] sm:$0x1] %v82
  %v84 = vstv %s75
  %85 = vst [vmem:[#allocation3] sm:$0x1] %v84
  loop: start=0, step=1, limit=4
  $region2: #{tpu_custom_call.1} parent=0 // loop_pre_header
    _
  $region3: #{tpu_custom_call.1} parent=0 // loop_header
    %s87 = sphi 0, %s91
    %p88 = scmp.ge.s32.totalorder %s87, 4
    %s97 = sphi 0, %s99
    %s100 = sphi 0, %s97
    %s101 = sphi 0, %s100
    %s117 = sphi 0, %s101
    %s123 = sphi 0, %s125
    %s126 = sphi 0, %s123
    %s127 = sphi 0, %s126
    %s143 = sphi 0, %s127
    %s149 = sphi 0, %s151
    %s152 = sphi 0, %s149
    %s153 = sphi 0, %s152
    %s169 = sphi 0, %s153
    %s175 = sphi 0, %s177
    %s178 = sphi 0, %s175
    %s179 = sphi 0, %s178
    %s195 = sphi 0, %s179
    %s199 = sphi 0, %s199
    %s201 = sphi 0, %s199
    %s202 = sphi 0, %s201
    %s216 = sphi 0, %s202
    %s220 = sphi 0, %s220
    %s222 = sphi 0, %s220
    %s223 = sphi 0, %s222
    %s237 = sphi 0, %s223
    %s241 = sphi 0, %s241
    %s243 = sphi 0, %s241
    %s244 = sphi 0, %s243
    %s258 = sphi 0, %s244
    %s262 = sphi 0, %s262
    %s264 = sphi 0, %s262
    %s265 = sphi 0, %s264
    %s279 = sphi 0, %s265
    %s283 = sphi 0, %s283
    %s285 = sphi 0, %s283
    %s286 = sphi 0, %s285
    %s300 = sphi 0, %s286
    %s304 = sphi 0, %s304
    %s306 = sphi 0, %s304
    %s307 = sphi 0, %s306
    %s321 = sphi 0, %s307
    %s325 = sphi 0, %s325
    %s327 = sphi 0, %s325
    %s328 = sphi 0, %s327
    %s342 = sphi 0, %s328
    %s346 = sphi 0, %s346
    %s348 = sphi 0, %s346
    %s349 = sphi 0, %s348
    %s363 = sphi 0, %s349
    %s367 = sphi 0, %s367
    %s369 = sphi 0, %s367
    %s370 = sphi 0, %s369
    %s384 = sphi 0, %s370
    %s388 = sphi 0, %s388
    %s390 = sphi 0, %s388
    %s391 = sphi 0, %s390
    %s405 = sphi 0, %s391
    %s409 = sphi 0, %s409
    %s411 = sphi 0, %s409
    %s412 = sphi 0, %s411
    %s426 = sphi 0, %s412
    %s430 = sphi 0, %s430
    %s432 = sphi 0, %s430
    %s433 = sphi 0, %s432
    %s447 = sphi 0, %s433
    %s451 = sphi 0, %s451
    %s453 = sphi 0, %s451
    %s454 = sphi 0, %s453
    %s468 = sphi 0, %s454
    %s472 = sphi 0, %s472
    %s474 = sphi 0, %s472
    %s475 = sphi 0, %s474
    %s489 = sphi 0, %s475
    %s493 = sphi 0, %s493
    %s495 = sphi 0, %s493
    %s496 = sphi 0, %s495
    %s510 = sphi 0, %s496
    %s514 = sphi 0, %s514
    %s516 = sphi 0, %s514
    %s517 = sphi 0, %s516
    %s531 = sphi 0, %s517
    %s535 = sphi 0, %s535
    %s537 = sphi 0, %s535
    %s538 = sphi 0, %s537
    %s552 = sphi 0, %s538
    %s556 = sphi 0, %s556
    %s558 = sphi 0, %s556
    %s559 = sphi 0, %s558
    %s573 = sphi 0, %s559
    %s577 = sphi 0, %s577
    %s579 = sphi 0, %s577
    %s580 = sphi 0, %s579
    %s594 = sphi 0, %s580
    %s598 = sphi 0, %s598
    %s600 = sphi 0, %s598
    %s601 = sphi 0, %s600
    %s615 = sphi 0, %s601
    %s619 = sphi 0, %s619
    %s621 = sphi 0, %s619
    %s622 = sphi 0, %s621
    %s636 = sphi 0, %s622
    %s640 = sphi 0, %s640
    %s642 = sphi 0, %s640
    %s643 = sphi 0, %s642
    %s657 = sphi 0, %s643
    %s661 = sphi 0, %s661
    %s663 = sphi 0, %s661
    %s664 = sphi 0, %s663
    %s678 = sphi 0, %s664
    %s682 = sphi 0, %s682
    %s684 = sphi 0, %s682
    %s685 = sphi 0, %s684
    %s699 = sphi 0, %s685
    %s703 = sphi 0, %s703
    %s705 = sphi 0, %s703
    %s706 = sphi 0, %s705
    %s720 = sphi 0, %s706
    %s724 = sphi 0, %s724
    %s726 = sphi 0, %s724
    %s727 = sphi 0, %s726
    %s741 = sphi 0, %s727
    %s745 = sphi 0, %s745
    %s747 = sphi 0, %s745
    %s748 = sphi 0, %s747
    %s762 = sphi 0, %s748
    %s766 = sphi 0, %s766
    %s768 = sphi 0, %s766
    %s769 = sphi 0, %s768
    %s783 = sphi 0, %s769
    %s787 = sphi 0, %s787
    %s789 = sphi 0, %s787
    %s790 = sphi 0, %s789
    %s804 = sphi 0, %s790
    %s808 = sphi 0, %s808
    %s810 = sphi 0, %s808
    %s811 = sphi 0, %s810
    %s825 = sphi 0, %s811
    %s829 = sphi 0, %s829
    %s831 = sphi 0, %s829
    %s832 = sphi 0, %s831
    %s846 = sphi 0, %s832
    %s850 = sphi 0, %s850
    %s852 = sphi 0, %s850
    %s853 = sphi 0, %s852
    %s867 = sphi 0, %s853
    %s871 = sphi 0, %s871
    %s873 = sphi 0, %s871
    %s874 = sphi 0, %s873
    %s888 = sphi 0, %s874
    %s892 = sphi 0, %s892
    %s894 = sphi 0, %s892
    %s895 = sphi 0, %s894
    %s909 = sphi 0, %s895
    %s915 = sphi 0, %s917
    %s918 = sphi 0, %s915
    %s919 = sphi 0, %s918
    %s935 = sphi 0, %s919
  $region4: #{tpu_custom_call.1} parent=0 // loop_header_branch
    %90 = sbr.rel (%p88) target = $region8
  $region5: #{tpu_custom_call.1} parent=0 // loop_body
    %s92 = ssub.s32 %s87, 1
    %s93 = ssub.s32 %s87, 2
    %s94 = sadd.s32 %s87, 1
    %s95 = ssub.s32 %s87, %s94
    %p96 = scmp.eq.s32.totalorder %s95, 0
    %s98 = sadd.s32 %s97, 1
    %s99 = scalar_select %p96, %s97, %s98
    %p102 = pneg %p96
    %p103 = scmp.eq.s32.totalorder %s87, 1
    %p104 = por %p102, %p103
    %p105 = scmp.ne.s32.totalorder %s97, %s100
    %p106 = scmp.eq.s32.totalorder %s87, 0
    %p107 = por %p105, %p106
    %p108 = scmp.ne.s32.totalorder %s97, %s100
    %p109 = scmp.eq.s32.totalorder %s92, 1
    %p110 = por %p108, %p109
    %p111 = scmp.ne.s32.totalorder %s100, %s101
    %p112 = scmp.eq.s32.totalorder %s92, 0
    %p113 = por %p111, %p112
    %p114 = scmp.ne.s32.totalorder %s100, %s101
    %p115 = scmp.eq.s32.totalorder %s93, 1
    %p116 = por %p114, %p115
    %p118 = scmp.ne.s32.totalorder %s101, %s117
    %p119 = scmp.eq.s32.totalorder %s93, 0
    %p120 = por %p118, %p119
    %s121 = ssub.s32 %s87, %s94
    %p122 = scmp.eq.s32.totalorder %s121, 0
    %s124 = sadd.s32 %s123, 1
    %s125 = scalar_select %p122, %s123, %s124
    %p128 = pneg %p122
    %p129 = scmp.eq.s32.totalorder %s87, 1
    %p130 = por %p128, %p129
    %p131 = scmp.ne.s32.totalorder %s123, %s126
    %p132 = scmp.eq.s32.totalorder %s87, 0
    %p133 = por %p131, %p132
    %p134 = scmp.ne.s32.totalorder %s123, %s126
    %p135 = scmp.eq.s32.totalorder %s92, 1
    %p136 = por %p134, %p135
    %p137 = scmp.ne.s32.totalorder %s126, %s127
    %p138 = scmp.eq.s32.totalorder %s92, 0
    %p139 = por %p137, %p138
    %p140 = scmp.ne.s32.totalorder %s126, %s127
    %p141 = scmp.eq.s32.totalorder %s93, 1
    %p142 = por %p140, %p141
    %p144 = scmp.ne.s32.totalorder %s127, %s143
    %p145 = scmp.eq.s32.totalorder %s93, 0
    %p146 = por %p144, %p145
    %s147 = ssub.s32 %s87, %s94
    %p148 = scmp.eq.s32.totalorder %s147, 0
    %s150 = sadd.s32 %s149, 1
    %s151 = scalar_select %p148, %s149, %s150
    %p154 = pneg %p148
    %p155 = scmp.eq.s32.totalorder %s87, 1
    %p156 = por %p154, %p155
    %p157 = scmp.ne.s32.totalorder %s149, %s152
    %p158 = scmp.eq.s32.totalorder %s87, 0
    %p159 = por %p157, %p158
    %p160 = scmp.ne.s32.totalorder %s149, %s152
    %p161 = scmp.eq.s32.totalorder %s92, 1
    %p162 = por %p160, %p161
    %p163 = scmp.ne.s32.totalorder %s152, %s153
    %p164 = scmp.eq.s32.totalorder %s92, 0
    %p165 = por %p163, %p164
    %p166 = scmp.ne.s32.totalorder %s152, %s153
    %p167 = scmp.eq.s32.totalorder %s93, 1
    %p168 = por %p166, %p167
    %p170 = scmp.ne.s32.totalorder %s153, %s169
    %p171 = scmp.eq.s32.totalorder %s93, 0
    %p172 = por %p170, %p171
    %s173 = ssub.s32 %s87, %s94
    %p174 = scmp.eq.s32.totalorder %s173, 0
    %s176 = sadd.s32 %s175, 1
    %s177 = scalar_select %p174, %s175, %s176
    %p180 = pneg %p174
    %p181 = scmp.eq.s32.totalorder %s87, 1
    %p182 = por %p180, %p181
    %p183 = scmp.ne.s32.totalorder %s175, %s178
    %p184 = scmp.eq.s32.totalorder %s87, 0
    %p185 = por %p183, %p184
    %p186 = scmp.ne.s32.totalorder %s175, %s178
    %p187 = scmp.eq.s32.totalorder %s92, 1
    %p188 = por %p186, %p187
    %p189 = scmp.ne.s32.totalorder %s178, %s179
    %p190 = scmp.eq.s32.totalorder %s92, 0
    %p191 = por %p189, %p190
    %p192 = scmp.ne.s32.totalorder %s178, %s179
    %p193 = scmp.eq.s32.totalorder %s93, 1
    %p194 = por %p192, %p193
    %p196 = scmp.ne.s32.totalorder %s179, %s195
    %p197 = scmp.eq.s32.totalorder %s93, 0
    %p198 = por %p196, %p197
    %s200 = sadd.s32 %s199, 1
    %p203 = scmp.eq.s32.totalorder %s87, 1
    %p204 = scmp.ne.s32.totalorder %s199, %s201
    %p205 = scmp.eq.s32.totalorder %s87, 0
    %p206 = por %p204, %p205
    %p207 = scmp.ne.s32.totalorder %s199, %s201
    %p208 = scmp.eq.s32.totalorder %s92, 1
    %p209 = por %p207, %p208
    %p210 = scmp.ne.s32.totalorder %s201, %s202
    %p211 = scmp.eq.s32.totalorder %s92, 0
    %p212 = por %p210, %p211
    %p213 = scmp.ne.s32.totalorder %s201, %s202
    %p214 = scmp.eq.s32.totalorder %s93, 1
    %p215 = por %p213, %p214
    %p217 = scmp.ne.s32.totalorder %s202, %s216
    %p218 = scmp.eq.s32.totalorder %s93, 0
    %p219 = por %p217, %p218
    %s221 = sadd.s32 %s220, 1
    %p224 = scmp.eq.s32.totalorder %s87, 1
    %p225 = scmp.ne.s32.totalorder %s220, %s222
    %p226 = scmp.eq.s32.totalorder %s87, 0
    %p227 = por %p225, %p226
    %p228 = scmp.ne.s32.totalorder %s220, %s222
    %p229 = scmp.eq.s32.totalorder %s92, 1
    %p230 = por %p228, %p229
    %p231 = scmp.ne.s32.totalorder %s222, %s223
    %p232 = scmp.eq.s32.totalorder %s92, 0
    %p233 = por %p231, %p232
    %p234 = scmp.ne.s32.totalorder %s222, %s223
    %p235 = scmp.eq.s32.totalorder %s93, 1
    %p236 = por %p234, %p235
    %p238 = scmp.ne.s32.totalorder %s223, %s237
    %p239 = scmp.eq.s32.totalorder %s93, 0
    %p240 = por %p238, %p239
    %s242 = sadd.s32 %s241, 1
    %p245 = scmp.eq.s32.totalorder %s87, 1
    %p246 = scmp.ne.s32.totalorder %s241, %s243
    %p247 = scmp.eq.s32.totalorder %s87, 0
    %p248 = por %p246, %p247
    %p249 = scmp.ne.s32.totalorder %s241, %s243
    %p250 = scmp.eq.s32.totalorder %s92, 1
    %p251 = por %p249, %p250
    %p252 = scmp.ne.s32.totalorder %s243, %s244
    %p253 = scmp.eq.s32.totalorder %s92, 0
    %p254 = por %p252, %p253
    %p255 = scmp.ne.s32.totalorder %s243, %s244
    %p256 = scmp.eq.s32.totalorder %s93, 1
    %p257 = por %p255, %p256
    %p259 = scmp.ne.s32.totalorder %s244, %s258
    %p260 = scmp.eq.s32.totalorder %s93, 0
    %p261 = por %p259, %p260
    %s263 = sadd.s32 %s262, 1
    %p266 = scmp.eq.s32.totalorder %s87, 1
    %p267 = scmp.ne.s32.totalorder %s262, %s264
    %p268 = scmp.eq.s32.totalorder %s87, 0
    %p269 = por %p267, %p268
    %p270 = scmp.ne.s32.totalorder %s262, %s264
    %p271 = scmp.eq.s32.totalorder %s92, 1
    %p272 = por %p270, %p271
    %p273 = scmp.ne.s32.totalorder %s264, %s265
    %p274 = scmp.eq.s32.totalorder %s92, 0
    %p275 = por %p273, %p274
    %p276 = scmp.ne.s32.totalorder %s264, %s265
    %p277 = scmp.eq.s32.totalorder %s93, 1
    %p278 = por %p276, %p277
    %p280 = scmp.ne.s32.totalorder %s265, %s279
    %p281 = scmp.eq.s32.totalorder %s93, 0
    %p282 = por %p280, %p281
    %s284 = sadd.s32 %s283, 1
    %p287 = scmp.eq.s32.totalorder %s87, 1
    %p288 = scmp.ne.s32.totalorder %s283, %s285
    %p289 = scmp.eq.s32.totalorder %s87, 0
    %p290 = por %p288, %p289
    %p291 = scmp.ne.s32.totalorder %s283, %s285
    %p292 = scmp.eq.s32.totalorder %s92, 1
    %p293 = por %p291, %p292
    %p294 = scmp.ne.s32.totalorder %s285, %s286
    %p295 = scmp.eq.s32.totalorder %s92, 0
    %p296 = por %p294, %p295
    %p297 = scmp.ne.s32.totalorder %s285, %s286
    %p298 = scmp.eq.s32.totalorder %s93, 1
    %p299 = por %p297, %p298
    %p301 = scmp.ne.s32.totalorder %s286, %s300
    %p302 = scmp.eq.s32.totalorder %s93, 0
    %p303 = por %p301, %p302
    %s305 = sadd.s32 %s304, 1
    %p308 = scmp.eq.s32.totalorder %s87, 1
    %p309 = scmp.ne.s32.totalorder %s304, %s306
    %p310 = scmp.eq.s32.totalorder %s87, 0
    %p311 = por %p309, %p310
    %p312 = scmp.ne.s32.totalorder %s304, %s306
    %p313 = scmp.eq.s32.totalorder %s92, 1
    %p314 = por %p312, %p313
    %p315 = scmp.ne.s32.totalorder %s306, %s307
    %p316 = scmp.eq.s32.totalorder %s92, 0
    %p317 = por %p315, %p316
    %p318 = scmp.ne.s32.totalorder %s306, %s307
    %p319 = scmp.eq.s32.totalorder %s93, 1
    %p320 = por %p318, %p319
    %p322 = scmp.ne.s32.totalorder %s307, %s321
    %p323 = scmp.eq.s32.totalorder %s93, 0
    %p324 = por %p322, %p323
    %s326 = sadd.s32 %s325, 1
    %p329 = scmp.eq.s32.totalorder %s87, 1
    %p330 = scmp.ne.s32.totalorder %s325, %s327
    %p331 = scmp.eq.s32.totalorder %s87, 0
    %p332 = por %p330, %p331
    %p333 = scmp.ne.s32.totalorder %s325, %s327
    %p334 = scmp.eq.s32.totalorder %s92, 1
    %p335 = por %p333, %p334
    %p336 = scmp.ne.s32.totalorder %s327, %s328
    %p337 = scmp.eq.s32.totalorder %s92, 0
    %p338 = por %p336, %p337
    %p339 = scmp.ne.s32.totalorder %s327, %s328
    %p340 = scmp.eq.s32.totalorder %s93, 1
    %p341 = por %p339, %p340
    %p343 = scmp.ne.s32.totalorder %s328, %s342
    %p344 = scmp.eq.s32.totalorder %s93, 0
    %p345 = por %p343, %p344
    %s347 = sadd.s32 %s346, 1
    %p350 = scmp.eq.s32.totalorder %s87, 1
    %p351 = scmp.ne.s32.totalorder %s346, %s348
    %p352 = scmp.eq.s32.totalorder %s87, 0
    %p353 = por %p351, %p352
    %p354 = scmp.ne.s32.totalorder %s346, %s348
    %p355 = scmp.eq.s32.totalorder %s92, 1
    %p356 = por %p354, %p355
    %p357 = scmp.ne.s32.totalorder %s348, %s349
    %p358 = scmp.eq.s32.totalorder %s92, 0
    %p359 = por %p357, %p358
    %p360 = scmp.ne.s32.totalorder %s348, %s349
    %p361 = scmp.eq.s32.totalorder %s93, 1
    %p362 = por %p360, %p361
    %p364 = scmp.ne.s32.totalorder %s349, %s363
    %p365 = scmp.eq.s32.totalorder %s93, 0
    %p366 = por %p364, %p365
    %s368 = sadd.s32 %s367, 1
    %p371 = scmp.eq.s32.totalorder %s87, 1
    %p372 = scmp.ne.s32.totalorder %s367, %s369
    %p373 = scmp.eq.s32.totalorder %s87, 0
    %p374 = por %p372, %p373
    %p375 = scmp.ne.s32.totalorder %s367, %s369
    %p376 = scmp.eq.s32.totalorder %s92, 1
    %p377 = por %p375, %p376
    %p378 = scmp.ne.s32.totalorder %s369, %s370
    %p379 = scmp.eq.s32.totalorder %s92, 0
    %p380 = por %p378, %p379
    %p381 = scmp.ne.s32.totalorder %s369, %s370
    %p382 = scmp.eq.s32.totalorder %s93, 1
    %p383 = por %p381, %p382
    %p385 = scmp.ne.s32.totalorder %s370, %s384
    %p386 = scmp.eq.s32.totalorder %s93, 0
    %p387 = por %p385, %p386
    %s389 = sadd.s32 %s388, 1
    %p392 = scmp.eq.s32.totalorder %s87, 1
    %p393 = scmp.ne.s32.totalorder %s388, %s390
    %p394 = scmp.eq.s32.totalorder %s87, 0
    %p395 = por %p393, %p394
    %p396 = scmp.ne.s32.totalorder %s388, %s390
    %p397 = scmp.eq.s32.totalorder %s92, 1
    %p398 = por %p396, %p397
    %p399 = scmp.ne.s32.totalorder %s390, %s391
    %p400 = scmp.eq.s32.totalorder %s92, 0
    %p401 = por %p399, %p400
    %p402 = scmp.ne.s32.totalorder %s390, %s391
    %p403 = scmp.eq.s32.totalorder %s93, 1
    %p404 = por %p402, %p403
    %p406 = scmp.ne.s32.totalorder %s391, %s405
    %p407 = scmp.eq.s32.totalorder %s93, 0
    %p408 = por %p406, %p407
    %s410 = sadd.s32 %s409, 1
    %p413 = scmp.eq.s32.totalorder %s87, 1
    %p414 = scmp.ne.s32.totalorder %s409, %s411
    %p415 = scmp.eq.s32.totalorder %s87, 0
    %p416 = por %p414, %p415
    %p417 = scmp.ne.s32.totalorder %s409, %s411
    %p418 = scmp.eq.s32.totalorder %s92, 1
    %p419 = por %p417, %p418
    %p420 = scmp.ne.s32.totalorder %s411, %s412
    %p421 = scmp.eq.s32.totalorder %s92, 0
    %p422 = por %p420, %p421
    %p423 = scmp.ne.s32.totalorder %s411, %s412
    %p424 = scmp.eq.s32.totalorder %s93, 1
    %p425 = por %p423, %p424
    %p427 = scmp.ne.s32.totalorder %s412, %s426
    %p428 = scmp.eq.s32.totalorder %s93, 0
    %p429 = por %p427, %p428
    %s431 = sadd.s32 %s430, 1
    %p434 = scmp.eq.s32.totalorder %s87, 1
    %p435 = scmp.ne.s32.totalorder %s430, %s432
    %p436 = scmp.eq.s32.totalorder %s87, 0
    %p437 = por %p435, %p436
    %p438 = scmp.ne.s32.totalorder %s430, %s432
    %p439 = scmp.eq.s32.totalorder %s92, 1
    %p440 = por %p438, %p439
    %p441 = scmp.ne.s32.totalorder %s432, %s433
    %p442 = scmp.eq.s32.totalorder %s92, 0
    %p443 = por %p441, %p442
    %p444 = scmp.ne.s32.totalorder %s432, %s433
    %p445 = scmp.eq.s32.totalorder %s93, 1
    %p446 = por %p444, %p445
    %p448 = scmp.ne.s32.totalorder %s433, %s447
    %p449 = scmp.eq.s32.totalorder %s93, 0
    %p450 = por %p448, %p449
    %s452 = sadd.s32 %s451, 1
    %p455 = scmp.eq.s32.totalorder %s87, 1
    %p456 = scmp.ne.s32.totalorder %s451, %s453
    %p457 = scmp.eq.s32.totalorder %s87, 0
    %p458 = por %p456, %p457
    %p459 = scmp.ne.s32.totalorder %s451, %s453
    %p460 = scmp.eq.s32.totalorder %s92, 1
    %p461 = por %p459, %p460
    %p462 = scmp.ne.s32.totalorder %s453, %s454
    %p463 = scmp.eq.s32.totalorder %s92, 0
    %p464 = por %p462, %p463
    %p465 = scmp.ne.s32.totalorder %s453, %s454
    %p466 = scmp.eq.s32.totalorder %s93, 1
    %p467 = por %p465, %p466
    %p469 = scmp.ne.s32.totalorder %s454, %s468
    %p470 = scmp.eq.s32.totalorder %s93, 0
    %p471 = por %p469, %p470
    %s473 = sadd.s32 %s472, 1
    %p476 = scmp.eq.s32.totalorder %s87, 1
    %p477 = scmp.ne.s32.totalorder %s472, %s474
    %p478 = scmp.eq.s32.totalorder %s87, 0
    %p479 = por %p477, %p478
    %p480 = scmp.ne.s32.totalorder %s472, %s474
    %p481 = scmp.eq.s32.totalorder %s92, 1
    %p482 = por %p480, %p481
    %p483 = scmp.ne.s32.totalorder %s474, %s475
    %p484 = scmp.eq.s32.totalorder %s92, 0
    %p485 = por %p483, %p484
    %p486 = scmp.ne.s32.totalorder %s474, %s475
    %p487 = scmp.eq.s32.totalorder %s93, 1
    %p488 = por %p486, %p487
    %p490 = scmp.ne.s32.totalorder %s475, %s489
    %p491 = scmp.eq.s32.totalorder %s93, 0
    %p492 = por %p490, %p491
    %s494 = sadd.s32 %s493, 1
    %p497 = scmp.eq.s32.totalorder %s87, 1
    %p498 = scmp.ne.s32.totalorder %s493, %s495
    %p499 = scmp.eq.s32.totalorder %s87, 0
    %p500 = por %p498, %p499
    %p501 = scmp.ne.s32.totalorder %s493, %s495
    %p502 = scmp.eq.s32.totalorder %s92, 1
    %p503 = por %p501, %p502
    %p504 = scmp.ne.s32.totalorder %s495, %s496
    %p505 = scmp.eq.s32.totalorder %s92, 0
    %p506 = por %p504, %p505
    %p507 = scmp.ne.s32.totalorder %s495, %s496
    %p508 = scmp.eq.s32.totalorder %s93, 1
    %p509 = por %p507, %p508
    %p511 = scmp.ne.s32.totalorder %s496, %s510
    %p512 = scmp.eq.s32.totalorder %s93, 0
    %p513 = por %p511, %p512
    %s515 = sadd.s32 %s514, 1
    %p518 = scmp.eq.s32.totalorder %s87, 1
    %p519 = scmp.ne.s32.totalorder %s514, %s516
    %p520 = scmp.eq.s32.totalorder %s87, 0
    %p521 = por %p519, %p520
    %p522 = scmp.ne.s32.totalorder %s514, %s516
    %p523 = scmp.eq.s32.totalorder %s92, 1
    %p524 = por %p522, %p523
    %p525 = scmp.ne.s32.totalorder %s516, %s517
    %p526 = scmp.eq.s32.totalorder %s92, 0
    %p527 = por %p525, %p526
    %p528 = scmp.ne.s32.totalorder %s516, %s517
    %p529 = scmp.eq.s32.totalorder %s93, 1
    %p530 = por %p528, %p529
    %p532 = scmp.ne.s32.totalorder %s517, %s531
    %p533 = scmp.eq.s32.totalorder %s93, 0
    %p534 = por %p532, %p533
    %s536 = sadd.s32 %s535, 1
    %p539 = scmp.eq.s32.totalorder %s87, 1
    %p540 = scmp.ne.s32.totalorder %s535, %s537
    %p541 = scmp.eq.s32.totalorder %s87, 0
    %p542 = por %p540, %p541
    %p543 = scmp.ne.s32.totalorder %s535, %s537
    %p544 = scmp.eq.s32.totalorder %s92, 1
    %p545 = por %p543, %p544
    %p546 = scmp.ne.s32.totalorder %s537, %s538
    %p547 = scmp.eq.s32.totalorder %s92, 0
    %p548 = por %p546, %p547
    %p549 = scmp.ne.s32.totalorder %s537, %s538
    %p550 = scmp.eq.s32.totalorder %s93, 1
    %p551 = por %p549, %p550
    %p553 = scmp.ne.s32.totalorder %s538, %s552
    %p554 = scmp.eq.s32.totalorder %s93, 0
    %p555 = por %p553, %p554
    %s557 = sadd.s32 %s556, 1
    %p560 = scmp.eq.s32.totalorder %s87, 1
    %p561 = scmp.ne.s32.totalorder %s556, %s558
    %p562 = scmp.eq.s32.totalorder %s87, 0
    %p563 = por %p561, %p562
    %p564 = scmp.ne.s32.totalorder %s556, %s558
    %p565 = scmp.eq.s32.totalorder %s92, 1
    %p566 = por %p564, %p565
    %p567 = scmp.ne.s32.totalorder %s558, %s559
    %p568 = scmp.eq.s32.totalorder %s92, 0
    %p569 = por %p567, %p568
    %p570 = scmp.ne.s32.totalorder %s558, %s559
    %p571 = scmp.eq.s32.totalorder %s93, 1
    %p572 = por %p570, %p571
    %p574 = scmp.ne.s32.totalorder %s559, %s573
    %p575 = scmp.eq.s32.totalorder %s93, 0
    %p576 = por %p574, %p575
    %s578 = sadd.s32 %s577, 1
    %p581 = scmp.eq.s32.totalorder %s87, 1
    %p582 = scmp.ne.s32.totalorder %s577, %s579
    %p583 = scmp.eq.s32.totalorder %s87, 0
    %p584 = por %p582, %p583
    %p585 = scmp.ne.s32.totalorder %s577, %s579
    %p586 = scmp.eq.s32.totalorder %s92, 1
    %p587 = por %p585, %p586
    %p588 = scmp.ne.s32.totalorder %s579, %s580
    %p589 = scmp.eq.s32.totalorder %s92, 0
    %p590 = por %p588, %p589
    %p591 = scmp.ne.s32.totalorder %s579, %s580
    %p592 = scmp.eq.s32.totalorder %s93, 1
    %p593 = por %p591, %p592
    %p595 = scmp.ne.s32.totalorder %s580, %s594
    %p596 = scmp.eq.s32.totalorder %s93, 0
    %p597 = por %p595, %p596
    %s599 = sadd.s32 %s598, 1
    %p602 = scmp.eq.s32.totalorder %s87, 1
    %p603 = scmp.ne.s32.totalorder %s598, %s600
    %p604 = scmp.eq.s32.totalorder %s87, 0
    %p605 = por %p603, %p604
    %p606 = scmp.ne.s32.totalorder %s598, %s600
    %p607 = scmp.eq.s32.totalorder %s92, 1
    %p608 = por %p606, %p607
    %p609 = scmp.ne.s32.totalorder %s600, %s601
    %p610 = scmp.eq.s32.totalorder %s92, 0
    %p611 = por %p609, %p610
    %p612 = scmp.ne.s32.totalorder %s600, %s601
    %p613 = scmp.eq.s32.totalorder %s93, 1
    %p614 = por %p612, %p613
    %p616 = scmp.ne.s32.totalorder %s601, %s615
    %p617 = scmp.eq.s32.totalorder %s93, 0
    %p618 = por %p616, %p617
    %s620 = sadd.s32 %s619, 1
    %p623 = scmp.eq.s32.totalorder %s87, 1
    %p624 = scmp.ne.s32.totalorder %s619, %s621
    %p625 = scmp.eq.s32.totalorder %s87, 0
    %p626 = por %p624, %p625
    %p627 = scmp.ne.s32.totalorder %s619, %s621
    %p628 = scmp.eq.s32.totalorder %s92, 1
    %p629 = por %p627, %p628
    %p630 = scmp.ne.s32.totalorder %s621, %s622
    %p631 = scmp.eq.s32.totalorder %s92, 0
    %p632 = por %p630, %p631
    %p633 = scmp.ne.s32.totalorder %s621, %s622
    %p634 = scmp.eq.s32.totalorder %s93, 1
    %p635 = por %p633, %p634
    %p637 = scmp.ne.s32.totalorder %s622, %s636
    %p638 = scmp.eq.s32.totalorder %s93, 0
    %p639 = por %p637, %p638
    %s641 = sadd.s32 %s640, 1
    %p644 = scmp.eq.s32.totalorder %s87, 1
    %p645 = scmp.ne.s32.totalorder %s640, %s642
    %p646 = scmp.eq.s32.totalorder %s87, 0
    %p647 = por %p645, %p646
    %p648 = scmp.ne.s32.totalorder %s640, %s642
    %p649 = scmp.eq.s32.totalorder %s92, 1
    %p650 = por %p648, %p649
    %p651 = scmp.ne.s32.totalorder %s642, %s643
    %p652 = scmp.eq.s32.totalorder %s92, 0
    %p653 = por %p651, %p652
    %p654 = scmp.ne.s32.totalorder %s642, %s643
    %p655 = scmp.eq.s32.totalorder %s93, 1
    %p656 = por %p654, %p655
    %p658 = scmp.ne.s32.totalorder %s643, %s657
    %p659 = scmp.eq.s32.totalorder %s93, 0
    %p660 = por %p658, %p659
    %s662 = sadd.s32 %s661, 1
    %p665 = scmp.eq.s32.totalorder %s87, 1
    %p666 = scmp.ne.s32.totalorder %s661, %s663
    %p667 = scmp.eq.s32.totalorder %s87, 0
    %p668 = por %p666, %p667
    %p669 = scmp.ne.s32.totalorder %s661, %s663
    %p670 = scmp.eq.s32.totalorder %s92, 1
    %p671 = por %p669, %p670
    %p672 = scmp.ne.s32.totalorder %s663, %s664
    %p673 = scmp.eq.s32.totalorder %s92, 0
    %p674 = por %p672, %p673
    %p675 = scmp.ne.s32.totalorder %s663, %s664
    %p676 = scmp.eq.s32.totalorder %s93, 1
    %p677 = por %p675, %p676
    %p679 = scmp.ne.s32.totalorder %s664, %s678
    %p680 = scmp.eq.s32.totalorder %s93, 0
    %p681 = por %p679, %p680
    %s683 = sadd.s32 %s682, 1
    %p686 = scmp.eq.s32.totalorder %s87, 1
    %p687 = scmp.ne.s32.totalorder %s682, %s684
    %p688 = scmp.eq.s32.totalorder %s87, 0
    %p689 = por %p687, %p688
    %p690 = scmp.ne.s32.totalorder %s682, %s684
    %p691 = scmp.eq.s32.totalorder %s92, 1
    %p692 = por %p690, %p691
    %p693 = scmp.ne.s32.totalorder %s684, %s685
    %p694 = scmp.eq.s32.totalorder %s92, 0
    %p695 = por %p693, %p694
    %p696 = scmp.ne.s32.totalorder %s684, %s685
    %p697 = scmp.eq.s32.totalorder %s93, 1
    %p698 = por %p696, %p697
    %p700 = scmp.ne.s32.totalorder %s685, %s699
    %p701 = scmp.eq.s32.totalorder %s93, 0
    %p702 = por %p700, %p701
    %s704 = sadd.s32 %s703, 1
    %p707 = scmp.eq.s32.totalorder %s87, 1
    %p708 = scmp.ne.s32.totalorder %s703, %s705
    %p709 = scmp.eq.s32.totalorder %s87, 0
    %p710 = por %p708, %p709
    %p711 = scmp.ne.s32.totalorder %s703, %s705
    %p712 = scmp.eq.s32.totalorder %s92, 1
    %p713 = por %p711, %p712
    %p714 = scmp.ne.s32.totalorder %s705, %s706
    %p715 = scmp.eq.s32.totalorder %s92, 0
    %p716 = por %p714, %p715
    %p717 = scmp.ne.s32.totalorder %s705, %s706
    %p718 = scmp.eq.s32.totalorder %s93, 1
    %p719 = por %p717, %p718
    %p721 = scmp.ne.s32.totalorder %s706, %s720
    %p722 = scmp.eq.s32.totalorder %s93, 0
    %p723 = por %p721, %p722
    %s725 = sadd.s32 %s724, 1
    %p728 = scmp.eq.s32.totalorder %s87, 1
    %p729 = scmp.ne.s32.totalorder %s724, %s726
    %p730 = scmp.eq.s32.totalorder %s87, 0
    %p731 = por %p729, %p730
    %p732 = scmp.ne.s32.totalorder %s724, %s726
    %p733 = scmp.eq.s32.totalorder %s92, 1
    %p734 = por %p732, %p733
    %p735 = scmp.ne.s32.totalorder %s726, %s727
    %p736 = scmp.eq.s32.totalorder %s92, 0
    %p737 = por %p735, %p736
    %p738 = scmp.ne.s32.totalorder %s726, %s727
    %p739 = scmp.eq.s32.totalorder %s93, 1
    %p740 = por %p738, %p739
    %p742 = scmp.ne.s32.totalorder %s727, %s741
    %p743 = scmp.eq.s32.totalorder %s93, 0
    %p744 = por %p742, %p743
    %s746 = sadd.s32 %s745, 1
    %p749 = scmp.eq.s32.totalorder %s87, 1
    %p750 = scmp.ne.s32.totalorder %s745, %s747
    %p751 = scmp.eq.s32.totalorder %s87, 0
    %p752 = por %p750, %p751
    %p753 = scmp.ne.s32.totalorder %s745, %s747
    %p754 = scmp.eq.s32.totalorder %s92, 1
    %p755 = por %p753, %p754
    %p756 = scmp.ne.s32.totalorder %s747, %s748
    %p757 = scmp.eq.s32.totalorder %s92, 0
    %p758 = por %p756, %p757
    %p759 = scmp.ne.s32.totalorder %s747, %s748
    %p760 = scmp.eq.s32.totalorder %s93, 1
    %p761 = por %p759, %p760
    %p763 = scmp.ne.s32.totalorder %s748, %s762
    %p764 = scmp.eq.s32.totalorder %s93, 0
    %p765 = por %p763, %p764
    %s767 = sadd.s32 %s766, 1
    %p770 = scmp.eq.s32.totalorder %s87, 1
    %p771 = scmp.ne.s32.totalorder %s766, %s768
    %p772 = scmp.eq.s32.totalorder %s87, 0
    %p773 = por %p771, %p772
    %p774 = scmp.ne.s32.totalorder %s766, %s768
    %p775 = scmp.eq.s32.totalorder %s92, 1
    %p776 = por %p774, %p775
    %p777 = scmp.ne.s32.totalorder %s768, %s769
    %p778 = scmp.eq.s32.totalorder %s92, 0
    %p779 = por %p777, %p778
    %p780 = scmp.ne.s32.totalorder %s768, %s769
    %p781 = scmp.eq.s32.totalorder %s93, 1
    %p782 = por %p780, %p781
    %p784 = scmp.ne.s32.totalorder %s769, %s783
    %p785 = scmp.eq.s32.totalorder %s93, 0
    %p786 = por %p784, %p785
    %s788 = sadd.s32 %s787, 1
    %p791 = scmp.eq.s32.totalorder %s87, 1
    %p792 = scmp.ne.s32.totalorder %s787, %s789
    %p793 = scmp.eq.s32.totalorder %s87, 0
    %p794 = por %p792, %p793
    %p795 = scmp.ne.s32.totalorder %s787, %s789
    %p796 = scmp.eq.s32.totalorder %s92, 1
    %p797 = por %p795, %p796
    %p798 = scmp.ne.s32.totalorder %s789, %s790
    %p799 = scmp.eq.s32.totalorder %s92, 0
    %p800 = por %p798, %p799
    %p801 = scmp.ne.s32.totalorder %s789, %s790
    %p802 = scmp.eq.s32.totalorder %s93, 1
    %p803 = por %p801, %p802
    %p805 = scmp.ne.s32.totalorder %s790, %s804
    %p806 = scmp.eq.s32.totalorder %s93, 0
    %p807 = por %p805, %p806
    %s809 = sadd.s32 %s808, 1
    %p812 = scmp.eq.s32.totalorder %s87, 1
    %p813 = scmp.ne.s32.totalorder %s808, %s810
    %p814 = scmp.eq.s32.totalorder %s87, 0
    %p815 = por %p813, %p814
    %p816 = scmp.ne.s32.totalorder %s808, %s810
    %p817 = scmp.eq.s32.totalorder %s92, 1
    %p818 = por %p816, %p817
    %p819 = scmp.ne.s32.totalorder %s810, %s811
    %p820 = scmp.eq.s32.totalorder %s92, 0
    %p821 = por %p819, %p820
    %p822 = scmp.ne.s32.totalorder %s810, %s811
    %p823 = scmp.eq.s32.totalorder %s93, 1
    %p824 = por %p822, %p823
    %p826 = scmp.ne.s32.totalorder %s811, %s825
    %p827 = scmp.eq.s32.totalorder %s93, 0
    %p828 = por %p826, %p827
    %s830 = sadd.s32 %s829, 1
    %p833 = scmp.eq.s32.totalorder %s87, 1
    %p834 = scmp.ne.s32.totalorder %s829, %s831
    %p835 = scmp.eq.s32.totalorder %s87, 0
    %p836 = por %p834, %p835
    %p837 = scmp.ne.s32.totalorder %s829, %s831
    %p838 = scmp.eq.s32.totalorder %s92, 1
    %p839 = por %p837, %p838
    %p840 = scmp.ne.s32.totalorder %s831, %s832
    %p841 = scmp.eq.s32.totalorder %s92, 0
    %p842 = por %p840, %p841
    %p843 = scmp.ne.s32.totalorder %s831, %s832
    %p844 = scmp.eq.s32.totalorder %s93, 1
    %p845 = por %p843, %p844
    %p847 = scmp.ne.s32.totalorder %s832, %s846
    %p848 = scmp.eq.s32.totalorder %s93, 0
    %p849 = por %p847, %p848
    %s851 = sadd.s32 %s850, 1
    %p854 = scmp.eq.s32.totalorder %s87, 1
    %p855 = scmp.ne.s32.totalorder %s850, %s852
    %p856 = scmp.eq.s32.totalorder %s87, 0
    %p857 = por %p855, %p856
    %p858 = scmp.ne.s32.totalorder %s850, %s852
    %p859 = scmp.eq.s32.totalorder %s92, 1
    %p860 = por %p858, %p859
    %p861 = scmp.ne.s32.totalorder %s852, %s853
    %p862 = scmp.eq.s32.totalorder %s92, 0
    %p863 = por %p861, %p862
    %p864 = scmp.ne.s32.totalorder %s852, %s853
    %p865 = scmp.eq.s32.totalorder %s93, 1
    %p866 = por %p864, %p865
    %p868 = scmp.ne.s32.totalorder %s853, %s867
    %p869 = scmp.eq.s32.totalorder %s93, 0
    %p870 = por %p868, %p869
    %s872 = sadd.s32 %s871, 1
    %p875 = scmp.eq.s32.totalorder %s87, 1
    %p876 = scmp.ne.s32.totalorder %s871, %s873
    %p877 = scmp.eq.s32.totalorder %s87, 0
    %p878 = por %p876, %p877
    %p879 = scmp.ne.s32.totalorder %s871, %s873
    %p880 = scmp.eq.s32.totalorder %s92, 1
    %p881 = por %p879, %p880
    %p882 = scmp.ne.s32.totalorder %s873, %s874
    %p883 = scmp.eq.s32.totalorder %s92, 0
    %p884 = por %p882, %p883
    %p885 = scmp.ne.s32.totalorder %s873, %s874
    %p886 = scmp.eq.s32.totalorder %s93, 1
    %p887 = por %p885, %p886
    %p889 = scmp.ne.s32.totalorder %s874, %s888
    %p890 = scmp.eq.s32.totalorder %s93, 0
    %p891 = por %p889, %p890
    %s893 = sadd.s32 %s892, 1
    %p896 = scmp.eq.s32.totalorder %s87, 1
    %p897 = scmp.ne.s32.totalorder %s892, %s894
    %p898 = scmp.eq.s32.totalorder %s87, 0
    %p899 = por %p897, %p898
    %p900 = scmp.ne.s32.totalorder %s892, %s894
    %p901 = scmp.eq.s32.totalorder %s92, 1
    %p902 = por %p900, %p901
    %p903 = scmp.ne.s32.totalorder %s894, %s895
    %p904 = scmp.eq.s32.totalorder %s92, 0
    %p905 = por %p903, %p904
    %p906 = scmp.ne.s32.totalorder %s894, %s895
    %p907 = scmp.eq.s32.totalorder %s93, 1
    %p908 = por %p906, %p907
    %p910 = scmp.ne.s32.totalorder %s895, %s909
    %p911 = scmp.eq.s32.totalorder %s93, 0
    %p912 = por %p910, %p911
    %s913 = ssub.s32 %s87, %s94
    %p914 = scmp.eq.s32.totalorder %s913, 0
    %s916 = sadd.s32 %s915, 1
    %s917 = scalar_select %p914, %s915, %s916
    %p920 = pneg %p914
    %p921 = scmp.eq.s32.totalorder %s87, 1
    %p922 = por %p920, %p921
    %p923 = scmp.ne.s32.totalorder %s915, %s918
    %p924 = scmp.eq.s32.totalorder %s87, 0
    %p925 = por %p923, %p924
    %p926 = scmp.ne.s32.totalorder %s915, %s918
    %p927 = scmp.eq.s32.totalorder %s92, 1
    %p928 = por %p926, %p927
    %p929 = scmp.ne.s32.totalorder %s918, %s919
    %p930 = scmp.eq.s32.totalorder %s92, 0
    %p931 = por %p929, %p930
    %p932 = scmp.ne.s32.totalorder %s918, %s919
    %p933 = scmp.eq.s32.totalorder %s93, 1
    %p934 = por %p932, %p933
    %p936 = scmp.ne.s32.totalorder %s919, %s935
    %p937 = scmp.eq.s32.totalorder %s93, 0
    %p938 = por %p936, %p937
    %p939 = scmp.le.s32.totalorder 1, %s87
    %p940 = scmp.lt.s32.totalorder %s87, 3
    %p941 = pnand %p939, %p940
    %p942 = pneg %p941
    // Predicated region
    $region9: #{tpu_custom_call.1} parent=5 // pred_check
      _
    $region10: #{tpu_custom_call.1} parent=5 // pred_check_branch
      %944 = sbr.rel (%p941) target = $region12
    $region11: #{tpu_custom_call.1} parent=5 // pred_region
      %s945 = ssub.s32 %s87, 1
      // Predicated region
      $region13: #{tpu_custom_call.1} parent=11 // pred_check
        %p946 = pneg %p212
      $region14: #{tpu_custom_call.1} parent=11 // pred_check_branch
        %948 = sbr.rel (%p946) target = $region16
      $region15: #{tpu_custom_call.1} parent=11 // pred_region
        _
      $region16: #{tpu_custom_call.1} parent=11 // pred_fallthru
        _
      // Predicated region
      $region17: #{tpu_custom_call.1} parent=11 // pred_check
        %p949 = pneg %p233
      $region18: #{tpu_custom_call.1} parent=11 // pred_check_branch
        %951 = sbr.rel (%p949) target = $region20
      $region19: #{tpu_custom_call.1} parent=11 // pred_region
        _
      $region20: #{tpu_custom_call.1} parent=11 // pred_fallthru
        _
      // Predicated region
      $region21: #{tpu_custom_call.1} parent=11 // pred_check
        %p952 = pneg %p254
      $region22: #{tpu_custom_call.1} parent=11 // pred_check_branch
        %954 = sbr.rel (%p952) target = $region24
      $region23: #{tpu_custom_call.1} parent=11 // pred_region
        _
      $region24: #{tpu_custom_call.1} parent=11 // pred_fallthru
        _
      // Predicated region
      $region25: #{tpu_custom_call.1} parent=11 // pred_check
        %p955 = pneg %p275
      $region26: #{tpu_custom_call.1} parent=11 // pred_check_branch
        %957 = sbr.rel (%p955) target = $region28
      $region27: #{tpu_custom_call.1} parent=11 // pred_region
        _
      $region28: #{tpu_custom_call.1} parent=11 // pred_fallthru
        _
      // Predicated region
      $region29: #{tpu_custom_call.1} parent=11 // pred_check
        %p958 = pneg %p296
      $region30: #{tpu_custom_call.1} parent=11 // pred_check_branch
        %960 = sbr.rel (%p958) target = $region32
      $region31: #{tpu_custom_call.1} parent=11 // pred_region
        _
      $region32: #{tpu_custom_call.1} parent=11 // pred_fallthru
        _
      // Predicated region
      $region33: #{tpu_custom_call.1} parent=11 // pred_check
        %p961 = pneg %p317
      $region34: #{tpu_custom_call.1} parent=11 // pred_check_branch
        %963 = sbr.rel (%p961) target = $region36
      $region35: #{tpu_custom_call.1} parent=11 // pred_region
        _
      $region36: #{tpu_custom_call.1} parent=11 // pred_fallthru
        _
      // Predicated region
      $region37: #{tpu_custom_call.1} parent=11 // pred_check
        %p964 = pneg %p338
      $region38: #{tpu_custom_call.1} parent=11 // pred_check_branch
        %966 = sbr.rel (%p964) target = $region40
      $region39: #{tpu_custom_call.1} parent=11 // pred_region
        _
      $region40: #{tpu_custom_call.1} parent=11 // pred_fallthru
        _
      // Predicated region
      $region41: #{tpu_custom_call.1} parent=11 // pred_check
        %p967 = pneg %p359
      $region42: #{tpu_custom_call.1} parent=11 // pred_check_branch
        %969 = sbr.rel (%p967) target = $region44
      $region43: #{tpu_custom_call.1} parent=11 // pred_region
        _
      $region44: #{tpu_custom_call.1} parent=11 // pred_fallthru
        _
      // Predicated region
      $region45: #{tpu_custom_call.1} parent=11 // pred_check
        %p970 = pneg %p380
      $region46: #{tpu_custom_call.1} parent=11 // pred_check_branch
        %972 = sbr.rel (%p970) target = $region48
      $region47: #{tpu_custom_call.1} parent=11 // pred_region
        _
      $region48: #{tpu_custom_call.1} parent=11 // pred_fallthru
        _
      // Predicated region
      $region49: #{tpu_custom_call.1} parent=11 // pred_check
        %p973 = pneg %p401
      $region50: #{tpu_custom_call.1} parent=11 // pred_check_branch
        %975 = sbr.rel (%p973) target = $region52
      $region51: #{tpu_custom_call.1} parent=11 // pred_region
        _
      $region52: #{tpu_custom_call.1} parent=11 // pred_fallthru
        _
      // Predicated region
      $region53: #{tpu_custom_call.1} parent=11 // pred_check
        %p976 = pneg %p422
      $region54: #{tpu_custom_call.1} parent=11 // pred_check_branch
        %978 = sbr.rel (%p976) target = $region56
      $region55: #{tpu_custom_call.1} parent=11 // pred_region
        _
      $region56: #{tpu_custom_call.1} parent=11 // pred_fallthru
        _
      // Predicated region
      $region57: #{tpu_custom_call.1} parent=11 // pred_check
        %p979 = pneg %p443
      $region58: #{tpu_custom_call.1} parent=11 // pred_check_branch
        %981 = sbr.rel (%p979) target = $region60
      $region59: #{tpu_custom_call.1} parent=11 // pred_region
        _
      $region60: #{tpu_custom_call.1} parent=11 // pred_fallthru
        _
      // Predicated region
      $region61: #{tpu_custom_call.1} parent=11 // pred_check
        %p982 = pneg %p464
      $region62: #{tpu_custom_call.1} parent=11 // pred_check_branch
        %984 = sbr.rel (%p982) target = $region64
      $region63: #{tpu_custom_call.1} parent=11 // pred_region
        _
      $region64: #{tpu_custom_call.1} parent=11 // pred_fallthru
        _
      // Predicated region
      $region65: #{tpu_custom_call.1} parent=11 // pred_check
        %p985 = pneg %p485
      $region66: #{tpu_custom_call.1} parent=11 // pred_check_branch
        %987 = sbr.rel (%p985) target = $region68
      $region67: #{tpu_custom_call.1} parent=11 // pred_region
        _
      $region68: #{tpu_custom_call.1} parent=11 // pred_fallthru
        _
      // Predicated region
      $region69: #{tpu_custom_call.1} parent=11 // pred_check
        %p988 = pneg %p506
      $region70: #{tpu_custom_call.1} parent=11 // pred_check_branch
        %990 = sbr.rel (%p988) target = $region72
      $region71: #{tpu_custom_call.1} parent=11 // pred_region
        _
      $region72: #{tpu_custom_call.1} parent=11 // pred_fallthru
        _
      // Predicated region
      $region73: #{tpu_custom_call.1} parent=11 // pred_check
        %p991 = pneg %p527
      $region74: #{tpu_custom_call.1} parent=11 // pred_check_branch
        %993 = sbr.rel (%p991) target = $region76
      $region75: #{tpu_custom_call.1} parent=11 // pred_region
        _
      $region76: #{tpu_custom_call.1} parent=11 // pred_fallthru
        _
      // Predicated region
      $region77: #{tpu_custom_call.1} parent=11 // pred_check
        %p994 = pneg %p548
      $region78: #{tpu_custom_call.1} parent=11 // pred_check_branch
        %996 = sbr.rel (%p994) target = $region80
      $region79: #{tpu_custom_call.1} parent=11 // pred_region
        _
      $region80: #{tpu_custom_call.1} parent=11 // pred_fallthru
        _
      // Predicated region
      $region81: #{tpu_custom_call.1} parent=11 // pred_check
        %p997 = pneg %p569
      $region82: #{tpu_custom_call.1} parent=11 // pred_check_branch
        %999 = sbr.rel (%p997) target = $region84
      $region83: #{tpu_custom_call.1} parent=11 // pred_region
        _
      $region84: #{tpu_custom_call.1} parent=11 // pred_fallthru
        _
      // Predicated region
      $region85: #{tpu_custom_call.1} parent=11 // pred_check
        %p1000 = pneg %p590
      $region86: #{tpu_custom_call.1} parent=11 // pred_check_branch
        %1002 = sbr.rel (%p1000) target = $region88
      $region87: #{tpu_custom_call.1} parent=11 // pred_region
        _
      $region88: #{tpu_custom_call.1} parent=11 // pred_fallthru
        _
      // Predicated region
      $region89: #{tpu_custom_call.1} parent=11 // pred_check
        %p1003 = pneg %p611
      $region90: #{tpu_custom_call.1} parent=11 // pred_check_branch
        %1005 = sbr.rel (%p1003) target = $region92
      $region91: #{tpu_custom_call.1} parent=11 // pred_region
        _
      $region92: #{tpu_custom_call.1} parent=11 // pred_fallthru
        _
      // Predicated region
      $region93: #{tpu_custom_call.1} parent=11 // pred_check
        %p1006 = pneg %p632
      $region94: #{tpu_custom_call.1} parent=11 // pred_check_branch
        %1008 = sbr.rel (%p1006) target = $region96
      $region95: #{tpu_custom_call.1} parent=11 // pred_region
        _
      $region96: #{tpu_custom_call.1} parent=11 // pred_fallthru
        _
      // Predicated region
      $region97: #{tpu_custom_call.1} parent=11 // pred_check
        %p1009 = pneg %p653
      $region98: #{tpu_custom_call.1} parent=11 // pred_check_branch
        %1011 = sbr.rel (%p1009) target = $region100
      $region99: #{tpu_custom_call.1} parent=11 // pred_region
        _
      $region100: #{tpu_custom_call.1} parent=11 // pred_fallthru
        _
      // Predicated region
      $region101: #{tpu_custom_call.1} parent=11 // pred_check
        %p1012 = pneg %p674
      $region102: #{tpu_custom_call.1} parent=11 // pred_check_branch
        %1014 = sbr.rel (%p1012) target = $region104
      $region103: #{tpu_custom_call.1} parent=11 // pred_region
        _
      $region104: #{tpu_custom_call.1} parent=11 // pred_fallthru
        _
      // Predicated region
      $region105: #{tpu_custom_call.1} parent=11 // pred_check
        %p1015 = pneg %p695
      $region106: #{tpu_custom_call.1} parent=11 // pred_check_branch
        %1017 = sbr.rel (%p1015) target = $region108
      $region107: #{tpu_custom_call.1} parent=11 // pred_region
        _
      $region108: #{tpu_custom_call.1} parent=11 // pred_fallthru
        _
      // Predicated region
      $region109: #{tpu_custom_call.1} parent=11 // pred_check
        %p1018 = pneg %p716
      $region110: #{tpu_custom_call.1} parent=11 // pred_check_branch
        %1020 = sbr.rel (%p1018) target = $region112
      $region111: #{tpu_custom_call.1} parent=11 // pred_region
        _
      $region112: #{tpu_custom_call.1} parent=11 // pred_fallthru
        _
      // Predicated region
      $region113: #{tpu_custom_call.1} parent=11 // pred_check
        %p1021 = pneg %p737
      $region114: #{tpu_custom_call.1} parent=11 // pred_check_branch
        %1023 = sbr.rel (%p1021) target = $region116
      $region115: #{tpu_custom_call.1} parent=11 // pred_region
        _
      $region116: #{tpu_custom_call.1} parent=11 // pred_fallthru
        _
      // Predicated region
      $region117: #{tpu_custom_call.1} parent=11 // pred_check
        %p1024 = pneg %p758
      $region118: #{tpu_custom_call.1} parent=11 // pred_check_branch
        %1026 = sbr.rel (%p1024) target = $region120
      $region119: #{tpu_custom_call.1} parent=11 // pred_region
        _
      $region120: #{tpu_custom_call.1} parent=11 // pred_fallthru
        _
      // Predicated region
      $region121: #{tpu_custom_call.1} parent=11 // pred_check
        %p1027 = pneg %p779
      $region122: #{tpu_custom_call.1} parent=11 // pred_check_branch
        %1029 = sbr.rel (%p1027) target = $region124
      $region123: #{tpu_custom_call.1} parent=11 // pred_region
        _
      $region124: #{tpu_custom_call.1} parent=11 // pred_fallthru
        _
      // Predicated region
      $region125: #{tpu_custom_call.1} parent=11 // pred_check
        %p1030 = pneg %p800
      $region126: #{tpu_custom_call.1} parent=11 // pred_check_branch
        %1032 = sbr.rel (%p1030) target = $region128
      $region127: #{tpu_custom_call.1} parent=11 // pred_region
        _
      $region128: #{tpu_custom_call.1} parent=11 // pred_fallthru
        _
      // Predicated region
      $region129: #{tpu_custom_call.1} parent=11 // pred_check
        %p1033 = pneg %p821
      $region130: #{tpu_custom_call.1} parent=11 // pred_check_branch
        %1035 = sbr.rel (%p1033) target = $region132
      $region131: #{tpu_custom_call.1} parent=11 // pred_region
        _
      $region132: #{tpu_custom_call.1} parent=11 // pred_fallthru
        _
      // Predicated region
      $region133: #{tpu_custom_call.1} parent=11 // pred_check
        %p1036 = pneg %p842
      $region134: #{tpu_custom_call.1} parent=11 // pred_check_branch
        %1038 = sbr.rel (%p1036) target = $region136
      $region135: #{tpu_custom_call.1} parent=11 // pred_region
        _
      $region136: #{tpu_custom_call.1} parent=11 // pred_fallthru
        _
      // Predicated region
      $region137: #{tpu_custom_call.1} parent=11 // pred_check
        %p1039 = pneg %p863
      $region138: #{tpu_custom_call.1} parent=11 // pred_check_branch
        %1041 = sbr.rel (%p1039) target = $region140
      $region139: #{tpu_custom_call.1} parent=11 // pred_region
        _
      $region140: #{tpu_custom_call.1} parent=11 // pred_fallthru
        _
      // Predicated region
      $region141: #{tpu_custom_call.1} parent=11 // pred_check
        %p1042 = pneg %p884
      $region142: #{tpu_custom_call.1} parent=11 // pred_check_branch
        %1044 = sbr.rel (%p1042) target = $region144
      $region143: #{tpu_custom_call.1} parent=11 // pred_region
        _
      $region144: #{tpu_custom_call.1} parent=11 // pred_fallthru
        _
      // Predicated region
      $region145: #{tpu_custom_call.1} parent=11 // pred_check
        %p1045 = pneg %p905
      $region146: #{tpu_custom_call.1} parent=11 // pred_check_branch
        %1047 = sbr.rel (%p1045) target = $region148
      $region147: #{tpu_custom_call.1} parent=11 // pred_region
        _
      $region148: #{tpu_custom_call.1} parent=11 // pred_fallthru
        _
    $region12: #{tpu_custom_call.1} parent=5 // pred_fallthru
      _
    %p1048 = scmp.lt.s32.totalorder %s87, 2
    // Predicated region
    $region149: #{tpu_custom_call.1} parent=5 // pred_check
      %p1049 = pneg %p1048
    $region150: #{tpu_custom_call.1} parent=5 // pred_check_branch
      %1051 = sbr.rel (%p1049) target = $region152
    $region151: #{tpu_custom_call.1} parent=5 // pred_region
      // Predicated region
      $region153: #{tpu_custom_call.1} parent=151 // pred_check
        %p1052 = pneg %p107
      $region154: #{tpu_custom_call.1} parent=151 // pred_check_branch
        %1054 = sbr.rel (%p1052) target = $region156
      $region155: #{tpu_custom_call.1} parent=151 // pred_region
        %s1055 = smul.u32 8, %s87
        %p1056 = scmp.lt.s32.totalorder %s1055, 15
        %s1057 = scalar_select %p1056, %s1055, 15
        %s1058 = smul.addr %s1057, 8
        %s1059 = scalar_lea.vmem %s1, %s1058
        %s1060 = smul.u32 8, %s87
      $region156: #{tpu_custom_call.1} parent=151 // pred_fallthru
        _
      // Predicated region
      $region157: #{tpu_custom_call.1} parent=151 // pred_check
        %p1061 = pneg %p133
      $region158: #{tpu_custom_call.1} parent=151 // pred_check_branch
        %1063 = sbr.rel (%p1061) target = $region160
      $region159: #{tpu_custom_call.1} parent=151 // pred_region
        %s1064 = smul.u32 8, %s87
        %p1065 = scmp.lt.s32.totalorder %s1064, 15
        %s1066 = scalar_select %p1065, %s1064, 15
        %s1067 = smul.addr %s1066, 8
        %s1068 = scalar_lea.vmem %s3, %s1067
        %s1069 = smul.u32 8, %s87
      $region160: #{tpu_custom_call.1} parent=151 // pred_fallthru
        _
      // Predicated region
      $region161: #{tpu_custom_call.1} parent=151 // pred_check
        %p1070 = pneg %p159
      $region162: #{tpu_custom_call.1} parent=151 // pred_check_branch
        %1072 = sbr.rel (%p1070) target = $region164
      $region163: #{tpu_custom_call.1} parent=151 // pred_region
        %s1073 = smul.u32 8, %s87
        %p1074 = scmp.lt.s32.totalorder %s1073, 15
        %s1075 = scalar_select %p1074, %s1073, 15
        %s1076 = smul.addr %s1075, 8
        %s1077 = scalar_lea.vmem %s5, %s1076
        %s1078 = smul.u32 8, %s87
      $region164: #{tpu_custom_call.1} parent=151 // pred_fallthru
        _
      // Predicated region
      $region165: #{tpu_custom_call.1} parent=151 // pred_check
        %p1079 = pneg %p185
      $region166: #{tpu_custom_call.1} parent=151 // pred_check_branch
        %1081 = sbr.rel (%p1079) target = $region168
      $region167: #{tpu_custom_call.1} parent=151 // pred_region
        %p1082 = scmp.lt.s32.totalorder %s87, 1
        %s1083 = scalar_select %p1082, %s87, 1
        %s1084 = smul.addr %s1083, 8
        %s1085 = scalar_lea.vmem %s7, %s1084
      $region168: #{tpu_custom_call.1} parent=151 // pred_fallthru
        _
    $region152: #{tpu_custom_call.1} parent=5 // pred_fallthru
      _
    %p1086 = scmp.le.s32.totalorder 1, %s87
    %p1087 = scmp.lt.s32.totalorder %s87, 3
    %p1088 = pnand %p1086, %p1087
    %p1089 = pneg %p1088
    // Predicated region
    $region169: #{tpu_custom_call.1} parent=5 // pred_check
      _
    $region170: #{tpu_custom_call.1} parent=5 // pred_check_branch
      %1091 = sbr.rel (%p1088) target = $region172
    $region171: #{tpu_custom_call.1} parent=5 // pred_region
      %s1092 = ssub.s32 %s87, 1
      %s1093 = smul.u32 8, %s92
      %p1094 = scmp.lt.s32.totalorder %s1093, 15
      %s1095 = scalar_select %p1094, %s1093, 15
      %s1096 = smul.addr %s1095, 8
      %s1097 = scalar_lea.vmem %s1, %s1096
      %p1098 = pneg %p113
      %p1099 = pneg %p110
      %s1100 = smul.u32 8, %s92
      %p1101 = scmp.lt.s32.totalorder %s1100, 15
      %s1102 = scalar_select %p1101, %s1100, 15
      %s1103 = smul.addr %s1102, 8
      %s1104 = scalar_lea.vmem %s3, %s1103
      %p1105 = pneg %p139
      %p1106 = pneg %p136
      %s1107 = smul.u32 8, %s92
      %p1108 = scmp.lt.s32.totalorder %s1107, 15
      %s1109 = scalar_select %p1108, %s1107, 15
      %s1110 = smul.addr %s1109, 8
      %s1111 = scalar_lea.vmem %s5, %s1110
      %p1112 = pneg %p165
      %p1113 = pneg %p162
      %p1114 = scmp.lt.s32.totalorder %s92, 1
      %s1115 = scalar_select %p1114, %s92, 1
      %s1116 = smul.addr %s1115, 8
      %s1117 = scalar_lea.vmem %s7, %s1116
      %p1118 = pneg %p191
      %p1119 = pneg %p188
      %p1120 = pneg %p212
      %p1121 = pneg %p209
      %p1122 = pneg %p233
      %p1123 = pneg %p230
      %p1124 = pneg %p254
      %p1125 = pneg %p251
      %p1126 = pneg %p275
      %p1127 = pneg %p272
      %p1128 = pneg %p296
      %p1129 = pneg %p293
      %p1130 = pneg %p317
      %p1131 = pneg %p314
      %p1132 = pneg %p338
      %p1133 = pneg %p335
      %p1134 = pneg %p359
      %p1135 = pneg %p356
      %p1136 = pneg %p380
      %p1137 = pneg %p377
      %p1138 = pneg %p401
      %p1139 = pneg %p398
      %p1140 = pneg %p422
      %p1141 = pneg %p419
      %p1142 = pneg %p443
      %p1143 = pneg %p440
      %p1144 = pneg %p464
      %p1145 = pneg %p461
      %p1146 = pneg %p485
      %p1147 = pneg %p482
      %p1148 = pneg %p506
      %p1149 = pneg %p503
      %p1150 = pneg %p527
      %p1151 = pneg %p524
      %p1152 = pneg %p548
      %p1153 = pneg %p545
      %p1154 = pneg %p569
      %p1155 = pneg %p566
      %p1156 = pneg %p590
      %p1157 = pneg %p587
      %p1158 = pneg %p611
      %p1159 = pneg %p608
      %p1160 = pneg %p632
      %p1161 = pneg %p629
      %p1162 = pneg %p653
      %p1163 = pneg %p650
      %p1164 = pneg %p674
      %p1165 = pneg %p671
      %p1166 = pneg %p695
      %p1167 = pneg %p692
      %p1168 = pneg %p716
      %p1169 = pneg %p713
      %p1170 = pneg %p737
      %p1171 = pneg %p734
      %p1172 = pneg %p758
      %p1173 = pneg %p755
      %p1174 = pneg %p779
      %p1175 = pneg %p776
      %p1176 = pneg %p800
      %p1177 = pneg %p797
      %p1178 = pneg %p821
      %p1179 = pneg %p818
      %p1180 = pneg %p842
      %p1181 = pneg %p839
      %p1182 = pneg %p863
      %p1183 = pneg %p860
      %p1184 = pneg %p884
      %p1185 = pneg %p881
      %p1186 = pneg %p905
      %p1187 = pneg %p902
      %p1188 = pneg %p931
      %p1189 = pneg %p928
      %p1190 = scmp.lt.s32.totalorder %s92, 1
      %s1191 = scalar_select %p1190, %s92, 1
      %s1192 = smul.addr %s1191, 8
      %s1193 = scalar_lea.vmem %s77, %s1192
      %s1194 = smul.u32 8, %s92
      %p1195 = scmp.lt.s32.totalorder %s1194, 15
      %s1196 = scalar_select %p1195, %s1194, 15
      %s1197 = smul.addr %s1196, 8
      %s1198 = scalar_lea.vmem %s1, %s1197
      %s1199 = smul.u32 8, %s92
      %s1200 = smul.u32 8, %s92
      %p1201 = scmp.lt.s32.totalorder %s1200, 15
      %s1202 = scalar_select %p1201, %s1200, 15
      %s1203 = smul.addr %s1202, 8
      %s1204 = scalar_lea.vmem %s3, %s1203
      %s1205 = smul.u32 8, %s92
      %s1206 = smul.u32 8, %s92
      %p1207 = scmp.lt.s32.totalorder %s1206, 15
      %s1208 = scalar_select %p1207, %s1206, 15
      %s1209 = smul.addr %s1208, 8
      %s1210 = scalar_lea.vmem %s5, %s1209
      %s1211 = smul.u32 8, %s92
      %p1212 = scmp.lt.s32.totalorder %s92, 1
      %s1213 = scalar_select %p1212, %s92, 1
      %s1214 = smul.addr %s1213, 8
      %s1215 = scalar_lea.vmem %s7, %s1214
      %p1216 = scmp.lt.s32.totalorder %s92, 1
      %s1217 = scalar_select %p1216, %s92, 1
      %s1218 = smul.addr %s1217, 8
      %s1219 = scalar_lea.vmem %s77, %s1218
      %v1221 = vld [vmem:[%s1210] sm:$0xff]
      %v1222 = vld [vmem:[%s1210 + $0x8] sm:$0xff]
      %v1223 = vld [vmem:[%s1210 + $0x10] sm:$0xff]
      %v1224 = vld [vmem:[%s1210 + $0x18] sm:$0xff]
      %v1225 = vld [vmem:[%s1210 + $0x20] sm:$0xff]
      %v1226 = vld [vmem:[%s1210 + $0x28] sm:$0xff]
      %v1227 = vld [vmem:[%s1210 + $0x30] sm:$0xff]
      %v1228 = vld [vmem:[%s1210 + $0x38] sm:$0xff]
      %v1229 = vld [vmem:[%s11] sm:$0x1]
      %v1230 = vld [vmem:[%s13] sm:$0x1]
      %vm1231 = vcmask 31744
      %v1232 = vsel %vm1231, %v1221, 0.0
      %1233 = vadd.xlane.f32.xlu0 %v1232
      %v1234 = vpop.xlane.xlu0 %1233
      %v1235 = vsel %vm1231, %v1222, 0.0
      %1236 = vadd.xlane.f32.xlu0 %v1235
      %v1237 = vpop.xlane.xlu0 %1236
      %v1238 = vsel %vm1231, %v1223, 0.0
      %1239 = vadd.xlane.f32.xlu0 %v1238
      %v1240 = vpop.xlane.xlu0 %1239
      %v1241 = vsel %vm1231, %v1224, 0.0
      %1242 = vadd.xlane.f32.xlu0 %v1241
      %v1243 = vpop.xlane.xlu0 %1242
      %v1244 = vsel %vm1231, %v1225, 0.0
      %1245 = vadd.xlane.f32.xlu0 %v1244
      %v1246 = vpop.xlane.xlu0 %1245
      %v1247 = vsel %vm1231, %v1226, 0.0
      %1248 = vadd.xlane.f32.xlu0 %v1247
      %v1249 = vpop.xlane.xlu0 %1248
      %v1250 = vsel %vm1231, %v1227, 0.0
      %1251 = vadd.xlane.f32.xlu0 %v1250
      %v1252 = vpop.xlane.xlu0 %1251
      %v1253 = vsel %vm1231, %v1228, 0.0
      %1254 = vadd.xlane.f32.xlu0 %v1253
      %v1255 = vpop.xlane.xlu0 %1254
      %v1256 = vrcp.pop 4.0
      %v1257 = vmul.f32 4.0, %v1256
      %v1258 = vsub.f32 1.0, %v1257
      %v1259 = vmul.f32 %v1256, %v1258
      %v1260 = vadd.f32 %v1256, %v1259
      %vm1261 = vweird.f32 %v1256
      %v1262 = vsel %vm1261, %v1256, %v1260
      %v1263 = vmul.f32 %v1234, %v1262
      %v1264 = vmul.f32 %v1237, %v1262
      %v1265 = vmul.f32 %v1240, %v1262
      %v1266 = vmul.f32 %v1243, %v1262
      %v1267 = vmul.f32 %v1246, %v1262
      %v1268 = vmul.f32 %v1249, %v1262
      %v1269 = vmul.f32 %v1252, %v1262
      %v1270 = vmul.f32 %v1255, %v1262
      %v1271 = vsub.f32 %v1221, %v1263
      %v1272 = vsub.f32 %v1222, %v1264
      %v1273 = vsub.f32 %v1223, %v1265
      %v1274 = vsub.f32 %v1224, %v1266
      %v1275 = vsub.f32 %v1225, %v1267
      %v1276 = vsub.f32 %v1226, %v1268
      %v1277 = vsub.f32 %v1227, %v1269
      %v1278 = vsub.f32 %v1228, %v1270
      %v1279 = vmul.f32 %v1271, %v1271
      %v1280 = vmul.f32 %v1272, %v1272
      %v1281 = vmul.f32 %v1273, %v1273
      %v1282 = vmul.f32 %v1274, %v1274
      %v1283 = vmul.f32 %v1275, %v1275
      %v1284 = vmul.f32 %v1276, %v1276
      %v1285 = vmul.f32 %v1277, %v1277
      %v1286 = vmul.f32 %v1278, %v1278
      %v1287 = vsel %vm1231, %v1279, 0.0
      %1288 = vadd.xlane.f32.xlu0 %v1287
      %v1289 = vpop.xlane.xlu0 %1288
      %v1290 = vsel %vm1231, %v1280, 0.0
      %1291 = vadd.xlane.f32.xlu0 %v1290
      %v1292 = vpop.xlane.xlu0 %1291
      %v1293 = vsel %vm1231, %v1281, 0.0
      %1294 = vadd.xlane.f32.xlu0 %v1293
      %v1295 = vpop.xlane.xlu0 %1294
      %v1296 = vsel %vm1231, %v1282, 0.0
      %1297 = vadd.xlane.f32.xlu0 %v1296
      %v1298 = vpop.xlane.xlu0 %1297
      %v1299 = vsel %vm1231, %v1283, 0.0
      %1300 = vadd.xlane.f32.xlu0 %v1299
      %v1301 = vpop.xlane.xlu0 %1300
      %v1302 = vsel %vm1231, %v1284, 0.0
      %1303 = vadd.xlane.f32.xlu0 %v1302
      %v1304 = vpop.xlane.xlu0 %1303
      %v1305 = vsel %vm1231, %v1285, 0.0
      %1306 = vadd.xlane.f32.xlu0 %v1305
      %v1307 = vpop.xlane.xlu0 %1306
      %v1308 = vsel %vm1231, %v1286, 0.0
      %1309 = vadd.xlane.f32.xlu0 %v1308
      %v1310 = vpop.xlane.xlu0 %1309
      %v1311 = vmul.f32 %v1289, %v1262
      %v1312 = vmul.f32 %v1292, %v1262
      %v1313 = vmul.f32 %v1295, %v1262
      %v1314 = vmul.f32 %v1298, %v1262
      %v1315 = vmul.f32 %v1301, %v1262
      %v1316 = vmul.f32 %v1304, %v1262
      %v1317 = vmul.f32 %v1307, %v1262
      %v1318 = vmul.f32 %v1310, %v1262
      %v1319 = vadd.f32 %v1311, 1e-05
      %v1320 = vadd.f32 %v1312, 1e-05
      %v1321 = vadd.f32 %v1313, 1e-05
      %v1322 = vadd.f32 %v1314, 1e-05
      %v1323 = vadd.f32 %v1315, 1e-05
      %v1324 = vadd.f32 %v1316, 1e-05
      %v1325 = vadd.f32 %v1317, 1e-05
      %v1326 = vadd.f32 %v1318, 1e-05
      %v1327 = vrsqrt.pop %v1319
      %v1328 = vmul.f32 %v1327, %v1319
      %v1329 = vmul.f32 %v1328, %v1327
      %v1330 = vmul.f32 0.5, %v1329
      %v1331 = vsub.f32 1.5, %v1330
      %v1332 = vmul.f32 %v1327, %v1331
      %vm1333 = vweird.f32 %v1319
      %vm1334 = vweird.f32 %v1327
      %vm1335 = vmor %vm1333, %vm1334
      %v1336 = vsel %vm1335, %v1327, %v1332
      %v1337 = vrsqrt.pop %v1320
      %v1338 = vmul.f32 %v1337, %v1320
      %v1339 = vmul.f32 %v1338, %v1337
      %v1340 = vmul.f32 0.5, %v1339
      %v1341 = vsub.f32 1.5, %v1340
      %v1342 = vmul.f32 %v1337, %v1341
      %vm1343 = vweird.f32 %v1320
      %vm1344 = vweird.f32 %v1337
      %vm1345 = vmor %vm1343, %vm1344
      %v1346 = vsel %vm1345, %v1337, %v1342
      %v1347 = vrsqrt.pop %v1321
      %v1348 = vmul.f32 %v1347, %v1321
      %v1349 = vmul.f32 %v1348, %v1347
      %v1350 = vmul.f32 0.5, %v1349
      %v1351 = vsub.f32 1.5, %v1350
      %v1352 = vmul.f32 %v1347, %v1351
      %vm1353 = vweird.f32 %v1321
      %vm1354 = vweird.f32 %v1347
      %vm1355 = vmor %vm1353, %vm1354
      %v1356 = vsel %vm1355, %v1347, %v1352
      %v1357 = vrsqrt.pop %v1322
      %v1358 = vmul.f32 %v1357, %v1322
      %v1359 = vmul.f32 %v1358, %v1357
      %v1360 = vmul.f32 0.5, %v1359
      %v1361 = vsub.f32 1.5, %v1360
      %v1362 = vmul.f32 %v1357, %v1361
      %vm1363 = vweird.f32 %v1322
      %vm1364 = vweird.f32 %v1357
      %vm1365 = vmor %vm1363, %vm1364
      %v1366 = vsel %vm1365, %v1357, %v1362
      %v1367 = vrsqrt.pop %v1323
      %v1368 = vmul.f32 %v1367, %v1323
      %v1369 = vmul.f32 %v1368, %v1367
      %v1370 = vmul.f32 0.5, %v1369
      %v1371 = vsub.f32 1.5, %v1370
      %v1372 = vmul.f32 %v1367, %v1371
      %vm1373 = vweird.f32 %v1323
      %vm1374 = vweird.f32 %v1367
      %vm1375 = vmor %vm1373, %vm1374
      %v1376 = vsel %vm1375, %v1367, %v1372
      %v1377 = vrsqrt.pop %v1324
      %v1378 = vmul.f32 %v1377, %v1324
      %v1379 = vmul.f32 %v1378, %v1377
      %v1380 = vmul.f32 0.5, %v1379
      %v1381 = vsub.f32 1.5, %v1380
      %v1382 = vmul.f32 %v1377, %v1381
      %vm1383 = vweird.f32 %v1324
      %vm1384 = vweird.f32 %v1377
      %vm1385 = vmor %vm1383, %vm1384
      %v1386 = vsel %vm1385, %v1377, %v1382
      %v1387 = vrsqrt.pop %v1325
      %v1388 = vmul.f32 %v1387, %v1325
      %v1389 = vmul.f32 %v1388, %v1387
      %v1390 = vmul.f32 0.5, %v1389
      %v1391 = vsub.f32 1.5, %v1390
      %v1392 = vmul.f32 %v1387, %v1391
      %vm1393 = vweird.f32 %v1325
      %vm1394 = vweird.f32 %v1387
      %vm1395 = vmor %vm1393, %vm1394
      %v1396 = vsel %vm1395, %v1387, %v1392
      %v1397 = vrsqrt.pop %v1326
      %v1398 = vmul.f32 %v1397, %v1326
      %v1399 = vmul.f32 %v1398, %v1397
      %v1400 = vmul.f32 0.5, %v1399
      %v1401 = vsub.f32 1.5, %v1400
      %v1402 = vmul.f32 %v1397, %v1401
      %vm1403 = vweird.f32 %v1326
      %vm1404 = vweird.f32 %v1397
      %vm1405 = vmor %vm1403, %vm1404
      %v1406 = vsel %vm1405, %v1397, %v1402
      %v1407 = vmul.f32 %v1271, %v1336
      %v1408 = vmul.f32 %v1272, %v1346
      %v1409 = vmul.f32 %v1273, %v1356
      %v1410 = vmul.f32 %v1274, %v1366
      %v1411 = vmul.f32 %v1275, %v1376
      %v1412 = vmul.f32 %v1276, %v1386
      %v1413 = vmul.f32 %v1277, %v1396
      %v1414 = vmul.f32 %v1278, %v1406
      %v1416 = vperm.slane %v1229, 0
      %v1418 = vmul.f32 %v1407, %v1416
      %v1419 = vmul.f32 %v1408, %v1416
      %v1420 = vmul.f32 %v1409, %v1416
      %v1421 = vmul.f32 %v1410, %v1416
      %v1422 = vmul.f32 %v1411, %v1416
      %v1423 = vmul.f32 %v1412, %v1416
      %v1424 = vmul.f32 %v1413, %v1416
      %v1425 = vmul.f32 %v1414, %v1416
      %v1427 = vperm.slane %v1230, 0
      %v1429 = vadd.f32 %v1418, %v1427
      %v1430 = vadd.f32 %v1419, %v1427
      %v1431 = vadd.f32 %v1420, %v1427
      %v1432 = vadd.f32 %v1421, %v1427
      %v1433 = vadd.f32 %v1422, %v1427
      %v1434 = vadd.f32 %v1423, %v1427
      %v1435 = vadd.f32 %v1424, %v1427
      %v1436 = vadd.f32 %v1425, %v1427
      %v1437 = vld [vmem:[%s1198] sm:$0xff]
      %v1438 = vld [vmem:[%s1198 + $0x8] sm:$0xff]
      %v1439 = vld [vmem:[%s1198 + $0x10] sm:$0xff]
      %v1440 = vld [vmem:[%s1198 + $0x18] sm:$0xff]
      %v1441 = vld [vmem:[%s1198 + $0x20] sm:$0xff]
      %v1442 = vld [vmem:[%s1198 + $0x28] sm:$0xff]
      %v1443 = vld [vmem:[%s1198 + $0x30] sm:$0xff]
      %v1444 = vld [vmem:[%s1198 + $0x38] sm:$0xff]
      %v1445 = vld [vmem:[%s1204] sm:$0xff]
      %v1446 = vld [vmem:[%s1204 + $0x8] sm:$0xff]
      %v1447 = vld [vmem:[%s1204 + $0x10] sm:$0xff]
      %v1448 = vld [vmem:[%s1204 + $0x18] sm:$0xff]
      %v1449 = vld [vmem:[%s1204 + $0x20] sm:$0xff]
      %v1450 = vld [vmem:[%s1204 + $0x28] sm:$0xff]
      %v1451 = vld [vmem:[%s1204 + $0x30] sm:$0xff]
      %v1452 = vld [vmem:[%s1204 + $0x38] sm:$0xff]
      %v1453 = vpack.c.bf16 %v1446, %v1445
      %v1454 = vpack.c.bf16 %v1448, %v1447
      %v1455 = vpack.c.bf16 %v1450, %v1449
      %v1456 = vpack.c.bf16 %v1452, %v1451
      %v1457 = vld [vmem:[%s15] sm:$0x3]
      %v1459 = vsel %vm1231, %v1453, 0
      %v1462 = vsel %vm1231, %v1454, 0
      %v1465 = vsel %vm1231, %v1455, 0
      %v1468 = vsel %vm1231, %v1456, 0
      %vm1470 = vcmask 1041408
      %v1472 = vsel %vm1470, %v1457, 0
      %1474 = vmatpush.bf16.msra.mxu0 0
      %1475 = vmatpush.bf16.msra.mxu0 0
      %1476 = vmatpush.bf16.msra.mxu0 0
      %1477 = vmatpush.bf16.msra.mxu0 0
      %1478 = vmatpush.bf16.msra.mxu0 0
      %1479 = vmatpush.bf16.msra.mxu0 0
      %1480 = vmatpush.bf16.msra.mxu0 0
      %1481 = vmatpush.bf16.msra.mxu0 %v1472
      %1482 = vmatmul.bf16.gmra.mxu0 %v1459
      %v1483 = vpop.f32.mrf.mxu0
      %v1484 = vadd.f32 0.0, %v1483
      %v1485 = vpop.f32.mrf.mxu0
      %v1486 = vadd.f32 0.0, %v1485
      %1487 = vmatmul.bf16.gmra.mxu0 %v1462
      %v1488 = vpop.f32.mrf.mxu0
      %v1489 = vadd.f32 0.0, %v1488
      %v1490 = vpop.f32.mrf.mxu0
      %v1491 = vadd.f32 0.0, %v1490
      %1492 = vmatmul.bf16.gmra.mxu0 %v1465
      %v1493 = vpop.f32.mrf.mxu0
      %v1494 = vadd.f32 0.0, %v1493
      %v1495 = vpop.f32.mrf.mxu0
      %v1496 = vadd.f32 0.0, %v1495
      %1497 = vmatmul.bf16.gmra.mxu0 %v1468
      %v1498 = vpop.f32.mrf.mxu0
      %v1499 = vadd.f32 0.0, %v1498
      %v1500 = vpop.f32.mrf.mxu0
      %v1501 = vadd.f32 0.0, %v1500
      %1502 = vdwg.mxu0
      %v1503 = vadd.f32 %v1437, %v1484
      %v1504 = vadd.f32 %v1438, %v1486
      %v1505 = vadd.f32 %v1439, %v1489
      %v1506 = vadd.f32 %v1440, %v1491
      %v1507 = vadd.f32 %v1441, %v1494
      %v1508 = vadd.f32 %v1442, %v1496
      %v1509 = vadd.f32 %v1443, %v1499
      %v1510 = vadd.f32 %v1444, %v1501
      %v1511 = vpack.c.bf16 %v1430, %v1429
      %v1512 = vpack.c.bf16 %v1432, %v1431
      %v1513 = vpack.c.bf16 %v1434, %v1433
      %v1514 = vpack.c.bf16 %v1436, %v1435
      %v1515 = vld [vmem:[%s17] sm:$0x3]
      %v1517 = vsel %vm1231, %v1511, 0
      %v1520 = vsel %vm1231, %v1512, 0
      %v1523 = vsel %vm1231, %v1513, 0
      %v1526 = vsel %vm1231, %v1514, 0
      %v1529 = vsel %vm1470, %v1515, 0
      %1531 = vmatpush.bf16.msra.mxu0 0
      %1532 = vmatpush.bf16.msra.mxu0 0
      %1533 = vmatpush.bf16.msra.mxu0 0
      %1534 = vmatpush.bf16.msra.mxu0 0
      %1535 = vmatpush.bf16.msra.mxu0 0
      %1536 = vmatpush.bf16.msra.mxu0 0
      %1537 = vmatpush.bf16.msra.mxu0 0
      %1538 = vmatpush.bf16.msra.mxu0 %v1529
      %1539 = vmatmul.bf16.gmra.mxu0 %v1517
      %v1540 = vpop.f32.mrf.mxu0
      %v1541 = vadd.f32 0.0, %v1540
      %v1542 = vpop.f32.mrf.mxu0
      %v1543 = vadd.f32 0.0, %v1542
      %1544 = vmatmul.bf16.gmra.mxu0 %v1520
      %v1545 = vpop.f32.mrf.mxu0
      %v1546 = vadd.f32 0.0, %v1545
      %v1547 = vpop.f32.mrf.mxu0
      %v1548 = vadd.f32 0.0, %v1547
      %1549 = vmatmul.bf16.gmra.mxu0 %v1523
      %v1550 = vpop.f32.mrf.mxu0
      %v1551 = vadd.f32 0.0, %v1550
      %v1552 = vpop.f32.mrf.mxu0
      %v1553 = vadd.f32 0.0, %v1552
      %1554 = vmatmul.bf16.gmra.mxu0 %v1526
      %v1555 = vpop.f32.mrf.mxu0
      %v1556 = vadd.f32 0.0, %v1555
      %v1557 = vpop.f32.mrf.mxu0
      %v1558 = vadd.f32 0.0, %v1557
      %1559 = vdwg.mxu0
      %v1560 = vadd.f32 %v1503, %v1541
      %v1561 = vadd.f32 %v1504, %v1543
      %v1562 = vadd.f32 %v1505, %v1546
      %v1563 = vadd.f32 %v1506, %v1548
      %v1564 = vadd.f32 %v1507, %v1551
      %v1565 = vadd.f32 %v1508, %v1553
      %v1566 = vadd.f32 %v1509, %v1556
      %v1567 = vadd.f32 %v1510, %v1558
      %v1568 = vld [vmem:[%s19] sm:$0x1]
      %v1570 = vperm.slane %v1568, 0
      %v1572 = vadd.f32 %v1560, %v1570
      %v1573 = vadd.f32 %v1561, %v1570
      %v1574 = vadd.f32 %v1562, %v1570
      %v1575 = vadd.f32 %v1563, %v1570
      %v1576 = vadd.f32 %v1564, %v1570
      %v1577 = vadd.f32 %v1565, %v1570
      %v1578 = vadd.f32 %v1566, %v1570
      %v1579 = vadd.f32 %v1567, %v1570
      %v1580 = vmax.f32 %v1572, 0.0
      %v1581 = vmax.f32 %v1573, 0.0
      %v1582 = vmax.f32 %v1574, 0.0
      %v1583 = vmax.f32 %v1575, 0.0
      %v1584 = vmax.f32 %v1576, 0.0
      %v1585 = vmax.f32 %v1577, 0.0
      %v1586 = vmax.f32 %v1578, 0.0
      %v1587 = vmax.f32 %v1579, 0.0
      %v1588 = vld [vmem:[%s9] sm:$0xff]
      %v1589 = vadd.f32 %v1580, %v1588
      %v1590 = vadd.f32 %v1581, %v1588
      %v1591 = vadd.f32 %v1582, %v1588
      %v1592 = vadd.f32 %v1583, %v1588
      %v1593 = vadd.f32 %v1584, %v1588
      %v1594 = vadd.f32 %v1585, %v1588
      %v1595 = vadd.f32 %v1586, %v1588
      %v1596 = vadd.f32 %v1587, %v1588
      %v1597 = vld [vmem:[%s1215] sm:$0xff]
      %v1599 = vrot.slane %v1597, 1
      %v1600 = vrot.slane %v1597, 2
      %v1601 = vrot.slane %v1597, 3
      %v1602 = vrot.slane %v1597, 4
      %v1603 = vrot.slane %v1597, 5
      %v1604 = vrot.slane %v1597, 6
      %v1605 = vrot.slane %v1597, 7
      %vm1613 = vcmp.gt.f32.partialorder %v1597, 0.0
      %vm1614 = vcmp.gt.f32.partialorder %v1599, 0.0
      %vm1615 = vcmp.gt.f32.partialorder %v1600, 0.0
      %vm1616 = vcmp.gt.f32.partialorder %v1601, 0.0
      %vm1617 = vcmp.gt.f32.partialorder %v1602, 0.0
      %vm1618 = vcmp.gt.f32.partialorder %v1603, 0.0
      %vm1619 = vcmp.gt.f32.partialorder %v1604, 0.0
      %vm1620 = vcmp.gt.f32.partialorder %v1605, 0.0
      %v1621 = vpack.c.bf16 %v1590, %v1589
      %v1622 = vpack.c.bf16 %v1592, %v1591
      %v1623 = vpack.c.bf16 %v1594, %v1593
      %v1624 = vpack.c.bf16 %v1596, %v1595
      %v1625 = vld [vmem:[%s21] sm:$0xf]
      %v1626 = vld [vmem:[%s21 + $0x4] sm:$0xf]
      %v1627 = vld [vmem:[%s21 + $0x8] sm:$0xf]
      %v1628 = vld [vmem:[%s21 + $0xc] sm:$0xf]
      %v1629 = vld [vmem:[%s23] sm:$0x1]
      %v1631 = vperm.slane %v1629, 0
      %v1637 = vunpack.c.l.b16 %v1625
      %v1638 = vunpack.c.l.b16 %v1626
      %v1639 = vunpack.c.l.b16 %v1627
      %v1640 = vunpack.c.l.b16 %v1628
      %v1641 = vpack.c.b16 %v1638, %v1637
      %v1642 = vpack.c.b16 %v1640, %v1639
      %vm1645 = vcmask 261120
      %v1647 = vsel %vm1645, %v1621, 0
      %v1650 = vsel %vm1645, %v1622, 0
      %v1653 = vsel %vm1645, %v1623, 0
      %v1656 = vsel %vm1645, %v1624, 0
      %1658 = vmatpush.bf16.msra.mxu0 0
      %1659 = vmatpush.bf16.msra.mxu0 0
      %1660 = vmatpush.bf16.msra.mxu0 0
      %1661 = vmatpush.bf16.msra.mxu0 0
      %1662 = vmatpush.bf16.msra.mxu0 0
      %1663 = vmatpush.bf16.msra.mxu0 0
      %1664 = vmatpush.bf16.msra.mxu0 %v1642
      %1665 = vmatpush.bf16.msra.mxu0 %v1641
      %1666 = vmatmul.bf16.gmra.mxu0 %v1647
      %v1667 = vpop.f32.mrf.mxu0
      %v1668 = vadd.f32 %v1631, %v1667
      %v1669 = vpop.f32.mrf.mxu0
      %v1670 = vadd.f32 %v1631, %v1669
      %1671 = vmatmul.bf16.gmra.mxu0 %v1650
      %v1672 = vpop.f32.mrf.mxu0
      %v1673 = vadd.f32 %v1631, %v1672
      %v1674 = vpop.f32.mrf.mxu0
      %v1675 = vadd.f32 %v1631, %v1674
      %1676 = vmatmul.bf16.gmra.mxu0 %v1653
      %v1677 = vpop.f32.mrf.mxu0
      %v1678 = vadd.f32 %v1631, %v1677
      %v1679 = vpop.f32.mrf.mxu0
      %v1680 = vadd.f32 %v1631, %v1679
      %1681 = vmatmul.bf16.gmra.mxu0 %v1656
      %v1682 = vpop.f32.mrf.mxu0
      %v1683 = vadd.f32 %v1631, %v1682
      %v1684 = vpop.f32.mrf.mxu0
      %v1685 = vadd.f32 %v1631, %v1684
      %1686 = vdwg.mxu0
      %v1687 = vmul.f32 %v1668, 0.35355338
      %v1688 = vmul.f32 %v1670, 0.35355338
      %v1689 = vmul.f32 %v1673, 0.35355338
      %v1690 = vmul.f32 %v1675, 0.35355338
      %v1691 = vmul.f32 %v1678, 0.35355338
      %v1692 = vmul.f32 %v1680, 0.35355338
      %v1693 = vmul.f32 %v1683, 0.35355338
      %v1694 = vmul.f32 %v1685, 0.35355338
      %v1695 = vld [vmem:[%s25] sm:$0xf]
      %v1696 = vld [vmem:[%s25 + $0x4] sm:$0xf]
      %v1697 = vld [vmem:[%s25 + $0x8] sm:$0xf]
      %v1698 = vld [vmem:[%s25 + $0xc] sm:$0xf]
      %v1699 = vpack.c.bf16 %v1687, %v1687
      %v1700 = vpack.c.bf16 %v1688, %v1688
      %v1701 = vpack.c.bf16 %v1689, %v1689
      %v1702 = vpack.c.bf16 %v1690, %v1690
      %v1703 = vpack.c.bf16 %v1691, %v1691
      %v1704 = vpack.c.bf16 %v1692, %v1692
      %v1705 = vpack.c.bf16 %v1693, %v1693
      %v1706 = vpack.c.bf16 %v1694, %v1694
      %v1707 = vpack.c.bf16 %v1668, %v1668
      %v1708 = vpack.c.bf16 %v1670, %v1670
      %v1709 = vpack.c.bf16 %v1673, %v1673
      %v1710 = vpack.c.bf16 %v1675, %v1675
      %v1711 = vpack.c.bf16 %v1678, %v1678
      %v1712 = vpack.c.bf16 %v1680, %v1680
      %v1713 = vpack.c.bf16 %v1683, %v1683
      %v1714 = vpack.c.bf16 %v1685, %v1685
      %v1716 = vunpack.c.l.b16 %v1707
      %v1717 = vpack.c.b16 %v1716, %v1716
      %1718 = vrot.lane.b32.xlu0 %v1717, 96
      %v1719 = vpop.permute.xlu0 %1718
      %vm1720 = vcmask 64512
      %v1722 = vsel %vm1720, %v1699, 0
      %v1725 = vsel %vm1720, %v1719, 0
      %1727 = vmatpush.bf16.xpose.msra.mxu0 0
      %1728 = vmatpush.bf16.xpose.msra.mxu0 0
      %1729 = vmatpush.bf16.xpose.msra.mxu0 0
      %1730 = vmatpush.bf16.xpose.msra.mxu0 0
      %1731 = vmatpush.bf16.xpose.msra.mxu0 0
      %1732 = vmatpush.bf16.xpose.msra.mxu0 0
      %1733 = vmatpush.bf16.xpose.msra.mxu0 0
      %1734 = vmatpush.bf16.xpose.msra.mxu0 %v1725
      %1735 = vmatmul.bf16.gmra.mxu0 %v1722
      %v1736 = vpop.f32.mrf.mxu0
      %v1737 = vadd.f32 0.0, %v1736
      %v1738 = vpop.f32.mrf.mxu0
      %1739 = vdwg.mxu0
      %v1741 = vunpack.c.l.b16 %v1708
      %v1742 = vpack.c.b16 %v1741, %v1741
      %1743 = vrot.lane.b32.xlu0 %v1742, 96
      %v1744 = vpop.permute.xlu0 %1743
      %v1746 = vsel %vm1720, %v1700, 0
      %v1749 = vsel %vm1720, %v1744, 0
      %1751 = vmatpush.bf16.xpose.msra.mxu0 0
      %1752 = vmatpush.bf16.xpose.msra.mxu0 0
      %1753 = vmatpush.bf16.xpose.msra.mxu0 0
      %1754 = vmatpush.bf16.xpose.msra.mxu0 0
      %1755 = vmatpush.bf16.xpose.msra.mxu0 0
      %1756 = vmatpush.bf16.xpose.msra.mxu0 0
      %1757 = vmatpush.bf16.xpose.msra.mxu0 0
      %1758 = vmatpush.bf16.xpose.msra.mxu0 %v1749
      %1759 = vmatmul.bf16.gmra.mxu0 %v1746
      %v1760 = vpop.f32.mrf.mxu0
      %v1761 = vadd.f32 0.0, %v1760
      %v1762 = vpop.f32.mrf.mxu0
      %1763 = vdwg.mxu0
      %v1765 = vunpack.c.l.b16 %v1709
      %v1766 = vpack.c.b16 %v1765, %v1765
      %1767 = vrot.lane.b32.xlu0 %v1766, 96
      %v1768 = vpop.permute.xlu0 %1767
      %v1770 = vsel %vm1720, %v1701, 0
      %v1773 = vsel %vm1720, %v1768, 0
      %1775 = vmatpush.bf16.xpose.msra.mxu0 0
      %1776 = vmatpush.bf16.xpose.msra.mxu0 0
      %1777 = vmatpush.bf16.xpose.msra.mxu0 0
      %1778 = vmatpush.bf16.xpose.msra.mxu0 0
      %1779 = vmatpush.bf16.xpose.msra.mxu0 0
      %1780 = vmatpush.bf16.xpose.msra.mxu0 0
      %1781 = vmatpush.bf16.xpose.msra.mxu0 0
      %1782 = vmatpush.bf16.xpose.msra.mxu0 %v1773
      %1783 = vmatmul.bf16.gmra.mxu0 %v1770
      %v1784 = vpop.f32.mrf.mxu0
      %v1785 = vadd.f32 0.0, %v1784
      %v1786 = vpop.f32.mrf.mxu0
      %1787 = vdwg.mxu0
      %v1789 = vunpack.c.l.b16 %v1710
      %v1790 = vpack.c.b16 %v1789, %v1789
      %1791 = vrot.lane.b32.xlu0 %v1790, 96
      %v1792 = vpop.permute.xlu0 %1791
      %v1794 = vsel %vm1720, %v1702, 0
      %v1797 = vsel %vm1720, %v1792, 0
      %1799 = vmatpush.bf16.xpose.msra.mxu0 0
      %1800 = vmatpush.bf16.xpose.msra.mxu0 0
      %1801 = vmatpush.bf16.xpose.msra.mxu0 0
      %1802 = vmatpush.bf16.xpose.msra.mxu0 0
      %1803 = vmatpush.bf16.xpose.msra.mxu0 0
      %1804 = vmatpush.bf16.xpose.msra.mxu0 0
      %1805 = vmatpush.bf16.xpose.msra.mxu0 0
      %1806 = vmatpush.bf16.xpose.msra.mxu0 %v1797
      %1807 = vmatmul.bf16.gmra.mxu0 %v1794
      %v1808 = vpop.f32.mrf.mxu0
      %v1809 = vadd.f32 0.0, %v1808
      %v1810 = vpop.f32.mrf.mxu0
      %1811 = vdwg.mxu0
      %v1813 = vunpack.c.l.b16 %v1711
      %v1814 = vpack.c.b16 %v1813, %v1813
      %1815 = vrot.lane.b32.xlu0 %v1814, 96
      %v1816 = vpop.permute.xlu0 %1815
      %v1818 = vsel %vm1720, %v1703, 0
      %v1821 = vsel %vm1720, %v1816, 0
      %1823 = vmatpush.bf16.xpose.msra.mxu0 0
      %1824 = vmatpush.bf16.xpose.msra.mxu0 0
      %1825 = vmatpush.bf16.xpose.msra.mxu0 0
      %1826 = vmatpush.bf16.xpose.msra.mxu0 0
      %1827 = vmatpush.bf16.xpose.msra.mxu0 0
      %1828 = vmatpush.bf16.xpose.msra.mxu0 0
      %1829 = vmatpush.bf16.xpose.msra.mxu0 0
      %1830 = vmatpush.bf16.xpose.msra.mxu0 %v1821
      %1831 = vmatmul.bf16.gmra.mxu0 %v1818
      %v1832 = vpop.f32.mrf.mxu0
      %v1833 = vadd.f32 0.0, %v1832
      %v1834 = vpop.f32.mrf.mxu0
      %1835 = vdwg.mxu0
      %v1837 = vunpack.c.l.b16 %v1712
      %v1838 = vpack.c.b16 %v1837, %v1837
      %1839 = vrot.lane.b32.xlu0 %v1838, 96
      %v1840 = vpop.permute.xlu0 %1839
      %v1842 = vsel %vm1720, %v1704, 0
      %v1845 = vsel %vm1720, %v1840, 0
      %1847 = vmatpush.bf16.xpose.msra.mxu0 0
      %1848 = vmatpush.bf16.xpose.msra.mxu0 0
      %1849 = vmatpush.bf16.xpose.msra.mxu0 0
      %1850 = vmatpush.bf16.xpose.msra.mxu0 0
      %1851 = vmatpush.bf16.xpose.msra.mxu0 0
      %1852 = vmatpush.bf16.xpose.msra.mxu0 0
      %1853 = vmatpush.bf16.xpose.msra.mxu0 0
      %1854 = vmatpush.bf16.xpose.msra.mxu0 %v1845
      %1855 = vmatmul.bf16.gmra.mxu0 %v1842
      %v1856 = vpop.f32.mrf.mxu0
      %v1857 = vadd.f32 0.0, %v1856
      %v1858 = vpop.f32.mrf.mxu0
      %1859 = vdwg.mxu0
      %v1861 = vunpack.c.l.b16 %v1713
      %v1862 = vpack.c.b16 %v1861, %v1861
      %1863 = vrot.lane.b32.xlu0 %v1862, 96
      %v1864 = vpop.permute.xlu0 %1863
      %v1866 = vsel %vm1720, %v1705, 0
      %v1869 = vsel %vm1720, %v1864, 0
      %1871 = vmatpush.bf16.xpose.msra.mxu0 0
      %1872 = vmatpush.bf16.xpose.msra.mxu0 0
      %1873 = vmatpush.bf16.xpose.msra.mxu0 0
      %1874 = vmatpush.bf16.xpose.msra.mxu0 0
      %1875 = vmatpush.bf16.xpose.msra.mxu0 0
      %1876 = vmatpush.bf16.xpose.msra.mxu0 0
      %1877 = vmatpush.bf16.xpose.msra.mxu0 0
      %1878 = vmatpush.bf16.xpose.msra.mxu0 %v1869
      %1879 = vmatmul.bf16.gmra.mxu0 %v1866
      %v1880 = vpop.f32.mrf.mxu0
      %v1881 = vadd.f32 0.0, %v1880
      %v1882 = vpop.f32.mrf.mxu0
      %1883 = vdwg.mxu0
      %v1885 = vunpack.c.l.b16 %v1714
      %v1886 = vpack.c.b16 %v1885, %v1885
      %1887 = vrot.lane.b32.xlu0 %v1886, 96
      %v1888 = vpop.permute.xlu0 %1887
      %v1890 = vsel %vm1720, %v1706, 0
      %v1893 = vsel %vm1720, %v1888, 0
      %1895 = vmatpush.bf16.xpose.msra.mxu0 0
      %1896 = vmatpush.bf16.xpose.msra.mxu0 0
      %1897 = vmatpush.bf16.xpose.msra.mxu0 0
      %1898 = vmatpush.bf16.xpose.msra.mxu0 0
      %1899 = vmatpush.bf16.xpose.msra.mxu0 0
      %1900 = vmatpush.bf16.xpose.msra.mxu0 0
      %1901 = vmatpush.bf16.xpose.msra.mxu0 0
      %1902 = vmatpush.bf16.xpose.msra.mxu0 %v1893
      %1903 = vmatmul.bf16.gmra.mxu0 %v1890
      %v1904 = vpop.f32.mrf.mxu0
      %v1905 = vadd.f32 0.0, %v1904
      %v1906 = vpop.f32.mrf.mxu0
      %1907 = vdwg.mxu0
      %v1908 = vsel %vm1613, 1, 0
      %v1909 = vsel %vm1614, 1, 0
      %v1910 = vsel %vm1615, 1, 0
      %v1911 = vsel %vm1616, 1, 0
      %v1912 = vsel %vm1617, 1, 0
      %v1913 = vsel %vm1618, 1, 0
      %v1914 = vsel %vm1619, 1, 0
      %v1915 = vsel %vm1620, 1, 0
      %v1916 = vperm.slane %v1908, 0
      %v1917 = vperm.slane %v1909, 0
      %v1918 = vperm.slane %v1910, 0
      %v1919 = vperm.slane %v1911, 0
      %v1920 = vperm.slane %v1912, 0
      %v1921 = vperm.slane %v1913, 0
      %v1922 = vperm.slane %v1914, 0
      %v1923 = vperm.slane %v1915, 0
      %vm1924 = vcmp.eq.s32.totalorder %v1916, 1
      %vm1925 = vcmp.eq.s32.totalorder %v1917, 1
      %vm1926 = vcmp.eq.s32.totalorder %v1918, 1
      %vm1927 = vcmp.eq.s32.totalorder %v1919, 1
      %vm1928 = vcmp.eq.s32.totalorder %v1920, 1
      %vm1929 = vcmp.eq.s32.totalorder %v1921, 1
      %vm1930 = vcmp.eq.s32.totalorder %v1922, 1
      %vm1931 = vcmp.eq.s32.totalorder %v1923, 1
      %v1932 = vsel %vm1924, %v1737, -1e+30
      %v1933 = vsel %vm1925, %v1761, -1e+30
      %v1934 = vsel %vm1926, %v1785, -1e+30
      %v1935 = vsel %vm1927, %v1809, -1e+30
      %v1936 = vsel %vm1928, %v1833, -1e+30
      %v1937 = vsel %vm1929, %v1857, -1e+30
      %v1938 = vsel %vm1930, %v1881, -1e+30
      %v1939 = vsel %vm1931, %v1905, -1e+30
      %v1940 = vsel %vm1720, %v1932, -inf
      %1941 = vmax.xlane.f32.xlu0 %v1940
      %v1942 = vpop.xlane.xlu0 %1941
      %v1943 = vsel %vm1720, %v1933, -inf
      %1944 = vmax.xlane.f32.xlu0 %v1943
      %v1945 = vpop.xlane.xlu0 %1944
      %v1946 = vsel %vm1720, %v1934, -inf
      %1947 = vmax.xlane.f32.xlu0 %v1946
      %v1948 = vpop.xlane.xlu0 %1947
      %v1949 = vsel %vm1720, %v1935, -inf
      %1950 = vmax.xlane.f32.xlu0 %v1949
      %v1951 = vpop.xlane.xlu0 %1950
      %v1952 = vsel %vm1720, %v1936, -inf
      %1953 = vmax.xlane.f32.xlu0 %v1952
      %v1954 = vpop.xlane.xlu0 %1953
      %v1955 = vsel %vm1720, %v1937, -inf
      %1956 = vmax.xlane.f32.xlu0 %v1955
      %v1957 = vpop.xlane.xlu0 %1956
      %v1958 = vsel %vm1720, %v1938, -inf
      %1959 = vmax.xlane.f32.xlu0 %v1958
      %v1960 = vpop.xlane.xlu0 %1959
      %v1961 = vsel %vm1720, %v1939, -inf
      %1962 = vmax.xlane.f32.xlu0 %v1961
      %v1963 = vpop.xlane.xlu0 %1962
      %v1964 = vsub.f32 %v1932, %v1942
      %v1965 = vsub.f32 %v1933, %v1945
      %v1966 = vsub.f32 %v1934, %v1948
      %v1967 = vsub.f32 %v1935, %v1951
      %v1968 = vsub.f32 %v1936, %v1954
      %v1969 = vsub.f32 %v1937, %v1957
      %v1970 = vsub.f32 %v1938, %v1960
      %v1971 = vsub.f32 %v1939, %v1963
      %v1972 = vmul.f32 %v1964, 1.442695
      %v1973 = vpow.pop %v1972
      %v1974 = vmul.f32 %v1965, 1.442695
      %v1975 = vpow.pop %v1974
      %v1976 = vmul.f32 %v1966, 1.442695
      %v1977 = vpow.pop %v1976
      %v1978 = vmul.f32 %v1967, 1.442695
      %v1979 = vpow.pop %v1978
      %v1980 = vmul.f32 %v1968, 1.442695
      %v1981 = vpow.pop %v1980
      %v1982 = vmul.f32 %v1969, 1.442695
      %v1983 = vpow.pop %v1982
      %v1984 = vmul.f32 %v1970, 1.442695
      %v1985 = vpow.pop %v1984
      %v1986 = vmul.f32 %v1971, 1.442695
      %v1987 = vpow.pop %v1986
      %v1988 = vsel %vm1720, %v1973, 0.0
      %1989 = vadd.xlane.f32.xlu0 %v1988
      %v1990 = vpop.xlane.xlu0 %1989
      %v1991 = vsel %vm1720, %v1975, 0.0
      %1992 = vadd.xlane.f32.xlu0 %v1991
      %v1993 = vpop.xlane.xlu0 %1992
      %v1994 = vsel %vm1720, %v1977, 0.0
      %1995 = vadd.xlane.f32.xlu0 %v1994
      %v1996 = vpop.xlane.xlu0 %1995
      %v1997 = vsel %vm1720, %v1979, 0.0
      %1998 = vadd.xlane.f32.xlu0 %v1997
      %v1999 = vpop.xlane.xlu0 %1998
      %v2000 = vsel %vm1720, %v1981, 0.0
      %2001 = vadd.xlane.f32.xlu0 %v2000
      %v2002 = vpop.xlane.xlu0 %2001
      %v2003 = vsel %vm1720, %v1983, 0.0
      %2004 = vadd.xlane.f32.xlu0 %v2003
      %v2005 = vpop.xlane.xlu0 %2004
      %v2006 = vsel %vm1720, %v1985, 0.0
      %2007 = vadd.xlane.f32.xlu0 %v2006
      %v2008 = vpop.xlane.xlu0 %2007
      %v2009 = vsel %vm1720, %v1987, 0.0
      %2010 = vadd.xlane.f32.xlu0 %v2009
      %v2011 = vpop.xlane.xlu0 %2010
      %v2012 = vrcp.pop %v1990
      %v2013 = vrcp.pop %v1993
      %v2014 = vrcp.pop %v1996
      %v2015 = vrcp.pop %v1999
      %v2016 = vrcp.pop %v2002
      %v2017 = vrcp.pop %v2005
      %v2018 = vrcp.pop %v2008
      %v2019 = vrcp.pop %v2011
      %v2020 = vmul.f32 %v1973, %v2012
      %v2021 = vmul.f32 %v1975, %v2013
      %v2022 = vmul.f32 %v1977, %v2014
      %v2023 = vmul.f32 %v1979, %v2015
      %v2024 = vmul.f32 %v1981, %v2016
      %v2025 = vmul.f32 %v1983, %v2017
      %v2026 = vmul.f32 %v1985, %v2018
      %v2027 = vmul.f32 %v1987, %v2019
      %v2028 = vpack.c.bf16 %v2020, %v2020
      %v2029 = vpack.c.bf16 %v2021, %v2021
      %v2030 = vpack.c.bf16 %v2022, %v2022
      %v2031 = vpack.c.bf16 %v2023, %v2023
      %v2032 = vpack.c.bf16 %v2024, %v2024
      %v2033 = vpack.c.bf16 %v2025, %v2025
      %v2034 = vpack.c.bf16 %v2026, %v2026
      %v2035 = vpack.c.bf16 %v2027, %v2027
      %2036 = vrot.lane.b32.xlu0 %v1717, 64
      %v2037 = vpop.permute.xlu0 %2036
      %v2039 = vsel %vm1720, %v2028, 0
      %vm2041 = vcmask 1043456
      %v2043 = vsel %vm2041, %v2037, 0
      %2045 = vmatpush.bf16.msra.mxu0 0
      %2046 = vmatpush.bf16.msra.mxu0 0
      %2047 = vmatpush.bf16.msra.mxu0 0
      %2048 = vmatpush.bf16.msra.mxu0 0
      %2049 = vmatpush.bf16.msra.mxu0 0
      %2050 = vmatpush.bf16.msra.mxu0 0
      %2051 = vmatpush.bf16.msra.mxu0 0
      %2052 = vmatpush.bf16.msra.mxu0 %v2043
      %2053 = vmatmul.bf16.gmra.mxu0 %v2039
      %v2054 = vpop.f32.mrf.mxu0
      %v2055 = vadd.f32 0.0, %v2054
      %v2056 = vpop.f32.mrf.mxu0
      %2057 = vdwg.mxu0
      %2058 = vrot.lane.b32.xlu0 %v1742, 64
      %v2059 = vpop.permute.xlu0 %2058
      %v2061 = vsel %vm1720, %v2029, 0
      %v2064 = vsel %vm2041, %v2059, 0
      %2066 = vmatpush.bf16.msra.mxu0 0
      %2067 = vmatpush.bf16.msra.mxu0 0
      %2068 = vmatpush.bf16.msra.mxu0 0
      %2069 = vmatpush.bf16.msra.mxu0 0
      %2070 = vmatpush.bf16.msra.mxu0 0
      %2071 = vmatpush.bf16.msra.mxu0 0
      %2072 = vmatpush.bf16.msra.mxu0 0
      %2073 = vmatpush.bf16.msra.mxu0 %v2064
      %2074 = vmatmul.bf16.gmra.mxu0 %v2061
      %v2075 = vpop.f32.mrf.mxu0
      %v2076 = vadd.f32 0.0, %v2075
      %v2077 = vpop.f32.mrf.mxu0
      %2078 = vdwg.mxu0
      %2079 = vrot.lane.b32.xlu0 %v1766, 64
      %v2080 = vpop.permute.xlu0 %2079
      %v2082 = vsel %vm1720, %v2030, 0
      %v2085 = vsel %vm2041, %v2080, 0
      %2087 = vmatpush.bf16.msra.mxu0 0
      %2088 = vmatpush.bf16.msra.mxu0 0
      %2089 = vmatpush.bf16.msra.mxu0 0
      %2090 = vmatpush.bf16.msra.mxu0 0
      %2091 = vmatpush.bf16.msra.mxu0 0
      %2092 = vmatpush.bf16.msra.mxu0 0
      %2093 = vmatpush.bf16.msra.mxu0 0
      %2094 = vmatpush.bf16.msra.mxu0 %v2085
      %2095 = vmatmul.bf16.gmra.mxu0 %v2082
      %v2096 = vpop.f32.mrf.mxu0
      %v2097 = vadd.f32 0.0, %v2096
      %v2098 = vpop.f32.mrf.mxu0
      %2099 = vdwg.mxu0
      %2100 = vrot.lane.b32.xlu0 %v1790, 64
      %v2101 = vpop.permute.xlu0 %2100
      %v2103 = vsel %vm1720, %v2031, 0
      %v2106 = vsel %vm2041, %v2101, 0
      %2108 = vmatpush.bf16.msra.mxu0 0
      %2109 = vmatpush.bf16.msra.mxu0 0
      %2110 = vmatpush.bf16.msra.mxu0 0
      %2111 = vmatpush.bf16.msra.mxu0 0
      %2112 = vmatpush.bf16.msra.mxu0 0
      %2113 = vmatpush.bf16.msra.mxu0 0
      %2114 = vmatpush.bf16.msra.mxu0 0
      %2115 = vmatpush.bf16.msra.mxu0 %v2106
      %2116 = vmatmul.bf16.gmra.mxu0 %v2103
      %v2117 = vpop.f32.mrf.mxu0
      %v2118 = vadd.f32 0.0, %v2117
      %v2119 = vpop.f32.mrf.mxu0
      %2120 = vdwg.mxu0
      %2121 = vrot.lane.b32.xlu0 %v1814, 64
      %v2122 = vpop.permute.xlu0 %2121
      %v2124 = vsel %vm1720, %v2032, 0
      %v2127 = vsel %vm2041, %v2122, 0
      %2129 = vmatpush.bf16.msra.mxu0 0
      %2130 = vmatpush.bf16.msra.mxu0 0
      %2131 = vmatpush.bf16.msra.mxu0 0
      %2132 = vmatpush.bf16.msra.mxu0 0
      %2133 = vmatpush.bf16.msra.mxu0 0
      %2134 = vmatpush.bf16.msra.mxu0 0
      %2135 = vmatpush.bf16.msra.mxu0 0
      %2136 = vmatpush.bf16.msra.mxu0 %v2127
      %2137 = vmatmul.bf16.gmra.mxu0 %v2124
      %v2138 = vpop.f32.mrf.mxu0
      %v2139 = vadd.f32 0.0, %v2138
      %v2140 = vpop.f32.mrf.mxu0
      %2141 = vdwg.mxu0
      %2142 = vrot.lane.b32.xlu0 %v1838, 64
      %v2143 = vpop.permute.xlu0 %2142
      %v2145 = vsel %vm1720, %v2033, 0
      %v2148 = vsel %vm2041, %v2143, 0
      %2150 = vmatpush.bf16.msra.mxu0 0
      %2151 = vmatpush.bf16.msra.mxu0 0
      %2152 = vmatpush.bf16.msra.mxu0 0
      %2153 = vmatpush.bf16.msra.mxu0 0
      %2154 = vmatpush.bf16.msra.mxu0 0
      %2155 = vmatpush.bf16.msra.mxu0 0
      %2156 = vmatpush.bf16.msra.mxu0 0
      %2157 = vmatpush.bf16.msra.mxu0 %v2148
      %2158 = vmatmul.bf16.gmra.mxu0 %v2145
      %v2159 = vpop.f32.mrf.mxu0
      %v2160 = vadd.f32 0.0, %v2159
      %v2161 = vpop.f32.mrf.mxu0
      %2162 = vdwg.mxu0
      %2163 = vrot.lane.b32.xlu0 %v1862, 64
      %v2164 = vpop.permute.xlu0 %2163
      %v2166 = vsel %vm1720, %v2034, 0
      %v2169 = vsel %vm2041, %v2164, 0
      %2171 = vmatpush.bf16.msra.mxu0 0
      %2172 = vmatpush.bf16.msra.mxu0 0
      %2173 = vmatpush.bf16.msra.mxu0 0
      %2174 = vmatpush.bf16.msra.mxu0 0
      %2175 = vmatpush.bf16.msra.mxu0 0
      %2176 = vmatpush.bf16.msra.mxu0 0
      %2177 = vmatpush.bf16.msra.mxu0 0
      %2178 = vmatpush.bf16.msra.mxu0 %v2169
      %2179 = vmatmul.bf16.gmra.mxu0 %v2166
      %v2180 = vpop.f32.mrf.mxu0
      %v2181 = vadd.f32 0.0, %v2180
      %v2182 = vpop.f32.mrf.mxu0
      %2183 = vdwg.mxu0
      %2184 = vrot.lane.b32.xlu0 %v1886, 64
      %v2185 = vpop.permute.xlu0 %2184
      %v2187 = vsel %vm1720, %v2035, 0
      %v2190 = vsel %vm2041, %v2185, 0
      %2192 = vmatpush.bf16.msra.mxu0 0
      %2193 = vmatpush.bf16.msra.mxu0 0
      %2194 = vmatpush.bf16.msra.mxu0 0
      %2195 = vmatpush.bf16.msra.mxu0 0
      %2196 = vmatpush.bf16.msra.mxu0 0
      %2197 = vmatpush.bf16.msra.mxu0 0
      %2198 = vmatpush.bf16.msra.mxu0 0
      %2199 = vmatpush.bf16.msra.mxu0 %v2190
      %2200 = vmatmul.bf16.gmra.mxu0 %v2187
      %v2201 = vpop.f32.mrf.mxu0
      %v2202 = vadd.f32 0.0, %v2201
      %v2203 = vpop.f32.mrf.mxu0
      %2204 = vdwg.mxu0
      %v2205 = vpack.c.bf16 %v2076, %v2055
      %v2206 = vpack.c.bf16 %v2118, %v2097
      %v2207 = vpack.c.bf16 %v2160, %v2139
      %v2208 = vpack.c.bf16 %v2202, %v2181
      %v2210 = vunpack.c.l.b16 %v1699
      %v2211 = vpack.c.b16 %v2210, %v2210
      %2212 = vrot.lane.b32.xlu0 %v2211, 120
      %v2213 = vpop.permute.xlu0 %2212
      %2214 = vrot.lane.b32.xlu0 %v1717, 88
      %v2215 = vpop.permute.xlu0 %2214
      %v2217 = vsel %vm1720, %v2213, 0
      %v2220 = vsel %vm1720, %v2215, 0
      %2222 = vmatpush.bf16.xpose.msra.mxu0 0
      %2223 = vmatpush.bf16.xpose.msra.mxu0 0
      %2224 = vmatpush.bf16.xpose.msra.mxu0 0
      %2225 = vmatpush.bf16.xpose.msra.mxu0 0
      %2226 = vmatpush.bf16.xpose.msra.mxu0 0
      %2227 = vmatpush.bf16.xpose.msra.mxu0 0
      %2228 = vmatpush.bf16.xpose.msra.mxu0 0
      %2229 = vmatpush.bf16.xpose.msra.mxu0 %v2220
      %2230 = vmatmul.bf16.gmra.mxu0 %v2217
      %v2231 = vpop.f32.mrf.mxu0
      %v2232 = vadd.f32 0.0, %v2231
      %v2233 = vpop.f32.mrf.mxu0
      %2234 = vdwg.mxu0
      %v2236 = vunpack.c.l.b16 %v1700
      %v2237 = vpack.c.b16 %v2236, %v2236
      %2238 = vrot.lane.b32.xlu0 %v2237, 120
      %v2239 = vpop.permute.xlu0 %2238
      %2240 = vrot.lane.b32.xlu0 %v1742, 88
      %v2241 = vpop.permute.xlu0 %2240
      %v2243 = vsel %vm1720, %v2239, 0
      %v2246 = vsel %vm1720, %v2241, 0
      %2248 = vmatpush.bf16.xpose.msra.mxu0 0
      %2249 = vmatpush.bf16.xpose.msra.mxu0 0
      %2250 = vmatpush.bf16.xpose.msra.mxu0 0
      %2251 = vmatpush.bf16.xpose.msra.mxu0 0
      %2252 = vmatpush.bf16.xpose.msra.mxu0 0
      %2253 = vmatpush.bf16.xpose.msra.mxu0 0
      %2254 = vmatpush.bf16.xpose.msra.mxu0 0
      %2255 = vmatpush.bf16.xpose.msra.mxu0 %v2246
      %2256 = vmatmul.bf16.gmra.mxu0 %v2243
      %v2257 = vpop.f32.mrf.mxu0
      %v2258 = vadd.f32 0.0, %v2257
      %v2259 = vpop.f32.mrf.mxu0
      %2260 = vdwg.mxu0
      %v2262 = vunpack.c.l.b16 %v1701
      %v2263 = vpack.c.b16 %v2262, %v2262
      %2264 = vrot.lane.b32.xlu0 %v2263, 120
      %v2265 = vpop.permute.xlu0 %2264
      %2266 = vrot.lane.b32.xlu0 %v1766, 88
      %v2267 = vpop.permute.xlu0 %2266
      %v2269 = vsel %vm1720, %v2265, 0
      %v2272 = vsel %vm1720, %v2267, 0
      %2274 = vmatpush.bf16.xpose.msra.mxu0 0
      %2275 = vmatpush.bf16.xpose.msra.mxu0 0
      %2276 = vmatpush.bf16.xpose.msra.mxu0 0
      %2277 = vmatpush.bf16.xpose.msra.mxu0 0
      %2278 = vmatpush.bf16.xpose.msra.mxu0 0
      %2279 = vmatpush.bf16.xpose.msra.mxu0 0
      %2280 = vmatpush.bf16.xpose.msra.mxu0 0
      %2281 = vmatpush.bf16.xpose.msra.mxu0 %v2272
      %2282 = vmatmul.bf16.gmra.mxu0 %v2269
      %v2283 = vpop.f32.mrf.mxu0
      %v2284 = vadd.f32 0.0, %v2283
      %v2285 = vpop.f32.mrf.mxu0
      %2286 = vdwg.mxu0
      %v2288 = vunpack.c.l.b16 %v1702
      %v2289 = vpack.c.b16 %v2288, %v2288
      %2290 = vrot.lane.b32.xlu0 %v2289, 120
      %v2291 = vpop.permute.xlu0 %2290
      %2292 = vrot.lane.b32.xlu0 %v1790, 88
      %v2293 = vpop.permute.xlu0 %2292
      %v2295 = vsel %vm1720, %v2291, 0
      %v2298 = vsel %vm1720, %v2293, 0
      %2300 = vmatpush.bf16.xpose.msra.mxu0 0
      %2301 = vmatpush.bf16.xpose.msra.mxu0 0
      %2302 = vmatpush.bf16.xpose.msra.mxu0 0
      %2303 = vmatpush.bf16.xpose.msra.mxu0 0
      %2304 = vmatpush.bf16.xpose.msra.mxu0 0
      %2305 = vmatpush.bf16.xpose.msra.mxu0 0
      %2306 = vmatpush.bf16.xpose.msra.mxu0 0
      %2307 = vmatpush.bf16.xpose.msra.mxu0 %v2298
      %2308 = vmatmul.bf16.gmra.mxu0 %v2295
      %v2309 = vpop.f32.mrf.mxu0
      %v2310 = vadd.f32 0.0, %v2309
      %v2311 = vpop.f32.mrf.mxu0
      %2312 = vdwg.mxu0
      %v2314 = vunpack.c.l.b16 %v1703
      %v2315 = vpack.c.b16 %v2314, %v2314
      %2316 = vrot.lane.b32.xlu0 %v2315, 120
      %v2317 = vpop.permute.xlu0 %2316
      %2318 = vrot.lane.b32.xlu0 %v1814, 88
      %v2319 = vpop.permute.xlu0 %2318
      %v2321 = vsel %vm1720, %v2317, 0
      %v2324 = vsel %vm1720, %v2319, 0
      %2326 = vmatpush.bf16.xpose.msra.mxu0 0
      %2327 = vmatpush.bf16.xpose.msra.mxu0 0
      %2328 = vmatpush.bf16.xpose.msra.mxu0 0
      %2329 = vmatpush.bf16.xpose.msra.mxu0 0
      %2330 = vmatpush.bf16.xpose.msra.mxu0 0
      %2331 = vmatpush.bf16.xpose.msra.mxu0 0
      %2332 = vmatpush.bf16.xpose.msra.mxu0 0
      %2333 = vmatpush.bf16.xpose.msra.mxu0 %v2324
      %2334 = vmatmul.bf16.gmra.mxu0 %v2321
      %v2335 = vpop.f32.mrf.mxu0
      %v2336 = vadd.f32 0.0, %v2335
      %v2337 = vpop.f32.mrf.mxu0
      %2338 = vdwg.mxu0
      %v2340 = vunpack.c.l.b16 %v1704
      %v2341 = vpack.c.b16 %v2340, %v2340
      %2342 = vrot.lane.b32.xlu0 %v2341, 120
      %v2343 = vpop.permute.xlu0 %2342
      %2344 = vrot.lane.b32.xlu0 %v1838, 88
      %v2345 = vpop.permute.xlu0 %2344
      %v2347 = vsel %vm1720, %v2343, 0
      %v2350 = vsel %vm1720, %v2345, 0
      %2352 = vmatpush.bf16.xpose.msra.mxu0 0
      %2353 = vmatpush.bf16.xpose.msra.mxu0 0
      %2354 = vmatpush.bf16.xpose.msra.mxu0 0
      %2355 = vmatpush.bf16.xpose.msra.mxu0 0
      %2356 = vmatpush.bf16.xpose.msra.mxu0 0
      %2357 = vmatpush.bf16.xpose.msra.mxu0 0
      %2358 = vmatpush.bf16.xpose.msra.mxu0 0
      %2359 = vmatpush.bf16.xpose.msra.mxu0 %v2350
      %2360 = vmatmul.bf16.gmra.mxu0 %v2347
      %v2361 = vpop.f32.mrf.mxu0
      %v2362 = vadd.f32 0.0, %v2361
      %v2363 = vpop.f32.mrf.mxu0
      %2364 = vdwg.mxu0
      %v2366 = vunpack.c.l.b16 %v1705
      %v2367 = vpack.c.b16 %v2366, %v2366
      %2368 = vrot.lane.b32.xlu0 %v2367, 120
      %v2369 = vpop.permute.xlu0 %2368
      %2370 = vrot.lane.b32.xlu0 %v1862, 88
      %v2371 = vpop.permute.xlu0 %2370
      %v2373 = vsel %vm1720, %v2369, 0
      %v2376 = vsel %vm1720, %v2371, 0
      %2378 = vmatpush.bf16.xpose.msra.mxu0 0
      %2379 = vmatpush.bf16.xpose.msra.mxu0 0
      %2380 = vmatpush.bf16.xpose.msra.mxu0 0
      %2381 = vmatpush.bf16.xpose.msra.mxu0 0
      %2382 = vmatpush.bf16.xpose.msra.mxu0 0
      %2383 = vmatpush.bf16.xpose.msra.mxu0 0
      %2384 = vmatpush.bf16.xpose.msra.mxu0 0
      %2385 = vmatpush.bf16.xpose.msra.mxu0 %v2376
      %2386 = vmatmul.bf16.gmra.mxu0 %v2373
      %v2387 = vpop.f32.mrf.mxu0
      %v2388 = vadd.f32 0.0, %v2387
      %v2389 = vpop.f32.mrf.mxu0
      %2390 = vdwg.mxu0
      %v2392 = vunpack.c.l.b16 %v1706
      %v2393 = vpack.c.b16 %v2392, %v2392
      %2394 = vrot.lane.b32.xlu0 %v2393, 120
      %v2395 = vpop.permute.xlu0 %2394
      %2396 = vrot.lane.b32.xlu0 %v1886, 88
      %v2397 = vpop.permute.xlu0 %2396
      %v2399 = vsel %vm1720, %v2395, 0
      %v2402 = vsel %vm1720, %v2397, 0
      %2404 = vmatpush.bf16.xpose.msra.mxu0 0
      %2405 = vmatpush.bf16.xpose.msra.mxu0 0
      %2406 = vmatpush.bf16.xpose.msra.mxu0 0
      %2407 = vmatpush.bf16.xpose.msra.mxu0 0
      %2408 = vmatpush.bf16.xpose.msra.mxu0 0
      %2409 = vmatpush.bf16.xpose.msra.mxu0 0
      %2410 = vmatpush.bf16.xpose.msra.mxu0 0
      %2411 = vmatpush.bf16.xpose.msra.mxu0 %v2402
      %2412 = vmatmul.bf16.gmra.mxu0 %v2399
      %v2413 = vpop.f32.mrf.mxu0
      %v2414 = vadd.f32 0.0, %v2413
      %v2415 = vpop.f32.mrf.mxu0
      %2416 = vdwg.mxu0
      %v2417 = vsel %vm1924, %v2232, -1e+30
      %v2418 = vsel %vm1925, %v2258, -1e+30
      %v2419 = vsel %vm1926, %v2284, -1e+30
      %v2420 = vsel %vm1927, %v2310, -1e+30
      %v2421 = vsel %vm1928, %v2336, -1e+30
      %v2422 = vsel %vm1929, %v2362, -1e+30
      %v2423 = vsel %vm1930, %v2388, -1e+30
      %v2424 = vsel %vm1931, %v2414, -1e+30
      %v2425 = vsel %vm1720, %v2417, -inf
      %2426 = vmax.xlane.f32.xlu0 %v2425
      %v2427 = vpop.xlane.xlu0 %2426
      %v2428 = vsel %vm1720, %v2418, -inf
      %2429 = vmax.xlane.f32.xlu0 %v2428
      %v2430 = vpop.xlane.xlu0 %2429
      %v2431 = vsel %vm1720, %v2419, -inf
      %2432 = vmax.xlane.f32.xlu0 %v2431
      %v2433 = vpop.xlane.xlu0 %2432
      %v2434 = vsel %vm1720, %v2420, -inf
      %2435 = vmax.xlane.f32.xlu0 %v2434
      %v2436 = vpop.xlane.xlu0 %2435
      %v2437 = vsel %vm1720, %v2421, -inf
      %2438 = vmax.xlane.f32.xlu0 %v2437
      %v2439 = vpop.xlane.xlu0 %2438
      %v2440 = vsel %vm1720, %v2422, -inf
      %2441 = vmax.xlane.f32.xlu0 %v2440
      %v2442 = vpop.xlane.xlu0 %2441
      %v2443 = vsel %vm1720, %v2423, -inf
      %2444 = vmax.xlane.f32.xlu0 %v2443
      %v2445 = vpop.xlane.xlu0 %2444
      %v2446 = vsel %vm1720, %v2424, -inf
      %2447 = vmax.xlane.f32.xlu0 %v2446
      %v2448 = vpop.xlane.xlu0 %2447
      %v2449 = vsub.f32 %v2417, %v2427
      %v2450 = vsub.f32 %v2418, %v2430
      %v2451 = vsub.f32 %v2419, %v2433
      %v2452 = vsub.f32 %v2420, %v2436
      %v2453 = vsub.f32 %v2421, %v2439
      %v2454 = vsub.f32 %v2422, %v2442
      %v2455 = vsub.f32 %v2423, %v2445
      %v2456 = vsub.f32 %v2424, %v2448
      %v2457 = vmul.f32 %v2449, 1.442695
      %v2458 = vpow.pop %v2457
      %v2459 = vmul.f32 %v2450, 1.442695
      %v2460 = vpow.pop %v2459
      %v2461 = vmul.f32 %v2451, 1.442695
      %v2462 = vpow.pop %v2461
      %v2463 = vmul.f32 %v2452, 1.442695
      %v2464 = vpow.pop %v2463
      %v2465 = vmul.f32 %v2453, 1.442695
      %v2466 = vpow.pop %v2465
      %v2467 = vmul.f32 %v2454, 1.442695
      %v2468 = vpow.pop %v2467
      %v2469 = vmul.f32 %v2455, 1.442695
      %v2470 = vpow.pop %v2469
      %v2471 = vmul.f32 %v2456, 1.442695
      %v2472 = vpow.pop %v2471
      %v2473 = vsel %vm1720, %v2458, 0.0
      %2474 = vadd.xlane.f32.xlu0 %v2473
      %v2475 = vpop.xlane.xlu0 %2474
      %v2476 = vsel %vm1720, %v2460, 0.0
      %2477 = vadd.xlane.f32.xlu0 %v2476
      %v2478 = vpop.xlane.xlu0 %2477
      %v2479 = vsel %vm1720, %v2462, 0.0
      %2480 = vadd.xlane.f32.xlu0 %v2479
      %v2481 = vpop.xlane.xlu0 %2480
      %v2482 = vsel %vm1720, %v2464, 0.0
      %2483 = vadd.xlane.f32.xlu0 %v2482
      %v2484 = vpop.xlane.xlu0 %2483
      %v2485 = vsel %vm1720, %v2466, 0.0
      %2486 = vadd.xlane.f32.xlu0 %v2485
      %v2487 = vpop.xlane.xlu0 %2486
      %v2488 = vsel %vm1720, %v2468, 0.0
      %2489 = vadd.xlane.f32.xlu0 %v2488
      %v2490 = vpop.xlane.xlu0 %2489
      %v2491 = vsel %vm1720, %v2470, 0.0
      %2492 = vadd.xlane.f32.xlu0 %v2491
      %v2493 = vpop.xlane.xlu0 %2492
      %v2494 = vsel %vm1720, %v2472, 0.0
      %2495 = vadd.xlane.f32.xlu0 %v2494
      %v2496 = vpop.xlane.xlu0 %2495
      %v2497 = vrcp.pop %v2475
      %v2498 = vrcp.pop %v2478
      %v2499 = vrcp.pop %v2481
      %v2500 = vrcp.pop %v2484
      %v2501 = vrcp.pop %v2487
      %v2502 = vrcp.pop %v2490
      %v2503 = vrcp.pop %v2493
      %v2504 = vrcp.pop %v2496
      %v2505 = vmul.f32 %v2458, %v2497
      %v2506 = vmul.f32 %v2460, %v2498
      %v2507 = vmul.f32 %v2462, %v2499
      %v2508 = vmul.f32 %v2464, %v2500
      %v2509 = vmul.f32 %v2466, %v2501
      %v2510 = vmul.f32 %v2468, %v2502
      %v2511 = vmul.f32 %v2470, %v2503
      %v2512 = vmul.f32 %v2472, %v2504
      %v2513 = vpack.c.bf16 %v2505, %v2505
      %v2514 = vpack.c.bf16 %v2506, %v2506
      %v2515 = vpack.c.bf16 %v2507, %v2507
      %v2516 = vpack.c.bf16 %v2508, %v2508
      %v2517 = vpack.c.bf16 %v2509, %v2509
      %v2518 = vpack.c.bf16 %v2510, %v2510
      %v2519 = vpack.c.bf16 %v2511, %v2511
      %v2520 = vpack.c.bf16 %v2512, %v2512
      %2521 = vrot.lane.b32.xlu0 %v1717, 56
      %v2522 = vpop.permute.xlu0 %2521
      %v2524 = vsel %vm1720, %v2513, 0
      %v2527 = vsel %vm2041, %v2522, 0
      %2529 = vmatpush.bf16.msra.mxu0 0
      %2530 = vmatpush.bf16.msra.mxu0 0
      %2531 = vmatpush.bf16.msra.mxu0 0
      %2532 = vmatpush.bf16.msra.mxu0 0
      %2533 = vmatpush.bf16.msra.mxu0 0
      %2534 = vmatpush.bf16.msra.mxu0 0
      %2535 = vmatpush.bf16.msra.mxu0 0
      %2536 = vmatpush.bf16.msra.mxu0 %v2527
      %2537 = vmatmul.bf16.gmra.mxu0 %v2524
      %v2538 = vpop.f32.mrf.mxu0
      %v2539 = vadd.f32 0.0, %v2538
      %v2540 = vpop.f32.mrf.mxu0
      %2541 = vdwg.mxu0
      %2542 = vrot.lane.b32.xlu0 %v1742, 56
      %v2543 = vpop.permute.xlu0 %2542
      %v2545 = vsel %vm1720, %v2514, 0
      %v2548 = vsel %vm2041, %v2543, 0
      %2550 = vmatpush.bf16.msra.mxu0 0
      %2551 = vmatpush.bf16.msra.mxu0 0
      %2552 = vmatpush.bf16.msra.mxu0 0
      %2553 = vmatpush.bf16.msra.mxu0 0
      %2554 = vmatpush.bf16.msra.mxu0 0
      %2555 = vmatpush.bf16.msra.mxu0 0
      %2556 = vmatpush.bf16.msra.mxu0 0
      %2557 = vmatpush.bf16.msra.mxu0 %v2548
      %2558 = vmatmul.bf16.gmra.mxu0 %v2545
      %v2559 = vpop.f32.mrf.mxu0
      %v2560 = vadd.f32 0.0, %v2559
      %v2561 = vpop.f32.mrf.mxu0
      %2562 = vdwg.mxu0
      %2563 = vrot.lane.b32.xlu0 %v1766, 56
      %v2564 = vpop.permute.xlu0 %2563
      %v2566 = vsel %vm1720, %v2515, 0
      %v2569 = vsel %vm2041, %v2564, 0
      %2571 = vmatpush.bf16.msra.mxu0 0
      %2572 = vmatpush.bf16.msra.mxu0 0
      %2573 = vmatpush.bf16.msra.mxu0 0
      %2574 = vmatpush.bf16.msra.mxu0 0
      %2575 = vmatpush.bf16.msra.mxu0 0
      %2576 = vmatpush.bf16.msra.mxu0 0
      %2577 = vmatpush.bf16.msra.mxu0 0
      %2578 = vmatpush.bf16.msra.mxu0 %v2569
      %2579 = vmatmul.bf16.gmra.mxu0 %v2566
      %v2580 = vpop.f32.mrf.mxu0
      %v2581 = vadd.f32 0.0, %v2580
      %v2582 = vpop.f32.mrf.mxu0
      %2583 = vdwg.mxu0
      %2584 = vrot.lane.b32.xlu0 %v1790, 56
      %v2585 = vpop.permute.xlu0 %2584
      %v2587 = vsel %vm1720, %v2516, 0
      %v2590 = vsel %vm2041, %v2585, 0
      %2592 = vmatpush.bf16.msra.mxu0 0
      %2593 = vmatpush.bf16.msra.mxu0 0
      %2594 = vmatpush.bf16.msra.mxu0 0
      %2595 = vmatpush.bf16.msra.mxu0 0
      %2596 = vmatpush.bf16.msra.mxu0 0
      %2597 = vmatpush.bf16.msra.mxu0 0
      %2598 = vmatpush.bf16.msra.mxu0 0
      %2599 = vmatpush.bf16.msra.mxu0 %v2590
      %2600 = vmatmul.bf16.gmra.mxu0 %v2587
      %v2601 = vpop.f32.mrf.mxu0
      %v2602 = vadd.f32 0.0, %v2601
      %v2603 = vpop.f32.mrf.mxu0
      %2604 = vdwg.mxu0
      %2605 = vrot.lane.b32.xlu0 %v1814, 56
      %v2606 = vpop.permute.xlu0 %2605
      %v2608 = vsel %vm1720, %v2517, 0
      %v2611 = vsel %vm2041, %v2606, 0
      %2613 = vmatpush.bf16.msra.mxu0 0
      %2614 = vmatpush.bf16.msra.mxu0 0
      %2615 = vmatpush.bf16.msra.mxu0 0
      %2616 = vmatpush.bf16.msra.mxu0 0
      %2617 = vmatpush.bf16.msra.mxu0 0
      %2618 = vmatpush.bf16.msra.mxu0 0
      %2619 = vmatpush.bf16.msra.mxu0 0
      %2620 = vmatpush.bf16.msra.mxu0 %v2611
      %2621 = vmatmul.bf16.gmra.mxu0 %v2608
      %v2622 = vpop.f32.mrf.mxu0
      %v2623 = vadd.f32 0.0, %v2622
      %v2624 = vpop.f32.mrf.mxu0
      %2625 = vdwg.mxu0
      %2626 = vrot.lane.b32.xlu0 %v1838, 56
      %v2627 = vpop.permute.xlu0 %2626
      %v2629 = vsel %vm1720, %v2518, 0
      %v2632 = vsel %vm2041, %v2627, 0
      %2634 = vmatpush.bf16.msra.mxu0 0
      %2635 = vmatpush.bf16.msra.mxu0 0
      %2636 = vmatpush.bf16.msra.mxu0 0
      %2637 = vmatpush.bf16.msra.mxu0 0
      %2638 = vmatpush.bf16.msra.mxu0 0
      %2639 = vmatpush.bf16.msra.mxu0 0
      %2640 = vmatpush.bf16.msra.mxu0 0
      %2641 = vmatpush.bf16.msra.mxu0 %v2632
      %2642 = vmatmul.bf16.gmra.mxu0 %v2629
      %v2643 = vpop.f32.mrf.mxu0
      %v2644 = vadd.f32 0.0, %v2643
      %v2645 = vpop.f32.mrf.mxu0
      %2646 = vdwg.mxu0
      %2647 = vrot.lane.b32.xlu0 %v1862, 56
      %v2648 = vpop.permute.xlu0 %2647
      %v2650 = vsel %vm1720, %v2519, 0
      %v2653 = vsel %vm2041, %v2648, 0
      %2655 = vmatpush.bf16.msra.mxu0 0
      %2656 = vmatpush.bf16.msra.mxu0 0
      %2657 = vmatpush.bf16.msra.mxu0 0
      %2658 = vmatpush.bf16.msra.mxu0 0
      %2659 = vmatpush.bf16.msra.mxu0 0
      %2660 = vmatpush.bf16.msra.mxu0 0
      %2661 = vmatpush.bf16.msra.mxu0 0
      %2662 = vmatpush.bf16.msra.mxu0 %v2653
      %2663 = vmatmul.bf16.gmra.mxu0 %v2650
      %v2664 = vpop.f32.mrf.mxu0
      %v2665 = vadd.f32 0.0, %v2664
      %v2666 = vpop.f32.mrf.mxu0
      %2667 = vdwg.mxu0
      %2668 = vrot.lane.b32.xlu0 %v1886, 56
      %v2669 = vpop.permute.xlu0 %2668
      %v2671 = vsel %vm1720, %v2520, 0
      %v2674 = vsel %vm2041, %v2669, 0
      %2676 = vmatpush.bf16.msra.mxu0 0
      %2677 = vmatpush.bf16.msra.mxu0 0
      %2678 = vmatpush.bf16.msra.mxu0 0
      %2679 = vmatpush.bf16.msra.mxu0 0
      %2680 = vmatpush.bf16.msra.mxu0 0
      %2681 = vmatpush.bf16.msra.mxu0 0
      %2682 = vmatpush.bf16.msra.mxu0 0
      %2683 = vmatpush.bf16.msra.mxu0 %v2674
      %2684 = vmatmul.bf16.gmra.mxu0 %v2671
      %v2685 = vpop.f32.mrf.mxu0
      %v2686 = vadd.f32 0.0, %v2685
      %v2687 = vpop.f32.mrf.mxu0
      %2688 = vdwg.mxu0
      %v2689 = vpack.c.bf16 %v2560, %v2539
      %v2690 = vpack.c.bf16 %v2602, %v2581
      %v2691 = vpack.c.bf16 %v2644, %v2623
      %v2692 = vpack.c.bf16 %v2686, %v2665
      %v2694 = vsel %vm1720, %v2689, 0
      %v2697 = vsel %vm1720, %v2690, 0
      %v2700 = vsel %vm1720, %v2691, 0
      %v2703 = vsel %vm1720, %v2692, 0
      %v2706 = vsel %vm2041, %v1696, 0
      %2708 = vmatpush.bf16.msra.mxu0 0
      %2709 = vmatpush.bf16.msra.mxu0 0
      %2710 = vmatpush.bf16.msra.mxu0 0
      %2711 = vmatpush.bf16.msra.mxu0 0
      %2712 = vmatpush.bf16.msra.mxu0 0
      %2713 = vmatpush.bf16.msra.mxu0 0
      %2714 = vmatpush.bf16.msra.mxu0 0
      %2715 = vmatpush.bf16.msra.mxu0 %v2706
      %2716 = vmatmul.bf16.gmra.mxu0 %v2694
      %v2717 = vpop.f32.mrf.mxu0
      %v2718 = vadd.f32 0.0, %v2717
      %v2719 = vpop.f32.mrf.mxu0
      %v2720 = vadd.f32 0.0, %v2719
      %2721 = vmatmul.bf16.gmra.mxu0 %v2697
      %v2722 = vpop.f32.mrf.mxu0
      %v2723 = vadd.f32 0.0, %v2722
      %v2724 = vpop.f32.mrf.mxu0
      %v2725 = vadd.f32 0.0, %v2724
      %2726 = vmatmul.bf16.gmra.mxu0 %v2700
      %v2727 = vpop.f32.mrf.mxu0
      %v2728 = vadd.f32 0.0, %v2727
      %v2729 = vpop.f32.mrf.mxu0
      %v2730 = vadd.f32 0.0, %v2729
      %2731 = vmatmul.bf16.gmra.mxu0 %v2703
      %v2732 = vpop.f32.mrf.mxu0
      %v2733 = vadd.f32 0.0, %v2732
      %v2734 = vpop.f32.mrf.mxu0
      %v2735 = vadd.f32 0.0, %v2734
      %2736 = vdwg.mxu0
      %v2738 = vsel %vm1720, %v2205, 0
      %v2741 = vsel %vm1720, %v2206, 0
      %v2744 = vsel %vm1720, %v2207, 0
      %v2747 = vsel %vm1720, %v2208, 0
      %v2750 = vsel %vm2041, %v1695, 0
      %2752 = vmatpush.bf16.msra.mxu0 0
      %2753 = vmatpush.bf16.msra.mxu0 0
      %2754 = vmatpush.bf16.msra.mxu0 0
      %2755 = vmatpush.bf16.msra.mxu0 0
      %2756 = vmatpush.bf16.msra.mxu0 0
      %2757 = vmatpush.bf16.msra.mxu0 0
      %2758 = vmatpush.bf16.msra.mxu0 0
      %2759 = vmatpush.bf16.msra.mxu0 %v2750
      %2760 = vmatmul.bf16.gmra.mxu0 %v2738
      %v2761 = vpop.f32.mrf.mxu0
      %v2762 = vadd.f32 %v2718, %v2761
      %v2763 = vpop.f32.mrf.mxu0
      %v2764 = vadd.f32 %v2720, %v2763
      %2765 = vmatmul.bf16.gmra.mxu0 %v2741
      %v2766 = vpop.f32.mrf.mxu0
      %v2767 = vadd.f32 %v2723, %v2766
      %v2768 = vpop.f32.mrf.mxu0
      %v2769 = vadd.f32 %v2725, %v2768
      %2770 = vmatmul.bf16.gmra.mxu0 %v2744
      %v2771 = vpop.f32.mrf.mxu0
      %v2772 = vadd.f32 %v2728, %v2771
      %v2773 = vpop.f32.mrf.mxu0
      %v2774 = vadd.f32 %v2730, %v2773
      %2775 = vmatmul.bf16.gmra.mxu0 %v2747
      %v2776 = vpop.f32.mrf.mxu0
      %v2777 = vadd.f32 %v2733, %v2776
      %v2778 = vpop.f32.mrf.mxu0
      %v2779 = vadd.f32 %v2735, %v2778
      %2780 = vdwg.mxu0
      %2781 = vrot.lane.b32.xlu0 %v2211, 112
      %v2782 = vpop.permute.xlu0 %2781
      %2783 = vrot.lane.b32.xlu0 %v1717, 80
      %v2784 = vpop.permute.xlu0 %2783
      %v2786 = vsel %vm1720, %v2782, 0
      %v2789 = vsel %vm1720, %v2784, 0
      %2791 = vmatpush.bf16.xpose.msra.mxu0 0
      %2792 = vmatpush.bf16.xpose.msra.mxu0 0
      %2793 = vmatpush.bf16.xpose.msra.mxu0 0
      %2794 = vmatpush.bf16.xpose.msra.mxu0 0
      %2795 = vmatpush.bf16.xpose.msra.mxu0 0
      %2796 = vmatpush.bf16.xpose.msra.mxu0 0
      %2797 = vmatpush.bf16.xpose.msra.mxu0 0
      %2798 = vmatpush.bf16.xpose.msra.mxu0 %v2789
      %2799 = vmatmul.bf16.gmra.mxu0 %v2786
      %v2800 = vpop.f32.mrf.mxu0
      %v2801 = vadd.f32 0.0, %v2800
      %v2802 = vpop.f32.mrf.mxu0
      %2803 = vdwg.mxu0
      %2804 = vrot.lane.b32.xlu0 %v2237, 112
      %v2805 = vpop.permute.xlu0 %2804
      %2806 = vrot.lane.b32.xlu0 %v1742, 80
      %v2807 = vpop.permute.xlu0 %2806
      %v2809 = vsel %vm1720, %v2805, 0
      %v2812 = vsel %vm1720, %v2807, 0
      %2814 = vmatpush.bf16.xpose.msra.mxu0 0
      %2815 = vmatpush.bf16.xpose.msra.mxu0 0
      %2816 = vmatpush.bf16.xpose.msra.mxu0 0
      %2817 = vmatpush.bf16.xpose.msra.mxu0 0
      %2818 = vmatpush.bf16.xpose.msra.mxu0 0
      %2819 = vmatpush.bf16.xpose.msra.mxu0 0
      %2820 = vmatpush.bf16.xpose.msra.mxu0 0
      %2821 = vmatpush.bf16.xpose.msra.mxu0 %v2812
      %2822 = vmatmul.bf16.gmra.mxu0 %v2809
      %v2823 = vpop.f32.mrf.mxu0
      %v2824 = vadd.f32 0.0, %v2823
      %v2825 = vpop.f32.mrf.mxu0
      %2826 = vdwg.mxu0
      %2827 = vrot.lane.b32.xlu0 %v2263, 112
      %v2828 = vpop.permute.xlu0 %2827
      %2829 = vrot.lane.b32.xlu0 %v1766, 80
      %v2830 = vpop.permute.xlu0 %2829
      %v2832 = vsel %vm1720, %v2828, 0
      %v2835 = vsel %vm1720, %v2830, 0
      %2837 = vmatpush.bf16.xpose.msra.mxu0 0
      %2838 = vmatpush.bf16.xpose.msra.mxu0 0
      %2839 = vmatpush.bf16.xpose.msra.mxu0 0
      %2840 = vmatpush.bf16.xpose.msra.mxu0 0
      %2841 = vmatpush.bf16.xpose.msra.mxu0 0
      %2842 = vmatpush.bf16.xpose.msra.mxu0 0
      %2843 = vmatpush.bf16.xpose.msra.mxu0 0
      %2844 = vmatpush.bf16.xpose.msra.mxu0 %v2835
      %2845 = vmatmul.bf16.gmra.mxu0 %v2832
      %v2846 = vpop.f32.mrf.mxu0
      %v2847 = vadd.f32 0.0, %v2846
      %v2848 = vpop.f32.mrf.mxu0
      %2849 = vdwg.mxu0
      %2850 = vrot.lane.b32.xlu0 %v2289, 112
      %v2851 = vpop.permute.xlu0 %2850
      %2852 = vrot.lane.b32.xlu0 %v1790, 80
      %v2853 = vpop.permute.xlu0 %2852
      %v2855 = vsel %vm1720, %v2851, 0
      %v2858 = vsel %vm1720, %v2853, 0
      %2860 = vmatpush.bf16.xpose.msra.mxu0 0
      %2861 = vmatpush.bf16.xpose.msra.mxu0 0
      %2862 = vmatpush.bf16.xpose.msra.mxu0 0
      %2863 = vmatpush.bf16.xpose.msra.mxu0 0
      %2864 = vmatpush.bf16.xpose.msra.mxu0 0
      %2865 = vmatpush.bf16.xpose.msra.mxu0 0
      %2866 = vmatpush.bf16.xpose.msra.mxu0 0
      %2867 = vmatpush.bf16.xpose.msra.mxu0 %v2858
      %2868 = vmatmul.bf16.gmra.mxu0 %v2855
      %v2869 = vpop.f32.mrf.mxu0
      %v2870 = vadd.f32 0.0, %v2869
      %v2871 = vpop.f32.mrf.mxu0
      %2872 = vdwg.mxu0
      %2873 = vrot.lane.b32.xlu0 %v2315, 112
      %v2874 = vpop.permute.xlu0 %2873
      %2875 = vrot.lane.b32.xlu0 %v1814, 80
      %v2876 = vpop.permute.xlu0 %2875
      %v2878 = vsel %vm1720, %v2874, 0
      %v2881 = vsel %vm1720, %v2876, 0
      %2883 = vmatpush.bf16.xpose.msra.mxu0 0
      %2884 = vmatpush.bf16.xpose.msra.mxu0 0
      %2885 = vmatpush.bf16.xpose.msra.mxu0 0
      %2886 = vmatpush.bf16.xpose.msra.mxu0 0
      %2887 = vmatpush.bf16.xpose.msra.mxu0 0
      %2888 = vmatpush.bf16.xpose.msra.mxu0 0
      %2889 = vmatpush.bf16.xpose.msra.mxu0 0
      %2890 = vmatpush.bf16.xpose.msra.mxu0 %v2881
      %2891 = vmatmul.bf16.gmra.mxu0 %v2878
      %v2892 = vpop.f32.mrf.mxu0
      %v2893 = vadd.f32 0.0, %v2892
      %v2894 = vpop.f32.mrf.mxu0
      %2895 = vdwg.mxu0
      %2896 = vrot.lane.b32.xlu0 %v2341, 112
      %v2897 = vpop.permute.xlu0 %2896
      %2898 = vrot.lane.b32.xlu0 %v1838, 80
      %v2899 = vpop.permute.xlu0 %2898
      %v2901 = vsel %vm1720, %v2897, 0
      %v2904 = vsel %vm1720, %v2899, 0
      %2906 = vmatpush.bf16.xpose.msra.mxu0 0
      %2907 = vmatpush.bf16.xpose.msra.mxu0 0
      %2908 = vmatpush.bf16.xpose.msra.mxu0 0
      %2909 = vmatpush.bf16.xpose.msra.mxu0 0
      %2910 = vmatpush.bf16.xpose.msra.mxu0 0
      %2911 = vmatpush.bf16.xpose.msra.mxu0 0
      %2912 = vmatpush.bf16.xpose.msra.mxu0 0
      %2913 = vmatpush.bf16.xpose.msra.mxu0 %v2904
      %2914 = vmatmul.bf16.gmra.mxu0 %v2901
      %v2915 = vpop.f32.mrf.mxu0
      %v2916 = vadd.f32 0.0, %v2915
      %v2917 = vpop.f32.mrf.mxu0
      %2918 = vdwg.mxu0
      %2919 = vrot.lane.b32.xlu0 %v2367, 112
      %v2920 = vpop.permute.xlu0 %2919
      %2921 = vrot.lane.b32.xlu0 %v1862, 80
      %v2922 = vpop.permute.xlu0 %2921
      %v2924 = vsel %vm1720, %v2920, 0
      %v2927 = vsel %vm1720, %v2922, 0
      %2929 = vmatpush.bf16.xpose.msra.mxu0 0
      %2930 = vmatpush.bf16.xpose.msra.mxu0 0
      %2931 = vmatpush.bf16.xpose.msra.mxu0 0
      %2932 = vmatpush.bf16.xpose.msra.mxu0 0
      %2933 = vmatpush.bf16.xpose.msra.mxu0 0
      %2934 = vmatpush.bf16.xpose.msra.mxu0 0
      %2935 = vmatpush.bf16.xpose.msra.mxu0 0
      %2936 = vmatpush.bf16.xpose.msra.mxu0 %v2927
      %2937 = vmatmul.bf16.gmra.mxu0 %v2924
      %v2938 = vpop.f32.mrf.mxu0
      %v2939 = vadd.f32 0.0, %v2938
      %v2940 = vpop.f32.mrf.mxu0
      %2941 = vdwg.mxu0
      %2942 = vrot.lane.b32.xlu0 %v2393, 112
      %v2943 = vpop.permute.xlu0 %2942
      %2944 = vrot.lane.b32.xlu0 %v1886, 80
      %v2945 = vpop.permute.xlu0 %2944
      %v2947 = vsel %vm1720, %v2943, 0
      %v2950 = vsel %vm1720, %v2945, 0
      %2952 = vmatpush.bf16.xpose.msra.mxu0 0
      %2953 = vmatpush.bf16.xpose.msra.mxu0 0
      %2954 = vmatpush.bf16.xpose.msra.mxu0 0
      %2955 = vmatpush.bf16.xpose.msra.mxu0 0
      %2956 = vmatpush.bf16.xpose.msra.mxu0 0
      %2957 = vmatpush.bf16.xpose.msra.mxu0 0
      %2958 = vmatpush.bf16.xpose.msra.mxu0 0
      %2959 = vmatpush.bf16.xpose.msra.mxu0 %v2950
      %2960 = vmatmul.bf16.gmra.mxu0 %v2947
      %v2961 = vpop.f32.mrf.mxu0
      %v2962 = vadd.f32 0.0, %v2961
      %v2963 = vpop.f32.mrf.mxu0
      %2964 = vdwg.mxu0
      %v2965 = vsel %vm1924, %v2801, -1e+30
      %v2966 = vsel %vm1925, %v2824, -1e+30
      %v2967 = vsel %vm1926, %v2847, -1e+30
      %v2968 = vsel %vm1927, %v2870, -1e+30
      %v2969 = vsel %vm1928, %v2893, -1e+30
      %v2970 = vsel %vm1929, %v2916, -1e+30
      %v2971 = vsel %vm1930, %v2939, -1e+30
      %v2972 = vsel %vm1931, %v2962, -1e+30
      %v2973 = vsel %vm1720, %v2965, -inf
      %2974 = vmax.xlane.f32.xlu0 %v2973
      %v2975 = vpop.xlane.xlu0 %2974
      %v2976 = vsel %vm1720, %v2966, -inf
      %2977 = vmax.xlane.f32.xlu0 %v2976
      %v2978 = vpop.xlane.xlu0 %2977
      %v2979 = vsel %vm1720, %v2967, -inf
      %2980 = vmax.xlane.f32.xlu0 %v2979
      %v2981 = vpop.xlane.xlu0 %2980
      %v2982 = vsel %vm1720, %v2968, -inf
      %2983 = vmax.xlane.f32.xlu0 %v2982
      %v2984 = vpop.xlane.xlu0 %2983
      %v2985 = vsel %vm1720, %v2969, -inf
      %2986 = vmax.xlane.f32.xlu0 %v2985
      %v2987 = vpop.xlane.xlu0 %2986
      %v2988 = vsel %vm1720, %v2970, -inf
      %2989 = vmax.xlane.f32.xlu0 %v2988
      %v2990 = vpop.xlane.xlu0 %2989
      %v2991 = vsel %vm1720, %v2971, -inf
      %2992 = vmax.xlane.f32.xlu0 %v2991
      %v2993 = vpop.xlane.xlu0 %2992
      %v2994 = vsel %vm1720, %v2972, -inf
      %2995 = vmax.xlane.f32.xlu0 %v2994
      %v2996 = vpop.xlane.xlu0 %2995
      %v2997 = vsub.f32 %v2965, %v2975
      %v2998 = vsub.f32 %v2966, %v2978
      %v2999 = vsub.f32 %v2967, %v2981
      %v3000 = vsub.f32 %v2968, %v2984
      %v3001 = vsub.f32 %v2969, %v2987
      %v3002 = vsub.f32 %v2970, %v2990
      %v3003 = vsub.f32 %v2971, %v2993
      %v3004 = vsub.f32 %v2972, %v2996
      %v3005 = vmul.f32 %v2997, 1.442695
      %v3006 = vpow.pop %v3005
      %v3007 = vmul.f32 %v2998, 1.442695
      %v3008 = vpow.pop %v3007
      %v3009 = vmul.f32 %v2999, 1.442695
      %v3010 = vpow.pop %v3009
      %v3011 = vmul.f32 %v3000, 1.442695
      %v3012 = vpow.pop %v3011
      %v3013 = vmul.f32 %v3001, 1.442695
      %v3014 = vpow.pop %v3013
      %v3015 = vmul.f32 %v3002, 1.442695
      %v3016 = vpow.pop %v3015
      %v3017 = vmul.f32 %v3003, 1.442695
      %v3018 = vpow.pop %v3017
      %v3019 = vmul.f32 %v3004, 1.442695
      %v3020 = vpow.pop %v3019
      %v3021 = vsel %vm1720, %v3006, 0.0
      %3022 = vadd.xlane.f32.xlu0 %v3021
      %v3023 = vpop.xlane.xlu0 %3022
      %v3024 = vsel %vm1720, %v3008, 0.0
      %3025 = vadd.xlane.f32.xlu0 %v3024
      %v3026 = vpop.xlane.xlu0 %3025
      %v3027 = vsel %vm1720, %v3010, 0.0
      %3028 = vadd.xlane.f32.xlu0 %v3027
      %v3029 = vpop.xlane.xlu0 %3028
      %v3030 = vsel %vm1720, %v3012, 0.0
      %3031 = vadd.xlane.f32.xlu0 %v3030
      %v3032 = vpop.xlane.xlu0 %3031
      %v3033 = vsel %vm1720, %v3014, 0.0
      %3034 = vadd.xlane.f32.xlu0 %v3033
      %v3035 = vpop.xlane.xlu0 %3034
      %v3036 = vsel %vm1720, %v3016, 0.0
      %3037 = vadd.xlane.f32.xlu0 %v3036
      %v3038 = vpop.xlane.xlu0 %3037
      %v3039 = vsel %vm1720, %v3018, 0.0
      %3040 = vadd.xlane.f32.xlu0 %v3039
      %v3041 = vpop.xlane.xlu0 %3040
      %v3042 = vsel %vm1720, %v3020, 0.0
      %3043 = vadd.xlane.f32.xlu0 %v3042
      %v3044 = vpop.xlane.xlu0 %3043
      %v3045 = vrcp.pop %v3023
      %v3046 = vrcp.pop %v3026
      %v3047 = vrcp.pop %v3029
      %v3048 = vrcp.pop %v3032
      %v3049 = vrcp.pop %v3035
      %v3050 = vrcp.pop %v3038
      %v3051 = vrcp.pop %v3041
      %v3052 = vrcp.pop %v3044
      %v3053 = vmul.f32 %v3006, %v3045
      %v3054 = vmul.f32 %v3008, %v3046
      %v3055 = vmul.f32 %v3010, %v3047
      %v3056 = vmul.f32 %v3012, %v3048
      %v3057 = vmul.f32 %v3014, %v3049
      %v3058 = vmul.f32 %v3016, %v3050
      %v3059 = vmul.f32 %v3018, %v3051
      %v3060 = vmul.f32 %v3020, %v3052
      %v3061 = vpack.c.bf16 %v3053, %v3053
      %v3062 = vpack.c.bf16 %v3054, %v3054
      %v3063 = vpack.c.bf16 %v3055, %v3055
      %v3064 = vpack.c.bf16 %v3056, %v3056
      %v3065 = vpack.c.bf16 %v3057, %v3057
      %v3066 = vpack.c.bf16 %v3058, %v3058
      %v3067 = vpack.c.bf16 %v3059, %v3059
      %v3068 = vpack.c.bf16 %v3060, %v3060
      %3069 = vrot.lane.b32.xlu0 %v1717, 48
      %v3070 = vpop.permute.xlu0 %3069
      %v3072 = vsel %vm1720, %v3061, 0
      %v3075 = vsel %vm2041, %v3070, 0
      %3077 = vmatpush.bf16.msra.mxu0 0
      %3078 = vmatpush.bf16.msra.mxu0 0
      %3079 = vmatpush.bf16.msra.mxu0 0
      %3080 = vmatpush.bf16.msra.mxu0 0
      %3081 = vmatpush.bf16.msra.mxu0 0
      %3082 = vmatpush.bf16.msra.mxu0 0
      %3083 = vmatpush.bf16.msra.mxu0 0
      %3084 = vmatpush.bf16.msra.mxu0 %v3075
      %3085 = vmatmul.bf16.gmra.mxu0 %v3072
      %v3086 = vpop.f32.mrf.mxu0
      %v3087 = vadd.f32 0.0, %v3086
      %v3088 = vpop.f32.mrf.mxu0
      %3089 = vdwg.mxu0
      %3090 = vrot.lane.b32.xlu0 %v1742, 48
      %v3091 = vpop.permute.xlu0 %3090
      %v3093 = vsel %vm1720, %v3062, 0
      %v3096 = vsel %vm2041, %v3091, 0
      %3098 = vmatpush.bf16.msra.mxu0 0
      %3099 = vmatpush.bf16.msra.mxu0 0
      %3100 = vmatpush.bf16.msra.mxu0 0
      %3101 = vmatpush.bf16.msra.mxu0 0
      %3102 = vmatpush.bf16.msra.mxu0 0
      %3103 = vmatpush.bf16.msra.mxu0 0
      %3104 = vmatpush.bf16.msra.mxu0 0
      %3105 = vmatpush.bf16.msra.mxu0 %v3096
      %3106 = vmatmul.bf16.gmra.mxu0 %v3093
      %v3107 = vpop.f32.mrf.mxu0
      %v3108 = vadd.f32 0.0, %v3107
      %v3109 = vpop.f32.mrf.mxu0
      %3110 = vdwg.mxu0
      %3111 = vrot.lane.b32.xlu0 %v1766, 48
      %v3112 = vpop.permute.xlu0 %3111
      %v3114 = vsel %vm1720, %v3063, 0
      %v3117 = vsel %vm2041, %v3112, 0
      %3119 = vmatpush.bf16.msra.mxu0 0
      %3120 = vmatpush.bf16.msra.mxu0 0
      %3121 = vmatpush.bf16.msra.mxu0 0
      %3122 = vmatpush.bf16.msra.mxu0 0
      %3123 = vmatpush.bf16.msra.mxu0 0
      %3124 = vmatpush.bf16.msra.mxu0 0
      %3125 = vmatpush.bf16.msra.mxu0 0
      %3126 = vmatpush.bf16.msra.mxu0 %v3117
      %3127 = vmatmul.bf16.gmra.mxu0 %v3114
      %v3128 = vpop.f32.mrf.mxu0
      %v3129 = vadd.f32 0.0, %v3128
      %v3130 = vpop.f32.mrf.mxu0
      %3131 = vdwg.mxu0
      %3132 = vrot.lane.b32.xlu0 %v1790, 48
      %v3133 = vpop.permute.xlu0 %3132
      %v3135 = vsel %vm1720, %v3064, 0
      %v3138 = vsel %vm2041, %v3133, 0
      %3140 = vmatpush.bf16.msra.mxu0 0
      %3141 = vmatpush.bf16.msra.mxu0 0
      %3142 = vmatpush.bf16.msra.mxu0 0
      %3143 = vmatpush.bf16.msra.mxu0 0
      %3144 = vmatpush.bf16.msra.mxu0 0
      %3145 = vmatpush.bf16.msra.mxu0 0
      %3146 = vmatpush.bf16.msra.mxu0 0
      %3147 = vmatpush.bf16.msra.mxu0 %v3138
      %3148 = vmatmul.bf16.gmra.mxu0 %v3135
      %v3149 = vpop.f32.mrf.mxu0
      %v3150 = vadd.f32 0.0, %v3149
      %v3151 = vpop.f32.mrf.mxu0
      %3152 = vdwg.mxu0
      %3153 = vrot.lane.b32.xlu0 %v1814, 48
      %v3154 = vpop.permute.xlu0 %3153
      %v3156 = vsel %vm1720, %v3065, 0
      %v3159 = vsel %vm2041, %v3154, 0
      %3161 = vmatpush.bf16.msra.mxu0 0
      %3162 = vmatpush.bf16.msra.mxu0 0
      %3163 = vmatpush.bf16.msra.mxu0 0
      %3164 = vmatpush.bf16.msra.mxu0 0
      %3165 = vmatpush.bf16.msra.mxu0 0
      %3166 = vmatpush.bf16.msra.mxu0 0
      %3167 = vmatpush.bf16.msra.mxu0 0
      %3168 = vmatpush.bf16.msra.mxu0 %v3159
      %3169 = vmatmul.bf16.gmra.mxu0 %v3156
      %v3170 = vpop.f32.mrf.mxu0
      %v3171 = vadd.f32 0.0, %v3170
      %v3172 = vpop.f32.mrf.mxu0
      %3173 = vdwg.mxu0
      %3174 = vrot.lane.b32.xlu0 %v1838, 48
      %v3175 = vpop.permute.xlu0 %3174
      %v3177 = vsel %vm1720, %v3066, 0
      %v3180 = vsel %vm2041, %v3175, 0
      %3182 = vmatpush.bf16.msra.mxu0 0
      %3183 = vmatpush.bf16.msra.mxu0 0
      %3184 = vmatpush.bf16.msra.mxu0 0
      %3185 = vmatpush.bf16.msra.mxu0 0
      %3186 = vmatpush.bf16.msra.mxu0 0
      %3187 = vmatpush.bf16.msra.mxu0 0
      %3188 = vmatpush.bf16.msra.mxu0 0
      %3189 = vmatpush.bf16.msra.mxu0 %v3180
      %3190 = vmatmul.bf16.gmra.mxu0 %v3177
      %v3191 = vpop.f32.mrf.mxu0
      %v3192 = vadd.f32 0.0, %v3191
      %v3193 = vpop.f32.mrf.mxu0
      %3194 = vdwg.mxu0
      %3195 = vrot.lane.b32.xlu0 %v1862, 48
      %v3196 = vpop.permute.xlu0 %3195
      %v3198 = vsel %vm1720, %v3067, 0
      %v3201 = vsel %vm2041, %v3196, 0
      %3203 = vmatpush.bf16.msra.mxu0 0
      %3204 = vmatpush.bf16.msra.mxu0 0
      %3205 = vmatpush.bf16.msra.mxu0 0
      %3206 = vmatpush.bf16.msra.mxu0 0
      %3207 = vmatpush.bf16.msra.mxu0 0
      %3208 = vmatpush.bf16.msra.mxu0 0
      %3209 = vmatpush.bf16.msra.mxu0 0
      %3210 = vmatpush.bf16.msra.mxu0 %v3201
      %3211 = vmatmul.bf16.gmra.mxu0 %v3198
      %v3212 = vpop.f32.mrf.mxu0
      %v3213 = vadd.f32 0.0, %v3212
      %v3214 = vpop.f32.mrf.mxu0
      %3215 = vdwg.mxu0
      %3216 = vrot.lane.b32.xlu0 %v1886, 48
      %v3217 = vpop.permute.xlu0 %3216
      %v3219 = vsel %vm1720, %v3068, 0
      %v3222 = vsel %vm2041, %v3217, 0
      %3224 = vmatpush.bf16.msra.mxu0 0
      %3225 = vmatpush.bf16.msra.mxu0 0
      %3226 = vmatpush.bf16.msra.mxu0 0
      %3227 = vmatpush.bf16.msra.mxu0 0
      %3228 = vmatpush.bf16.msra.mxu0 0
      %3229 = vmatpush.bf16.msra.mxu0 0
      %3230 = vmatpush.bf16.msra.mxu0 0
      %3231 = vmatpush.bf16.msra.mxu0 %v3222
      %3232 = vmatmul.bf16.gmra.mxu0 %v3219
      %v3233 = vpop.f32.mrf.mxu0
      %v3234 = vadd.f32 0.0, %v3233
      %v3235 = vpop.f32.mrf.mxu0
      %3236 = vdwg.mxu0
      %v3237 = vpack.c.bf16 %v3108, %v3087
      %v3238 = vpack.c.bf16 %v3150, %v3129
      %v3239 = vpack.c.bf16 %v3192, %v3171
      %v3240 = vpack.c.bf16 %v3234, %v3213
      %v3242 = vsel %vm1720, %v3237, 0
      %v3245 = vsel %vm1720, %v3238, 0
      %v3248 = vsel %vm1720, %v3239, 0
      %v3251 = vsel %vm1720, %v3240, 0
      %v3254 = vsel %vm2041, %v1697, 0
      %3256 = vmatpush.bf16.msra.mxu0 0
      %3257 = vmatpush.bf16.msra.mxu0 0
      %3258 = vmatpush.bf16.msra.mxu0 0
      %3259 = vmatpush.bf16.msra.mxu0 0
      %3260 = vmatpush.bf16.msra.mxu0 0
      %3261 = vmatpush.bf16.msra.mxu0 0
      %3262 = vmatpush.bf16.msra.mxu0 0
      %3263 = vmatpush.bf16.msra.mxu0 %v3254
      %3264 = vmatmul.bf16.gmra.mxu0 %v3242
      %v3265 = vpop.f32.mrf.mxu0
      %v3266 = vadd.f32 0.0, %v3265
      %v3267 = vpop.f32.mrf.mxu0
      %v3268 = vadd.f32 0.0, %v3267
      %3269 = vmatmul.bf16.gmra.mxu0 %v3245
      %v3270 = vpop.f32.mrf.mxu0
      %v3271 = vadd.f32 0.0, %v3270
      %v3272 = vpop.f32.mrf.mxu0
      %v3273 = vadd.f32 0.0, %v3272
      %3274 = vmatmul.bf16.gmra.mxu0 %v3248
      %v3275 = vpop.f32.mrf.mxu0
      %v3276 = vadd.f32 0.0, %v3275
      %v3277 = vpop.f32.mrf.mxu0
      %v3278 = vadd.f32 0.0, %v3277
      %3279 = vmatmul.bf16.gmra.mxu0 %v3251
      %v3280 = vpop.f32.mrf.mxu0
      %v3281 = vadd.f32 0.0, %v3280
      %v3282 = vpop.f32.mrf.mxu0
      %v3283 = vadd.f32 0.0, %v3282
      %3284 = vdwg.mxu0
      %v3285 = vadd.f32 %v2762, %v3266
      %v3286 = vadd.f32 %v2764, %v3268
      %v3287 = vadd.f32 %v2767, %v3271
      %v3288 = vadd.f32 %v2769, %v3273
      %v3289 = vadd.f32 %v2772, %v3276
      %v3290 = vadd.f32 %v2774, %v3278
      %v3291 = vadd.f32 %v2777, %v3281
      %v3292 = vadd.f32 %v2779, %v3283
      %3293 = vrot.lane.b32.xlu0 %v2211, 104
      %v3294 = vpop.permute.xlu0 %3293
      %3295 = vrot.lane.b32.xlu0 %v1717, 72
      %v3296 = vpop.permute.xlu0 %3295
      %v3298 = vsel %vm1720, %v3294, 0
      %v3301 = vsel %vm1720, %v3296, 0
      %3303 = vmatpush.bf16.xpose.msra.mxu0 0
      %3304 = vmatpush.bf16.xpose.msra.mxu0 0
      %3305 = vmatpush.bf16.xpose.msra.mxu0 0
      %3306 = vmatpush.bf16.xpose.msra.mxu0 0
      %3307 = vmatpush.bf16.xpose.msra.mxu0 0
      %3308 = vmatpush.bf16.xpose.msra.mxu0 0
      %3309 = vmatpush.bf16.xpose.msra.mxu0 0
      %3310 = vmatpush.bf16.xpose.msra.mxu0 %v3301
      %3311 = vmatmul.bf16.gmra.mxu0 %v3298
      %v3312 = vpop.f32.mrf.mxu0
      %v3313 = vadd.f32 0.0, %v3312
      %v3314 = vpop.f32.mrf.mxu0
      %3315 = vdwg.mxu0
      %3316 = vrot.lane.b32.xlu0 %v2237, 104
      %v3317 = vpop.permute.xlu0 %3316
      %3318 = vrot.lane.b32.xlu0 %v1742, 72
      %v3319 = vpop.permute.xlu0 %3318
      %v3321 = vsel %vm1720, %v3317, 0
      %v3324 = vsel %vm1720, %v3319, 0
      %3326 = vmatpush.bf16.xpose.msra.mxu0 0
      %3327 = vmatpush.bf16.xpose.msra.mxu0 0
      %3328 = vmatpush.bf16.xpose.msra.mxu0 0
      %3329 = vmatpush.bf16.xpose.msra.mxu0 0
      %3330 = vmatpush.bf16.xpose.msra.mxu0 0
      %3331 = vmatpush.bf16.xpose.msra.mxu0 0
      %3332 = vmatpush.bf16.xpose.msra.mxu0 0
      %3333 = vmatpush.bf16.xpose.msra.mxu0 %v3324
      %3334 = vmatmul.bf16.gmra.mxu0 %v3321
      %v3335 = vpop.f32.mrf.mxu0
      %v3336 = vadd.f32 0.0, %v3335
      %v3337 = vpop.f32.mrf.mxu0
      %3338 = vdwg.mxu0
      %3339 = vrot.lane.b32.xlu0 %v2263, 104
      %v3340 = vpop.permute.xlu0 %3339
      %3341 = vrot.lane.b32.xlu0 %v1766, 72
      %v3342 = vpop.permute.xlu0 %3341
      %v3344 = vsel %vm1720, %v3340, 0
      %v3347 = vsel %vm1720, %v3342, 0
      %3349 = vmatpush.bf16.xpose.msra.mxu0 0
      %3350 = vmatpush.bf16.xpose.msra.mxu0 0
      %3351 = vmatpush.bf16.xpose.msra.mxu0 0
      %3352 = vmatpush.bf16.xpose.msra.mxu0 0
      %3353 = vmatpush.bf16.xpose.msra.mxu0 0
      %3354 = vmatpush.bf16.xpose.msra.mxu0 0
      %3355 = vmatpush.bf16.xpose.msra.mxu0 0
      %3356 = vmatpush.bf16.xpose.msra.mxu0 %v3347
      %3357 = vmatmul.bf16.gmra.mxu0 %v3344
      %v3358 = vpop.f32.mrf.mxu0
      %v3359 = vadd.f32 0.0, %v3358
      %v3360 = vpop.f32.mrf.mxu0
      %3361 = vdwg.mxu0
      %3362 = vrot.lane.b32.xlu0 %v2289, 104
      %v3363 = vpop.permute.xlu0 %3362
      %3364 = vrot.lane.b32.xlu0 %v1790, 72
      %v3365 = vpop.permute.xlu0 %3364
      %v3367 = vsel %vm1720, %v3363, 0
      %v3370 = vsel %vm1720, %v3365, 0
      %3372 = vmatpush.bf16.xpose.msra.mxu0 0
      %3373 = vmatpush.bf16.xpose.msra.mxu0 0
      %3374 = vmatpush.bf16.xpose.msra.mxu0 0
      %3375 = vmatpush.bf16.xpose.msra.mxu0 0
      %3376 = vmatpush.bf16.xpose.msra.mxu0 0
      %3377 = vmatpush.bf16.xpose.msra.mxu0 0
      %3378 = vmatpush.bf16.xpose.msra.mxu0 0
      %3379 = vmatpush.bf16.xpose.msra.mxu0 %v3370
      %3380 = vmatmul.bf16.gmra.mxu0 %v3367
      %v3381 = vpop.f32.mrf.mxu0
      %v3382 = vadd.f32 0.0, %v3381
      %v3383 = vpop.f32.mrf.mxu0
      %3384 = vdwg.mxu0
      %3385 = vrot.lane.b32.xlu0 %v2315, 104
      %v3386 = vpop.permute.xlu0 %3385
      %3387 = vrot.lane.b32.xlu0 %v1814, 72
      %v3388 = vpop.permute.xlu0 %3387
      %v3390 = vsel %vm1720, %v3386, 0
      %v3393 = vsel %vm1720, %v3388, 0
      %3395 = vmatpush.bf16.xpose.msra.mxu0 0
      %3396 = vmatpush.bf16.xpose.msra.mxu0 0
      %3397 = vmatpush.bf16.xpose.msra.mxu0 0
      %3398 = vmatpush.bf16.xpose.msra.mxu0 0
      %3399 = vmatpush.bf16.xpose.msra.mxu0 0
      %3400 = vmatpush.bf16.xpose.msra.mxu0 0
      %3401 = vmatpush.bf16.xpose.msra.mxu0 0
      %3402 = vmatpush.bf16.xpose.msra.mxu0 %v3393
      %3403 = vmatmul.bf16.gmra.mxu0 %v3390
      %v3404 = vpop.f32.mrf.mxu0
      %v3405 = vadd.f32 0.0, %v3404
      %v3406 = vpop.f32.mrf.mxu0
      %3407 = vdwg.mxu0
      %3408 = vrot.lane.b32.xlu0 %v2341, 104
      %v3409 = vpop.permute.xlu0 %3408
      %3410 = vrot.lane.b32.xlu0 %v1838, 72
      %v3411 = vpop.permute.xlu0 %3410
      %v3413 = vsel %vm1720, %v3409, 0
      %v3416 = vsel %vm1720, %v3411, 0
      %3418 = vmatpush.bf16.xpose.msra.mxu0 0
      %3419 = vmatpush.bf16.xpose.msra.mxu0 0
      %3420 = vmatpush.bf16.xpose.msra.mxu0 0
      %3421 = vmatpush.bf16.xpose.msra.mxu0 0
      %3422 = vmatpush.bf16.xpose.msra.mxu0 0
      %3423 = vmatpush.bf16.xpose.msra.mxu0 0
      %3424 = vmatpush.bf16.xpose.msra.mxu0 0
      %3425 = vmatpush.bf16.xpose.msra.mxu0 %v3416
      %3426 = vmatmul.bf16.gmra.mxu0 %v3413
      %v3427 = vpop.f32.mrf.mxu0
      %v3428 = vadd.f32 0.0, %v3427
      %v3429 = vpop.f32.mrf.mxu0
      %3430 = vdwg.mxu0
      %3431 = vrot.lane.b32.xlu0 %v2367, 104
      %v3432 = vpop.permute.xlu0 %3431
      %3433 = vrot.lane.b32.xlu0 %v1862, 72
      %v3434 = vpop.permute.xlu0 %3433
      %v3436 = vsel %vm1720, %v3432, 0
      %v3439 = vsel %vm1720, %v3434, 0
      %3441 = vmatpush.bf16.xpose.msra.mxu0 0
      %3442 = vmatpush.bf16.xpose.msra.mxu0 0
      %3443 = vmatpush.bf16.xpose.msra.mxu0 0
      %3444 = vmatpush.bf16.xpose.msra.mxu0 0
      %3445 = vmatpush.bf16.xpose.msra.mxu0 0
      %3446 = vmatpush.bf16.xpose.msra.mxu0 0
      %3447 = vmatpush.bf16.xpose.msra.mxu0 0
      %3448 = vmatpush.bf16.xpose.msra.mxu0 %v3439
      %3449 = vmatmul.bf16.gmra.mxu0 %v3436
      %v3450 = vpop.f32.mrf.mxu0
      %v3451 = vadd.f32 0.0, %v3450
      %v3452 = vpop.f32.mrf.mxu0
      %3453 = vdwg.mxu0
      %3454 = vrot.lane.b32.xlu0 %v2393, 104
      %v3455 = vpop.permute.xlu0 %3454
      %3456 = vrot.lane.b32.xlu0 %v1886, 72
      %v3457 = vpop.permute.xlu0 %3456
      %v3459 = vsel %vm1720, %v3455, 0
      %v3462 = vsel %vm1720, %v3457, 0
      %3464 = vmatpush.bf16.xpose.msra.mxu0 0
      %3465 = vmatpush.bf16.xpose.msra.mxu0 0
      %3466 = vmatpush.bf16.xpose.msra.mxu0 0
      %3467 = vmatpush.bf16.xpose.msra.mxu0 0
      %3468 = vmatpush.bf16.xpose.msra.mxu0 0
      %3469 = vmatpush.bf16.xpose.msra.mxu0 0
      %3470 = vmatpush.bf16.xpose.msra.mxu0 0
      %3471 = vmatpush.bf16.xpose.msra.mxu0 %v3462
      %3472 = vmatmul.bf16.gmra.mxu0 %v3459
      %v3473 = vpop.f32.mrf.mxu0
      %v3474 = vadd.f32 0.0, %v3473
      %v3475 = vpop.f32.mrf.mxu0
      %3476 = vdwg.mxu0
      %v3477 = vsel %vm1924, %v3313, -1e+30
      %v3478 = vsel %vm1925, %v3336, -1e+30
      %v3479 = vsel %vm1926, %v3359, -1e+30
      %v3480 = vsel %vm1927, %v3382, -1e+30
      %v3481 = vsel %vm1928, %v3405, -1e+30
      %v3482 = vsel %vm1929, %v3428, -1e+30
      %v3483 = vsel %vm1930, %v3451, -1e+30
      %v3484 = vsel %vm1931, %v3474, -1e+30
      %v3485 = vsel %vm1720, %v3477, -inf
      %3486 = vmax.xlane.f32.xlu0 %v3485
      %v3487 = vpop.xlane.xlu0 %3486
      %v3488 = vsel %vm1720, %v3478, -inf
      %3489 = vmax.xlane.f32.xlu0 %v3488
      %v3490 = vpop.xlane.xlu0 %3489
      %v3491 = vsel %vm1720, %v3479, -inf
      %3492 = vmax.xlane.f32.xlu0 %v3491
      %v3493 = vpop.xlane.xlu0 %3492
      %v3494 = vsel %vm1720, %v3480, -inf
      %3495 = vmax.xlane.f32.xlu0 %v3494
      %v3496 = vpop.xlane.xlu0 %3495
      %v3497 = vsel %vm1720, %v3481, -inf
      %3498 = vmax.xlane.f32.xlu0 %v3497
      %v3499 = vpop.xlane.xlu0 %3498
      %v3500 = vsel %vm1720, %v3482, -inf
      %3501 = vmax.xlane.f32.xlu0 %v3500
      %v3502 = vpop.xlane.xlu0 %3501
      %v3503 = vsel %vm1720, %v3483, -inf
      %3504 = vmax.xlane.f32.xlu0 %v3503
      %v3505 = vpop.xlane.xlu0 %3504
      %v3506 = vsel %vm1720, %v3484, -inf
      %3507 = vmax.xlane.f32.xlu0 %v3506
      %v3508 = vpop.xlane.xlu0 %3507
      %v3509 = vsub.f32 %v3477, %v3487
      %v3510 = vsub.f32 %v3478, %v3490
      %v3511 = vsub.f32 %v3479, %v3493
      %v3512 = vsub.f32 %v3480, %v3496
      %v3513 = vsub.f32 %v3481, %v3499
      %v3514 = vsub.f32 %v3482, %v3502
      %v3515 = vsub.f32 %v3483, %v3505
      %v3516 = vsub.f32 %v3484, %v3508
      %v3517 = vmul.f32 %v3509, 1.442695
      %v3518 = vpow.pop %v3517
      %v3519 = vmul.f32 %v3510, 1.442695
      %v3520 = vpow.pop %v3519
      %v3521 = vmul.f32 %v3511, 1.442695
      %v3522 = vpow.pop %v3521
      %v3523 = vmul.f32 %v3512, 1.442695
      %v3524 = vpow.pop %v3523
      %v3525 = vmul.f32 %v3513, 1.442695
      %v3526 = vpow.pop %v3525
      %v3527 = vmul.f32 %v3514, 1.442695
      %v3528 = vpow.pop %v3527
      %v3529 = vmul.f32 %v3515, 1.442695
      %v3530 = vpow.pop %v3529
      %v3531 = vmul.f32 %v3516, 1.442695
      %v3532 = vpow.pop %v3531
      %v3533 = vsel %vm1720, %v3518, 0.0
      %3534 = vadd.xlane.f32.xlu0 %v3533
      %v3535 = vpop.xlane.xlu0 %3534
      %v3536 = vsel %vm1720, %v3520, 0.0
      %3537 = vadd.xlane.f32.xlu0 %v3536
      %v3538 = vpop.xlane.xlu0 %3537
      %v3539 = vsel %vm1720, %v3522, 0.0
      %3540 = vadd.xlane.f32.xlu0 %v3539
      %v3541 = vpop.xlane.xlu0 %3540
      %v3542 = vsel %vm1720, %v3524, 0.0
      %3543 = vadd.xlane.f32.xlu0 %v3542
      %v3544 = vpop.xlane.xlu0 %3543
      %v3545 = vsel %vm1720, %v3526, 0.0
      %3546 = vadd.xlane.f32.xlu0 %v3545
      %v3547 = vpop.xlane.xlu0 %3546
      %v3548 = vsel %vm1720, %v3528, 0.0
      %3549 = vadd.xlane.f32.xlu0 %v3548
      %v3550 = vpop.xlane.xlu0 %3549
      %v3551 = vsel %vm1720, %v3530, 0.0
      %3552 = vadd.xlane.f32.xlu0 %v3551
      %v3553 = vpop.xlane.xlu0 %3552
      %v3554 = vsel %vm1720, %v3532, 0.0
      %3555 = vadd.xlane.f32.xlu0 %v3554
      %v3556 = vpop.xlane.xlu0 %3555
      %v3557 = vrcp.pop %v3535
      %v3558 = vrcp.pop %v3538
      %v3559 = vrcp.pop %v3541
      %v3560 = vrcp.pop %v3544
      %v3561 = vrcp.pop %v3547
      %v3562 = vrcp.pop %v3550
      %v3563 = vrcp.pop %v3553
      %v3564 = vrcp.pop %v3556
      %v3565 = vmul.f32 %v3518, %v3557
      %v3566 = vmul.f32 %v3520, %v3558
      %v3567 = vmul.f32 %v3522, %v3559
      %v3568 = vmul.f32 %v3524, %v3560
      %v3569 = vmul.f32 %v3526, %v3561
      %v3570 = vmul.f32 %v3528, %v3562
      %v3571 = vmul.f32 %v3530, %v3563
      %v3572 = vmul.f32 %v3532, %v3564
      %v3573 = vpack.c.bf16 %v3565, %v3565
      %v3574 = vpack.c.bf16 %v3566, %v3566
      %v3575 = vpack.c.bf16 %v3567, %v3567
      %v3576 = vpack.c.bf16 %v3568, %v3568
      %v3577 = vpack.c.bf16 %v3569, %v3569
      %v3578 = vpack.c.bf16 %v3570, %v3570
      %v3579 = vpack.c.bf16 %v3571, %v3571
      %v3580 = vpack.c.bf16 %v3572, %v3572
      %3581 = vrot.lane.b32.xlu0 %v1717, 40
      %v3582 = vpop.permute.xlu0 %3581
      %v3584 = vsel %vm1720, %v3573, 0
      %v3587 = vsel %vm2041, %v3582, 0
      %3589 = vmatpush.bf16.msra.mxu0 0
      %3590 = vmatpush.bf16.msra.mxu0 0
      %3591 = vmatpush.bf16.msra.mxu0 0
      %3592 = vmatpush.bf16.msra.mxu0 0
      %3593 = vmatpush.bf16.msra.mxu0 0
      %3594 = vmatpush.bf16.msra.mxu0 0
      %3595 = vmatpush.bf16.msra.mxu0 0
      %3596 = vmatpush.bf16.msra.mxu0 %v3587
      %3597 = vmatmul.bf16.gmra.mxu0 %v3584
      %v3598 = vpop.f32.mrf.mxu0
      %v3599 = vadd.f32 0.0, %v3598
      %v3600 = vpop.f32.mrf.mxu0
      %3601 = vdwg.mxu0
      %3602 = vrot.lane.b32.xlu0 %v1742, 40
      %v3603 = vpop.permute.xlu0 %3602
      %v3605 = vsel %vm1720, %v3574, 0
      %v3608 = vsel %vm2041, %v3603, 0
      %3610 = vmatpush.bf16.msra.mxu0 0
      %3611 = vmatpush.bf16.msra.mxu0 0
      %3612 = vmatpush.bf16.msra.mxu0 0
      %3613 = vmatpush.bf16.msra.mxu0 0
      %3614 = vmatpush.bf16.msra.mxu0 0
      %3615 = vmatpush.bf16.msra.mxu0 0
      %3616 = vmatpush.bf16.msra.mxu0 0
      %3617 = vmatpush.bf16.msra.mxu0 %v3608
      %3618 = vmatmul.bf16.gmra.mxu0 %v3605
      %v3619 = vpop.f32.mrf.mxu0
      %v3620 = vadd.f32 0.0, %v3619
      %v3621 = vpop.f32.mrf.mxu0
      %3622 = vdwg.mxu0
      %3623 = vrot.lane.b32.xlu0 %v1766, 40
      %v3624 = vpop.permute.xlu0 %3623
      %v3626 = vsel %vm1720, %v3575, 0
      %v3629 = vsel %vm2041, %v3624, 0
      %3631 = vmatpush.bf16.msra.mxu0 0
      %3632 = vmatpush.bf16.msra.mxu0 0
      %3633 = vmatpush.bf16.msra.mxu0 0
      %3634 = vmatpush.bf16.msra.mxu0 0
      %3635 = vmatpush.bf16.msra.mxu0 0
      %3636 = vmatpush.bf16.msra.mxu0 0
      %3637 = vmatpush.bf16.msra.mxu0 0
      %3638 = vmatpush.bf16.msra.mxu0 %v3629
      %3639 = vmatmul.bf16.gmra.mxu0 %v3626
      %v3640 = vpop.f32.mrf.mxu0
      %v3641 = vadd.f32 0.0, %v3640
      %v3642 = vpop.f32.mrf.mxu0
      %3643 = vdwg.mxu0
      %3644 = vrot.lane.b32.xlu0 %v1790, 40
      %v3645 = vpop.permute.xlu0 %3644
      %v3647 = vsel %vm1720, %v3576, 0
      %v3650 = vsel %vm2041, %v3645, 0
      %3652 = vmatpush.bf16.msra.mxu0 0
      %3653 = vmatpush.bf16.msra.mxu0 0
      %3654 = vmatpush.bf16.msra.mxu0 0
      %3655 = vmatpush.bf16.msra.mxu0 0
      %3656 = vmatpush.bf16.msra.mxu0 0
      %3657 = vmatpush.bf16.msra.mxu0 0
      %3658 = vmatpush.bf16.msra.mxu0 0
      %3659 = vmatpush.bf16.msra.mxu0 %v3650
      %3660 = vmatmul.bf16.gmra.mxu0 %v3647
      %v3661 = vpop.f32.mrf.mxu0
      %v3662 = vadd.f32 0.0, %v3661
      %v3663 = vpop.f32.mrf.mxu0
      %3664 = vdwg.mxu0
      %3665 = vrot.lane.b32.xlu0 %v1814, 40
      %v3666 = vpop.permute.xlu0 %3665
      %v3668 = vsel %vm1720, %v3577, 0
      %v3671 = vsel %vm2041, %v3666, 0
      %3673 = vmatpush.bf16.msra.mxu0 0
      %3674 = vmatpush.bf16.msra.mxu0 0
      %3675 = vmatpush.bf16.msra.mxu0 0
      %3676 = vmatpush.bf16.msra.mxu0 0
      %3677 = vmatpush.bf16.msra.mxu0 0
      %3678 = vmatpush.bf16.msra.mxu0 0
      %3679 = vmatpush.bf16.msra.mxu0 0
      %3680 = vmatpush.bf16.msra.mxu0 %v3671
      %3681 = vmatmul.bf16.gmra.mxu0 %v3668
      %v3682 = vpop.f32.mrf.mxu0
      %v3683 = vadd.f32 0.0, %v3682
      %v3684 = vpop.f32.mrf.mxu0
      %3685 = vdwg.mxu0
      %3686 = vrot.lane.b32.xlu0 %v1838, 40
      %v3687 = vpop.permute.xlu0 %3686
      %v3689 = vsel %vm1720, %v3578, 0
      %v3692 = vsel %vm2041, %v3687, 0
      %3694 = vmatpush.bf16.msra.mxu0 0
      %3695 = vmatpush.bf16.msra.mxu0 0
      %3696 = vmatpush.bf16.msra.mxu0 0
      %3697 = vmatpush.bf16.msra.mxu0 0
      %3698 = vmatpush.bf16.msra.mxu0 0
      %3699 = vmatpush.bf16.msra.mxu0 0
      %3700 = vmatpush.bf16.msra.mxu0 0
      %3701 = vmatpush.bf16.msra.mxu0 %v3692
      %3702 = vmatmul.bf16.gmra.mxu0 %v3689
      %v3703 = vpop.f32.mrf.mxu0
      %v3704 = vadd.f32 0.0, %v3703
      %v3705 = vpop.f32.mrf.mxu0
      %3706 = vdwg.mxu0
      %3707 = vrot.lane.b32.xlu0 %v1862, 40
      %v3708 = vpop.permute.xlu0 %3707
      %v3710 = vsel %vm1720, %v3579, 0
      %v3713 = vsel %vm2041, %v3708, 0
      %3715 = vmatpush.bf16.msra.mxu0 0
      %3716 = vmatpush.bf16.msra.mxu0 0
      %3717 = vmatpush.bf16.msra.mxu0 0
      %3718 = vmatpush.bf16.msra.mxu0 0
      %3719 = vmatpush.bf16.msra.mxu0 0
      %3720 = vmatpush.bf16.msra.mxu0 0
      %3721 = vmatpush.bf16.msra.mxu0 0
      %3722 = vmatpush.bf16.msra.mxu0 %v3713
      %3723 = vmatmul.bf16.gmra.mxu0 %v3710
      %v3724 = vpop.f32.mrf.mxu0
      %v3725 = vadd.f32 0.0, %v3724
      %v3726 = vpop.f32.mrf.mxu0
      %3727 = vdwg.mxu0
      %3728 = vrot.lane.b32.xlu0 %v1886, 40
      %v3729 = vpop.permute.xlu0 %3728
      %v3731 = vsel %vm1720, %v3580, 0
      %v3734 = vsel %vm2041, %v3729, 0
      %3736 = vmatpush.bf16.msra.mxu0 0
      %3737 = vmatpush.bf16.msra.mxu0 0
      %3738 = vmatpush.bf16.msra.mxu0 0
      %3739 = vmatpush.bf16.msra.mxu0 0
      %3740 = vmatpush.bf16.msra.mxu0 0
      %3741 = vmatpush.bf16.msra.mxu0 0
      %3742 = vmatpush.bf16.msra.mxu0 0
      %3743 = vmatpush.bf16.msra.mxu0 %v3734
      %3744 = vmatmul.bf16.gmra.mxu0 %v3731
      %v3745 = vpop.f32.mrf.mxu0
      %v3746 = vadd.f32 0.0, %v3745
      %v3747 = vpop.f32.mrf.mxu0
      %3748 = vdwg.mxu0
      %v3749 = vpack.c.bf16 %v3620, %v3599
      %v3750 = vpack.c.bf16 %v3662, %v3641
      %v3751 = vpack.c.bf16 %v3704, %v3683
      %v3752 = vpack.c.bf16 %v3746, %v3725
      %v3754 = vsel %vm1720, %v3749, 0
      %v3757 = vsel %vm1720, %v3750, 0
      %v3760 = vsel %vm1720, %v3751, 0
      %v3763 = vsel %vm1720, %v3752, 0
      %v3766 = vsel %vm2041, %v1698, 0
      %3768 = vmatpush.bf16.msra.mxu0 0
      %3769 = vmatpush.bf16.msra.mxu0 0
      %3770 = vmatpush.bf16.msra.mxu0 0
      %3771 = vmatpush.bf16.msra.mxu0 0
      %3772 = vmatpush.bf16.msra.mxu0 0
      %3773 = vmatpush.bf16.msra.mxu0 0
      %3774 = vmatpush.bf16.msra.mxu0 0
      %3775 = vmatpush.bf16.msra.mxu0 %v3766
      %3776 = vmatmul.bf16.gmra.mxu0 %v3754
      %v3777 = vpop.f32.mrf.mxu0
      %v3778 = vadd.f32 0.0, %v3777
      %v3779 = vpop.f32.mrf.mxu0
      %v3780 = vadd.f32 0.0, %v3779
      %3781 = vmatmul.bf16.gmra.mxu0 %v3757
      %v3782 = vpop.f32.mrf.mxu0
      %v3783 = vadd.f32 0.0, %v3782
      %v3784 = vpop.f32.mrf.mxu0
      %v3785 = vadd.f32 0.0, %v3784
      %3786 = vmatmul.bf16.gmra.mxu0 %v3760
      %v3787 = vpop.f32.mrf.mxu0
      %v3788 = vadd.f32 0.0, %v3787
      %v3789 = vpop.f32.mrf.mxu0
      %v3790 = vadd.f32 0.0, %v3789
      %3791 = vmatmul.bf16.gmra.mxu0 %v3763
      %v3792 = vpop.f32.mrf.mxu0
      %v3793 = vadd.f32 0.0, %v3792
      %v3794 = vpop.f32.mrf.mxu0
      %v3795 = vadd.f32 0.0, %v3794
      %3796 = vdwg.mxu0
      %v3797 = vadd.f32 %v3285, %v3778
      %v3798 = vadd.f32 %v3286, %v3780
      %v3799 = vadd.f32 %v3287, %v3783
      %v3800 = vadd.f32 %v3288, %v3785
      %v3801 = vadd.f32 %v3289, %v3788
      %v3802 = vadd.f32 %v3290, %v3790
      %v3803 = vadd.f32 %v3291, %v3793
      %v3804 = vadd.f32 %v3292, %v3795
      %v3805 = vld [vmem:[%s27] sm:$0x1]
      %v3807 = vperm.slane %v3805, 0
      %v3809 = vadd.f32 %v3797, %v3807
      %v3810 = vadd.f32 %v3798, %v3807
      %v3811 = vadd.f32 %v3799, %v3807
      %v3812 = vadd.f32 %v3800, %v3807
      %v3813 = vadd.f32 %v3801, %v3807
      %v3814 = vadd.f32 %v3802, %v3807
      %v3815 = vadd.f32 %v3803, %v3807
      %v3816 = vadd.f32 %v3804, %v3807
      %v3817 = vadd.f32 %v1589, %v3809
      %v3818 = vadd.f32 %v1590, %v3810
      %v3819 = vadd.f32 %v1591, %v3811
      %v3820 = vadd.f32 %v1592, %v3812
      %v3821 = vadd.f32 %v1593, %v3813
      %v3822 = vadd.f32 %v1594, %v3814
      %v3823 = vadd.f32 %v1595, %v3815
      %v3824 = vadd.f32 %v1596, %v3816
      %v3825 = vld [vmem:[%s29] sm:$0x1]
      %v3826 = vld [vmem:[%s31] sm:$0x1]
      %v3827 = vsel %vm1645, %v3817, 0.0
      %3828 = vadd.xlane.f32.xlu0 %v3827
      %v3829 = vpop.xlane.xlu0 %3828
      %v3830 = vsel %vm1645, %v3818, 0.0
      %3831 = vadd.xlane.f32.xlu0 %v3830
      %v3832 = vpop.xlane.xlu0 %3831
      %v3833 = vsel %vm1645, %v3819, 0.0
      %3834 = vadd.xlane.f32.xlu0 %v3833
      %v3835 = vpop.xlane.xlu0 %3834
      %v3836 = vsel %vm1645, %v3820, 0.0
      %3837 = vadd.xlane.f32.xlu0 %v3836
      %v3838 = vpop.xlane.xlu0 %3837
      %v3839 = vsel %vm1645, %v3821, 0.0
      %3840 = vadd.xlane.f32.xlu0 %v3839
      %v3841 = vpop.xlane.xlu0 %3840
      %v3842 = vsel %vm1645, %v3822, 0.0
      %3843 = vadd.xlane.f32.xlu0 %v3842
      %v3844 = vpop.xlane.xlu0 %3843
      %v3845 = vsel %vm1645, %v3823, 0.0
      %3846 = vadd.xlane.f32.xlu0 %v3845
      %v3847 = vpop.xlane.xlu0 %3846
      %v3848 = vsel %vm1645, %v3824, 0.0
      %3849 = vadd.xlane.f32.xlu0 %v3848
      %v3850 = vpop.xlane.xlu0 %3849
      %v3851 = vrcp.pop 32.0
      %v3852 = vmul.f32 32.0, %v3851
      %v3853 = vsub.f32 1.0, %v3852
      %v3854 = vmul.f32 %v3851, %v3853
      %v3855 = vadd.f32 %v3851, %v3854
      %vm3856 = vweird.f32 %v3851
      %v3857 = vsel %vm3856, %v3851, %v3855
      %v3858 = vmul.f32 %v3829, %v3857
      %v3859 = vmul.f32 %v3832, %v3857
      %v3860 = vmul.f32 %v3835, %v3857
      %v3861 = vmul.f32 %v3838, %v3857
      %v3862 = vmul.f32 %v3841, %v3857
      %v3863 = vmul.f32 %v3844, %v3857
      %v3864 = vmul.f32 %v3847, %v3857
      %v3865 = vmul.f32 %v3850, %v3857
      %v3866 = vsub.f32 %v3817, %v3858
      %v3867 = vsub.f32 %v3818, %v3859
      %v3868 = vsub.f32 %v3819, %v3860
      %v3869 = vsub.f32 %v3820, %v3861
      %v3870 = vsub.f32 %v3821, %v3862
      %v3871 = vsub.f32 %v3822, %v3863
      %v3872 = vsub.f32 %v3823, %v3864
      %v3873 = vsub.f32 %v3824, %v3865
      %v3874 = vmul.f32 %v3866, %v3866
      %v3875 = vmul.f32 %v3867, %v3867
      %v3876 = vmul.f32 %v3868, %v3868
      %v3877 = vmul.f32 %v3869, %v3869
      %v3878 = vmul.f32 %v3870, %v3870
      %v3879 = vmul.f32 %v3871, %v3871
      %v3880 = vmul.f32 %v3872, %v3872
      %v3881 = vmul.f32 %v3873, %v3873
      %v3882 = vsel %vm1645, %v3874, 0.0
      %3883 = vadd.xlane.f32.xlu0 %v3882
      %v3884 = vpop.xlane.xlu0 %3883
      %v3885 = vsel %vm1645, %v3875, 0.0
      %3886 = vadd.xlane.f32.xlu0 %v3885
      %v3887 = vpop.xlane.xlu0 %3886
      %v3888 = vsel %vm1645, %v3876, 0.0
      %3889 = vadd.xlane.f32.xlu0 %v3888
      %v3890 = vpop.xlane.xlu0 %3889
      %v3891 = vsel %vm1645, %v3877, 0.0
      %3892 = vadd.xlane.f32.xlu0 %v3891
      %v3893 = vpop.xlane.xlu0 %3892
      %v3894 = vsel %vm1645, %v3878, 0.0
      %3895 = vadd.xlane.f32.xlu0 %v3894
      %v3896 = vpop.xlane.xlu0 %3895
      %v3897 = vsel %vm1645, %v3879, 0.0
      %3898 = vadd.xlane.f32.xlu0 %v3897
      %v3899 = vpop.xlane.xlu0 %3898
      %v3900 = vsel %vm1645, %v3880, 0.0
      %3901 = vadd.xlane.f32.xlu0 %v3900
      %v3902 = vpop.xlane.xlu0 %3901
      %v3903 = vsel %vm1645, %v3881, 0.0
      %3904 = vadd.xlane.f32.xlu0 %v3903
      %v3905 = vpop.xlane.xlu0 %3904
      %v3906 = vmul.f32 %v3884, %v3857
      %v3907 = vmul.f32 %v3887, %v3857
      %v3908 = vmul.f32 %v3890, %v3857
      %v3909 = vmul.f32 %v3893, %v3857
      %v3910 = vmul.f32 %v3896, %v3857
      %v3911 = vmul.f32 %v3899, %v3857
      %v3912 = vmul.f32 %v3902, %v3857
      %v3913 = vmul.f32 %v3905, %v3857
      %v3914 = vadd.f32 %v3906, 1e-05
      %v3915 = vadd.f32 %v3907, 1e-05
      %v3916 = vadd.f32 %v3908, 1e-05
      %v3917 = vadd.f32 %v3909, 1e-05
      %v3918 = vadd.f32 %v3910, 1e-05
      %v3919 = vadd.f32 %v3911, 1e-05
      %v3920 = vadd.f32 %v3912, 1e-05
      %v3921 = vadd.f32 %v3913, 1e-05
      %v3922 = vrsqrt.pop %v3914
      %v3923 = vmul.f32 %v3922, %v3914
      %v3924 = vmul.f32 %v3923, %v3922
      %v3925 = vmul.f32 0.5, %v3924
      %v3926 = vsub.f32 1.5, %v3925
      %v3927 = vmul.f32 %v3922, %v3926
      %vm3928 = vweird.f32 %v3914
      %vm3929 = vweird.f32 %v3922
      %vm3930 = vmor %vm3928, %vm3929
      %v3931 = vsel %vm3930, %v3922, %v3927
      %v3932 = vrsqrt.pop %v3915
      %v3933 = vmul.f32 %v3932, %v3915
      %v3934 = vmul.f32 %v3933, %v3932
      %v3935 = vmul.f32 0.5, %v3934
      %v3936 = vsub.f32 1.5, %v3935
      %v3937 = vmul.f32 %v3932, %v3936
      %vm3938 = vweird.f32 %v3915
      %vm3939 = vweird.f32 %v3932
      %vm3940 = vmor %vm3938, %vm3939
      %v3941 = vsel %vm3940, %v3932, %v3937
      %v3942 = vrsqrt.pop %v3916
      %v3943 = vmul.f32 %v3942, %v3916
      %v3944 = vmul.f32 %v3943, %v3942
      %v3945 = vmul.f32 0.5, %v3944
      %v3946 = vsub.f32 1.5, %v3945
      %v3947 = vmul.f32 %v3942, %v3946
      %vm3948 = vweird.f32 %v3916
      %vm3949 = vweird.f32 %v3942
      %vm3950 = vmor %vm3948, %vm3949
      %v3951 = vsel %vm3950, %v3942, %v3947
      %v3952 = vrsqrt.pop %v3917
      %v3953 = vmul.f32 %v3952, %v3917
      %v3954 = vmul.f32 %v3953, %v3952
      %v3955 = vmul.f32 0.5, %v3954
      %v3956 = vsub.f32 1.5, %v3955
      %v3957 = vmul.f32 %v3952, %v3956
      %vm3958 = vweird.f32 %v3917
      %vm3959 = vweird.f32 %v3952
      %vm3960 = vmor %vm3958, %vm3959
      %v3961 = vsel %vm3960, %v3952, %v3957
      %v3962 = vrsqrt.pop %v3918
      %v3963 = vmul.f32 %v3962, %v3918
      %v3964 = vmul.f32 %v3963, %v3962
      %v3965 = vmul.f32 0.5, %v3964
      %v3966 = vsub.f32 1.5, %v3965
      %v3967 = vmul.f32 %v3962, %v3966
      %vm3968 = vweird.f32 %v3918
      %vm3969 = vweird.f32 %v3962
      %vm3970 = vmor %vm3968, %vm3969
      %v3971 = vsel %vm3970, %v3962, %v3967
      %v3972 = vrsqrt.pop %v3919
      %v3973 = vmul.f32 %v3972, %v3919
      %v3974 = vmul.f32 %v3973, %v3972
      %v3975 = vmul.f32 0.5, %v3974
      %v3976 = vsub.f32 1.5, %v3975
      %v3977 = vmul.f32 %v3972, %v3976
      %vm3978 = vweird.f32 %v3919
      %vm3979 = vweird.f32 %v3972
      %vm3980 = vmor %vm3978, %vm3979
      %v3981 = vsel %vm3980, %v3972, %v3977
      %v3982 = vrsqrt.pop %v3920
      %v3983 = vmul.f32 %v3982, %v3920
      %v3984 = vmul.f32 %v3983, %v3982
      %v3985 = vmul.f32 0.5, %v3984
      %v3986 = vsub.f32 1.5, %v3985
      %v3987 = vmul.f32 %v3982, %v3986
      %vm3988 = vweird.f32 %v3920
      %vm3989 = vweird.f32 %v3982
      %vm3990 = vmor %vm3988, %vm3989
      %v3991 = vsel %vm3990, %v3982, %v3987
      %v3992 = vrsqrt.pop %v3921
      %v3993 = vmul.f32 %v3992, %v3921
      %v3994 = vmul.f32 %v3993, %v3992
      %v3995 = vmul.f32 0.5, %v3994
      %v3996 = vsub.f32 1.5, %v3995
      %v3997 = vmul.f32 %v3992, %v3996
      %vm3998 = vweird.f32 %v3921
      %vm3999 = vweird.f32 %v3992
      %vm4000 = vmor %vm3998, %vm3999
      %v4001 = vsel %vm4000, %v3992, %v3997
      %v4002 = vmul.f32 %v3866, %v3931
      %v4003 = vmul.f32 %v3867, %v3941
      %v4004 = vmul.f32 %v3868, %v3951
      %v4005 = vmul.f32 %v3869, %v3961
      %v4006 = vmul.f32 %v3870, %v3971
      %v4007 = vmul.f32 %v3871, %v3981
      %v4008 = vmul.f32 %v3872, %v3991
      %v4009 = vmul.f32 %v3873, %v4001
      %v4011 = vperm.slane %v3825, 0
      %v4013 = vmul.f32 %v4002, %v4011
      %v4014 = vmul.f32 %v4003, %v4011
      %v4015 = vmul.f32 %v4004, %v4011
      %v4016 = vmul.f32 %v4005, %v4011
      %v4017 = vmul.f32 %v4006, %v4011
      %v4018 = vmul.f32 %v4007, %v4011
      %v4019 = vmul.f32 %v4008, %v4011
      %v4020 = vmul.f32 %v4009, %v4011
      %v4022 = vperm.slane %v3826, 0
      %v4024 = vadd.f32 %v4013, %v4022
      %v4025 = vadd.f32 %v4014, %v4022
      %v4026 = vadd.f32 %v4015, %v4022
      %v4027 = vadd.f32 %v4016, %v4022
      %v4028 = vadd.f32 %v4017, %v4022
      %v4029 = vadd.f32 %v4018, %v4022
      %v4030 = vadd.f32 %v4019, %v4022
      %v4031 = vadd.f32 %v4020, %v4022
      %v4032 = vpack.c.bf16 %v4025, %v4024
      %v4033 = vpack.c.bf16 %v4027, %v4026
      %v4034 = vpack.c.bf16 %v4029, %v4028
      %v4035 = vpack.c.bf16 %v4031, %v4030
      %v4036 = vld [vmem:[%s33] sm:$0xf]
      %v4037 = vld [vmem:[%s33 + $0x4] sm:$0xf]
      %v4038 = vld [vmem:[%s33 + $0x8] sm:$0xf]
      %v4039 = vld [vmem:[%s33 + $0xc] sm:$0xf]
      %v4040 = vld [vmem:[%s35] sm:$0x1]
      %v4042 = vperm.slane %v4040, 0
      %v4048 = vunpack.c.l.b16 %v4036
      %v4049 = vunpack.c.l.b16 %v4037
      %v4050 = vunpack.c.l.b16 %v4038
      %v4051 = vunpack.c.l.b16 %v4039
      %v4052 = vpack.c.b16 %v4049, %v4048
      %v4053 = vpack.c.b16 %v4051, %v4050
      %v4057 = vsel %vm1645, %v4032, 0
      %v4060 = vsel %vm1645, %v4033, 0
      %v4063 = vsel %vm1645, %v4034, 0
      %v4066 = vsel %vm1645, %v4035, 0
      %4068 = vmatpush.bf16.msra.mxu0 0
      %4069 = vmatpush.bf16.msra.mxu0 0
      %4070 = vmatpush.bf16.msra.mxu0 0
      %4071 = vmatpush.bf16.msra.mxu0 0
      %4072 = vmatpush.bf16.msra.mxu0 0
      %4073 = vmatpush.bf16.msra.mxu0 0
      %4074 = vmatpush.bf16.msra.mxu0 %v4053
      %4075 = vmatpush.bf16.msra.mxu0 %v4052
      %4076 = vmatmul.bf16.gmra.mxu0 %v4057
      %v4077 = vpop.f32.mrf.mxu0
      %v4078 = vadd.f32 %v4042, %v4077
      %v4079 = vpop.f32.mrf.mxu0
      %v4080 = vadd.f32 %v4042, %v4079
      %4081 = vmatmul.bf16.gmra.mxu0 %v4060
      %v4082 = vpop.f32.mrf.mxu0
      %v4083 = vadd.f32 %v4042, %v4082
      %v4084 = vpop.f32.mrf.mxu0
      %v4085 = vadd.f32 %v4042, %v4084
      %4086 = vmatmul.bf16.gmra.mxu0 %v4063
      %v4087 = vpop.f32.mrf.mxu0
      %v4088 = vadd.f32 %v4042, %v4087
      %v4089 = vpop.f32.mrf.mxu0
      %v4090 = vadd.f32 %v4042, %v4089
      %4091 = vmatmul.bf16.gmra.mxu0 %v4066
      %v4092 = vpop.f32.mrf.mxu0
      %v4093 = vadd.f32 %v4042, %v4092
      %v4094 = vpop.f32.mrf.mxu0
      %v4095 = vadd.f32 %v4042, %v4094
      %4096 = vdwg.mxu0
      %v4097 = vmax.f32 %v4078, 0.0
      %v4098 = vmax.f32 %v4080, 0.0
      %v4099 = vmax.f32 %v4083, 0.0
      %v4100 = vmax.f32 %v4085, 0.0
      %v4101 = vmax.f32 %v4088, 0.0
      %v4102 = vmax.f32 %v4090, 0.0
      %v4103 = vmax.f32 %v4093, 0.0
      %v4104 = vmax.f32 %v4095, 0.0
      %v4105 = vpack.c.bf16 %v4098, %v4097
      %v4106 = vpack.c.bf16 %v4100, %v4099
      %v4107 = vpack.c.bf16 %v4102, %v4101
      %v4108 = vpack.c.bf16 %v4104, %v4103
      %v4109 = vld [vmem:[%s37] sm:$0xf]
      %v4110 = vld [vmem:[%s37 + $0x4] sm:$0xf]
      %v4111 = vld [vmem:[%s37 + $0x8] sm:$0xf]
      %v4112 = vld [vmem:[%s37 + $0xc] sm:$0xf]
      %v4113 = vld [vmem:[%s37 + $0x10] sm:$0xf]
      %v4114 = vld [vmem:[%s37 + $0x14] sm:$0xf]
      %v4115 = vld [vmem:[%s37 + $0x18] sm:$0xf]
      %v4116 = vld [vmem:[%s37 + $0x1c] sm:$0xf]
      %v4117 = vld [vmem:[%s39] sm:$0x1]
      %v4119 = vperm.slane %v4117, 0
      %v4129 = vunpack.c.l.b16 %v4109
      %v4130 = vunpack.c.l.b16 %v4110
      %v4131 = vunpack.c.l.b16 %v4111
      %v4132 = vunpack.c.l.b16 %v4112
      %v4133 = vunpack.c.l.b16 %v4113
      %v4134 = vunpack.c.l.b16 %v4114
      %v4135 = vunpack.c.l.b16 %v4115
      %v4136 = vunpack.c.l.b16 %v4116
      %v4137 = vpack.c.b16 %v4130, %v4129
      %v4138 = vpack.c.b16 %v4132, %v4131
      %v4139 = vpack.c.b16 %v4134, %v4133
      %v4140 = vpack.c.b16 %v4136, %v4135
      %vm4145 = vcmask 523264
      %v4147 = vsel %vm4145, %v4105, 0
      %v4150 = vsel %vm4145, %v4106, 0
      %v4153 = vsel %vm4145, %v4107, 0
      %v4156 = vsel %vm4145, %v4108, 0
      %4158 = vmatpush.bf16.msra.mxu0 0
      %4159 = vmatpush.bf16.msra.mxu0 0
      %4160 = vmatpush.bf16.msra.mxu0 0
      %4161 = vmatpush.bf16.msra.mxu0 0
      %4162 = vmatpush.bf16.msra.mxu0 %v4140
      %4163 = vmatpush.bf16.msra.mxu0 %v4139
      %4164 = vmatpush.bf16.msra.mxu0 %v4138
      %4165 = vmatpush.bf16.msra.mxu0 %v4137
      %4166 = vmatmul.bf16.gmra.mxu0 %v4147
      %v4167 = vpop.f32.mrf.mxu0
      %v4168 = vadd.f32 %v4119, %v4167
      %v4169 = vpop.f32.mrf.mxu0
      %v4170 = vadd.f32 %v4119, %v4169
      %4171 = vmatmul.bf16.gmra.mxu0 %v4150
      %v4172 = vpop.f32.mrf.mxu0
      %v4173 = vadd.f32 %v4119, %v4172
      %v4174 = vpop.f32.mrf.mxu0
      %v4175 = vadd.f32 %v4119, %v4174
      %4176 = vmatmul.bf16.gmra.mxu0 %v4153
      %v4177 = vpop.f32.mrf.mxu0
      %v4178 = vadd.f32 %v4119, %v4177
      %v4179 = vpop.f32.mrf.mxu0
      %v4180 = vadd.f32 %v4119, %v4179
      %4181 = vmatmul.bf16.gmra.mxu0 %v4156
      %v4182 = vpop.f32.mrf.mxu0
      %v4183 = vadd.f32 %v4119, %v4182
      %v4184 = vpop.f32.mrf.mxu0
      %v4185 = vadd.f32 %v4119, %v4184
      %4186 = vdwg.mxu0
      %v4187 = vadd.f32 %v4024, %v4168
      %v4188 = vadd.f32 %v4025, %v4170
      %v4189 = vadd.f32 %v4026, %v4173
      %v4190 = vadd.f32 %v4027, %v4175
      %v4191 = vadd.f32 %v4028, %v4178
      %v4192 = vadd.f32 %v4029, %v4180
      %v4193 = vadd.f32 %v4030, %v4183
      %v4194 = vadd.f32 %v4031, %v4185
      %v4195 = vld [vmem:[%s41] sm:$0x1]
      %v4196 = vld [vmem:[%s43] sm:$0x1]
      %v4197 = vsel %vm1645, %v4187, 0.0
      %4198 = vadd.xlane.f32.xlu0 %v4197
      %v4199 = vpop.xlane.xlu0 %4198
      %v4200 = vsel %vm1645, %v4188, 0.0
      %4201 = vadd.xlane.f32.xlu0 %v4200
      %v4202 = vpop.xlane.xlu0 %4201
      %v4203 = vsel %vm1645, %v4189, 0.0
      %4204 = vadd.xlane.f32.xlu0 %v4203
      %v4205 = vpop.xlane.xlu0 %4204
      %v4206 = vsel %vm1645, %v4190, 0.0
      %4207 = vadd.xlane.f32.xlu0 %v4206
      %v4208 = vpop.xlane.xlu0 %4207
      %v4209 = vsel %vm1645, %v4191, 0.0
      %4210 = vadd.xlane.f32.xlu0 %v4209
      %v4211 = vpop.xlane.xlu0 %4210
      %v4212 = vsel %vm1645, %v4192, 0.0
      %4213 = vadd.xlane.f32.xlu0 %v4212
      %v4214 = vpop.xlane.xlu0 %4213
      %v4215 = vsel %vm1645, %v4193, 0.0
      %4216 = vadd.xlane.f32.xlu0 %v4215
      %v4217 = vpop.xlane.xlu0 %4216
      %v4218 = vsel %vm1645, %v4194, 0.0
      %4219 = vadd.xlane.f32.xlu0 %v4218
      %v4220 = vpop.xlane.xlu0 %4219
      %v4221 = vmul.f32 %v4199, %v3857
      %v4222 = vmul.f32 %v4202, %v3857
      %v4223 = vmul.f32 %v4205, %v3857
      %v4224 = vmul.f32 %v4208, %v3857
      %v4225 = vmul.f32 %v4211, %v3857
      %v4226 = vmul.f32 %v4214, %v3857
      %v4227 = vmul.f32 %v4217, %v3857
      %v4228 = vmul.f32 %v4220, %v3857
      %v4229 = vsub.f32 %v4187, %v4221
      %v4230 = vsub.f32 %v4188, %v4222
      %v4231 = vsub.f32 %v4189, %v4223
      %v4232 = vsub.f32 %v4190, %v4224
      %v4233 = vsub.f32 %v4191, %v4225
      %v4234 = vsub.f32 %v4192, %v4226
      %v4235 = vsub.f32 %v4193, %v4227
      %v4236 = vsub.f32 %v4194, %v4228
      %v4237 = vmul.f32 %v4229, %v4229
      %v4238 = vmul.f32 %v4230, %v4230
      %v4239 = vmul.f32 %v4231, %v4231
      %v4240 = vmul.f32 %v4232, %v4232
      %v4241 = vmul.f32 %v4233, %v4233
      %v4242 = vmul.f32 %v4234, %v4234
      %v4243 = vmul.f32 %v4235, %v4235
      %v4244 = vmul.f32 %v4236, %v4236
      %v4245 = vsel %vm1645, %v4237, 0.0
      %4246 = vadd.xlane.f32.xlu0 %v4245
      %v4247 = vpop.xlane.xlu0 %4246
      %v4248 = vsel %vm1645, %v4238, 0.0
      %4249 = vadd.xlane.f32.xlu0 %v4248
      %v4250 = vpop.xlane.xlu0 %4249
      %v4251 = vsel %vm1645, %v4239, 0.0
      %4252 = vadd.xlane.f32.xlu0 %v4251
      %v4253 = vpop.xlane.xlu0 %4252
      %v4254 = vsel %vm1645, %v4240, 0.0
      %4255 = vadd.xlane.f32.xlu0 %v4254
      %v4256 = vpop.xlane.xlu0 %4255
      %v4257 = vsel %vm1645, %v4241, 0.0
      %4258 = vadd.xlane.f32.xlu0 %v4257
      %v4259 = vpop.xlane.xlu0 %4258
      %v4260 = vsel %vm1645, %v4242, 0.0
      %4261 = vadd.xlane.f32.xlu0 %v4260
      %v4262 = vpop.xlane.xlu0 %4261
      %v4263 = vsel %vm1645, %v4243, 0.0
      %4264 = vadd.xlane.f32.xlu0 %v4263
      %v4265 = vpop.xlane.xlu0 %4264
      %v4266 = vsel %vm1645, %v4244, 0.0
      %4267 = vadd.xlane.f32.xlu0 %v4266
      %v4268 = vpop.xlane.xlu0 %4267
      %v4269 = vmul.f32 %v4247, %v3857
      %v4270 = vmul.f32 %v4250, %v3857
      %v4271 = vmul.f32 %v4253, %v3857
      %v4272 = vmul.f32 %v4256, %v3857
      %v4273 = vmul.f32 %v4259, %v3857
      %v4274 = vmul.f32 %v4262, %v3857
      %v4275 = vmul.f32 %v4265, %v3857
      %v4276 = vmul.f32 %v4268, %v3857
      %v4277 = vadd.f32 %v4269, 1e-05
      %v4278 = vadd.f32 %v4270, 1e-05
      %v4279 = vadd.f32 %v4271, 1e-05
      %v4280 = vadd.f32 %v4272, 1e-05
      %v4281 = vadd.f32 %v4273, 1e-05
      %v4282 = vadd.f32 %v4274, 1e-05
      %v4283 = vadd.f32 %v4275, 1e-05
      %v4284 = vadd.f32 %v4276, 1e-05
      %v4285 = vrsqrt.pop %v4277
      %v4286 = vmul.f32 %v4285, %v4277
      %v4287 = vmul.f32 %v4286, %v4285
      %v4288 = vmul.f32 0.5, %v4287
      %v4289 = vsub.f32 1.5, %v4288
      %v4290 = vmul.f32 %v4285, %v4289
      %vm4291 = vweird.f32 %v4277
      %vm4292 = vweird.f32 %v4285
      %vm4293 = vmor %vm4291, %vm4292
      %v4294 = vsel %vm4293, %v4285, %v4290
      %v4295 = vrsqrt.pop %v4278
      %v4296 = vmul.f32 %v4295, %v4278
      %v4297 = vmul.f32 %v4296, %v4295
      %v4298 = vmul.f32 0.5, %v4297
      %v4299 = vsub.f32 1.5, %v4298
      %v4300 = vmul.f32 %v4295, %v4299
      %vm4301 = vweird.f32 %v4278
      %vm4302 = vweird.f32 %v4295
      %vm4303 = vmor %vm4301, %vm4302
      %v4304 = vsel %vm4303, %v4295, %v4300
      %v4305 = vrsqrt.pop %v4279
      %v4306 = vmul.f32 %v4305, %v4279
      %v4307 = vmul.f32 %v4306, %v4305
      %v4308 = vmul.f32 0.5, %v4307
      %v4309 = vsub.f32 1.5, %v4308
      %v4310 = vmul.f32 %v4305, %v4309
      %vm4311 = vweird.f32 %v4279
      %vm4312 = vweird.f32 %v4305
      %vm4313 = vmor %vm4311, %vm4312
      %v4314 = vsel %vm4313, %v4305, %v4310
      %v4315 = vrsqrt.pop %v4280
      %v4316 = vmul.f32 %v4315, %v4280
      %v4317 = vmul.f32 %v4316, %v4315
      %v4318 = vmul.f32 0.5, %v4317
      %v4319 = vsub.f32 1.5, %v4318
      %v4320 = vmul.f32 %v4315, %v4319
      %vm4321 = vweird.f32 %v4280
      %vm4322 = vweird.f32 %v4315
      %vm4323 = vmor %vm4321, %vm4322
      %v4324 = vsel %vm4323, %v4315, %v4320
      %v4325 = vrsqrt.pop %v4281
      %v4326 = vmul.f32 %v4325, %v4281
      %v4327 = vmul.f32 %v4326, %v4325
      %v4328 = vmul.f32 0.5, %v4327
      %v4329 = vsub.f32 1.5, %v4328
      %v4330 = vmul.f32 %v4325, %v4329
      %vm4331 = vweird.f32 %v4281
      %vm4332 = vweird.f32 %v4325
      %vm4333 = vmor %vm4331, %vm4332
      %v4334 = vsel %vm4333, %v4325, %v4330
      %v4335 = vrsqrt.pop %v4282
      %v4336 = vmul.f32 %v4335, %v4282
      %v4337 = vmul.f32 %v4336, %v4335
      %v4338 = vmul.f32 0.5, %v4337
      %v4339 = vsub.f32 1.5, %v4338
      %v4340 = vmul.f32 %v4335, %v4339
      %vm4341 = vweird.f32 %v4282
      %vm4342 = vweird.f32 %v4335
      %vm4343 = vmor %vm4341, %vm4342
      %v4344 = vsel %vm4343, %v4335, %v4340
      %v4345 = vrsqrt.pop %v4283
      %v4346 = vmul.f32 %v4345, %v4283
      %v4347 = vmul.f32 %v4346, %v4345
      %v4348 = vmul.f32 0.5, %v4347
      %v4349 = vsub.f32 1.5, %v4348
      %v4350 = vmul.f32 %v4345, %v4349
      %vm4351 = vweird.f32 %v4283
      %vm4352 = vweird.f32 %v4345
      %vm4353 = vmor %vm4351, %vm4352
      %v4354 = vsel %vm4353, %v4345, %v4350
      %v4355 = vrsqrt.pop %v4284
      %v4356 = vmul.f32 %v4355, %v4284
      %v4357 = vmul.f32 %v4356, %v4355
      %v4358 = vmul.f32 0.5, %v4357
      %v4359 = vsub.f32 1.5, %v4358
      %v4360 = vmul.f32 %v4355, %v4359
      %vm4361 = vweird.f32 %v4284
      %vm4362 = vweird.f32 %v4355
      %vm4363 = vmor %vm4361, %vm4362
      %v4364 = vsel %vm4363, %v4355, %v4360
      %v4365 = vmul.f32 %v4229, %v4294
      %v4366 = vmul.f32 %v4230, %v4304
      %v4367 = vmul.f32 %v4231, %v4314
      %v4368 = vmul.f32 %v4232, %v4324
      %v4369 = vmul.f32 %v4233, %v4334
      %v4370 = vmul.f32 %v4234, %v4344
      %v4371 = vmul.f32 %v4235, %v4354
      %v4372 = vmul.f32 %v4236, %v4364
      %v4374 = vperm.slane %v4195, 0
      %v4376 = vmul.f32 %v4365, %v4374
      %v4377 = vmul.f32 %v4366, %v4374
      %v4378 = vmul.f32 %v4367, %v4374
      %v4379 = vmul.f32 %v4368, %v4374
      %v4380 = vmul.f32 %v4369, %v4374
      %v4381 = vmul.f32 %v4370, %v4374
      %v4382 = vmul.f32 %v4371, %v4374
      %v4383 = vmul.f32 %v4372, %v4374
      %v4385 = vperm.slane %v4196, 0
      %v4387 = vadd.f32 %v4376, %v4385
      %v4388 = vadd.f32 %v4377, %v4385
      %v4389 = vadd.f32 %v4378, %v4385
      %v4390 = vadd.f32 %v4379, %v4385
      %v4391 = vadd.f32 %v4380, %v4385
      %v4392 = vadd.f32 %v4381, %v4385
      %v4393 = vadd.f32 %v4382, %v4385
      %v4394 = vadd.f32 %v4383, %v4385
      %v4395 = vpack.c.bf16 %v4388, %v4387
      %v4396 = vpack.c.bf16 %v4390, %v4389
      %v4397 = vpack.c.bf16 %v4392, %v4391
      %v4398 = vpack.c.bf16 %v4394, %v4393
      %v4399 = vld [vmem:[%s45] sm:$0xf]
      %v4400 = vld [vmem:[%s45 + $0x4] sm:$0xf]
      %v4401 = vld [vmem:[%s45 + $0x8] sm:$0xf]
      %v4402 = vld [vmem:[%s45 + $0xc] sm:$0xf]
      %v4403 = vld [vmem:[%s47] sm:$0x1]
      %v4405 = vperm.slane %v4403, 0
      %v4411 = vunpack.c.l.b16 %v4399
      %v4412 = vunpack.c.l.b16 %v4400
      %v4413 = vunpack.c.l.b16 %v4401
      %v4414 = vunpack.c.l.b16 %v4402
      %v4415 = vpack.c.b16 %v4412, %v4411
      %v4416 = vpack.c.b16 %v4414, %v4413
      %v4420 = vsel %vm1645, %v4395, 0
      %v4423 = vsel %vm1645, %v4396, 0
      %v4426 = vsel %vm1645, %v4397, 0
      %v4429 = vsel %vm1645, %v4398, 0
      %4431 = vmatpush.bf16.msra.mxu0 0
      %4432 = vmatpush.bf16.msra.mxu0 0
      %4433 = vmatpush.bf16.msra.mxu0 0
      %4434 = vmatpush.bf16.msra.mxu0 0
      %4435 = vmatpush.bf16.msra.mxu0 0
      %4436 = vmatpush.bf16.msra.mxu0 0
      %4437 = vmatpush.bf16.msra.mxu0 %v4416
      %4438 = vmatpush.bf16.msra.mxu0 %v4415
      %4439 = vmatmul.bf16.gmra.mxu0 %v4420
      %v4440 = vpop.f32.mrf.mxu0
      %v4441 = vadd.f32 %v4405, %v4440
      %v4442 = vpop.f32.mrf.mxu0
      %v4443 = vadd.f32 %v4405, %v4442
      %4444 = vmatmul.bf16.gmra.mxu0 %v4423
      %v4445 = vpop.f32.mrf.mxu0
      %v4446 = vadd.f32 %v4405, %v4445
      %v4447 = vpop.f32.mrf.mxu0
      %v4448 = vadd.f32 %v4405, %v4447
      %4449 = vmatmul.bf16.gmra.mxu0 %v4426
      %v4450 = vpop.f32.mrf.mxu0
      %v4451 = vadd.f32 %v4405, %v4450
      %v4452 = vpop.f32.mrf.mxu0
      %v4453 = vadd.f32 %v4405, %v4452
      %4454 = vmatmul.bf16.gmra.mxu0 %v4429
      %v4455 = vpop.f32.mrf.mxu0
      %v4456 = vadd.f32 %v4405, %v4455
      %v4457 = vpop.f32.mrf.mxu0
      %v4458 = vadd.f32 %v4405, %v4457
      %4459 = vdwg.mxu0
      %v4460 = vmul.f32 %v4441, 0.35355338
      %v4461 = vmul.f32 %v4443, 0.35355338
      %v4462 = vmul.f32 %v4446, 0.35355338
      %v4463 = vmul.f32 %v4448, 0.35355338
      %v4464 = vmul.f32 %v4451, 0.35355338
      %v4465 = vmul.f32 %v4453, 0.35355338
      %v4466 = vmul.f32 %v4456, 0.35355338
      %v4467 = vmul.f32 %v4458, 0.35355338
      %v4468 = vld [vmem:[%s49] sm:$0xf]
      %v4469 = vld [vmem:[%s49 + $0x4] sm:$0xf]
      %v4470 = vld [vmem:[%s49 + $0x8] sm:$0xf]
      %v4471 = vld [vmem:[%s49 + $0xc] sm:$0xf]
      %v4472 = vpack.c.bf16 %v4460, %v4460
      %v4473 = vpack.c.bf16 %v4461, %v4461
      %v4474 = vpack.c.bf16 %v4462, %v4462
      %v4475 = vpack.c.bf16 %v4463, %v4463
      %v4476 = vpack.c.bf16 %v4464, %v4464
      %v4477 = vpack.c.bf16 %v4465, %v4465
      %v4478 = vpack.c.bf16 %v4466, %v4466
      %v4479 = vpack.c.bf16 %v4467, %v4467
      %v4480 = vpack.c.bf16 %v4441, %v4441
      %v4481 = vpack.c.bf16 %v4443, %v4443
      %v4482 = vpack.c.bf16 %v4446, %v4446
      %v4483 = vpack.c.bf16 %v4448, %v4448
      %v4484 = vpack.c.bf16 %v4451, %v4451
      %v4485 = vpack.c.bf16 %v4453, %v4453
      %v4486 = vpack.c.bf16 %v4456, %v4456
      %v4487 = vpack.c.bf16 %v4458, %v4458
      %v4489 = vunpack.c.l.b16 %v4480
      %v4490 = vpack.c.b16 %v4489, %v4489
      %4491 = vrot.lane.b32.xlu0 %v4490, 96
      %v4492 = vpop.permute.xlu0 %4491
      %v4494 = vsel %vm1720, %v4472, 0
      %v4497 = vsel %vm1720, %v4492, 0
      %4499 = vmatpush.bf16.xpose.msra.mxu0 0
      %4500 = vmatpush.bf16.xpose.msra.mxu0 0
      %4501 = vmatpush.bf16.xpose.msra.mxu0 0
      %4502 = vmatpush.bf16.xpose.msra.mxu0 0
      %4503 = vmatpush.bf16.xpose.msra.mxu0 0
      %4504 = vmatpush.bf16.xpose.msra.mxu0 0
      %4505 = vmatpush.bf16.xpose.msra.mxu0 0
      %4506 = vmatpush.bf16.xpose.msra.mxu0 %v4497
      %4507 = vmatmul.bf16.gmra.mxu0 %v4494
      %v4508 = vpop.f32.mrf.mxu0
      %v4509 = vadd.f32 0.0, %v4508
      %v4510 = vpop.f32.mrf.mxu0
      %4511 = vdwg.mxu0
      %v4513 = vunpack.c.l.b16 %v4481
      %v4514 = vpack.c.b16 %v4513, %v4513
      %4515 = vrot.lane.b32.xlu0 %v4514, 96
      %v4516 = vpop.permute.xlu0 %4515
      %v4518 = vsel %vm1720, %v4473, 0
      %v4521 = vsel %vm1720, %v4516, 0
      %4523 = vmatpush.bf16.xpose.msra.mxu0 0
      %4524 = vmatpush.bf16.xpose.msra.mxu0 0
      %4525 = vmatpush.bf16.xpose.msra.mxu0 0
      %4526 = vmatpush.bf16.xpose.msra.mxu0 0
      %4527 = vmatpush.bf16.xpose.msra.mxu0 0
      %4528 = vmatpush.bf16.xpose.msra.mxu0 0
      %4529 = vmatpush.bf16.xpose.msra.mxu0 0
      %4530 = vmatpush.bf16.xpose.msra.mxu0 %v4521
      %4531 = vmatmul.bf16.gmra.mxu0 %v4518
      %v4532 = vpop.f32.mrf.mxu0
      %v4533 = vadd.f32 0.0, %v4532
      %v4534 = vpop.f32.mrf.mxu0
      %4535 = vdwg.mxu0
      %v4537 = vunpack.c.l.b16 %v4482
      %v4538 = vpack.c.b16 %v4537, %v4537
      %4539 = vrot.lane.b32.xlu0 %v4538, 96
      %v4540 = vpop.permute.xlu0 %4539
      %v4542 = vsel %vm1720, %v4474, 0
      %v4545 = vsel %vm1720, %v4540, 0
      %4547 = vmatpush.bf16.xpose.msra.mxu0 0
      %4548 = vmatpush.bf16.xpose.msra.mxu0 0
      %4549 = vmatpush.bf16.xpose.msra.mxu0 0
      %4550 = vmatpush.bf16.xpose.msra.mxu0 0
      %4551 = vmatpush.bf16.xpose.msra.mxu0 0
      %4552 = vmatpush.bf16.xpose.msra.mxu0 0
      %4553 = vmatpush.bf16.xpose.msra.mxu0 0
      %4554 = vmatpush.bf16.xpose.msra.mxu0 %v4545
      %4555 = vmatmul.bf16.gmra.mxu0 %v4542
      %v4556 = vpop.f32.mrf.mxu0
      %v4557 = vadd.f32 0.0, %v4556
      %v4558 = vpop.f32.mrf.mxu0
      %4559 = vdwg.mxu0
      %v4561 = vunpack.c.l.b16 %v4483
      %v4562 = vpack.c.b16 %v4561, %v4561
      %4563 = vrot.lane.b32.xlu0 %v4562, 96
      %v4564 = vpop.permute.xlu0 %4563
      %v4566 = vsel %vm1720, %v4475, 0
      %v4569 = vsel %vm1720, %v4564, 0
      %4571 = vmatpush.bf16.xpose.msra.mxu0 0
      %4572 = vmatpush.bf16.xpose.msra.mxu0 0
      %4573 = vmatpush.bf16.xpose.msra.mxu0 0
      %4574 = vmatpush.bf16.xpose.msra.mxu0 0
      %4575 = vmatpush.bf16.xpose.msra.mxu0 0
      %4576 = vmatpush.bf16.xpose.msra.mxu0 0
      %4577 = vmatpush.bf16.xpose.msra.mxu0 0
      %4578 = vmatpush.bf16.xpose.msra.mxu0 %v4569
      %4579 = vmatmul.bf16.gmra.mxu0 %v4566
      %v4580 = vpop.f32.mrf.mxu0
      %v4581 = vadd.f32 0.0, %v4580
      %v4582 = vpop.f32.mrf.mxu0
      %4583 = vdwg.mxu0
      %v4585 = vunpack.c.l.b16 %v4484
      %v4586 = vpack.c.b16 %v4585, %v4585
      %4587 = vrot.lane.b32.xlu0 %v4586, 96
      %v4588 = vpop.permute.xlu0 %4587
      %v4590 = vsel %vm1720, %v4476, 0
      %v4593 = vsel %vm1720, %v4588, 0
      %4595 = vmatpush.bf16.xpose.msra.mxu0 0
      %4596 = vmatpush.bf16.xpose.msra.mxu0 0
      %4597 = vmatpush.bf16.xpose.msra.mxu0 0
      %4598 = vmatpush.bf16.xpose.msra.mxu0 0
      %4599 = vmatpush.bf16.xpose.msra.mxu0 0
      %4600 = vmatpush.bf16.xpose.msra.mxu0 0
      %4601 = vmatpush.bf16.xpose.msra.mxu0 0
      %4602 = vmatpush.bf16.xpose.msra.mxu0 %v4593
      %4603 = vmatmul.bf16.gmra.mxu0 %v4590
      %v4604 = vpop.f32.mrf.mxu0
      %v4605 = vadd.f32 0.0, %v4604
      %v4606 = vpop.f32.mrf.mxu0
      %4607 = vdwg.mxu0
      %v4609 = vunpack.c.l.b16 %v4485
      %v4610 = vpack.c.b16 %v4609, %v4609
      %4611 = vrot.lane.b32.xlu0 %v4610, 96
      %v4612 = vpop.permute.xlu0 %4611
      %v4614 = vsel %vm1720, %v4477, 0
      %v4617 = vsel %vm1720, %v4612, 0
      %4619 = vmatpush.bf16.xpose.msra.mxu0 0
      %4620 = vmatpush.bf16.xpose.msra.mxu0 0
      %4621 = vmatpush.bf16.xpose.msra.mxu0 0
      %4622 = vmatpush.bf16.xpose.msra.mxu0 0
      %4623 = vmatpush.bf16.xpose.msra.mxu0 0
      %4624 = vmatpush.bf16.xpose.msra.mxu0 0
      %4625 = vmatpush.bf16.xpose.msra.mxu0 0
      %4626 = vmatpush.bf16.xpose.msra.mxu0 %v4617
      %4627 = vmatmul.bf16.gmra.mxu0 %v4614
      %v4628 = vpop.f32.mrf.mxu0
      %v4629 = vadd.f32 0.0, %v4628
      %v4630 = vpop.f32.mrf.mxu0
      %4631 = vdwg.mxu0
      %v4633 = vunpack.c.l.b16 %v4486
      %v4634 = vpack.c.b16 %v4633, %v4633
      %4635 = vrot.lane.b32.xlu0 %v4634, 96
      %v4636 = vpop.permute.xlu0 %4635
      %v4638 = vsel %vm1720, %v4478, 0
      %v4641 = vsel %vm1720, %v4636, 0
      %4643 = vmatpush.bf16.xpose.msra.mxu0 0
      %4644 = vmatpush.bf16.xpose.msra.mxu0 0
      %4645 = vmatpush.bf16.xpose.msra.mxu0 0
      %4646 = vmatpush.bf16.xpose.msra.mxu0 0
      %4647 = vmatpush.bf16.xpose.msra.mxu0 0
      %4648 = vmatpush.bf16.xpose.msra.mxu0 0
      %4649 = vmatpush.bf16.xpose.msra.mxu0 0
      %4650 = vmatpush.bf16.xpose.msra.mxu0 %v4641
      %4651 = vmatmul.bf16.gmra.mxu0 %v4638
      %v4652 = vpop.f32.mrf.mxu0
      %v4653 = vadd.f32 0.0, %v4652
      %v4654 = vpop.f32.mrf.mxu0
      %4655 = vdwg.mxu0
      %v4657 = vunpack.c.l.b16 %v4487
      %v4658 = vpack.c.b16 %v4657, %v4657
      %4659 = vrot.lane.b32.xlu0 %v4658, 96
      %v4660 = vpop.permute.xlu0 %4659
      %v4662 = vsel %vm1720, %v4479, 0
      %v4665 = vsel %vm1720, %v4660, 0
      %4667 = vmatpush.bf16.xpose.msra.mxu0 0
      %4668 = vmatpush.bf16.xpose.msra.mxu0 0
      %4669 = vmatpush.bf16.xpose.msra.mxu0 0
      %4670 = vmatpush.bf16.xpose.msra.mxu0 0
      %4671 = vmatpush.bf16.xpose.msra.mxu0 0
      %4672 = vmatpush.bf16.xpose.msra.mxu0 0
      %4673 = vmatpush.bf16.xpose.msra.mxu0 0
      %4674 = vmatpush.bf16.xpose.msra.mxu0 %v4665
      %4675 = vmatmul.bf16.gmra.mxu0 %v4662
      %v4676 = vpop.f32.mrf.mxu0
      %v4677 = vadd.f32 0.0, %v4676
      %v4678 = vpop.f32.mrf.mxu0
      %4679 = vdwg.mxu0
      %v4680 = vsel %vm1924, %v4509, -1e+30
      %v4681 = vsel %vm1925, %v4533, -1e+30
      %v4682 = vsel %vm1926, %v4557, -1e+30
      %v4683 = vsel %vm1927, %v4581, -1e+30
      %v4684 = vsel %vm1928, %v4605, -1e+30
      %v4685 = vsel %vm1929, %v4629, -1e+30
      %v4686 = vsel %vm1930, %v4653, -1e+30
      %v4687 = vsel %vm1931, %v4677, -1e+30
      %v4688 = vsel %vm1720, %v4680, -inf
      %4689 = vmax.xlane.f32.xlu0 %v4688
      %v4690 = vpop.xlane.xlu0 %4689
      %v4691 = vsel %vm1720, %v4681, -inf
      %4692 = vmax.xlane.f32.xlu0 %v4691
      %v4693 = vpop.xlane.xlu0 %4692
      %v4694 = vsel %vm1720, %v4682, -inf
      %4695 = vmax.xlane.f32.xlu0 %v4694
      %v4696 = vpop.xlane.xlu0 %4695
      %v4697 = vsel %vm1720, %v4683, -inf
      %4698 = vmax.xlane.f32.xlu0 %v4697
      %v4699 = vpop.xlane.xlu0 %4698
      %v4700 = vsel %vm1720, %v4684, -inf
      %4701 = vmax.xlane.f32.xlu0 %v4700
      %v4702 = vpop.xlane.xlu0 %4701
      %v4703 = vsel %vm1720, %v4685, -inf
      %4704 = vmax.xlane.f32.xlu0 %v4703
      %v4705 = vpop.xlane.xlu0 %4704
      %v4706 = vsel %vm1720, %v4686, -inf
      %4707 = vmax.xlane.f32.xlu0 %v4706
      %v4708 = vpop.xlane.xlu0 %4707
      %v4709 = vsel %vm1720, %v4687, -inf
      %4710 = vmax.xlane.f32.xlu0 %v4709
      %v4711 = vpop.xlane.xlu0 %4710
      %v4712 = vsub.f32 %v4680, %v4690
      %v4713 = vsub.f32 %v4681, %v4693
      %v4714 = vsub.f32 %v4682, %v4696
      %v4715 = vsub.f32 %v4683, %v4699
      %v4716 = vsub.f32 %v4684, %v4702
      %v4717 = vsub.f32 %v4685, %v4705
      %v4718 = vsub.f32 %v4686, %v4708
      %v4719 = vsub.f32 %v4687, %v4711
      %v4720 = vmul.f32 %v4712, 1.442695
      %v4721 = vpow.pop %v4720
      %v4722 = vmul.f32 %v4713, 1.442695
      %v4723 = vpow.pop %v4722
      %v4724 = vmul.f32 %v4714, 1.442695
      %v4725 = vpow.pop %v4724
      %v4726 = vmul.f32 %v4715, 1.442695
      %v4727 = vpow.pop %v4726
      %v4728 = vmul.f32 %v4716, 1.442695
      %v4729 = vpow.pop %v4728
      %v4730 = vmul.f32 %v4717, 1.442695
      %v4731 = vpow.pop %v4730
      %v4732 = vmul.f32 %v4718, 1.442695
      %v4733 = vpow.pop %v4732
      %v4734 = vmul.f32 %v4719, 1.442695
      %v4735 = vpow.pop %v4734
      %v4736 = vsel %vm1720, %v4721, 0.0
      %4737 = vadd.xlane.f32.xlu0 %v4736
      %v4738 = vpop.xlane.xlu0 %4737
      %v4739 = vsel %vm1720, %v4723, 0.0
      %4740 = vadd.xlane.f32.xlu0 %v4739
      %v4741 = vpop.xlane.xlu0 %4740
      %v4742 = vsel %vm1720, %v4725, 0.0
      %4743 = vadd.xlane.f32.xlu0 %v4742
      %v4744 = vpop.xlane.xlu0 %4743
      %v4745 = vsel %vm1720, %v4727, 0.0
      %4746 = vadd.xlane.f32.xlu0 %v4745
      %v4747 = vpop.xlane.xlu0 %4746
      %v4748 = vsel %vm1720, %v4729, 0.0
      %4749 = vadd.xlane.f32.xlu0 %v4748
      %v4750 = vpop.xlane.xlu0 %4749
      %v4751 = vsel %vm1720, %v4731, 0.0
      %4752 = vadd.xlane.f32.xlu0 %v4751
      %v4753 = vpop.xlane.xlu0 %4752
      %v4754 = vsel %vm1720, %v4733, 0.0
      %4755 = vadd.xlane.f32.xlu0 %v4754
      %v4756 = vpop.xlane.xlu0 %4755
      %v4757 = vsel %vm1720, %v4735, 0.0
      %4758 = vadd.xlane.f32.xlu0 %v4757
      %v4759 = vpop.xlane.xlu0 %4758
      %v4760 = vrcp.pop %v4738
      %v4761 = vrcp.pop %v4741
      %v4762 = vrcp.pop %v4744
      %v4763 = vrcp.pop %v4747
      %v4764 = vrcp.pop %v4750
      %v4765 = vrcp.pop %v4753
      %v4766 = vrcp.pop %v4756
      %v4767 = vrcp.pop %v4759
      %v4768 = vmul.f32 %v4721, %v4760
      %v4769 = vmul.f32 %v4723, %v4761
      %v4770 = vmul.f32 %v4725, %v4762
      %v4771 = vmul.f32 %v4727, %v4763
      %v4772 = vmul.f32 %v4729, %v4764
      %v4773 = vmul.f32 %v4731, %v4765
      %v4774 = vmul.f32 %v4733, %v4766
      %v4775 = vmul.f32 %v4735, %v4767
      %v4776 = vpack.c.bf16 %v4768, %v4768
      %v4777 = vpack.c.bf16 %v4769, %v4769
      %v4778 = vpack.c.bf16 %v4770, %v4770
      %v4779 = vpack.c.bf16 %v4771, %v4771
      %v4780 = vpack.c.bf16 %v4772, %v4772
      %v4781 = vpack.c.bf16 %v4773, %v4773
      %v4782 = vpack.c.bf16 %v4774, %v4774
      %v4783 = vpack.c.bf16 %v4775, %v4775
      %4784 = vrot.lane.b32.xlu0 %v4490, 64
      %v4785 = vpop.permute.xlu0 %4784
      %v4787 = vsel %vm1720, %v4776, 0
      %v4790 = vsel %vm2041, %v4785, 0
      %4792 = vmatpush.bf16.msra.mxu0 0
      %4793 = vmatpush.bf16.msra.mxu0 0
      %4794 = vmatpush.bf16.msra.mxu0 0
      %4795 = vmatpush.bf16.msra.mxu0 0
      %4796 = vmatpush.bf16.msra.mxu0 0
      %4797 = vmatpush.bf16.msra.mxu0 0
      %4798 = vmatpush.bf16.msra.mxu0 0
      %4799 = vmatpush.bf16.msra.mxu0 %v4790
      %4800 = vmatmul.bf16.gmra.mxu0 %v4787
      %v4801 = vpop.f32.mrf.mxu0
      %v4802 = vadd.f32 0.0, %v4801
      %v4803 = vpop.f32.mrf.mxu0
      %4804 = vdwg.mxu0
      %4805 = vrot.lane.b32.xlu0 %v4514, 64
      %v4806 = vpop.permute.xlu0 %4805
      %v4808 = vsel %vm1720, %v4777, 0
      %v4811 = vsel %vm2041, %v4806, 0
      %4813 = vmatpush.bf16.msra.mxu0 0
      %4814 = vmatpush.bf16.msra.mxu0 0
      %4815 = vmatpush.bf16.msra.mxu0 0
      %4816 = vmatpush.bf16.msra.mxu0 0
      %4817 = vmatpush.bf16.msra.mxu0 0
      %4818 = vmatpush.bf16.msra.mxu0 0
      %4819 = vmatpush.bf16.msra.mxu0 0
      %4820 = vmatpush.bf16.msra.mxu0 %v4811
      %4821 = vmatmul.bf16.gmra.mxu0 %v4808
      %v4822 = vpop.f32.mrf.mxu0
      %v4823 = vadd.f32 0.0, %v4822
      %v4824 = vpop.f32.mrf.mxu0
      %4825 = vdwg.mxu0
      %4826 = vrot.lane.b32.xlu0 %v4538, 64
      %v4827 = vpop.permute.xlu0 %4826
      %v4829 = vsel %vm1720, %v4778, 0
      %v4832 = vsel %vm2041, %v4827, 0
      %4834 = vmatpush.bf16.msra.mxu0 0
      %4835 = vmatpush.bf16.msra.mxu0 0
      %4836 = vmatpush.bf16.msra.mxu0 0
      %4837 = vmatpush.bf16.msra.mxu0 0
      %4838 = vmatpush.bf16.msra.mxu0 0
      %4839 = vmatpush.bf16.msra.mxu0 0
      %4840 = vmatpush.bf16.msra.mxu0 0
      %4841 = vmatpush.bf16.msra.mxu0 %v4832
      %4842 = vmatmul.bf16.gmra.mxu0 %v4829
      %v4843 = vpop.f32.mrf.mxu0
      %v4844 = vadd.f32 0.0, %v4843
      %v4845 = vpop.f32.mrf.mxu0
      %4846 = vdwg.mxu0
      %4847 = vrot.lane.b32.xlu0 %v4562, 64
      %v4848 = vpop.permute.xlu0 %4847
      %v4850 = vsel %vm1720, %v4779, 0
      %v4853 = vsel %vm2041, %v4848, 0
      %4855 = vmatpush.bf16.msra.mxu0 0
      %4856 = vmatpush.bf16.msra.mxu0 0
      %4857 = vmatpush.bf16.msra.mxu0 0
      %4858 = vmatpush.bf16.msra.mxu0 0
      %4859 = vmatpush.bf16.msra.mxu0 0
      %4860 = vmatpush.bf16.msra.mxu0 0
      %4861 = vmatpush.bf16.msra.mxu0 0
      %4862 = vmatpush.bf16.msra.mxu0 %v4853
      %4863 = vmatmul.bf16.gmra.mxu0 %v4850
      %v4864 = vpop.f32.mrf.mxu0
      %v4865 = vadd.f32 0.0, %v4864
      %v4866 = vpop.f32.mrf.mxu0
      %4867 = vdwg.mxu0
      %4868 = vrot.lane.b32.xlu0 %v4586, 64
      %v4869 = vpop.permute.xlu0 %4868
      %v4871 = vsel %vm1720, %v4780, 0
      %v4874 = vsel %vm2041, %v4869, 0
      %4876 = vmatpush.bf16.msra.mxu0 0
      %4877 = vmatpush.bf16.msra.mxu0 0
      %4878 = vmatpush.bf16.msra.mxu0 0
      %4879 = vmatpush.bf16.msra.mxu0 0
      %4880 = vmatpush.bf16.msra.mxu0 0
      %4881 = vmatpush.bf16.msra.mxu0 0
      %4882 = vmatpush.bf16.msra.mxu0 0
      %4883 = vmatpush.bf16.msra.mxu0 %v4874
      %4884 = vmatmul.bf16.gmra.mxu0 %v4871
      %v4885 = vpop.f32.mrf.mxu0
      %v4886 = vadd.f32 0.0, %v4885
      %v4887 = vpop.f32.mrf.mxu0
      %4888 = vdwg.mxu0
      %4889 = vrot.lane.b32.xlu0 %v4610, 64
      %v4890 = vpop.permute.xlu0 %4889
      %v4892 = vsel %vm1720, %v4781, 0
      %v4895 = vsel %vm2041, %v4890, 0
      %4897 = vmatpush.bf16.msra.mxu0 0
      %4898 = vmatpush.bf16.msra.mxu0 0
      %4899 = vmatpush.bf16.msra.mxu0 0
      %4900 = vmatpush.bf16.msra.mxu0 0
      %4901 = vmatpush.bf16.msra.mxu0 0
      %4902 = vmatpush.bf16.msra.mxu0 0
      %4903 = vmatpush.bf16.msra.mxu0 0
      %4904 = vmatpush.bf16.msra.mxu0 %v4895
      %4905 = vmatmul.bf16.gmra.mxu0 %v4892
      %v4906 = vpop.f32.mrf.mxu0
      %v4907 = vadd.f32 0.0, %v4906
      %v4908 = vpop.f32.mrf.mxu0
      %4909 = vdwg.mxu0
      %4910 = vrot.lane.b32.xlu0 %v4634, 64
      %v4911 = vpop.permute.xlu0 %4910
      %v4913 = vsel %vm1720, %v4782, 0
      %v4916 = vsel %vm2041, %v4911, 0
      %4918 = vmatpush.bf16.msra.mxu0 0
      %4919 = vmatpush.bf16.msra.mxu0 0
      %4920 = vmatpush.bf16.msra.mxu0 0
      %4921 = vmatpush.bf16.msra.mxu0 0
      %4922 = vmatpush.bf16.msra.mxu0 0
      %4923 = vmatpush.bf16.msra.mxu0 0
      %4924 = vmatpush.bf16.msra.mxu0 0
      %4925 = vmatpush.bf16.msra.mxu0 %v4916
      %4926 = vmatmul.bf16.gmra.mxu0 %v4913
      %v4927 = vpop.f32.mrf.mxu0
      %v4928 = vadd.f32 0.0, %v4927
      %v4929 = vpop.f32.mrf.mxu0
      %4930 = vdwg.mxu0
      %4931 = vrot.lane.b32.xlu0 %v4658, 64
      %v4932 = vpop.permute.xlu0 %4931
      %v4934 = vsel %vm1720, %v4783, 0
      %v4937 = vsel %vm2041, %v4932, 0
      %4939 = vmatpush.bf16.msra.mxu0 0
      %4940 = vmatpush.bf16.msra.mxu0 0
      %4941 = vmatpush.bf16.msra.mxu0 0
      %4942 = vmatpush.bf16.msra.mxu0 0
      %4943 = vmatpush.bf16.msra.mxu0 0
      %4944 = vmatpush.bf16.msra.mxu0 0
      %4945 = vmatpush.bf16.msra.mxu0 0
      %4946 = vmatpush.bf16.msra.mxu0 %v4937
      %4947 = vmatmul.bf16.gmra.mxu0 %v4934
      %v4948 = vpop.f32.mrf.mxu0
      %v4949 = vadd.f32 0.0, %v4948
      %v4950 = vpop.f32.mrf.mxu0
      %4951 = vdwg.mxu0
      %v4952 = vpack.c.bf16 %v4823, %v4802
      %v4953 = vpack.c.bf16 %v4865, %v4844
      %v4954 = vpack.c.bf16 %v4907, %v4886
      %v4955 = vpack.c.bf16 %v4949, %v4928
      %v4957 = vunpack.c.l.b16 %v4472
      %v4958 = vpack.c.b16 %v4957, %v4957
      %4959 = vrot.lane.b32.xlu0 %v4958, 120
      %v4960 = vpop.permute.xlu0 %4959
      %4961 = vrot.lane.b32.xlu0 %v4490, 88
      %v4962 = vpop.permute.xlu0 %4961
      %v4964 = vsel %vm1720, %v4960, 0
      %v4967 = vsel %vm1720, %v4962, 0
      %4969 = vmatpush.bf16.xpose.msra.mxu0 0
      %4970 = vmatpush.bf16.xpose.msra.mxu0 0
      %4971 = vmatpush.bf16.xpose.msra.mxu0 0
      %4972 = vmatpush.bf16.xpose.msra.mxu0 0
      %4973 = vmatpush.bf16.xpose.msra.mxu0 0
      %4974 = vmatpush.bf16.xpose.msra.mxu0 0
      %4975 = vmatpush.bf16.xpose.msra.mxu0 0
      %4976 = vmatpush.bf16.xpose.msra.mxu0 %v4967
      %4977 = vmatmul.bf16.gmra.mxu0 %v4964
      %v4978 = vpop.f32.mrf.mxu0
      %v4979 = vadd.f32 0.0, %v4978
      %v4980 = vpop.f32.mrf.mxu0
      %4981 = vdwg.mxu0
      %v4983 = vunpack.c.l.b16 %v4473
      %v4984 = vpack.c.b16 %v4983, %v4983
      %4985 = vrot.lane.b32.xlu0 %v4984, 120
      %v4986 = vpop.permute.xlu0 %4985
      %4987 = vrot.lane.b32.xlu0 %v4514, 88
      %v4988 = vpop.permute.xlu0 %4987
      %v4990 = vsel %vm1720, %v4986, 0
      %v4993 = vsel %vm1720, %v4988, 0
      %4995 = vmatpush.bf16.xpose.msra.mxu0 0
      %4996 = vmatpush.bf16.xpose.msra.mxu0 0
      %4997 = vmatpush.bf16.xpose.msra.mxu0 0
      %4998 = vmatpush.bf16.xpose.msra.mxu0 0
      %4999 = vmatpush.bf16.xpose.msra.mxu0 0
      %5000 = vmatpush.bf16.xpose.msra.mxu0 0
      %5001 = vmatpush.bf16.xpose.msra.mxu0 0
      %5002 = vmatpush.bf16.xpose.msra.mxu0 %v4993
      %5003 = vmatmul.bf16.gmra.mxu0 %v4990
      %v5004 = vpop.f32.mrf.mxu0
      %v5005 = vadd.f32 0.0, %v5004
      %v5006 = vpop.f32.mrf.mxu0
      %5007 = vdwg.mxu0
      %v5009 = vunpack.c.l.b16 %v4474
      %v5010 = vpack.c.b16 %v5009, %v5009
      %5011 = vrot.lane.b32.xlu0 %v5010, 120
      %v5012 = vpop.permute.xlu0 %5011
      %5013 = vrot.lane.b32.xlu0 %v4538, 88
      %v5014 = vpop.permute.xlu0 %5013
      %v5016 = vsel %vm1720, %v5012, 0
      %v5019 = vsel %vm1720, %v5014, 0
      %5021 = vmatpush.bf16.xpose.msra.mxu0 0
      %5022 = vmatpush.bf16.xpose.msra.mxu0 0
      %5023 = vmatpush.bf16.xpose.msra.mxu0 0
      %5024 = vmatpush.bf16.xpose.msra.mxu0 0
      %5025 = vmatpush.bf16.xpose.msra.mxu0 0
      %5026 = vmatpush.bf16.xpose.msra.mxu0 0
      %5027 = vmatpush.bf16.xpose.msra.mxu0 0
      %5028 = vmatpush.bf16.xpose.msra.mxu0 %v5019
      %5029 = vmatmul.bf16.gmra.mxu0 %v5016
      %v5030 = vpop.f32.mrf.mxu0
      %v5031 = vadd.f32 0.0, %v5030
      %v5032 = vpop.f32.mrf.mxu0
      %5033 = vdwg.mxu0
      %v5035 = vunpack.c.l.b16 %v4475
      %v5036 = vpack.c.b16 %v5035, %v5035
      %5037 = vrot.lane.b32.xlu0 %v5036, 120
      %v5038 = vpop.permute.xlu0 %5037
      %5039 = vrot.lane.b32.xlu0 %v4562, 88
      %v5040 = vpop.permute.xlu0 %5039
      %v5042 = vsel %vm1720, %v5038, 0
      %v5045 = vsel %vm1720, %v5040, 0
      %5047 = vmatpush.bf16.xpose.msra.mxu0 0
      %5048 = vmatpush.bf16.xpose.msra.mxu0 0
      %5049 = vmatpush.bf16.xpose.msra.mxu0 0
      %5050 = vmatpush.bf16.xpose.msra.mxu0 0
      %5051 = vmatpush.bf16.xpose.msra.mxu0 0
      %5052 = vmatpush.bf16.xpose.msra.mxu0 0
      %5053 = vmatpush.bf16.xpose.msra.mxu0 0
      %5054 = vmatpush.bf16.xpose.msra.mxu0 %v5045
      %5055 = vmatmul.bf16.gmra.mxu0 %v5042
      %v5056 = vpop.f32.mrf.mxu0
      %v5057 = vadd.f32 0.0, %v5056
      %v5058 = vpop.f32.mrf.mxu0
      %5059 = vdwg.mxu0
      %v5061 = vunpack.c.l.b16 %v4476
      %v5062 = vpack.c.b16 %v5061, %v5061
      %5063 = vrot.lane.b32.xlu0 %v5062, 120
      %v5064 = vpop.permute.xlu0 %5063
      %5065 = vrot.lane.b32.xlu0 %v4586, 88
      %v5066 = vpop.permute.xlu0 %5065
      %v5068 = vsel %vm1720, %v5064, 0
      %v5071 = vsel %vm1720, %v5066, 0
      %5073 = vmatpush.bf16.xpose.msra.mxu0 0
      %5074 = vmatpush.bf16.xpose.msra.mxu0 0
      %5075 = vmatpush.bf16.xpose.msra.mxu0 0
      %5076 = vmatpush.bf16.xpose.msra.mxu0 0
      %5077 = vmatpush.bf16.xpose.msra.mxu0 0
      %5078 = vmatpush.bf16.xpose.msra.mxu0 0
      %5079 = vmatpush.bf16.xpose.msra.mxu0 0
      %5080 = vmatpush.bf16.xpose.msra.mxu0 %v5071
      %5081 = vmatmul.bf16.gmra.mxu0 %v5068
      %v5082 = vpop.f32.mrf.mxu0
      %v5083 = vadd.f32 0.0, %v5082
      %v5084 = vpop.f32.mrf.mxu0
      %5085 = vdwg.mxu0
      %v5087 = vunpack.c.l.b16 %v4477
      %v5088 = vpack.c.b16 %v5087, %v5087
      %5089 = vrot.lane.b32.xlu0 %v5088, 120
      %v5090 = vpop.permute.xlu0 %5089
      %5091 = vrot.lane.b32.xlu0 %v4610, 88
      %v5092 = vpop.permute.xlu0 %5091
      %v5094 = vsel %vm1720, %v5090, 0
      %v5097 = vsel %vm1720, %v5092, 0
      %5099 = vmatpush.bf16.xpose.msra.mxu0 0
      %5100 = vmatpush.bf16.xpose.msra.mxu0 0
      %5101 = vmatpush.bf16.xpose.msra.mxu0 0
      %5102 = vmatpush.bf16.xpose.msra.mxu0 0
      %5103 = vmatpush.bf16.xpose.msra.mxu0 0
      %5104 = vmatpush.bf16.xpose.msra.mxu0 0
      %5105 = vmatpush.bf16.xpose.msra.mxu0 0
      %5106 = vmatpush.bf16.xpose.msra.mxu0 %v5097
      %5107 = vmatmul.bf16.gmra.mxu0 %v5094
      %v5108 = vpop.f32.mrf.mxu0
      %v5109 = vadd.f32 0.0, %v5108
      %v5110 = vpop.f32.mrf.mxu0
      %5111 = vdwg.mxu0
      %v5113 = vunpack.c.l.b16 %v4478
      %v5114 = vpack.c.b16 %v5113, %v5113
      %5115 = vrot.lane.b32.xlu0 %v5114, 120
      %v5116 = vpop.permute.xlu0 %5115
      %5117 = vrot.lane.b32.xlu0 %v4634, 88
      %v5118 = vpop.permute.xlu0 %5117
      %v5120 = vsel %vm1720, %v5116, 0
      %v5123 = vsel %vm1720, %v5118, 0
      %5125 = vmatpush.bf16.xpose.msra.mxu0 0
      %5126 = vmatpush.bf16.xpose.msra.mxu0 0
      %5127 = vmatpush.bf16.xpose.msra.mxu0 0
      %5128 = vmatpush.bf16.xpose.msra.mxu0 0
      %5129 = vmatpush.bf16.xpose.msra.mxu0 0
      %5130 = vmatpush.bf16.xpose.msra.mxu0 0
      %5131 = vmatpush.bf16.xpose.msra.mxu0 0
      %5132 = vmatpush.bf16.xpose.msra.mxu0 %v5123
      %5133 = vmatmul.bf16.gmra.mxu0 %v5120
      %v5134 = vpop.f32.mrf.mxu0
      %v5135 = vadd.f32 0.0, %v5134
      %v5136 = vpop.f32.mrf.mxu0
      %5137 = vdwg.mxu0
      %v5139 = vunpack.c.l.b16 %v4479
      %v5140 = vpack.c.b16 %v5139, %v5139
      %5141 = vrot.lane.b32.xlu0 %v5140, 120
      %v5142 = vpop.permute.xlu0 %5141
      %5143 = vrot.lane.b32.xlu0 %v4658, 88
      %v5144 = vpop.permute.xlu0 %5143
      %v5146 = vsel %vm1720, %v5142, 0
      %v5149 = vsel %vm1720, %v5144, 0
      %5151 = vmatpush.bf16.xpose.msra.mxu0 0
      %5152 = vmatpush.bf16.xpose.msra.mxu0 0
      %5153 = vmatpush.bf16.xpose.msra.mxu0 0
      %5154 = vmatpush.bf16.xpose.msra.mxu0 0
      %5155 = vmatpush.bf16.xpose.msra.mxu0 0
      %5156 = vmatpush.bf16.xpose.msra.mxu0 0
      %5157 = vmatpush.bf16.xpose.msra.mxu0 0
      %5158 = vmatpush.bf16.xpose.msra.mxu0 %v5149
      %5159 = vmatmul.bf16.gmra.mxu0 %v5146
      %v5160 = vpop.f32.mrf.mxu0
      %v5161 = vadd.f32 0.0, %v5160
      %v5162 = vpop.f32.mrf.mxu0
      %5163 = vdwg.mxu0
      %v5164 = vsel %vm1924, %v4979, -1e+30
      %v5165 = vsel %vm1925, %v5005, -1e+30
      %v5166 = vsel %vm1926, %v5031, -1e+30
      %v5167 = vsel %vm1927, %v5057, -1e+30
      %v5168 = vsel %vm1928, %v5083, -1e+30
      %v5169 = vsel %vm1929, %v5109, -1e+30
      %v5170 = vsel %vm1930, %v5135, -1e+30
      %v5171 = vsel %vm1931, %v5161, -1e+30
      %v5172 = vsel %vm1720, %v5164, -inf
      %5173 = vmax.xlane.f32.xlu0 %v5172
      %v5174 = vpop.xlane.xlu0 %5173
      %v5175 = vsel %vm1720, %v5165, -inf
      %5176 = vmax.xlane.f32.xlu0 %v5175
      %v5177 = vpop.xlane.xlu0 %5176
      %v5178 = vsel %vm1720, %v5166, -inf
      %5179 = vmax.xlane.f32.xlu0 %v5178
      %v5180 = vpop.xlane.xlu0 %5179
      %v5181 = vsel %vm1720, %v5167, -inf
      %5182 = vmax.xlane.f32.xlu0 %v5181
      %v5183 = vpop.xlane.xlu0 %5182
      %v5184 = vsel %vm1720, %v5168, -inf
      %5185 = vmax.xlane.f32.xlu0 %v5184
      %v5186 = vpop.xlane.xlu0 %5185
      %v5187 = vsel %vm1720, %v5169, -inf
      %5188 = vmax.xlane.f32.xlu0 %v5187
      %v5189 = vpop.xlane.xlu0 %5188
      %v5190 = vsel %vm1720, %v5170, -inf
      %5191 = vmax.xlane.f32.xlu0 %v5190
      %v5192 = vpop.xlane.xlu0 %5191
      %v5193 = vsel %vm1720, %v5171, -inf
      %5194 = vmax.xlane.f32.xlu0 %v5193
      %v5195 = vpop.xlane.xlu0 %5194
      %v5196 = vsub.f32 %v5164, %v5174
      %v5197 = vsub.f32 %v5165, %v5177
      %v5198 = vsub.f32 %v5166, %v5180
      %v5199 = vsub.f32 %v5167, %v5183
      %v5200 = vsub.f32 %v5168, %v5186
      %v5201 = vsub.f32 %v5169, %v5189
      %v5202 = vsub.f32 %v5170, %v5192
      %v5203 = vsub.f32 %v5171, %v5195
      %v5204 = vmul.f32 %v5196, 1.442695
      %v5205 = vpow.pop %v5204
      %v5206 = vmul.f32 %v5197, 1.442695
      %v5207 = vpow.pop %v5206
      %v5208 = vmul.f32 %v5198, 1.442695
      %v5209 = vpow.pop %v5208
      %v5210 = vmul.f32 %v5199, 1.442695
      %v5211 = vpow.pop %v5210
      %v5212 = vmul.f32 %v5200, 1.442695
      %v5213 = vpow.pop %v5212
      %v5214 = vmul.f32 %v5201, 1.442695
      %v5215 = vpow.pop %v5214
      %v5216 = vmul.f32 %v5202, 1.442695
      %v5217 = vpow.pop %v5216
      %v5218 = vmul.f32 %v5203, 1.442695
      %v5219 = vpow.pop %v5218
      %v5220 = vsel %vm1720, %v5205, 0.0
      %5221 = vadd.xlane.f32.xlu0 %v5220
      %v5222 = vpop.xlane.xlu0 %5221
      %v5223 = vsel %vm1720, %v5207, 0.0
      %5224 = vadd.xlane.f32.xlu0 %v5223
      %v5225 = vpop.xlane.xlu0 %5224
      %v5226 = vsel %vm1720, %v5209, 0.0
      %5227 = vadd.xlane.f32.xlu0 %v5226
      %v5228 = vpop.xlane.xlu0 %5227
      %v5229 = vsel %vm1720, %v5211, 0.0
      %5230 = vadd.xlane.f32.xlu0 %v5229
      %v5231 = vpop.xlane.xlu0 %5230
      %v5232 = vsel %vm1720, %v5213, 0.0
      %5233 = vadd.xlane.f32.xlu0 %v5232
      %v5234 = vpop.xlane.xlu0 %5233
      %v5235 = vsel %vm1720, %v5215, 0.0
      %5236 = vadd.xlane.f32.xlu0 %v5235
      %v5237 = vpop.xlane.xlu0 %5236
      %v5238 = vsel %vm1720, %v5217, 0.0
      %5239 = vadd.xlane.f32.xlu0 %v5238
      %v5240 = vpop.xlane.xlu0 %5239
      %v5241 = vsel %vm1720, %v5219, 0.0
      %5242 = vadd.xlane.f32.xlu0 %v5241
      %v5243 = vpop.xlane.xlu0 %5242
      %v5244 = vrcp.pop %v5222
      %v5245 = vrcp.pop %v5225
      %v5246 = vrcp.pop %v5228
      %v5247 = vrcp.pop %v5231
      %v5248 = vrcp.pop %v5234
      %v5249 = vrcp.pop %v5237
      %v5250 = vrcp.pop %v5240
      %v5251 = vrcp.pop %v5243
      %v5252 = vmul.f32 %v5205, %v5244
      %v5253 = vmul.f32 %v5207, %v5245
      %v5254 = vmul.f32 %v5209, %v5246
      %v5255 = vmul.f32 %v5211, %v5247
      %v5256 = vmul.f32 %v5213, %v5248
      %v5257 = vmul.f32 %v5215, %v5249
      %v5258 = vmul.f32 %v5217, %v5250
      %v5259 = vmul.f32 %v5219, %v5251
      %v5260 = vpack.c.bf16 %v5252, %v5252
      %v5261 = vpack.c.bf16 %v5253, %v5253
      %v5262 = vpack.c.bf16 %v5254, %v5254
      %v5263 = vpack.c.bf16 %v5255, %v5255
      %v5264 = vpack.c.bf16 %v5256, %v5256
      %v5265 = vpack.c.bf16 %v5257, %v5257
      %v5266 = vpack.c.bf16 %v5258, %v5258
      %v5267 = vpack.c.bf16 %v5259, %v5259
      %5268 = vrot.lane.b32.xlu0 %v4490, 56
      %v5269 = vpop.permute.xlu0 %5268
      %v5271 = vsel %vm1720, %v5260, 0
      %v5274 = vsel %vm2041, %v5269, 0
      %5276 = vmatpush.bf16.msra.mxu0 0
      %5277 = vmatpush.bf16.msra.mxu0 0
      %5278 = vmatpush.bf16.msra.mxu0 0
      %5279 = vmatpush.bf16.msra.mxu0 0
      %5280 = vmatpush.bf16.msra.mxu0 0
      %5281 = vmatpush.bf16.msra.mxu0 0
      %5282 = vmatpush.bf16.msra.mxu0 0
      %5283 = vmatpush.bf16.msra.mxu0 %v5274
      %5284 = vmatmul.bf16.gmra.mxu0 %v5271
      %v5285 = vpop.f32.mrf.mxu0
      %v5286 = vadd.f32 0.0, %v5285
      %v5287 = vpop.f32.mrf.mxu0
      %5288 = vdwg.mxu0
      %5289 = vrot.lane.b32.xlu0 %v4514, 56
      %v5290 = vpop.permute.xlu0 %5289
      %v5292 = vsel %vm1720, %v5261, 0
      %v5295 = vsel %vm2041, %v5290, 0
      %5297 = vmatpush.bf16.msra.mxu0 0
      %5298 = vmatpush.bf16.msra.mxu0 0
      %5299 = vmatpush.bf16.msra.mxu0 0
      %5300 = vmatpush.bf16.msra.mxu0 0
      %5301 = vmatpush.bf16.msra.mxu0 0
      %5302 = vmatpush.bf16.msra.mxu0 0
      %5303 = vmatpush.bf16.msra.mxu0 0
      %5304 = vmatpush.bf16.msra.mxu0 %v5295
      %5305 = vmatmul.bf16.gmra.mxu0 %v5292
      %v5306 = vpop.f32.mrf.mxu0
      %v5307 = vadd.f32 0.0, %v5306
      %v5308 = vpop.f32.mrf.mxu0
      %5309 = vdwg.mxu0
      %5310 = vrot.lane.b32.xlu0 %v4538, 56
      %v5311 = vpop.permute.xlu0 %5310
      %v5313 = vsel %vm1720, %v5262, 0
      %v5316 = vsel %vm2041, %v5311, 0
      %5318 = vmatpush.bf16.msra.mxu0 0
      %5319 = vmatpush.bf16.msra.mxu0 0
      %5320 = vmatpush.bf16.msra.mxu0 0
      %5321 = vmatpush.bf16.msra.mxu0 0
      %5322 = vmatpush.bf16.msra.mxu0 0
      %5323 = vmatpush.bf16.msra.mxu0 0
      %5324 = vmatpush.bf16.msra.mxu0 0
      %5325 = vmatpush.bf16.msra.mxu0 %v5316
      %5326 = vmatmul.bf16.gmra.mxu0 %v5313
      %v5327 = vpop.f32.mrf.mxu0
      %v5328 = vadd.f32 0.0, %v5327
      %v5329 = vpop.f32.mrf.mxu0
      %5330 = vdwg.mxu0
      %5331 = vrot.lane.b32.xlu0 %v4562, 56
      %v5332 = vpop.permute.xlu0 %5331
      %v5334 = vsel %vm1720, %v5263, 0
      %v5337 = vsel %vm2041, %v5332, 0
      %5339 = vmatpush.bf16.msra.mxu0 0
      %5340 = vmatpush.bf16.msra.mxu0 0
      %5341 = vmatpush.bf16.msra.mxu0 0
      %5342 = vmatpush.bf16.msra.mxu0 0
      %5343 = vmatpush.bf16.msra.mxu0 0
      %5344 = vmatpush.bf16.msra.mxu0 0
      %5345 = vmatpush.bf16.msra.mxu0 0
      %5346 = vmatpush.bf16.msra.mxu0 %v5337
      %5347 = vmatmul.bf16.gmra.mxu0 %v5334
      %v5348 = vpop.f32.mrf.mxu0
      %v5349 = vadd.f32 0.0, %v5348
      %v5350 = vpop.f32.mrf.mxu0
      %5351 = vdwg.mxu0
      %5352 = vrot.lane.b32.xlu0 %v4586, 56
      %v5353 = vpop.permute.xlu0 %5352
      %v5355 = vsel %vm1720, %v5264, 0
      %v5358 = vsel %vm2041, %v5353, 0
      %5360 = vmatpush.bf16.msra.mxu0 0
      %5361 = vmatpush.bf16.msra.mxu0 0
      %5362 = vmatpush.bf16.msra.mxu0 0
      %5363 = vmatpush.bf16.msra.mxu0 0
      %5364 = vmatpush.bf16.msra.mxu0 0
      %5365 = vmatpush.bf16.msra.mxu0 0
      %5366 = vmatpush.bf16.msra.mxu0 0
      %5367 = vmatpush.bf16.msra.mxu0 %v5358
      %5368 = vmatmul.bf16.gmra.mxu0 %v5355
      %v5369 = vpop.f32.mrf.mxu0
      %v5370 = vadd.f32 0.0, %v5369
      %v5371 = vpop.f32.mrf.mxu0
      %5372 = vdwg.mxu0
      %5373 = vrot.lane.b32.xlu0 %v4610, 56
      %v5374 = vpop.permute.xlu0 %5373
      %v5376 = vsel %vm1720, %v5265, 0
      %v5379 = vsel %vm2041, %v5374, 0
      %5381 = vmatpush.bf16.msra.mxu0 0
      %5382 = vmatpush.bf16.msra.mxu0 0
      %5383 = vmatpush.bf16.msra.mxu0 0
      %5384 = vmatpush.bf16.msra.mxu0 0
      %5385 = vmatpush.bf16.msra.mxu0 0
      %5386 = vmatpush.bf16.msra.mxu0 0
      %5387 = vmatpush.bf16.msra.mxu0 0
      %5388 = vmatpush.bf16.msra.mxu0 %v5379
      %5389 = vmatmul.bf16.gmra.mxu0 %v5376
      %v5390 = vpop.f32.mrf.mxu0
      %v5391 = vadd.f32 0.0, %v5390
      %v5392 = vpop.f32.mrf.mxu0
      %5393 = vdwg.mxu0
      %5394 = vrot.lane.b32.xlu0 %v4634, 56
      %v5395 = vpop.permute.xlu0 %5394
      %v5397 = vsel %vm1720, %v5266, 0
      %v5400 = vsel %vm2041, %v5395, 0
      %5402 = vmatpush.bf16.msra.mxu0 0
      %5403 = vmatpush.bf16.msra.mxu0 0
      %5404 = vmatpush.bf16.msra.mxu0 0
      %5405 = vmatpush.bf16.msra.mxu0 0
      %5406 = vmatpush.bf16.msra.mxu0 0
      %5407 = vmatpush.bf16.msra.mxu0 0
      %5408 = vmatpush.bf16.msra.mxu0 0
      %5409 = vmatpush.bf16.msra.mxu0 %v5400
      %5410 = vmatmul.bf16.gmra.mxu0 %v5397
      %v5411 = vpop.f32.mrf.mxu0
      %v5412 = vadd.f32 0.0, %v5411
      %v5413 = vpop.f32.mrf.mxu0
      %5414 = vdwg.mxu0
      %5415 = vrot.lane.b32.xlu0 %v4658, 56
      %v5416 = vpop.permute.xlu0 %5415
      %v5418 = vsel %vm1720, %v5267, 0
      %v5421 = vsel %vm2041, %v5416, 0
      %5423 = vmatpush.bf16.msra.mxu0 0
      %5424 = vmatpush.bf16.msra.mxu0 0
      %5425 = vmatpush.bf16.msra.mxu0 0
      %5426 = vmatpush.bf16.msra.mxu0 0
      %5427 = vmatpush.bf16.msra.mxu0 0
      %5428 = vmatpush.bf16.msra.mxu0 0
      %5429 = vmatpush.bf16.msra.mxu0 0
      %5430 = vmatpush.bf16.msra.mxu0 %v5421
      %5431 = vmatmul.bf16.gmra.mxu0 %v5418
      %v5432 = vpop.f32.mrf.mxu0
      %v5433 = vadd.f32 0.0, %v5432
      %v5434 = vpop.f32.mrf.mxu0
      %5435 = vdwg.mxu0
      %v5436 = vpack.c.bf16 %v5307, %v5286
      %v5437 = vpack.c.bf16 %v5349, %v5328
      %v5438 = vpack.c.bf16 %v5391, %v5370
      %v5439 = vpack.c.bf16 %v5433, %v5412
      %v5441 = vsel %vm1720, %v5436, 0
      %v5444 = vsel %vm1720, %v5437, 0
      %v5447 = vsel %vm1720, %v5438, 0
      %v5450 = vsel %vm1720, %v5439, 0
      %v5453 = vsel %vm2041, %v4469, 0
      %5455 = vmatpush.bf16.msra.mxu0 0
      %5456 = vmatpush.bf16.msra.mxu0 0
      %5457 = vmatpush.bf16.msra.mxu0 0
      %5458 = vmatpush.bf16.msra.mxu0 0
      %5459 = vmatpush.bf16.msra.mxu0 0
      %5460 = vmatpush.bf16.msra.mxu0 0
      %5461 = vmatpush.bf16.msra.mxu0 0
      %5462 = vmatpush.bf16.msra.mxu0 %v5453
      %5463 = vmatmul.bf16.gmra.mxu0 %v5441
      %v5464 = vpop.f32.mrf.mxu0
      %v5465 = vadd.f32 0.0, %v5464
      %v5466 = vpop.f32.mrf.mxu0
      %v5467 = vadd.f32 0.0, %v5466
      %5468 = vmatmul.bf16.gmra.mxu0 %v5444
      %v5469 = vpop.f32.mrf.mxu0
      %v5470 = vadd.f32 0.0, %v5469
      %v5471 = vpop.f32.mrf.mxu0
      %v5472 = vadd.f32 0.0, %v5471
      %5473 = vmatmul.bf16.gmra.mxu0 %v5447
      %v5474 = vpop.f32.mrf.mxu0
      %v5475 = vadd.f32 0.0, %v5474
      %v5476 = vpop.f32.mrf.mxu0
      %v5477 = vadd.f32 0.0, %v5476
      %5478 = vmatmul.bf16.gmra.mxu0 %v5450
      %v5479 = vpop.f32.mrf.mxu0
      %v5480 = vadd.f32 0.0, %v5479
      %v5481 = vpop.f32.mrf.mxu0
      %v5482 = vadd.f32 0.0, %v5481
      %5483 = vdwg.mxu0
      %v5485 = vsel %vm1720, %v4952, 0
      %v5488 = vsel %vm1720, %v4953, 0
      %v5491 = vsel %vm1720, %v4954, 0
      %v5494 = vsel %vm1720, %v4955, 0
      %v5497 = vsel %vm2041, %v4468, 0
      %5499 = vmatpush.bf16.msra.mxu0 0
      %5500 = vmatpush.bf16.msra.mxu0 0
      %5501 = vmatpush.bf16.msra.mxu0 0
      %5502 = vmatpush.bf16.msra.mxu0 0
      %5503 = vmatpush.bf16.msra.mxu0 0
      %5504 = vmatpush.bf16.msra.mxu0 0
      %5505 = vmatpush.bf16.msra.mxu0 0
      %5506 = vmatpush.bf16.msra.mxu0 %v5497
      %5507 = vmatmul.bf16.gmra.mxu0 %v5485
      %v5508 = vpop.f32.mrf.mxu0
      %v5509 = vadd.f32 %v5465, %v5508
      %v5510 = vpop.f32.mrf.mxu0
      %v5511 = vadd.f32 %v5467, %v5510
      %5512 = vmatmul.bf16.gmra.mxu0 %v5488
      %v5513 = vpop.f32.mrf.mxu0
      %v5514 = vadd.f32 %v5470, %v5513
      %v5515 = vpop.f32.mrf.mxu0
      %v5516 = vadd.f32 %v5472, %v5515
      %5517 = vmatmul.bf16.gmra.mxu0 %v5491
      %v5518 = vpop.f32.mrf.mxu0
      %v5519 = vadd.f32 %v5475, %v5518
      %v5520 = vpop.f32.mrf.mxu0
      %v5521 = vadd.f32 %v5477, %v5520
      %5522 = vmatmul.bf16.gmra.mxu0 %v5494
      %v5523 = vpop.f32.mrf.mxu0
      %v5524 = vadd.f32 %v5480, %v5523
      %v5525 = vpop.f32.mrf.mxu0
      %v5526 = vadd.f32 %v5482, %v5525
      %5527 = vdwg.mxu0
      %5528 = vrot.lane.b32.xlu0 %v4958, 112
      %v5529 = vpop.permute.xlu0 %5528
      %5530 = vrot.lane.b32.xlu0 %v4490, 80
      %v5531 = vpop.permute.xlu0 %5530
      %v5533 = vsel %vm1720, %v5529, 0
      %v5536 = vsel %vm1720, %v5531, 0
      %5538 = vmatpush.bf16.xpose.msra.mxu0 0
      %5539 = vmatpush.bf16.xpose.msra.mxu0 0
      %5540 = vmatpush.bf16.xpose.msra.mxu0 0
      %5541 = vmatpush.bf16.xpose.msra.mxu0 0
      %5542 = vmatpush.bf16.xpose.msra.mxu0 0
      %5543 = vmatpush.bf16.xpose.msra.mxu0 0
      %5544 = vmatpush.bf16.xpose.msra.mxu0 0
      %5545 = vmatpush.bf16.xpose.msra.mxu0 %v5536
      %5546 = vmatmul.bf16.gmra.mxu0 %v5533
      %v5547 = vpop.f32.mrf.mxu0
      %v5548 = vadd.f32 0.0, %v5547
      %v5549 = vpop.f32.mrf.mxu0
      %5550 = vdwg.mxu0
      %5551 = vrot.lane.b32.xlu0 %v4984, 112
      %v5552 = vpop.permute.xlu0 %5551
      %5553 = vrot.lane.b32.xlu0 %v4514, 80
      %v5554 = vpop.permute.xlu0 %5553
      %v5556 = vsel %vm1720, %v5552, 0
      %v5559 = vsel %vm1720, %v5554, 0
      %5561 = vmatpush.bf16.xpose.msra.mxu0 0
      %5562 = vmatpush.bf16.xpose.msra.mxu0 0
      %5563 = vmatpush.bf16.xpose.msra.mxu0 0
      %5564 = vmatpush.bf16.xpose.msra.mxu0 0
      %5565 = vmatpush.bf16.xpose.msra.mxu0 0
      %5566 = vmatpush.bf16.xpose.msra.mxu0 0
      %5567 = vmatpush.bf16.xpose.msra.mxu0 0
      %5568 = vmatpush.bf16.xpose.msra.mxu0 %v5559
      %5569 = vmatmul.bf16.gmra.mxu0 %v5556
      %v5570 = vpop.f32.mrf.mxu0
      %v5571 = vadd.f32 0.0, %v5570
      %v5572 = vpop.f32.mrf.mxu0
      %5573 = vdwg.mxu0
      %5574 = vrot.lane.b32.xlu0 %v5010, 112
      %v5575 = vpop.permute.xlu0 %5574
      %5576 = vrot.lane.b32.xlu0 %v4538, 80
      %v5577 = vpop.permute.xlu0 %5576
      %v5579 = vsel %vm1720, %v5575, 0
      %v5582 = vsel %vm1720, %v5577, 0
      %5584 = vmatpush.bf16.xpose.msra.mxu0 0
      %5585 = vmatpush.bf16.xpose.msra.mxu0 0
      %5586 = vmatpush.bf16.xpose.msra.mxu0 0
      %5587 = vmatpush.bf16.xpose.msra.mxu0 0
      %5588 = vmatpush.bf16.xpose.msra.mxu0 0
      %5589 = vmatpush.bf16.xpose.msra.mxu0 0
      %5590 = vmatpush.bf16.xpose.msra.mxu0 0
      %5591 = vmatpush.bf16.xpose.msra.mxu0 %v5582
      %5592 = vmatmul.bf16.gmra.mxu0 %v5579
      %v5593 = vpop.f32.mrf.mxu0
      %v5594 = vadd.f32 0.0, %v5593
      %v5595 = vpop.f32.mrf.mxu0
      %5596 = vdwg.mxu0
      %5597 = vrot.lane.b32.xlu0 %v5036, 112
      %v5598 = vpop.permute.xlu0 %5597
      %5599 = vrot.lane.b32.xlu0 %v4562, 80
      %v5600 = vpop.permute.xlu0 %5599
      %v5602 = vsel %vm1720, %v5598, 0
      %v5605 = vsel %vm1720, %v5600, 0
      %5607 = vmatpush.bf16.xpose.msra.mxu0 0
      %5608 = vmatpush.bf16.xpose.msra.mxu0 0
      %5609 = vmatpush.bf16.xpose.msra.mxu0 0
      %5610 = vmatpush.bf16.xpose.msra.mxu0 0
      %5611 = vmatpush.bf16.xpose.msra.mxu0 0
      %5612 = vmatpush.bf16.xpose.msra.mxu0 0
      %5613 = vmatpush.bf16.xpose.msra.mxu0 0
      %5614 = vmatpush.bf16.xpose.msra.mxu0 %v5605
      %5615 = vmatmul.bf16.gmra.mxu0 %v5602
      %v5616 = vpop.f32.mrf.mxu0
      %v5617 = vadd.f32 0.0, %v5616
      %v5618 = vpop.f32.mrf.mxu0
      %5619 = vdwg.mxu0
      %5620 = vrot.lane.b32.xlu0 %v5062, 112
      %v5621 = vpop.permute.xlu0 %5620
      %5622 = vrot.lane.b32.xlu0 %v4586, 80
      %v5623 = vpop.permute.xlu0 %5622
      %v5625 = vsel %vm1720, %v5621, 0
      %v5628 = vsel %vm1720, %v5623, 0
      %5630 = vmatpush.bf16.xpose.msra.mxu0 0
      %5631 = vmatpush.bf16.xpose.msra.mxu0 0
      %5632 = vmatpush.bf16.xpose.msra.mxu0 0
      %5633 = vmatpush.bf16.xpose.msra.mxu0 0
      %5634 = vmatpush.bf16.xpose.msra.mxu0 0
      %5635 = vmatpush.bf16.xpose.msra.mxu0 0
      %5636 = vmatpush.bf16.xpose.msra.mxu0 0
      %5637 = vmatpush.bf16.xpose.msra.mxu0 %v5628
      %5638 = vmatmul.bf16.gmra.mxu0 %v5625
      %v5639 = vpop.f32.mrf.mxu0
      %v5640 = vadd.f32 0.0, %v5639
      %v5641 = vpop.f32.mrf.mxu0
      %5642 = vdwg.mxu0
      %5643 = vrot.lane.b32.xlu0 %v5088, 112
      %v5644 = vpop.permute.xlu0 %5643
      %5645 = vrot.lane.b32.xlu0 %v4610, 80
      %v5646 = vpop.permute.xlu0 %5645
      %v5648 = vsel %vm1720, %v5644, 0
      %v5651 = vsel %vm1720, %v5646, 0
      %5653 = vmatpush.bf16.xpose.msra.mxu0 0
      %5654 = vmatpush.bf16.xpose.msra.mxu0 0
      %5655 = vmatpush.bf16.xpose.msra.mxu0 0
      %5656 = vmatpush.bf16.xpose.msra.mxu0 0
      %5657 = vmatpush.bf16.xpose.msra.mxu0 0
      %5658 = vmatpush.bf16.xpose.msra.mxu0 0
      %5659 = vmatpush.bf16.xpose.msra.mxu0 0
      %5660 = vmatpush.bf16.xpose.msra.mxu0 %v5651
      %5661 = vmatmul.bf16.gmra.mxu0 %v5648
      %v5662 = vpop.f32.mrf.mxu0
      %v5663 = vadd.f32 0.0, %v5662
      %v5664 = vpop.f32.mrf.mxu0
      %5665 = vdwg.mxu0
      %5666 = vrot.lane.b32.xlu0 %v5114, 112
      %v5667 = vpop.permute.xlu0 %5666
      %5668 = vrot.lane.b32.xlu0 %v4634, 80
      %v5669 = vpop.permute.xlu0 %5668
      %v5671 = vsel %vm1720, %v5667, 0
      %v5674 = vsel %vm1720, %v5669, 0
      %5676 = vmatpush.bf16.xpose.msra.mxu0 0
      %5677 = vmatpush.bf16.xpose.msra.mxu0 0
      %5678 = vmatpush.bf16.xpose.msra.mxu0 0
      %5679 = vmatpush.bf16.xpose.msra.mxu0 0
      %5680 = vmatpush.bf16.xpose.msra.mxu0 0
      %5681 = vmatpush.bf16.xpose.msra.mxu0 0
      %5682 = vmatpush.bf16.xpose.msra.mxu0 0
      %5683 = vmatpush.bf16.xpose.msra.mxu0 %v5674
      %5684 = vmatmul.bf16.gmra.mxu0 %v5671
      %v5685 = vpop.f32.mrf.mxu0
      %v5686 = vadd.f32 0.0, %v5685
      %v5687 = vpop.f32.mrf.mxu0
      %5688 = vdwg.mxu0
      %5689 = vrot.lane.b32.xlu0 %v5140, 112
      %v5690 = vpop.permute.xlu0 %5689
      %5691 = vrot.lane.b32.xlu0 %v4658, 80
      %v5692 = vpop.permute.xlu0 %5691
      %v5694 = vsel %vm1720, %v5690, 0
      %v5697 = vsel %vm1720, %v5692, 0
      %5699 = vmatpush.bf16.xpose.msra.mxu0 0
      %5700 = vmatpush.bf16.xpose.msra.mxu0 0
      %5701 = vmatpush.bf16.xpose.msra.mxu0 0
      %5702 = vmatpush.bf16.xpose.msra.mxu0 0
      %5703 = vmatpush.bf16.xpose.msra.mxu0 0
      %5704 = vmatpush.bf16.xpose.msra.mxu0 0
      %5705 = vmatpush.bf16.xpose.msra.mxu0 0
      %5706 = vmatpush.bf16.xpose.msra.mxu0 %v5697
      %5707 = vmatmul.bf16.gmra.mxu0 %v5694
      %v5708 = vpop.f32.mrf.mxu0
      %v5709 = vadd.f32 0.0, %v5708
      %v5710 = vpop.f32.mrf.mxu0
      %5711 = vdwg.mxu0
      %v5712 = vsel %vm1924, %v5548, -1e+30
      %v5713 = vsel %vm1925, %v5571, -1e+30
      %v5714 = vsel %vm1926, %v5594, -1e+30
      %v5715 = vsel %vm1927, %v5617, -1e+30
      %v5716 = vsel %vm1928, %v5640, -1e+30
      %v5717 = vsel %vm1929, %v5663, -1e+30
      %v5718 = vsel %vm1930, %v5686, -1e+30
      %v5719 = vsel %vm1931, %v5709, -1e+30
      %v5720 = vsel %vm1720, %v5712, -inf
      %5721 = vmax.xlane.f32.xlu0 %v5720
      %v5722 = vpop.xlane.xlu0 %5721
      %v5723 = vsel %vm1720, %v5713, -inf
      %5724 = vmax.xlane.f32.xlu0 %v5723
      %v5725 = vpop.xlane.xlu0 %5724
      %v5726 = vsel %vm1720, %v5714, -inf
      %5727 = vmax.xlane.f32.xlu0 %v5726
      %v5728 = vpop.xlane.xlu0 %5727
      %v5729 = vsel %vm1720, %v5715, -inf
      %5730 = vmax.xlane.f32.xlu0 %v5729
      %v5731 = vpop.xlane.xlu0 %5730
      %v5732 = vsel %vm1720, %v5716, -inf
      %5733 = vmax.xlane.f32.xlu0 %v5732
      %v5734 = vpop.xlane.xlu0 %5733
      %v5735 = vsel %vm1720, %v5717, -inf
      %5736 = vmax.xlane.f32.xlu0 %v5735
      %v5737 = vpop.xlane.xlu0 %5736
      %v5738 = vsel %vm1720, %v5718, -inf
      %5739 = vmax.xlane.f32.xlu0 %v5738
      %v5740 = vpop.xlane.xlu0 %5739
      %v5741 = vsel %vm1720, %v5719, -inf
      %5742 = vmax.xlane.f32.xlu0 %v5741
      %v5743 = vpop.xlane.xlu0 %5742
      %v5744 = vsub.f32 %v5712, %v5722
      %v5745 = vsub.f32 %v5713, %v5725
      %v5746 = vsub.f32 %v5714, %v5728
      %v5747 = vsub.f32 %v5715, %v5731
      %v5748 = vsub.f32 %v5716, %v5734
      %v5749 = vsub.f32 %v5717, %v5737
      %v5750 = vsub.f32 %v5718, %v5740
      %v5751 = vsub.f32 %v5719, %v5743
      %v5752 = vmul.f32 %v5744, 1.442695
      %v5753 = vpow.pop %v5752
      %v5754 = vmul.f32 %v5745, 1.442695
      %v5755 = vpow.pop %v5754
      %v5756 = vmul.f32 %v5746, 1.442695
      %v5757 = vpow.pop %v5756
      %v5758 = vmul.f32 %v5747, 1.442695
      %v5759 = vpow.pop %v5758
      %v5760 = vmul.f32 %v5748, 1.442695
      %v5761 = vpow.pop %v5760
      %v5762 = vmul.f32 %v5749, 1.442695
      %v5763 = vpow.pop %v5762
      %v5764 = vmul.f32 %v5750, 1.442695
      %v5765 = vpow.pop %v5764
      %v5766 = vmul.f32 %v5751, 1.442695
      %v5767 = vpow.pop %v5766
      %v5768 = vsel %vm1720, %v5753, 0.0
      %5769 = vadd.xlane.f32.xlu0 %v5768
      %v5770 = vpop.xlane.xlu0 %5769
      %v5771 = vsel %vm1720, %v5755, 0.0
      %5772 = vadd.xlane.f32.xlu0 %v5771
      %v5773 = vpop.xlane.xlu0 %5772
      %v5774 = vsel %vm1720, %v5757, 0.0
      %5775 = vadd.xlane.f32.xlu0 %v5774
      %v5776 = vpop.xlane.xlu0 %5775
      %v5777 = vsel %vm1720, %v5759, 0.0
      %5778 = vadd.xlane.f32.xlu0 %v5777
      %v5779 = vpop.xlane.xlu0 %5778
      %v5780 = vsel %vm1720, %v5761, 0.0
      %5781 = vadd.xlane.f32.xlu0 %v5780
      %v5782 = vpop.xlane.xlu0 %5781
      %v5783 = vsel %vm1720, %v5763, 0.0
      %5784 = vadd.xlane.f32.xlu0 %v5783
      %v5785 = vpop.xlane.xlu0 %5784
      %v5786 = vsel %vm1720, %v5765, 0.0
      %5787 = vadd.xlane.f32.xlu0 %v5786
      %v5788 = vpop.xlane.xlu0 %5787
      %v5789 = vsel %vm1720, %v5767, 0.0
      %5790 = vadd.xlane.f32.xlu0 %v5789
      %v5791 = vpop.xlane.xlu0 %5790
      %v5792 = vrcp.pop %v5770
      %v5793 = vrcp.pop %v5773
      %v5794 = vrcp.pop %v5776
      %v5795 = vrcp.pop %v5779
      %v5796 = vrcp.pop %v5782
      %v5797 = vrcp.pop %v5785
      %v5798 = vrcp.pop %v5788
      %v5799 = vrcp.pop %v5791
      %v5800 = vmul.f32 %v5753, %v5792
      %v5801 = vmul.f32 %v5755, %v5793
      %v5802 = vmul.f32 %v5757, %v5794
      %v5803 = vmul.f32 %v5759, %v5795
      %v5804 = vmul.f32 %v5761, %v5796
      %v5805 = vmul.f32 %v5763, %v5797
      %v5806 = vmul.f32 %v5765, %v5798
      %v5807 = vmul.f32 %v5767, %v5799
      %v5808 = vpack.c.bf16 %v5800, %v5800
      %v5809 = vpack.c.bf16 %v5801, %v5801
      %v5810 = vpack.c.bf16 %v5802, %v5802
      %v5811 = vpack.c.bf16 %v5803, %v5803
      %v5812 = vpack.c.bf16 %v5804, %v5804
      %v5813 = vpack.c.bf16 %v5805, %v5805
      %v5814 = vpack.c.bf16 %v5806, %v5806
      %v5815 = vpack.c.bf16 %v5807, %v5807
      %5816 = vrot.lane.b32.xlu0 %v4490, 48
      %v5817 = vpop.permute.xlu0 %5816
      %v5819 = vsel %vm1720, %v5808, 0
      %v5822 = vsel %vm2041, %v5817, 0
      %5824 = vmatpush.bf16.msra.mxu0 0
      %5825 = vmatpush.bf16.msra.mxu0 0
      %5826 = vmatpush.bf16.msra.mxu0 0
      %5827 = vmatpush.bf16.msra.mxu0 0
      %5828 = vmatpush.bf16.msra.mxu0 0
      %5829 = vmatpush.bf16.msra.mxu0 0
      %5830 = vmatpush.bf16.msra.mxu0 0
      %5831 = vmatpush.bf16.msra.mxu0 %v5822
      %5832 = vmatmul.bf16.gmra.mxu0 %v5819
      %v5833 = vpop.f32.mrf.mxu0
      %v5834 = vadd.f32 0.0, %v5833
      %v5835 = vpop.f32.mrf.mxu0
      %5836 = vdwg.mxu0
      %5837 = vrot.lane.b32.xlu0 %v4514, 48
      %v5838 = vpop.permute.xlu0 %5837
      %v5840 = vsel %vm1720, %v5809, 0
      %v5843 = vsel %vm2041, %v5838, 0
      %5845 = vmatpush.bf16.msra.mxu0 0
      %5846 = vmatpush.bf16.msra.mxu0 0
      %5847 = vmatpush.bf16.msra.mxu0 0
      %5848 = vmatpush.bf16.msra.mxu0 0
      %5849 = vmatpush.bf16.msra.mxu0 0
      %5850 = vmatpush.bf16.msra.mxu0 0
      %5851 = vmatpush.bf16.msra.mxu0 0
      %5852 = vmatpush.bf16.msra.mxu0 %v5843
      %5853 = vmatmul.bf16.gmra.mxu0 %v5840
      %v5854 = vpop.f32.mrf.mxu0
      %v5855 = vadd.f32 0.0, %v5854
      %v5856 = vpop.f32.mrf.mxu0
      %5857 = vdwg.mxu0
      %5858 = vrot.lane.b32.xlu0 %v4538, 48
      %v5859 = vpop.permute.xlu0 %5858
      %v5861 = vsel %vm1720, %v5810, 0
      %v5864 = vsel %vm2041, %v5859, 0
      %5866 = vmatpush.bf16.msra.mxu0 0
      %5867 = vmatpush.bf16.msra.mxu0 0
      %5868 = vmatpush.bf16.msra.mxu0 0
      %5869 = vmatpush.bf16.msra.mxu0 0
      %5870 = vmatpush.bf16.msra.mxu0 0
      %5871 = vmatpush.bf16.msra.mxu0 0
      %5872 = vmatpush.bf16.msra.mxu0 0
      %5873 = vmatpush.bf16.msra.mxu0 %v5864
      %5874 = vmatmul.bf16.gmra.mxu0 %v5861
      %v5875 = vpop.f32.mrf.mxu0
      %v5876 = vadd.f32 0.0, %v5875
      %v5877 = vpop.f32.mrf.mxu0
      %5878 = vdwg.mxu0
      %5879 = vrot.lane.b32.xlu0 %v4562, 48
      %v5880 = vpop.permute.xlu0 %5879
      %v5882 = vsel %vm1720, %v5811, 0
      %v5885 = vsel %vm2041, %v5880, 0
      %5887 = vmatpush.bf16.msra.mxu0 0
      %5888 = vmatpush.bf16.msra.mxu0 0
      %5889 = vmatpush.bf16.msra.mxu0 0
      %5890 = vmatpush.bf16.msra.mxu0 0
      %5891 = vmatpush.bf16.msra.mxu0 0
      %5892 = vmatpush.bf16.msra.mxu0 0
      %5893 = vmatpush.bf16.msra.mxu0 0
      %5894 = vmatpush.bf16.msra.mxu0 %v5885
      %5895 = vmatmul.bf16.gmra.mxu0 %v5882
      %v5896 = vpop.f32.mrf.mxu0
      %v5897 = vadd.f32 0.0, %v5896
      %v5898 = vpop.f32.mrf.mxu0
      %5899 = vdwg.mxu0
      %5900 = vrot.lane.b32.xlu0 %v4586, 48
      %v5901 = vpop.permute.xlu0 %5900
      %v5903 = vsel %vm1720, %v5812, 0
      %v5906 = vsel %vm2041, %v5901, 0
      %5908 = vmatpush.bf16.msra.mxu0 0
      %5909 = vmatpush.bf16.msra.mxu0 0
      %5910 = vmatpush.bf16.msra.mxu0 0
      %5911 = vmatpush.bf16.msra.mxu0 0
      %5912 = vmatpush.bf16.msra.mxu0 0
      %5913 = vmatpush.bf16.msra.mxu0 0
      %5914 = vmatpush.bf16.msra.mxu0 0
      %5915 = vmatpush.bf16.msra.mxu0 %v5906
      %5916 = vmatmul.bf16.gmra.mxu0 %v5903
      %v5917 = vpop.f32.mrf.mxu0
      %v5918 = vadd.f32 0.0, %v5917
      %v5919 = vpop.f32.mrf.mxu0
      %5920 = vdwg.mxu0
      %5921 = vrot.lane.b32.xlu0 %v4610, 48
      %v5922 = vpop.permute.xlu0 %5921
      %v5924 = vsel %vm1720, %v5813, 0
      %v5927 = vsel %vm2041, %v5922, 0
      %5929 = vmatpush.bf16.msra.mxu0 0
      %5930 = vmatpush.bf16.msra.mxu0 0
      %5931 = vmatpush.bf16.msra.mxu0 0
      %5932 = vmatpush.bf16.msra.mxu0 0
      %5933 = vmatpush.bf16.msra.mxu0 0
      %5934 = vmatpush.bf16.msra.mxu0 0
      %5935 = vmatpush.bf16.msra.mxu0 0
      %5936 = vmatpush.bf16.msra.mxu0 %v5927
      %5937 = vmatmul.bf16.gmra.mxu0 %v5924
      %v5938 = vpop.f32.mrf.mxu0
      %v5939 = vadd.f32 0.0, %v5938
      %v5940 = vpop.f32.mrf.mxu0
      %5941 = vdwg.mxu0
      %5942 = vrot.lane.b32.xlu0 %v4634, 48
      %v5943 = vpop.permute.xlu0 %5942
      %v5945 = vsel %vm1720, %v5814, 0
      %v5948 = vsel %vm2041, %v5943, 0
      %5950 = vmatpush.bf16.msra.mxu0 0
      %5951 = vmatpush.bf16.msra.mxu0 0
      %5952 = vmatpush.bf16.msra.mxu0 0
      %5953 = vmatpush.bf16.msra.mxu0 0
      %5954 = vmatpush.bf16.msra.mxu0 0
      %5955 = vmatpush.bf16.msra.mxu0 0
      %5956 = vmatpush.bf16.msra.mxu0 0
      %5957 = vmatpush.bf16.msra.mxu0 %v5948
      %5958 = vmatmul.bf16.gmra.mxu0 %v5945
      %v5959 = vpop.f32.mrf.mxu0
      %v5960 = vadd.f32 0.0, %v5959
      %v5961 = vpop.f32.mrf.mxu0
      %5962 = vdwg.mxu0
      %5963 = vrot.lane.b32.xlu0 %v4658, 48
      %v5964 = vpop.permute.xlu0 %5963
      %v5966 = vsel %vm1720, %v5815, 0
      %v5969 = vsel %vm2041, %v5964, 0
      %5971 = vmatpush.bf16.msra.mxu0 0
      %5972 = vmatpush.bf16.msra.mxu0 0
      %5973 = vmatpush.bf16.msra.mxu0 0
      %5974 = vmatpush.bf16.msra.mxu0 0
      %5975 = vmatpush.bf16.msra.mxu0 0
      %5976 = vmatpush.bf16.msra.mxu0 0
      %5977 = vmatpush.bf16.msra.mxu0 0
      %5978 = vmatpush.bf16.msra.mxu0 %v5969
      %5979 = vmatmul.bf16.gmra.mxu0 %v5966
      %v5980 = vpop.f32.mrf.mxu0
      %v5981 = vadd.f32 0.0, %v5980
      %v5982 = vpop.f32.mrf.mxu0
      %5983 = vdwg.mxu0
      %v5984 = vpack.c.bf16 %v5855, %v5834
      %v5985 = vpack.c.bf16 %v5897, %v5876
      %v5986 = vpack.c.bf16 %v5939, %v5918
      %v5987 = vpack.c.bf16 %v5981, %v5960
      %v5989 = vsel %vm1720, %v5984, 0
      %v5992 = vsel %vm1720, %v5985, 0
      %v5995 = vsel %vm1720, %v5986, 0
      %v5998 = vsel %vm1720, %v5987, 0
      %v6001 = vsel %vm2041, %v4470, 0
      %6003 = vmatpush.bf16.msra.mxu0 0
      %6004 = vmatpush.bf16.msra.mxu0 0
      %6005 = vmatpush.bf16.msra.mxu0 0
      %6006 = vmatpush.bf16.msra.mxu0 0
      %6007 = vmatpush.bf16.msra.mxu0 0
      %6008 = vmatpush.bf16.msra.mxu0 0
      %6009 = vmatpush.bf16.msra.mxu0 0
      %6010 = vmatpush.bf16.msra.mxu0 %v6001
      %6011 = vmatmul.bf16.gmra.mxu0 %v5989
      %v6012 = vpop.f32.mrf.mxu0
      %v6013 = vadd.f32 0.0, %v6012
      %v6014 = vpop.f32.mrf.mxu0
      %v6015 = vadd.f32 0.0, %v6014
      %6016 = vmatmul.bf16.gmra.mxu0 %v5992
      %v6017 = vpop.f32.mrf.mxu0
      %v6018 = vadd.f32 0.0, %v6017
      %v6019 = vpop.f32.mrf.mxu0
      %v6020 = vadd.f32 0.0, %v6019
      %6021 = vmatmul.bf16.gmra.mxu0 %v5995
      %v6022 = vpop.f32.mrf.mxu0
      %v6023 = vadd.f32 0.0, %v6022
      %v6024 = vpop.f32.mrf.mxu0
      %v6025 = vadd.f32 0.0, %v6024
      %6026 = vmatmul.bf16.gmra.mxu0 %v5998
      %v6027 = vpop.f32.mrf.mxu0
      %v6028 = vadd.f32 0.0, %v6027
      %v6029 = vpop.f32.mrf.mxu0
      %v6030 = vadd.f32 0.0, %v6029
      %6031 = vdwg.mxu0
      %v6032 = vadd.f32 %v5509, %v6013
      %v6033 = vadd.f32 %v5511, %v6015
      %v6034 = vadd.f32 %v5514, %v6018
      %v6035 = vadd.f32 %v5516, %v6020
      %v6036 = vadd.f32 %v5519, %v6023
      %v6037 = vadd.f32 %v5521, %v6025
      %v6038 = vadd.f32 %v5524, %v6028
      %v6039 = vadd.f32 %v5526, %v6030
      %6040 = vrot.lane.b32.xlu0 %v4958, 104
      %v6041 = vpop.permute.xlu0 %6040
      %6042 = vrot.lane.b32.xlu0 %v4490, 72
      %v6043 = vpop.permute.xlu0 %6042
      %v6045 = vsel %vm1720, %v6041, 0
      %v6048 = vsel %vm1720, %v6043, 0
      %6050 = vmatpush.bf16.xpose.msra.mxu0 0
      %6051 = vmatpush.bf16.xpose.msra.mxu0 0
      %6052 = vmatpush.bf16.xpose.msra.mxu0 0
      %6053 = vmatpush.bf16.xpose.msra.mxu0 0
      %6054 = vmatpush.bf16.xpose.msra.mxu0 0
      %6055 = vmatpush.bf16.xpose.msra.mxu0 0
      %6056 = vmatpush.bf16.xpose.msra.mxu0 0
      %6057 = vmatpush.bf16.xpose.msra.mxu0 %v6048
      %6058 = vmatmul.bf16.gmra.mxu0 %v6045
      %v6059 = vpop.f32.mrf.mxu0
      %v6060 = vadd.f32 0.0, %v6059
      %v6061 = vpop.f32.mrf.mxu0
      %6062 = vdwg.mxu0
      %6063 = vrot.lane.b32.xlu0 %v4984, 104
      %v6064 = vpop.permute.xlu0 %6063
      %6065 = vrot.lane.b32.xlu0 %v4514, 72
      %v6066 = vpop.permute.xlu0 %6065
      %v6068 = vsel %vm1720, %v6064, 0
      %v6071 = vsel %vm1720, %v6066, 0
      %6073 = vmatpush.bf16.xpose.msra.mxu0 0
      %6074 = vmatpush.bf16.xpose.msra.mxu0 0
      %6075 = vmatpush.bf16.xpose.msra.mxu0 0
      %6076 = vmatpush.bf16.xpose.msra.mxu0 0
      %6077 = vmatpush.bf16.xpose.msra.mxu0 0
      %6078 = vmatpush.bf16.xpose.msra.mxu0 0
      %6079 = vmatpush.bf16.xpose.msra.mxu0 0
      %6080 = vmatpush.bf16.xpose.msra.mxu0 %v6071
      %6081 = vmatmul.bf16.gmra.mxu0 %v6068
      %v6082 = vpop.f32.mrf.mxu0
      %v6083 = vadd.f32 0.0, %v6082
      %v6084 = vpop.f32.mrf.mxu0
      %6085 = vdwg.mxu0
      %6086 = vrot.lane.b32.xlu0 %v5010, 104
      %v6087 = vpop.permute.xlu0 %6086
      %6088 = vrot.lane.b32.xlu0 %v4538, 72
      %v6089 = vpop.permute.xlu0 %6088
      %v6091 = vsel %vm1720, %v6087, 0
      %v6094 = vsel %vm1720, %v6089, 0
      %6096 = vmatpush.bf16.xpose.msra.mxu0 0
      %6097 = vmatpush.bf16.xpose.msra.mxu0 0
      %6098 = vmatpush.bf16.xpose.msra.mxu0 0
      %6099 = vmatpush.bf16.xpose.msra.mxu0 0
      %6100 = vmatpush.bf16.xpose.msra.mxu0 0
      %6101 = vmatpush.bf16.xpose.msra.mxu0 0
      %6102 = vmatpush.bf16.xpose.msra.mxu0 0
      %6103 = vmatpush.bf16.xpose.msra.mxu0 %v6094
      %6104 = vmatmul.bf16.gmra.mxu0 %v6091
      %v6105 = vpop.f32.mrf.mxu0
      %v6106 = vadd.f32 0.0, %v6105
      %v6107 = vpop.f32.mrf.mxu0
      %6108 = vdwg.mxu0
      %6109 = vrot.lane.b32.xlu0 %v5036, 104
      %v6110 = vpop.permute.xlu0 %6109
      %6111 = vrot.lane.b32.xlu0 %v4562, 72
      %v6112 = vpop.permute.xlu0 %6111
      %v6114 = vsel %vm1720, %v6110, 0
      %v6117 = vsel %vm1720, %v6112, 0
      %6119 = vmatpush.bf16.xpose.msra.mxu0 0
      %6120 = vmatpush.bf16.xpose.msra.mxu0 0
      %6121 = vmatpush.bf16.xpose.msra.mxu0 0
      %6122 = vmatpush.bf16.xpose.msra.mxu0 0
      %6123 = vmatpush.bf16.xpose.msra.mxu0 0
      %6124 = vmatpush.bf16.xpose.msra.mxu0 0
      %6125 = vmatpush.bf16.xpose.msra.mxu0 0
      %6126 = vmatpush.bf16.xpose.msra.mxu0 %v6117
      %6127 = vmatmul.bf16.gmra.mxu0 %v6114
      %v6128 = vpop.f32.mrf.mxu0
      %v6129 = vadd.f32 0.0, %v6128
      %v6130 = vpop.f32.mrf.mxu0
      %6131 = vdwg.mxu0
      %6132 = vrot.lane.b32.xlu0 %v5062, 104
      %v6133 = vpop.permute.xlu0 %6132
      %6134 = vrot.lane.b32.xlu0 %v4586, 72
      %v6135 = vpop.permute.xlu0 %6134
      %v6137 = vsel %vm1720, %v6133, 0
      %v6140 = vsel %vm1720, %v6135, 0
      %6142 = vmatpush.bf16.xpose.msra.mxu0 0
      %6143 = vmatpush.bf16.xpose.msra.mxu0 0
      %6144 = vmatpush.bf16.xpose.msra.mxu0 0
      %6145 = vmatpush.bf16.xpose.msra.mxu0 0
      %6146 = vmatpush.bf16.xpose.msra.mxu0 0
      %6147 = vmatpush.bf16.xpose.msra.mxu0 0
      %6148 = vmatpush.bf16.xpose.msra.mxu0 0
      %6149 = vmatpush.bf16.xpose.msra.mxu0 %v6140
      %6150 = vmatmul.bf16.gmra.mxu0 %v6137
      %v6151 = vpop.f32.mrf.mxu0
      %v6152 = vadd.f32 0.0, %v6151
      %v6153 = vpop.f32.mrf.mxu0
      %6154 = vdwg.mxu0
      %6155 = vrot.lane.b32.xlu0 %v5088, 104
      %v6156 = vpop.permute.xlu0 %6155
      %6157 = vrot.lane.b32.xlu0 %v4610, 72
      %v6158 = vpop.permute.xlu0 %6157
      %v6160 = vsel %vm1720, %v6156, 0
      %v6163 = vsel %vm1720, %v6158, 0
      %6165 = vmatpush.bf16.xpose.msra.mxu0 0
      %6166 = vmatpush.bf16.xpose.msra.mxu0 0
      %6167 = vmatpush.bf16.xpose.msra.mxu0 0
      %6168 = vmatpush.bf16.xpose.msra.mxu0 0
      %6169 = vmatpush.bf16.xpose.msra.mxu0 0
      %6170 = vmatpush.bf16.xpose.msra.mxu0 0
      %6171 = vmatpush.bf16.xpose.msra.mxu0 0
      %6172 = vmatpush.bf16.xpose.msra.mxu0 %v6163
      %6173 = vmatmul.bf16.gmra.mxu0 %v6160
      %v6174 = vpop.f32.mrf.mxu0
      %v6175 = vadd.f32 0.0, %v6174
      %v6176 = vpop.f32.mrf.mxu0
      %6177 = vdwg.mxu0
      %6178 = vrot.lane.b32.xlu0 %v5114, 104
      %v6179 = vpop.permute.xlu0 %6178
      %6180 = vrot.lane.b32.xlu0 %v4634, 72
      %v6181 = vpop.permute.xlu0 %6180
      %v6183 = vsel %vm1720, %v6179, 0
      %v6186 = vsel %vm1720, %v6181, 0
      %6188 = vmatpush.bf16.xpose.msra.mxu0 0
      %6189 = vmatpush.bf16.xpose.msra.mxu0 0
      %6190 = vmatpush.bf16.xpose.msra.mxu0 0
      %6191 = vmatpush.bf16.xpose.msra.mxu0 0
      %6192 = vmatpush.bf16.xpose.msra.mxu0 0
      %6193 = vmatpush.bf16.xpose.msra.mxu0 0
      %6194 = vmatpush.bf16.xpose.msra.mxu0 0
      %6195 = vmatpush.bf16.xpose.msra.mxu0 %v6186
      %6196 = vmatmul.bf16.gmra.mxu0 %v6183
      %v6197 = vpop.f32.mrf.mxu0
      %v6198 = vadd.f32 0.0, %v6197
      %v6199 = vpop.f32.mrf.mxu0
      %6200 = vdwg.mxu0
      %6201 = vrot.lane.b32.xlu0 %v5140, 104
      %v6202 = vpop.permute.xlu0 %6201
      %6203 = vrot.lane.b32.xlu0 %v4658, 72
      %v6204 = vpop.permute.xlu0 %6203
      %v6206 = vsel %vm1720, %v6202, 0
      %v6209 = vsel %vm1720, %v6204, 0
      %6211 = vmatpush.bf16.xpose.msra.mxu0 0
      %6212 = vmatpush.bf16.xpose.msra.mxu0 0
      %6213 = vmatpush.bf16.xpose.msra.mxu0 0
      %6214 = vmatpush.bf16.xpose.msra.mxu0 0
      %6215 = vmatpush.bf16.xpose.msra.mxu0 0
      %6216 = vmatpush.bf16.xpose.msra.mxu0 0
      %6217 = vmatpush.bf16.xpose.msra.mxu0 0
      %6218 = vmatpush.bf16.xpose.msra.mxu0 %v6209
      %6219 = vmatmul.bf16.gmra.mxu0 %v6206
      %v6220 = vpop.f32.mrf.mxu0
      %v6221 = vadd.f32 0.0, %v6220
      %v6222 = vpop.f32.mrf.mxu0
      %6223 = vdwg.mxu0
      %v6224 = vsel %vm1924, %v6060, -1e+30
      %v6225 = vsel %vm1925, %v6083, -1e+30
      %v6226 = vsel %vm1926, %v6106, -1e+30
      %v6227 = vsel %vm1927, %v6129, -1e+30
      %v6228 = vsel %vm1928, %v6152, -1e+30
      %v6229 = vsel %vm1929, %v6175, -1e+30
      %v6230 = vsel %vm1930, %v6198, -1e+30
      %v6231 = vsel %vm1931, %v6221, -1e+30
      %v6232 = vsel %vm1720, %v6224, -inf
      %6233 = vmax.xlane.f32.xlu0 %v6232
      %v6234 = vpop.xlane.xlu0 %6233
      %v6235 = vsel %vm1720, %v6225, -inf
      %6236 = vmax.xlane.f32.xlu0 %v6235
      %v6237 = vpop.xlane.xlu0 %6236
      %v6238 = vsel %vm1720, %v6226, -inf
      %6239 = vmax.xlane.f32.xlu0 %v6238
      %v6240 = vpop.xlane.xlu0 %6239
      %v6241 = vsel %vm1720, %v6227, -inf
      %6242 = vmax.xlane.f32.xlu0 %v6241
      %v6243 = vpop.xlane.xlu0 %6242
      %v6244 = vsel %vm1720, %v6228, -inf
      %6245 = vmax.xlane.f32.xlu0 %v6244
      %v6246 = vpop.xlane.xlu0 %6245
      %v6247 = vsel %vm1720, %v6229, -inf
      %6248 = vmax.xlane.f32.xlu0 %v6247
      %v6249 = vpop.xlane.xlu0 %6248
      %v6250 = vsel %vm1720, %v6230, -inf
      %6251 = vmax.xlane.f32.xlu0 %v6250
      %v6252 = vpop.xlane.xlu0 %6251
      %v6253 = vsel %vm1720, %v6231, -inf
      %6254 = vmax.xlane.f32.xlu0 %v6253
      %v6255 = vpop.xlane.xlu0 %6254
      %v6256 = vsub.f32 %v6224, %v6234
      %v6257 = vsub.f32 %v6225, %v6237
      %v6258 = vsub.f32 %v6226, %v6240
      %v6259 = vsub.f32 %v6227, %v6243
      %v6260 = vsub.f32 %v6228, %v6246
      %v6261 = vsub.f32 %v6229, %v6249
      %v6262 = vsub.f32 %v6230, %v6252
      %v6263 = vsub.f32 %v6231, %v6255
      %v6264 = vmul.f32 %v6256, 1.442695
      %v6265 = vpow.pop %v6264
      %v6266 = vmul.f32 %v6257, 1.442695
      %v6267 = vpow.pop %v6266
      %v6268 = vmul.f32 %v6258, 1.442695
      %v6269 = vpow.pop %v6268
      %v6270 = vmul.f32 %v6259, 1.442695
      %v6271 = vpow.pop %v6270
      %v6272 = vmul.f32 %v6260, 1.442695
      %v6273 = vpow.pop %v6272
      %v6274 = vmul.f32 %v6261, 1.442695
      %v6275 = vpow.pop %v6274
      %v6276 = vmul.f32 %v6262, 1.442695
      %v6277 = vpow.pop %v6276
      %v6278 = vmul.f32 %v6263, 1.442695
      %v6279 = vpow.pop %v6278
      %v6280 = vsel %vm1720, %v6265, 0.0
      %6281 = vadd.xlane.f32.xlu0 %v6280
      %v6282 = vpop.xlane.xlu0 %6281
      %v6283 = vsel %vm1720, %v6267, 0.0
      %6284 = vadd.xlane.f32.xlu0 %v6283
      %v6285 = vpop.xlane.xlu0 %6284
      %v6286 = vsel %vm1720, %v6269, 0.0
      %6287 = vadd.xlane.f32.xlu0 %v6286
      %v6288 = vpop.xlane.xlu0 %6287
      %v6289 = vsel %vm1720, %v6271, 0.0
      %6290 = vadd.xlane.f32.xlu0 %v6289
      %v6291 = vpop.xlane.xlu0 %6290
      %v6292 = vsel %vm1720, %v6273, 0.0
      %6293 = vadd.xlane.f32.xlu0 %v6292
      %v6294 = vpop.xlane.xlu0 %6293
      %v6295 = vsel %vm1720, %v6275, 0.0
      %6296 = vadd.xlane.f32.xlu0 %v6295
      %v6297 = vpop.xlane.xlu0 %6296
      %v6298 = vsel %vm1720, %v6277, 0.0
      %6299 = vadd.xlane.f32.xlu0 %v6298
      %v6300 = vpop.xlane.xlu0 %6299
      %v6301 = vsel %vm1720, %v6279, 0.0
      %6302 = vadd.xlane.f32.xlu0 %v6301
      %v6303 = vpop.xlane.xlu0 %6302
      %v6304 = vrcp.pop %v6282
      %v6305 = vrcp.pop %v6285
      %v6306 = vrcp.pop %v6288
      %v6307 = vrcp.pop %v6291
      %v6308 = vrcp.pop %v6294
      %v6309 = vrcp.pop %v6297
      %v6310 = vrcp.pop %v6300
      %v6311 = vrcp.pop %v6303
      %v6312 = vmul.f32 %v6265, %v6304
      %v6313 = vmul.f32 %v6267, %v6305
      %v6314 = vmul.f32 %v6269, %v6306
      %v6315 = vmul.f32 %v6271, %v6307
      %v6316 = vmul.f32 %v6273, %v6308
      %v6317 = vmul.f32 %v6275, %v6309
      %v6318 = vmul.f32 %v6277, %v6310
      %v6319 = vmul.f32 %v6279, %v6311
      %v6320 = vpack.c.bf16 %v6312, %v6312
      %v6321 = vpack.c.bf16 %v6313, %v6313
      %v6322 = vpack.c.bf16 %v6314, %v6314
      %v6323 = vpack.c.bf16 %v6315, %v6315
      %v6324 = vpack.c.bf16 %v6316, %v6316
      %v6325 = vpack.c.bf16 %v6317, %v6317
      %v6326 = vpack.c.bf16 %v6318, %v6318
      %v6327 = vpack.c.bf16 %v6319, %v6319
      %6328 = vrot.lane.b32.xlu0 %v4490, 40
      %v6329 = vpop.permute.xlu0 %6328
      %v6331 = vsel %vm1720, %v6320, 0
      %v6334 = vsel %vm2041, %v6329, 0
      %6336 = vmatpush.bf16.msra.mxu0 0
      %6337 = vmatpush.bf16.msra.mxu0 0
      %6338 = vmatpush.bf16.msra.mxu0 0
      %6339 = vmatpush.bf16.msra.mxu0 0
      %6340 = vmatpush.bf16.msra.mxu0 0
      %6341 = vmatpush.bf16.msra.mxu0 0
      %6342 = vmatpush.bf16.msra.mxu0 0
      %6343 = vmatpush.bf16.msra.mxu0 %v6334
      %6344 = vmatmul.bf16.gmra.mxu0 %v6331
      %v6345 = vpop.f32.mrf.mxu0
      %v6346 = vadd.f32 0.0, %v6345
      %v6347 = vpop.f32.mrf.mxu0
      %6348 = vdwg.mxu0
      %6349 = vrot.lane.b32.xlu0 %v4514, 40
      %v6350 = vpop.permute.xlu0 %6349
      %v6352 = vsel %vm1720, %v6321, 0
      %v6355 = vsel %vm2041, %v6350, 0
      %6357 = vmatpush.bf16.msra.mxu0 0
      %6358 = vmatpush.bf16.msra.mxu0 0
      %6359 = vmatpush.bf16.msra.mxu0 0
      %6360 = vmatpush.bf16.msra.mxu0 0
      %6361 = vmatpush.bf16.msra.mxu0 0
      %6362 = vmatpush.bf16.msra.mxu0 0
      %6363 = vmatpush.bf16.msra.mxu0 0
      %6364 = vmatpush.bf16.msra.mxu0 %v6355
      %6365 = vmatmul.bf16.gmra.mxu0 %v6352
      %v6366 = vpop.f32.mrf.mxu0
      %v6367 = vadd.f32 0.0, %v6366
      %v6368 = vpop.f32.mrf.mxu0
      %6369 = vdwg.mxu0
      %6370 = vrot.lane.b32.xlu0 %v4538, 40
      %v6371 = vpop.permute.xlu0 %6370
      %v6373 = vsel %vm1720, %v6322, 0
      %v6376 = vsel %vm2041, %v6371, 0
      %6378 = vmatpush.bf16.msra.mxu0 0
      %6379 = vmatpush.bf16.msra.mxu0 0
      %6380 = vmatpush.bf16.msra.mxu0 0
      %6381 = vmatpush.bf16.msra.mxu0 0
      %6382 = vmatpush.bf16.msra.mxu0 0
      %6383 = vmatpush.bf16.msra.mxu0 0
      %6384 = vmatpush.bf16.msra.mxu0 0
      %6385 = vmatpush.bf16.msra.mxu0 %v6376
      %6386 = vmatmul.bf16.gmra.mxu0 %v6373
      %v6387 = vpop.f32.mrf.mxu0
      %v6388 = vadd.f32 0.0, %v6387
      %v6389 = vpop.f32.mrf.mxu0
      %6390 = vdwg.mxu0
      %6391 = vrot.lane.b32.xlu0 %v4562, 40
      %v6392 = vpop.permute.xlu0 %6391
      %v6394 = vsel %vm1720, %v6323, 0
      %v6397 = vsel %vm2041, %v6392, 0
      %6399 = vmatpush.bf16.msra.mxu0 0
      %6400 = vmatpush.bf16.msra.mxu0 0
      %6401 = vmatpush.bf16.msra.mxu0 0
      %6402 = vmatpush.bf16.msra.mxu0 0
      %6403 = vmatpush.bf16.msra.mxu0 0
      %6404 = vmatpush.bf16.msra.mxu0 0
      %6405 = vmatpush.bf16.msra.mxu0 0
      %6406 = vmatpush.bf16.msra.mxu0 %v6397
      %6407 = vmatmul.bf16.gmra.mxu0 %v6394
      %v6408 = vpop.f32.mrf.mxu0
      %v6409 = vadd.f32 0.0, %v6408
      %v6410 = vpop.f32.mrf.mxu0
      %6411 = vdwg.mxu0
      %6412 = vrot.lane.b32.xlu0 %v4586, 40
      %v6413 = vpop.permute.xlu0 %6412
      %v6415 = vsel %vm1720, %v6324, 0
      %v6418 = vsel %vm2041, %v6413, 0
      %6420 = vmatpush.bf16.msra.mxu0 0
      %6421 = vmatpush.bf16.msra.mxu0 0
      %6422 = vmatpush.bf16.msra.mxu0 0
      %6423 = vmatpush.bf16.msra.mxu0 0
      %6424 = vmatpush.bf16.msra.mxu0 0
      %6425 = vmatpush.bf16.msra.mxu0 0
      %6426 = vmatpush.bf16.msra.mxu0 0
      %6427 = vmatpush.bf16.msra.mxu0 %v6418
      %6428 = vmatmul.bf16.gmra.mxu0 %v6415
      %v6429 = vpop.f32.mrf.mxu0
      %v6430 = vadd.f32 0.0, %v6429
      %v6431 = vpop.f32.mrf.mxu0
      %6432 = vdwg.mxu0
      %6433 = vrot.lane.b32.xlu0 %v4610, 40
      %v6434 = vpop.permute.xlu0 %6433
      %v6436 = vsel %vm1720, %v6325, 0
      %v6439 = vsel %vm2041, %v6434, 0
      %6441 = vmatpush.bf16.msra.mxu0 0
      %6442 = vmatpush.bf16.msra.mxu0 0
      %6443 = vmatpush.bf16.msra.mxu0 0
      %6444 = vmatpush.bf16.msra.mxu0 0
      %6445 = vmatpush.bf16.msra.mxu0 0
      %6446 = vmatpush.bf16.msra.mxu0 0
      %6447 = vmatpush.bf16.msra.mxu0 0
      %6448 = vmatpush.bf16.msra.mxu0 %v6439
      %6449 = vmatmul.bf16.gmra.mxu0 %v6436
      %v6450 = vpop.f32.mrf.mxu0
      %v6451 = vadd.f32 0.0, %v6450
      %v6452 = vpop.f32.mrf.mxu0
      %6453 = vdwg.mxu0
      %6454 = vrot.lane.b32.xlu0 %v4634, 40
      %v6455 = vpop.permute.xlu0 %6454
      %v6457 = vsel %vm1720, %v6326, 0
      %v6460 = vsel %vm2041, %v6455, 0
      %6462 = vmatpush.bf16.msra.mxu0 0
      %6463 = vmatpush.bf16.msra.mxu0 0
      %6464 = vmatpush.bf16.msra.mxu0 0
      %6465 = vmatpush.bf16.msra.mxu0 0
      %6466 = vmatpush.bf16.msra.mxu0 0
      %6467 = vmatpush.bf16.msra.mxu0 0
      %6468 = vmatpush.bf16.msra.mxu0 0
      %6469 = vmatpush.bf16.msra.mxu0 %v6460
      %6470 = vmatmul.bf16.gmra.mxu0 %v6457
      %v6471 = vpop.f32.mrf.mxu0
      %v6472 = vadd.f32 0.0, %v6471
      %v6473 = vpop.f32.mrf.mxu0
      %6474 = vdwg.mxu0
      %6475 = vrot.lane.b32.xlu0 %v4658, 40
      %v6476 = vpop.permute.xlu0 %6475
      %v6478 = vsel %vm1720, %v6327, 0
      %v6481 = vsel %vm2041, %v6476, 0
      %6483 = vmatpush.bf16.msra.mxu0 0
      %6484 = vmatpush.bf16.msra.mxu0 0
      %6485 = vmatpush.bf16.msra.mxu0 0
      %6486 = vmatpush.bf16.msra.mxu0 0
      %6487 = vmatpush.bf16.msra.mxu0 0
      %6488 = vmatpush.bf16.msra.mxu0 0
      %6489 = vmatpush.bf16.msra.mxu0 0
      %6490 = vmatpush.bf16.msra.mxu0 %v6481
      %6491 = vmatmul.bf16.gmra.mxu0 %v6478
      %v6492 = vpop.f32.mrf.mxu0
      %v6493 = vadd.f32 0.0, %v6492
      %v6494 = vpop.f32.mrf.mxu0
      %6495 = vdwg.mxu0
      %v6496 = vpack.c.bf16 %v6367, %v6346
      %v6497 = vpack.c.bf16 %v6409, %v6388
      %v6498 = vpack.c.bf16 %v6451, %v6430
      %v6499 = vpack.c.bf16 %v6493, %v6472
      %v6501 = vsel %vm1720, %v6496, 0
      %v6504 = vsel %vm1720, %v6497, 0
      %v6507 = vsel %vm1720, %v6498, 0
      %v6510 = vsel %vm1720, %v6499, 0
      %v6513 = vsel %vm2041, %v4471, 0
      %6515 = vmatpush.bf16.msra.mxu0 0
      %6516 = vmatpush.bf16.msra.mxu0 0
      %6517 = vmatpush.bf16.msra.mxu0 0
      %6518 = vmatpush.bf16.msra.mxu0 0
      %6519 = vmatpush.bf16.msra.mxu0 0
      %6520 = vmatpush.bf16.msra.mxu0 0
      %6521 = vmatpush.bf16.msra.mxu0 0
      %6522 = vmatpush.bf16.msra.mxu0 %v6513
      %6523 = vmatmul.bf16.gmra.mxu0 %v6501
      %v6524 = vpop.f32.mrf.mxu0
      %v6525 = vadd.f32 0.0, %v6524
      %v6526 = vpop.f32.mrf.mxu0
      %v6527 = vadd.f32 0.0, %v6526
      %6528 = vmatmul.bf16.gmra.mxu0 %v6504
      %v6529 = vpop.f32.mrf.mxu0
      %v6530 = vadd.f32 0.0, %v6529
      %v6531 = vpop.f32.mrf.mxu0
      %v6532 = vadd.f32 0.0, %v6531
      %6533 = vmatmul.bf16.gmra.mxu0 %v6507
      %v6534 = vpop.f32.mrf.mxu0
      %v6535 = vadd.f32 0.0, %v6534
      %v6536 = vpop.f32.mrf.mxu0
      %v6537 = vadd.f32 0.0, %v6536
      %6538 = vmatmul.bf16.gmra.mxu0 %v6510
      %v6539 = vpop.f32.mrf.mxu0
      %v6540 = vadd.f32 0.0, %v6539
      %v6541 = vpop.f32.mrf.mxu0
      %v6542 = vadd.f32 0.0, %v6541
      %6543 = vdwg.mxu0
      %v6544 = vadd.f32 %v6032, %v6525
      %v6545 = vadd.f32 %v6033, %v6527
      %v6546 = vadd.f32 %v6034, %v6530
      %v6547 = vadd.f32 %v6035, %v6532
      %v6548 = vadd.f32 %v6036, %v6535
      %v6549 = vadd.f32 %v6037, %v6537
      %v6550 = vadd.f32 %v6038, %v6540
      %v6551 = vadd.f32 %v6039, %v6542
      %v6552 = vld [vmem:[%s51] sm:$0x1]
      %v6554 = vperm.slane %v6552, 0
      %v6556 = vadd.f32 %v6544, %v6554
      %v6557 = vadd.f32 %v6545, %v6554
      %v6558 = vadd.f32 %v6546, %v6554
      %v6559 = vadd.f32 %v6547, %v6554
      %v6560 = vadd.f32 %v6548, %v6554
      %v6561 = vadd.f32 %v6549, %v6554
      %v6562 = vadd.f32 %v6550, %v6554
      %v6563 = vadd.f32 %v6551, %v6554
      %v6564 = vadd.f32 %v4387, %v6556
      %v6565 = vadd.f32 %v4388, %v6557
      %v6566 = vadd.f32 %v4389, %v6558
      %v6567 = vadd.f32 %v4390, %v6559
      %v6568 = vadd.f32 %v4391, %v6560
      %v6569 = vadd.f32 %v4392, %v6561
      %v6570 = vadd.f32 %v4393, %v6562
      %v6571 = vadd.f32 %v4394, %v6563
      %v6572 = vld [vmem:[%s53] sm:$0x1]
      %v6573 = vld [vmem:[%s55] sm:$0x1]
      %v6574 = vsel %vm1645, %v6564, 0.0
      %6575 = vadd.xlane.f32.xlu0 %v6574
      %v6576 = vpop.xlane.xlu0 %6575
      %v6577 = vsel %vm1645, %v6565, 0.0
      %6578 = vadd.xlane.f32.xlu0 %v6577
      %v6579 = vpop.xlane.xlu0 %6578
      %v6580 = vsel %vm1645, %v6566, 0.0
      %6581 = vadd.xlane.f32.xlu0 %v6580
      %v6582 = vpop.xlane.xlu0 %6581
      %v6583 = vsel %vm1645, %v6567, 0.0
      %6584 = vadd.xlane.f32.xlu0 %v6583
      %v6585 = vpop.xlane.xlu0 %6584
      %v6586 = vsel %vm1645, %v6568, 0.0
      %6587 = vadd.xlane.f32.xlu0 %v6586
      %v6588 = vpop.xlane.xlu0 %6587
      %v6589 = vsel %vm1645, %v6569, 0.0
      %6590 = vadd.xlane.f32.xlu0 %v6589
      %v6591 = vpop.xlane.xlu0 %6590
      %v6592 = vsel %vm1645, %v6570, 0.0
      %6593 = vadd.xlane.f32.xlu0 %v6592
      %v6594 = vpop.xlane.xlu0 %6593
      %v6595 = vsel %vm1645, %v6571, 0.0
      %6596 = vadd.xlane.f32.xlu0 %v6595
      %v6597 = vpop.xlane.xlu0 %6596
      %v6598 = vmul.f32 %v6576, %v3857
      %v6599 = vmul.f32 %v6579, %v3857
      %v6600 = vmul.f32 %v6582, %v3857
      %v6601 = vmul.f32 %v6585, %v3857
      %v6602 = vmul.f32 %v6588, %v3857
      %v6603 = vmul.f32 %v6591, %v3857
      %v6604 = vmul.f32 %v6594, %v3857
      %v6605 = vmul.f32 %v6597, %v3857
      %v6606 = vsub.f32 %v6564, %v6598
      %v6607 = vsub.f32 %v6565, %v6599
      %v6608 = vsub.f32 %v6566, %v6600
      %v6609 = vsub.f32 %v6567, %v6601
      %v6610 = vsub.f32 %v6568, %v6602
      %v6611 = vsub.f32 %v6569, %v6603
      %v6612 = vsub.f32 %v6570, %v6604
      %v6613 = vsub.f32 %v6571, %v6605
      %v6614 = vmul.f32 %v6606, %v6606
      %v6615 = vmul.f32 %v6607, %v6607
      %v6616 = vmul.f32 %v6608, %v6608
      %v6617 = vmul.f32 %v6609, %v6609
      %v6618 = vmul.f32 %v6610, %v6610
      %v6619 = vmul.f32 %v6611, %v6611
      %v6620 = vmul.f32 %v6612, %v6612
      %v6621 = vmul.f32 %v6613, %v6613
      %v6622 = vsel %vm1645, %v6614, 0.0
      %6623 = vadd.xlane.f32.xlu0 %v6622
      %v6624 = vpop.xlane.xlu0 %6623
      %v6625 = vsel %vm1645, %v6615, 0.0
      %6626 = vadd.xlane.f32.xlu0 %v6625
      %v6627 = vpop.xlane.xlu0 %6626
      %v6628 = vsel %vm1645, %v6616, 0.0
      %6629 = vadd.xlane.f32.xlu0 %v6628
      %v6630 = vpop.xlane.xlu0 %6629
      %v6631 = vsel %vm1645, %v6617, 0.0
      %6632 = vadd.xlane.f32.xlu0 %v6631
      %v6633 = vpop.xlane.xlu0 %6632
      %v6634 = vsel %vm1645, %v6618, 0.0
      %6635 = vadd.xlane.f32.xlu0 %v6634
      %v6636 = vpop.xlane.xlu0 %6635
      %v6637 = vsel %vm1645, %v6619, 0.0
      %6638 = vadd.xlane.f32.xlu0 %v6637
      %v6639 = vpop.xlane.xlu0 %6638
      %v6640 = vsel %vm1645, %v6620, 0.0
      %6641 = vadd.xlane.f32.xlu0 %v6640
      %v6642 = vpop.xlane.xlu0 %6641
      %v6643 = vsel %vm1645, %v6621, 0.0
      %6644 = vadd.xlane.f32.xlu0 %v6643
      %v6645 = vpop.xlane.xlu0 %6644
      %v6646 = vmul.f32 %v6624, %v3857
      %v6647 = vmul.f32 %v6627, %v3857
      %v6648 = vmul.f32 %v6630, %v3857
      %v6649 = vmul.f32 %v6633, %v3857
      %v6650 = vmul.f32 %v6636, %v3857
      %v6651 = vmul.f32 %v6639, %v3857
      %v6652 = vmul.f32 %v6642, %v3857
      %v6653 = vmul.f32 %v6645, %v3857
      %v6654 = vadd.f32 %v6646, 1e-05
      %v6655 = vadd.f32 %v6647, 1e-05
      %v6656 = vadd.f32 %v6648, 1e-05
      %v6657 = vadd.f32 %v6649, 1e-05
      %v6658 = vadd.f32 %v6650, 1e-05
      %v6659 = vadd.f32 %v6651, 1e-05
      %v6660 = vadd.f32 %v6652, 1e-05
      %v6661 = vadd.f32 %v6653, 1e-05
      %v6662 = vrsqrt.pop %v6654
      %v6663 = vmul.f32 %v6662, %v6654
      %v6664 = vmul.f32 %v6663, %v6662
      %v6665 = vmul.f32 0.5, %v6664
      %v6666 = vsub.f32 1.5, %v6665
      %v6667 = vmul.f32 %v6662, %v6666
      %vm6668 = vweird.f32 %v6654
      %vm6669 = vweird.f32 %v6662
      %vm6670 = vmor %vm6668, %vm6669
      %v6671 = vsel %vm6670, %v6662, %v6667
      %v6672 = vrsqrt.pop %v6655
      %v6673 = vmul.f32 %v6672, %v6655
      %v6674 = vmul.f32 %v6673, %v6672
      %v6675 = vmul.f32 0.5, %v6674
      %v6676 = vsub.f32 1.5, %v6675
      %v6677 = vmul.f32 %v6672, %v6676
      %vm6678 = vweird.f32 %v6655
      %vm6679 = vweird.f32 %v6672
      %vm6680 = vmor %vm6678, %vm6679
      %v6681 = vsel %vm6680, %v6672, %v6677
      %v6682 = vrsqrt.pop %v6656
      %v6683 = vmul.f32 %v6682, %v6656
      %v6684 = vmul.f32 %v6683, %v6682
      %v6685 = vmul.f32 0.5, %v6684
      %v6686 = vsub.f32 1.5, %v6685
      %v6687 = vmul.f32 %v6682, %v6686
      %vm6688 = vweird.f32 %v6656
      %vm6689 = vweird.f32 %v6682
      %vm6690 = vmor %vm6688, %vm6689
      %v6691 = vsel %vm6690, %v6682, %v6687
      %v6692 = vrsqrt.pop %v6657
      %v6693 = vmul.f32 %v6692, %v6657
      %v6694 = vmul.f32 %v6693, %v6692
      %v6695 = vmul.f32 0.5, %v6694
      %v6696 = vsub.f32 1.5, %v6695
      %v6697 = vmul.f32 %v6692, %v6696
      %vm6698 = vweird.f32 %v6657
      %vm6699 = vweird.f32 %v6692
      %vm6700 = vmor %vm6698, %vm6699
      %v6701 = vsel %vm6700, %v6692, %v6697
      %v6702 = vrsqrt.pop %v6658
      %v6703 = vmul.f32 %v6702, %v6658
      %v6704 = vmul.f32 %v6703, %v6702
      %v6705 = vmul.f32 0.5, %v6704
      %v6706 = vsub.f32 1.5, %v6705
      %v6707 = vmul.f32 %v6702, %v6706
      %vm6708 = vweird.f32 %v6658
      %vm6709 = vweird.f32 %v6702
      %vm6710 = vmor %vm6708, %vm6709
      %v6711 = vsel %vm6710, %v6702, %v6707
      %v6712 = vrsqrt.pop %v6659
      %v6713 = vmul.f32 %v6712, %v6659
      %v6714 = vmul.f32 %v6713, %v6712
      %v6715 = vmul.f32 0.5, %v6714
      %v6716 = vsub.f32 1.5, %v6715
      %v6717 = vmul.f32 %v6712, %v6716
      %vm6718 = vweird.f32 %v6659
      %vm6719 = vweird.f32 %v6712
      %vm6720 = vmor %vm6718, %vm6719
      %v6721 = vsel %vm6720, %v6712, %v6717
      %v6722 = vrsqrt.pop %v6660
      %v6723 = vmul.f32 %v6722, %v6660
      %v6724 = vmul.f32 %v6723, %v6722
      %v6725 = vmul.f32 0.5, %v6724
      %v6726 = vsub.f32 1.5, %v6725
      %v6727 = vmul.f32 %v6722, %v6726
      %vm6728 = vweird.f32 %v6660
      %vm6729 = vweird.f32 %v6722
      %vm6730 = vmor %vm6728, %vm6729
      %v6731 = vsel %vm6730, %v6722, %v6727
      %v6732 = vrsqrt.pop %v6661
      %v6733 = vmul.f32 %v6732, %v6661
      %v6734 = vmul.f32 %v6733, %v6732
      %v6735 = vmul.f32 0.5, %v6734
      %v6736 = vsub.f32 1.5, %v6735
      %v6737 = vmul.f32 %v6732, %v6736
      %vm6738 = vweird.f32 %v6661
      %vm6739 = vweird.f32 %v6732
      %vm6740 = vmor %vm6738, %vm6739
      %v6741 = vsel %vm6740, %v6732, %v6737
      %v6742 = vmul.f32 %v6606, %v6671
      %v6743 = vmul.f32 %v6607, %v6681
      %v6744 = vmul.f32 %v6608, %v6691
      %v6745 = vmul.f32 %v6609, %v6701
      %v6746 = vmul.f32 %v6610, %v6711
      %v6747 = vmul.f32 %v6611, %v6721
      %v6748 = vmul.f32 %v6612, %v6731
      %v6749 = vmul.f32 %v6613, %v6741
      %v6751 = vperm.slane %v6572, 0
      %v6753 = vmul.f32 %v6742, %v6751
      %v6754 = vmul.f32 %v6743, %v6751
      %v6755 = vmul.f32 %v6744, %v6751
      %v6756 = vmul.f32 %v6745, %v6751
      %v6757 = vmul.f32 %v6746, %v6751
      %v6758 = vmul.f32 %v6747, %v6751
      %v6759 = vmul.f32 %v6748, %v6751
      %v6760 = vmul.f32 %v6749, %v6751
      %v6762 = vperm.slane %v6573, 0
      %v6764 = vadd.f32 %v6753, %v6762
      %v6765 = vadd.f32 %v6754, %v6762
      %v6766 = vadd.f32 %v6755, %v6762
      %v6767 = vadd.f32 %v6756, %v6762
      %v6768 = vadd.f32 %v6757, %v6762
      %v6769 = vadd.f32 %v6758, %v6762
      %v6770 = vadd.f32 %v6759, %v6762
      %v6771 = vadd.f32 %v6760, %v6762
      %v6772 = vpack.c.bf16 %v6765, %v6764
      %v6773 = vpack.c.bf16 %v6767, %v6766
      %v6774 = vpack.c.bf16 %v6769, %v6768
      %v6775 = vpack.c.bf16 %v6771, %v6770
      %v6776 = vld [vmem:[%s57] sm:$0xf]
      %v6777 = vld [vmem:[%s57 + $0x4] sm:$0xf]
      %v6778 = vld [vmem:[%s57 + $0x8] sm:$0xf]
      %v6779 = vld [vmem:[%s57 + $0xc] sm:$0xf]
      %v6780 = vld [vmem:[%s59] sm:$0x1]
      %v6782 = vperm.slane %v6780, 0
      %v6788 = vunpack.c.l.b16 %v6776
      %v6789 = vunpack.c.l.b16 %v6777
      %v6790 = vunpack.c.l.b16 %v6778
      %v6791 = vunpack.c.l.b16 %v6779
      %v6792 = vpack.c.b16 %v6789, %v6788
      %v6793 = vpack.c.b16 %v6791, %v6790
      %v6797 = vsel %vm1645, %v6772, 0
      %v6800 = vsel %vm1645, %v6773, 0
      %v6803 = vsel %vm1645, %v6774, 0
      %v6806 = vsel %vm1645, %v6775, 0
      %6808 = vmatpush.bf16.msra.mxu0 0
      %6809 = vmatpush.bf16.msra.mxu0 0
      %6810 = vmatpush.bf16.msra.mxu0 0
      %6811 = vmatpush.bf16.msra.mxu0 0
      %6812 = vmatpush.bf16.msra.mxu0 0
      %6813 = vmatpush.bf16.msra.mxu0 0
      %6814 = vmatpush.bf16.msra.mxu0 %v6793
      %6815 = vmatpush.bf16.msra.mxu0 %v6792
      %6816 = vmatmul.bf16.gmra.mxu0 %v6797
      %v6817 = vpop.f32.mrf.mxu0
      %v6818 = vadd.f32 %v6782, %v6817
      %v6819 = vpop.f32.mrf.mxu0
      %v6820 = vadd.f32 %v6782, %v6819
      %6821 = vmatmul.bf16.gmra.mxu0 %v6800
      %v6822 = vpop.f32.mrf.mxu0
      %v6823 = vadd.f32 %v6782, %v6822
      %v6824 = vpop.f32.mrf.mxu0
      %v6825 = vadd.f32 %v6782, %v6824
      %6826 = vmatmul.bf16.gmra.mxu0 %v6803
      %v6827 = vpop.f32.mrf.mxu0
      %v6828 = vadd.f32 %v6782, %v6827
      %v6829 = vpop.f32.mrf.mxu0
      %v6830 = vadd.f32 %v6782, %v6829
      %6831 = vmatmul.bf16.gmra.mxu0 %v6806
      %v6832 = vpop.f32.mrf.mxu0
      %v6833 = vadd.f32 %v6782, %v6832
      %v6834 = vpop.f32.mrf.mxu0
      %v6835 = vadd.f32 %v6782, %v6834
      %6836 = vdwg.mxu0
      %v6837 = vmax.f32 %v6818, 0.0
      %v6838 = vmax.f32 %v6820, 0.0
      %v6839 = vmax.f32 %v6823, 0.0
      %v6840 = vmax.f32 %v6825, 0.0
      %v6841 = vmax.f32 %v6828, 0.0
      %v6842 = vmax.f32 %v6830, 0.0
      %v6843 = vmax.f32 %v6833, 0.0
      %v6844 = vmax.f32 %v6835, 0.0
      %v6845 = vpack.c.bf16 %v6838, %v6837
      %v6846 = vpack.c.bf16 %v6840, %v6839
      %v6847 = vpack.c.bf16 %v6842, %v6841
      %v6848 = vpack.c.bf16 %v6844, %v6843
      %v6849 = vld [vmem:[%s61] sm:$0xf]
      %v6850 = vld [vmem:[%s61 + $0x4] sm:$0xf]
      %v6851 = vld [vmem:[%s61 + $0x8] sm:$0xf]
      %v6852 = vld [vmem:[%s61 + $0xc] sm:$0xf]
      %v6853 = vld [vmem:[%s61 + $0x10] sm:$0xf]
      %v6854 = vld [vmem:[%s61 + $0x14] sm:$0xf]
      %v6855 = vld [vmem:[%s61 + $0x18] sm:$0xf]
      %v6856 = vld [vmem:[%s61 + $0x1c] sm:$0xf]
      %v6857 = vld [vmem:[%s63] sm:$0x1]
      %v6859 = vperm.slane %v6857, 0
      %v6869 = vunpack.c.l.b16 %v6849
      %v6870 = vunpack.c.l.b16 %v6850
      %v6871 = vunpack.c.l.b16 %v6851
      %v6872 = vunpack.c.l.b16 %v6852
      %v6873 = vunpack.c.l.b16 %v6853
      %v6874 = vunpack.c.l.b16 %v6854
      %v6875 = vunpack.c.l.b16 %v6855
      %v6876 = vunpack.c.l.b16 %v6856
      %v6877 = vpack.c.b16 %v6870, %v6869
      %v6878 = vpack.c.b16 %v6872, %v6871
      %v6879 = vpack.c.b16 %v6874, %v6873
      %v6880 = vpack.c.b16 %v6876, %v6875
      %v6886 = vsel %vm4145, %v6845, 0
      %v6889 = vsel %vm4145, %v6846, 0
      %v6892 = vsel %vm4145, %v6847, 0
      %v6895 = vsel %vm4145, %v6848, 0
      %6897 = vmatpush.bf16.msra.mxu0 0
      %6898 = vmatpush.bf16.msra.mxu0 0
      %6899 = vmatpush.bf16.msra.mxu0 0
      %6900 = vmatpush.bf16.msra.mxu0 0
      %6901 = vmatpush.bf16.msra.mxu0 %v6880
      %6902 = vmatpush.bf16.msra.mxu0 %v6879
      %6903 = vmatpush.bf16.msra.mxu0 %v6878
      %6904 = vmatpush.bf16.msra.mxu0 %v6877
      %6905 = vmatmul.bf16.gmra.mxu0 %v6886
      %v6906 = vpop.f32.mrf.mxu0
      %v6907 = vadd.f32 %v6859, %v6906
      %v6908 = vpop.f32.mrf.mxu0
      %v6909 = vadd.f32 %v6859, %v6908
      %6910 = vmatmul.bf16.gmra.mxu0 %v6889
      %v6911 = vpop.f32.mrf.mxu0
      %v6912 = vadd.f32 %v6859, %v6911
      %v6913 = vpop.f32.mrf.mxu0
      %v6914 = vadd.f32 %v6859, %v6913
      %6915 = vmatmul.bf16.gmra.mxu0 %v6892
      %v6916 = vpop.f32.mrf.mxu0
      %v6917 = vadd.f32 %v6859, %v6916
      %v6918 = vpop.f32.mrf.mxu0
      %v6919 = vadd.f32 %v6859, %v6918
      %6920 = vmatmul.bf16.gmra.mxu0 %v6895
      %v6921 = vpop.f32.mrf.mxu0
      %v6922 = vadd.f32 %v6859, %v6921
      %v6923 = vpop.f32.mrf.mxu0
      %v6924 = vadd.f32 %v6859, %v6923
      %6925 = vdwg.mxu0
      %v6926 = vadd.f32 %v6764, %v6907
      %v6927 = vadd.f32 %v6765, %v6909
      %v6928 = vadd.f32 %v6766, %v6912
      %v6929 = vadd.f32 %v6767, %v6914
      %v6930 = vadd.f32 %v6768, %v6917
      %v6931 = vadd.f32 %v6769, %v6919
      %v6932 = vadd.f32 %v6770, %v6922
      %v6933 = vadd.f32 %v6771, %v6924
      %v6934 = vld [vmem:[%s65] sm:$0x1]
      %v6935 = vld [vmem:[%s67] sm:$0x1]
      %v6936 = vsel %vm1645, %v6926, 0.0
      %6937 = vadd.xlane.f32.xlu0 %v6936
      %v6938 = vpop.xlane.xlu0 %6937
      %v6939 = vsel %vm1645, %v6927, 0.0
      %6940 = vadd.xlane.f32.xlu0 %v6939
      %v6941 = vpop.xlane.xlu0 %6940
      %v6942 = vsel %vm1645, %v6928, 0.0
      %6943 = vadd.xlane.f32.xlu0 %v6942
      %v6944 = vpop.xlane.xlu0 %6943
      %v6945 = vsel %vm1645, %v6929, 0.0
      %6946 = vadd.xlane.f32.xlu0 %v6945
      %v6947 = vpop.xlane.xlu0 %6946
      %v6948 = vsel %vm1645, %v6930, 0.0
      %6949 = vadd.xlane.f32.xlu0 %v6948
      %v6950 = vpop.xlane.xlu0 %6949
      %v6951 = vsel %vm1645, %v6931, 0.0
      %6952 = vadd.xlane.f32.xlu0 %v6951
      %v6953 = vpop.xlane.xlu0 %6952
      %v6954 = vsel %vm1645, %v6932, 0.0
      %6955 = vadd.xlane.f32.xlu0 %v6954
      %v6956 = vpop.xlane.xlu0 %6955
      %v6957 = vsel %vm1645, %v6933, 0.0
      %6958 = vadd.xlane.f32.xlu0 %v6957
      %v6959 = vpop.xlane.xlu0 %6958
      %v6960 = vmul.f32 %v6938, %v3857
      %v6961 = vmul.f32 %v6941, %v3857
      %v6962 = vmul.f32 %v6944, %v3857
      %v6963 = vmul.f32 %v6947, %v3857
      %v6964 = vmul.f32 %v6950, %v3857
      %v6965 = vmul.f32 %v6953, %v3857
      %v6966 = vmul.f32 %v6956, %v3857
      %v6967 = vmul.f32 %v6959, %v3857
      %v6968 = vsub.f32 %v6926, %v6960
      %v6969 = vsub.f32 %v6927, %v6961
      %v6970 = vsub.f32 %v6928, %v6962
      %v6971 = vsub.f32 %v6929, %v6963
      %v6972 = vsub.f32 %v6930, %v6964
      %v6973 = vsub.f32 %v6931, %v6965
      %v6974 = vsub.f32 %v6932, %v6966
      %v6975 = vsub.f32 %v6933, %v6967
      %v6976 = vmul.f32 %v6968, %v6968
      %v6977 = vmul.f32 %v6969, %v6969
      %v6978 = vmul.f32 %v6970, %v6970
      %v6979 = vmul.f32 %v6971, %v6971
      %v6980 = vmul.f32 %v6972, %v6972
      %v6981 = vmul.f32 %v6973, %v6973
      %v6982 = vmul.f32 %v6974, %v6974
      %v6983 = vmul.f32 %v6975, %v6975
      %v6984 = vsel %vm1645, %v6976, 0.0
      %6985 = vadd.xlane.f32.xlu0 %v6984
      %v6986 = vpop.xlane.xlu0 %6985
      %v6987 = vsel %vm1645, %v6977, 0.0
      %6988 = vadd.xlane.f32.xlu0 %v6987
      %v6989 = vpop.xlane.xlu0 %6988
      %v6990 = vsel %vm1645, %v6978, 0.0
      %6991 = vadd.xlane.f32.xlu0 %v6990
      %v6992 = vpop.xlane.xlu0 %6991
      %v6993 = vsel %vm1645, %v6979, 0.0
      %6994 = vadd.xlane.f32.xlu0 %v6993
      %v6995 = vpop.xlane.xlu0 %6994
      %v6996 = vsel %vm1645, %v6980, 0.0
      %6997 = vadd.xlane.f32.xlu0 %v6996
      %v6998 = vpop.xlane.xlu0 %6997
      %v6999 = vsel %vm1645, %v6981, 0.0
      %7000 = vadd.xlane.f32.xlu0 %v6999
      %v7001 = vpop.xlane.xlu0 %7000
      %v7002 = vsel %vm1645, %v6982, 0.0
      %7003 = vadd.xlane.f32.xlu0 %v7002
      %v7004 = vpop.xlane.xlu0 %7003
      %v7005 = vsel %vm1645, %v6983, 0.0
      %7006 = vadd.xlane.f32.xlu0 %v7005
      %v7007 = vpop.xlane.xlu0 %7006
      %v7008 = vmul.f32 %v6986, %v3857
      %v7009 = vmul.f32 %v6989, %v3857
      %v7010 = vmul.f32 %v6992, %v3857
      %v7011 = vmul.f32 %v6995, %v3857
      %v7012 = vmul.f32 %v6998, %v3857
      %v7013 = vmul.f32 %v7001, %v3857
      %v7014 = vmul.f32 %v7004, %v3857
      %v7015 = vmul.f32 %v7007, %v3857
      %v7016 = vadd.f32 %v7008, 1e-05
      %v7017 = vadd.f32 %v7009, 1e-05
      %v7018 = vadd.f32 %v7010, 1e-05
      %v7019 = vadd.f32 %v7011, 1e-05
      %v7020 = vadd.f32 %v7012, 1e-05
      %v7021 = vadd.f32 %v7013, 1e-05
      %v7022 = vadd.f32 %v7014, 1e-05
      %v7023 = vadd.f32 %v7015, 1e-05
      %v7024 = vrsqrt.pop %v7016
      %v7025 = vmul.f32 %v7024, %v7016
      %v7026 = vmul.f32 %v7025, %v7024
      %v7027 = vmul.f32 0.5, %v7026
      %v7028 = vsub.f32 1.5, %v7027
      %v7029 = vmul.f32 %v7024, %v7028
      %vm7030 = vweird.f32 %v7016
      %vm7031 = vweird.f32 %v7024
      %vm7032 = vmor %vm7030, %vm7031
      %v7033 = vsel %vm7032, %v7024, %v7029
      %v7034 = vrsqrt.pop %v7017
      %v7035 = vmul.f32 %v7034, %v7017
      %v7036 = vmul.f32 %v7035, %v7034
      %v7037 = vmul.f32 0.5, %v7036
      %v7038 = vsub.f32 1.5, %v7037
      %v7039 = vmul.f32 %v7034, %v7038
      %vm7040 = vweird.f32 %v7017
      %vm7041 = vweird.f32 %v7034
      %vm7042 = vmor %vm7040, %vm7041
      %v7043 = vsel %vm7042, %v7034, %v7039
      %v7044 = vrsqrt.pop %v7018
      %v7045 = vmul.f32 %v7044, %v7018
      %v7046 = vmul.f32 %v7045, %v7044
      %v7047 = vmul.f32 0.5, %v7046
      %v7048 = vsub.f32 1.5, %v7047
      %v7049 = vmul.f32 %v7044, %v7048
      %vm7050 = vweird.f32 %v7018
      %vm7051 = vweird.f32 %v7044
      %vm7052 = vmor %vm7050, %vm7051
      %v7053 = vsel %vm7052, %v7044, %v7049
      %v7054 = vrsqrt.pop %v7019
      %v7055 = vmul.f32 %v7054, %v7019
      %v7056 = vmul.f32 %v7055, %v7054
      %v7057 = vmul.f32 0.5, %v7056
      %v7058 = vsub.f32 1.5, %v7057
      %v7059 = vmul.f32 %v7054, %v7058
      %vm7060 = vweird.f32 %v7019
      %vm7061 = vweird.f32 %v7054
      %vm7062 = vmor %vm7060, %vm7061
      %v7063 = vsel %vm7062, %v7054, %v7059
      %v7064 = vrsqrt.pop %v7020
      %v7065 = vmul.f32 %v7064, %v7020
      %v7066 = vmul.f32 %v7065, %v7064
      %v7067 = vmul.f32 0.5, %v7066
      %v7068 = vsub.f32 1.5, %v7067
      %v7069 = vmul.f32 %v7064, %v7068
      %vm7070 = vweird.f32 %v7020
      %vm7071 = vweird.f32 %v7064
      %vm7072 = vmor %vm7070, %vm7071
      %v7073 = vsel %vm7072, %v7064, %v7069
      %v7074 = vrsqrt.pop %v7021
      %v7075 = vmul.f32 %v7074, %v7021
      %v7076 = vmul.f32 %v7075, %v7074
      %v7077 = vmul.f32 0.5, %v7076
      %v7078 = vsub.f32 1.5, %v7077
      %v7079 = vmul.f32 %v7074, %v7078
      %vm7080 = vweird.f32 %v7021
      %vm7081 = vweird.f32 %v7074
      %vm7082 = vmor %vm7080, %vm7081
      %v7083 = vsel %vm7082, %v7074, %v7079
      %v7084 = vrsqrt.pop %v7022
      %v7085 = vmul.f32 %v7084, %v7022
      %v7086 = vmul.f32 %v7085, %v7084
      %v7087 = vmul.f32 0.5, %v7086
      %v7088 = vsub.f32 1.5, %v7087
      %v7089 = vmul.f32 %v7084, %v7088
      %vm7090 = vweird.f32 %v7022
      %vm7091 = vweird.f32 %v7084
      %vm7092 = vmor %vm7090, %vm7091
      %v7093 = vsel %vm7092, %v7084, %v7089
      %v7094 = vrsqrt.pop %v7023
      %v7095 = vmul.f32 %v7094, %v7023
      %v7096 = vmul.f32 %v7095, %v7094
      %v7097 = vmul.f32 0.5, %v7096
      %v7098 = vsub.f32 1.5, %v7097
      %v7099 = vmul.f32 %v7094, %v7098
      %vm7100 = vweird.f32 %v7023
      %vm7101 = vweird.f32 %v7094
      %vm7102 = vmor %vm7100, %vm7101
      %v7103 = vsel %vm7102, %v7094, %v7099
      %v7104 = vmul.f32 %v6968, %v7033
      %v7105 = vmul.f32 %v6969, %v7043
      %v7106 = vmul.f32 %v6970, %v7053
      %v7107 = vmul.f32 %v6971, %v7063
      %v7108 = vmul.f32 %v6972, %v7073
      %v7109 = vmul.f32 %v6973, %v7083
      %v7110 = vmul.f32 %v6974, %v7093
      %v7111 = vmul.f32 %v6975, %v7103
      %v7113 = vperm.slane %v6934, 0
      %v7115 = vmul.f32 %v7104, %v7113
      %v7116 = vmul.f32 %v7105, %v7113
      %v7117 = vmul.f32 %v7106, %v7113
      %v7118 = vmul.f32 %v7107, %v7113
      %v7119 = vmul.f32 %v7108, %v7113
      %v7120 = vmul.f32 %v7109, %v7113
      %v7121 = vmul.f32 %v7110, %v7113
      %v7122 = vmul.f32 %v7111, %v7113
      %v7124 = vperm.slane %v6935, 0
      %v7126 = vadd.f32 %v7115, %v7124
      %v7127 = vadd.f32 %v7116, %v7124
      %v7128 = vadd.f32 %v7117, %v7124
      %v7129 = vadd.f32 %v7118, %v7124
      %v7130 = vadd.f32 %v7119, %v7124
      %v7131 = vadd.f32 %v7120, %v7124
      %v7132 = vadd.f32 %v7121, %v7124
      %v7133 = vadd.f32 %v7122, %v7124
      %v7134 = vld [vmem:[%s69] sm:$0x1]
      %v7136 = vperm.slane %v7134, 0
      %v7138 = vmul.f32 %v7126, %v7136
      %v7139 = vmul.f32 %v7127, %v7136
      %v7140 = vmul.f32 %v7128, %v7136
      %v7141 = vmul.f32 %v7129, %v7136
      %v7142 = vmul.f32 %v7130, %v7136
      %v7143 = vmul.f32 %v7131, %v7136
      %v7144 = vmul.f32 %v7132, %v7136
      %v7145 = vmul.f32 %v7133, %v7136
      %v7146 = vsel %vm1645, %v7138, 0.0
      %7147 = vadd.xlane.f32.xlu0 %v7146
      %v7148 = vpop.xlane.xlu0 %7147
      %v7149 = vsel %vm1645, %v7139, 0.0
      %7150 = vadd.xlane.f32.xlu0 %v7149
      %v7151 = vpop.xlane.xlu0 %7150
      %v7152 = vsel %vm1645, %v7140, 0.0
      %7153 = vadd.xlane.f32.xlu0 %v7152
      %v7154 = vpop.xlane.xlu0 %7153
      %v7155 = vsel %vm1645, %v7141, 0.0
      %7156 = vadd.xlane.f32.xlu0 %v7155
      %v7157 = vpop.xlane.xlu0 %7156
      %v7158 = vsel %vm1645, %v7142, 0.0
      %7159 = vadd.xlane.f32.xlu0 %v7158
      %v7160 = vpop.xlane.xlu0 %7159
      %v7161 = vsel %vm1645, %v7143, 0.0
      %7162 = vadd.xlane.f32.xlu0 %v7161
      %v7163 = vpop.xlane.xlu0 %7162
      %v7164 = vsel %vm1645, %v7144, 0.0
      %7165 = vadd.xlane.f32.xlu0 %v7164
      %v7166 = vpop.xlane.xlu0 %7165
      %v7167 = vsel %vm1645, %v7145, 0.0
      %7168 = vadd.xlane.f32.xlu0 %v7167
      %v7169 = vpop.xlane.xlu0 %7168
      %v7170 = vld [vmem:[#allocation2] sm:$0x1]
      %v7172 = vperm.slane %v7170, 0
      %7173 = vset.pattern.permute.xlu0 0
      %7174 = vperm.xlu0 %7173, %v7172
      %v7175 = vpop.permute.xlu0 %7174
      %v7177 = vadd.f32 %v7148, %v7175
      %v7178 = vadd.f32 %v7151, %v7175
      %v7179 = vadd.f32 %v7154, %v7175
      %v7180 = vadd.f32 %v7157, %v7175
      %v7181 = vadd.f32 %v7160, %v7175
      %v7182 = vadd.f32 %v7163, %v7175
      %v7183 = vadd.f32 %v7166, %v7175
      %v7184 = vadd.f32 %v7169, %v7175
      %v7185 = vld [vmem:[%s1215] sm:$0xff]
      %vm7186 = vcmp.gt.f32.partialorder %v7185, 0.0
      %v7195 = vlaneseq
      %v7196 = vand.u32 %v7195, 127
      %v7197 = vperm.slane %v7177, %v7196
      %v7198 = vperm.slane %v7178, %v7196
      %v7199 = vperm.slane %v7179, %v7196
      %v7200 = vperm.slane %v7180, %v7196
      %v7201 = vperm.slane %v7181, %v7196
      %v7202 = vperm.slane %v7182, %v7196
      %v7203 = vperm.slane %v7183, %v7196
      %v7204 = vperm.slane %v7184, %v7196
      %vm7205 = vcmask 1041409
      %v7206 = vsel %vm7205, %v7198, %v7197
      %vm7207 = vcmask 1042434
      %v7208 = vsel %vm7207, %v7199, %v7206
      %vm7209 = vcmask 1043459
      %v7210 = vsel %vm7209, %v7200, %v7208
      %vm7211 = vcmask 1044484
      %v7212 = vsel %vm7211, %v7201, %v7210
      %vm7213 = vcmask 1045509
      %v7214 = vsel %vm7213, %v7202, %v7212
      %vm7215 = vcmask 1046534
      %v7216 = vsel %vm7215, %v7203, %v7214
      %vm7217 = vcmask 1047559
      %v7218 = vsel %vm7217, %v7204, %v7216
      %v7220 = vsel %vm7186, %v7218, -1e+30
      %v7221 = vsel %vm1720, %v7220, -inf
      %7222 = vmax.xlane.f32.xlu0 %v7221
      %v7223 = vpop.xlane.xlu0 %7222
      %v7224 = vsub.f32 %v7220, %v7223
      %v7225 = vmul.f32 %v7224, 1.442695
      %v7226 = vpow.pop %v7225
      %v7227 = vsel %vm1720, %v7226, 0.0
      %7228 = vadd.xlane.f32.xlu0 %v7227
      %v7229 = vpop.xlane.xlu0 %7228
      %v7230 = vrcp.pop %v7229
      %v7231 = vmul.f32 %v7226, %v7230
      %v7232 = vperm.slane %v7231, 0
      %v7233 = vlaneseq
      %v7234 = vshrl.u32 %v7233, 7
      %7236 = vset.pattern.permute.xlu0 %v7234
      %7237 = vperm.xlu0 %7236, %v7232
      %v7238 = vpop.permute.xlu0 %7237
      %v7239 = vperm.slane %v7231, 1
      %v7240 = vlaneseq
      %v7241 = vshrl.u32 %v7240, 7
      %7243 = vset.pattern.permute.xlu0 %v7241
      %7244 = vperm.xlu0 %7243, %v7239
      %v7245 = vpop.permute.xlu0 %7244
      %v7246 = vperm.slane %v7231, 2
      %v7247 = vlaneseq
      %v7248 = vshrl.u32 %v7247, 7
      %7250 = vset.pattern.permute.xlu0 %v7248
      %7251 = vperm.xlu0 %7250, %v7246
      %v7252 = vpop.permute.xlu0 %7251
      %v7253 = vperm.slane %v7231, 3
      %v7254 = vlaneseq
      %v7255 = vshrl.u32 %v7254, 7
      %7257 = vset.pattern.permute.xlu0 %v7255
      %7258 = vperm.xlu0 %7257, %v7253
      %v7259 = vpop.permute.xlu0 %7258
      %v7260 = vperm.slane %v7231, 4
      %v7261 = vlaneseq
      %v7262 = vshrl.u32 %v7261, 7
      %7264 = vset.pattern.permute.xlu0 %v7262
      %7265 = vperm.xlu0 %7264, %v7260
      %v7266 = vpop.permute.xlu0 %7265
      %v7267 = vperm.slane %v7231, 5
      %v7268 = vlaneseq
      %v7269 = vshrl.u32 %v7268, 7
      %7271 = vset.pattern.permute.xlu0 %v7269
      %7272 = vperm.xlu0 %7271, %v7267
      %v7273 = vpop.permute.xlu0 %7272
      %v7274 = vperm.slane %v7231, 6
      %v7275 = vlaneseq
      %v7276 = vshrl.u32 %v7275, 7
      %7278 = vset.pattern.permute.xlu0 %v7276
      %7279 = vperm.xlu0 %7278, %v7274
      %v7280 = vpop.permute.xlu0 %7279
      %v7281 = vperm.slane %v7231, 7
      %v7282 = vlaneseq
      %v7283 = vshrl.u32 %v7282, 7
      %7285 = vset.pattern.permute.xlu0 %v7283
      %7286 = vperm.xlu0 %7285, %v7281
      %v7287 = vpop.permute.xlu0 %7286
      %v7288 = vmul.f32 %v7238, %v7126
      %v7289 = vmul.f32 %v7245, %v7127
      %v7290 = vmul.f32 %v7252, %v7128
      %v7291 = vmul.f32 %v7259, %v7129
      %v7292 = vmul.f32 %v7266, %v7130
      %v7293 = vmul.f32 %v7273, %v7131
      %v7294 = vmul.f32 %v7280, %v7132
      %v7295 = vmul.f32 %v7287, %v7133
      %v7296 = vsel %vm1645, %v7288, 0.0
      %v7297 = vrot.slane %v7296, 4
      %v7298 = vadd.f32 %v7296, %v7297
      %v7299 = vrot.slane %v7298, 2
      %v7300 = vadd.f32 %v7298, %v7299
      %v7301 = vrot.slane %v7300, 1
      %v7302 = vadd.f32 %v7300, %v7301
      %v7303 = vsel %vm1645, %v7289, 0.0
      %v7304 = vrot.slane %v7303, 4
      %v7305 = vadd.f32 %v7303, %v7304
      %v7306 = vrot.slane %v7305, 2
      %v7307 = vadd.f32 %v7305, %v7306
      %v7308 = vrot.slane %v7307, 1
      %v7309 = vadd.f32 %v7307, %v7308
      %v7310 = vsel %vm1645, %v7290, 0.0
      %v7311 = vrot.slane %v7310, 4
      %v7312 = vadd.f32 %v7310, %v7311
      %v7313 = vrot.slane %v7312, 2
      %v7314 = vadd.f32 %v7312, %v7313
      %v7315 = vrot.slane %v7314, 1
      %v7316 = vadd.f32 %v7314, %v7315
      %v7317 = vsel %vm1645, %v7291, 0.0
      %v7318 = vrot.slane %v7317, 4
      %v7319 = vadd.f32 %v7317, %v7318
      %v7320 = vrot.slane %v7319, 2
      %v7321 = vadd.f32 %v7319, %v7320
      %v7322 = vrot.slane %v7321, 1
      %v7323 = vadd.f32 %v7321, %v7322
      %v7324 = vsel %vm1645, %v7292, 0.0
      %v7325 = vrot.slane %v7324, 4
      %v7326 = vadd.f32 %v7324, %v7325
      %v7327 = vrot.slane %v7326, 2
      %v7328 = vadd.f32 %v7326, %v7327
      %v7329 = vrot.slane %v7328, 1
      %v7330 = vadd.f32 %v7328, %v7329
      %v7331 = vsel %vm1645, %v7293, 0.0
      %v7332 = vrot.slane %v7331, 4
      %v7333 = vadd.f32 %v7331, %v7332
      %v7334 = vrot.slane %v7333, 2
      %v7335 = vadd.f32 %v7333, %v7334
      %v7336 = vrot.slane %v7335, 1
      %v7337 = vadd.f32 %v7335, %v7336
      %v7338 = vsel %vm1645, %v7294, 0.0
      %v7339 = vrot.slane %v7338, 4
      %v7340 = vadd.f32 %v7338, %v7339
      %v7341 = vrot.slane %v7340, 2
      %v7342 = vadd.f32 %v7340, %v7341
      %v7343 = vrot.slane %v7342, 1
      %v7344 = vadd.f32 %v7342, %v7343
      %v7345 = vsel %vm1645, %v7295, 0.0
      %v7346 = vrot.slane %v7345, 4
      %v7347 = vadd.f32 %v7345, %v7346
      %v7348 = vrot.slane %v7347, 2
      %v7349 = vadd.f32 %v7347, %v7348
      %v7350 = vrot.slane %v7349, 1
      %v7351 = vadd.f32 %v7349, %v7350
      %v7352 = vld [vmem:[%s73] sm:$0xff]
      %v7353 = vld [vmem:[%s73 + $0x8] sm:$0xff]
      %v7354 = vld [vmem:[%s73 + $0x10] sm:$0xff]
      %v7355 = vld [vmem:[%s73 + $0x18] sm:$0xff]
      %v7356 = vld [vmem:[#allocation3] sm:$0x1]
      %v7358 = vperm.slane %v7356, 0
      %v7368 = vsel %vm7205, %v7309, %v7302
      %v7369 = vsel %vm7207, %v7316, %v7368
      %v7370 = vsel %vm7209, %v7323, %v7369
      %v7371 = vsel %vm7211, %v7330, %v7370
      %v7372 = vsel %vm7213, %v7337, %v7371
      %v7373 = vsel %vm7215, %v7344, %v7372
      %v7374 = vsel %vm7217, %v7351, %v7373
      %v7375 = vsel %vm1645, %v7374, 0
      %7377 = vmatpush.msra.mxu0 0.0
      %7378 = vmatpush.msra.mxu0 0.0
      %7379 = vmatpush.msra.mxu0 0.0
      %7380 = vmatpush.msra.mxu0 0.0
      %7381 = vmatpush.msra.mxu0 0.0
      %7382 = vmatpush.msra.mxu0 0.0
      %7383 = vmatpush.msra.mxu0 0.0
      %7384 = vmatpush.msra.mxu0 0.0
      %7385 = vmatpush.msra.mxu0 0.0
      %7386 = vmatpush.msra.mxu0 0.0
      %7387 = vmatpush.msra.mxu0 0.0
      %7388 = vmatpush.msra.mxu0 0.0
      %7389 = vmatpush.msra.mxu0 %v7355
      %7390 = vmatpush.msra.mxu0 %v7354
      %7391 = vmatpush.msra.mxu0 %v7353
      %7392 = vmatpush.msra.mxu0 %v7352
      %7393 = vmatmul.f32.gmra.mxu0 %v7375
      %v7394 = vpop.f32.mrf.mxu0
      %v7395 = vadd.f32 %v7358, %v7394
      %7396 = vdwg.mxu0
      %vm7397 = vcmask 7168
      %7398 = vst.msk [vmem:[%s1219] sm:$0xff] %vm7397, %v7395
      %p7399 = scmp.lt.s32.totalorder %s92, 1
      %s7400 = scalar_select %p7399, %s92, 1
      %s7401 = smul.addr %s7400, 8
      %s7402 = scalar_lea.vmem %s77, %s7401
      // Predicated region
      $region173: #{tpu_custom_call.1} parent=171 // pred_check
        %p7403 = pneg %p928
      $region174: #{tpu_custom_call.1} parent=171 // pred_check_branch
        %7405 = sbr.rel (%p7403) target = $region176
      $region175: #{tpu_custom_call.1} parent=171 // pred_region
        _
      $region176: #{tpu_custom_call.1} parent=171 // pred_fallthru
        _
    $region172: #{tpu_custom_call.1} parent=5 // pred_fallthru
      _
    %p7406 = scmp.le.s32.totalorder 2, %s87
    // Predicated region
    $region177: #{tpu_custom_call.1} parent=5 // pred_check
      %p7407 = pneg %p7406
    $region178: #{tpu_custom_call.1} parent=5 // pred_check_branch
      %7409 = sbr.rel (%p7407) target = $region180
    $region179: #{tpu_custom_call.1} parent=5 // pred_region
      %s7410 = ssub.s32 %s87, 2
      // Predicated region
      $region181: #{tpu_custom_call.1} parent=179 // pred_check
        %p7411 = pneg %p934
      $region182: #{tpu_custom_call.1} parent=179 // pred_check_branch
        %7413 = sbr.rel (%p7411) target = $region184
      $region183: #{tpu_custom_call.1} parent=179 // pred_region
        %p7414 = scmp.lt.s32.totalorder %s93, 1
        %s7415 = scalar_select %p7414, %s93, 1
        %s7416 = smul.addr %s7415, 8
        %s7417 = scalar_lea.vmem %s77, %s7416
      $region184: #{tpu_custom_call.1} parent=179 // pred_fallthru
        _
    $region180: #{tpu_custom_call.1} parent=5 // pred_fallthru
      _
  $region6: #{tpu_custom_call.1} parent=0 // loop_footer
    %s91 = sadd.s32 1, %s87
  $region7: #{tpu_custom_call.1} parent=0 // loop_footer_branch
    %86 = sbr.rel target = $region3
  $region8: #{tpu_custom_call.1} parent=0 // loop_exit
    _

</llo_original>
